<compile_context>
chip_gen: v6e
topology: v6e:2x2x1
jax: 0.10.0
libtpu: 0.0.40
codegen_flags: <defaults>
</compile_context>

<pallas_src>
import jax
import jax.numpy as jnp
from jax.experimental import pallas as pl
from jax.experimental.pallas import tpu as pltpu

BN_EPS = 1e-5
_VMEM = pl.BlockSpec(memory_space=pltpu.MemorySpace.VMEM)


# --------------------------------------------------------------------------- geometry helpers
def _geom(n, h, w):
    """Padded-slab geometry for a logical (n, h, w, C) activation."""
    hp, wp = h + 2, w + 2
    return {"n": n, "H": h, "W": w, "Hp": hp, "Wp": wp, "R": n * hp * wp, "base": wp + 1}


def _irow(g, b, h, w):
    """Flat slab row of interior position (b, h, w)."""
    return (b * g["Hp"] + h + 1) * g["Wp"] + (w + 1)


def _down(h, w):
    """Output size of a 3x3 / stride-2 / pad-1 conv or pool."""
    return (h + 2 - 3) // 2 + 1, (w + 2 - 3) // 2 + 1


# --------------------------------------------------------------------------- wrapper + kernel
def feature_extractor(x_nchw, params):
    x = jnp.transpose(x_nchw, (0, 2, 3, 1)).astype(jnp.float32)      # NCHW -> NHWC (once)
    n, h0, w0, cin = x.shape

    c0 = params["stem_w"].shape[-1]                                   # 64
    c1 = params["l1b1"]["conv1_w"].shape[-1]                          # 96
    c2 = params["l2b1"]["conv1_w"].shape[-1]                          # 128

    h1, w1 = (h0 + 6 - 7) // 2 + 1, (w0 + 6 - 7) // 2 + 1             # stem 7x7/s2/p3
    h2, w2 = _down(h1, w1)                                            # maxpool
    h3, w3 = _down(h2, w2)                                            # layer1 downsample
    h4, w4 = _down(h3, w3)                                            # layer2 downsample
    g1, g2, g3, g4 = _geom(n, h1, w1), _geom(n, h2, w2), _geom(n, h3, w3), _geom(n, h4, w4)

    # ---------------- parameter prep: fold BN, flatten to (kh*kw*cin, cout), bf16 ----------------
    def fold_flat(w_hwio, scale):
        w = w_hwio * scale[None, None, None, :]
        kh, kw, ci, co = w.shape
        return w.reshape(kh * kw * ci, co).astype(jnp.bfloat16)

    def flat(w_hwio):
        kh, kw, ci, co = w_hwio.shape
        return w_hwio.reshape(kh * kw * ci, co).astype(jnp.bfloat16)

    def prep_block(p, fuse_shortcut):
        w1 = fold_flat(p["conv1_w"], p["bn1_scale"])                  # (9*ci, co)
        if fuse_shortcut:
            ci, co = p["conv1_w"].shape[2], p["conv1_w"].shape[3]
            sc = p["shortcut_w"].reshape(ci, co)
            right = jnp.zeros((9 * ci, co), jnp.float32).at[4 * ci:5 * ci, :].set(sc)
            w1 = jnp.concatenate([w1, right.astype(jnp.bfloat16)], axis=1)   # (9*ci, 2*co)
        b1 = p["bn1_bias"].reshape(1, -1).astype(jnp.float32)
        return w1, b1, flat(p["conv2_w"])

    stem_w = fold_flat(params["stem_w"], params["stem_bn_scale"])     # (49*cin, 64)
    stem_b = params["stem_bn_bias"].reshape(1, -1).astype(jnp.float32)
    l1b1_w1, l1b1_b1, l1b1_w2 = prep_block(params["l1b1"], True)
    l1b2_w1, l1b2_b1, l1b2_w2 = prep_block(params["l1b2"], False)
    l2b1_w1, l2b1_b1, l2b1_w2 = prep_block(params["l2b1"], True)
    l2b2_w1, l2b2_b1, l2b2_w2 = prep_block(params["l2b2"], False)
    fc_w = params["fc_w"].astype(jnp.bfloat16)
    fc_b = params["fc_b"].reshape(1, -1).astype(jnp.float32)
    out_dim = fc_w.shape[-1]

    # ---------------- stem im2col LHS (stride-2 exact), built in the wrapper ----------------
    xpad = jnp.pad(x, ((0, 0), (3, 3), (3, 3), (0, 0)))
    cols = []
    for i in range(7):
        for j in range(7):
            cols.append(xpad[:, i:i + 2 * h1 - 1:2, j:j + 2 * w1 - 1:2, :])
    stem_lhs = jnp.stack(cols, axis=3).reshape(n * h1 * w1, 7 * 7 * cin).astype(jnp.bfloat16)

    # ---------------- fused kernel ----------------
    def kernel(lhs_ref, stem_w_ref, stem_b_ref,
               w11, b11, w12, w21, b21, w22, w31, b31, w32, w41, b41, w42,
               fcw_ref, fcb_ref, out_ref,
               p_stem, p_pool, p_l1m, p_l1o, p_l1m2, p_l1o2, p_l2m, p_l2o, p_l2m2,
               final_ref, lhs_a, lhs_b, lhs_c):
        f32, bf16 = jnp.float32, jnp.bfloat16

        # Zero every padded slab exactly once (their borders provide conv zero-padding).
        for r in (p_stem, p_pool, p_l1m, p_l1o, p_l1m2, p_l1o2, p_l2m, p_l2o, p_l2m2):
            r[...] = jnp.zeros(r.shape, r.dtype)

        # ---- stem: one im2col matmul + folded-BN bias + ReLU, scatter into the first slab ----
        a = jnp.dot(lhs_ref[...], stem_w_ref[...], preferred_element_type=f32)
        a = jnp.maximum(a + stem_b_ref[...], 0.0)
        for b in range(n):
            for hh in range(h1):
                d = _irow(g1, b, hh, 0)
                s = (b * h1 + hh) * w1
                p_stem[d:d + w1, :] = a[s:s + w1, :]

        # ---- maxpool 3x3/s2/p1: stride-1 sliding max over the slab + exact row subsample ----
        # (zero padding == -inf padding because the input is post-ReLU)
        base1, m1 = g1["base"], g1["R"] - 2 * g1["base"]
        mx = p_stem[0:m1, :]
        for t in range(1, 9):
            off = (t // 3) * g1["Wp"] + (t % 3)
            mx = jnp.maximum(mx, p_stem[off:off + m1, :])
        for b in range(n):
            for oh in range(h2):
                for ow in range(w2):
                    k = _irow(g1, b, 2 * oh, 2 * ow) - base1
                    d = _irow(g2, b, oh, ow)
                    p_pool[d:d + 1, :] = mx[k:k + 1, :]

        # ---- generic 3x3 conv over a padded slab: ONE matmul with K = 9*Cin ----
        def conv(src_ref, g, cin_, w_ref, lhs_scr):
            base_, wp = g["base"], g["Wp"]
            m_ = g["R"] - 2 * base_
            for i in range(3):
                for j in range(3):
                    t = i * 3 + j
                    lhs_scr[:, t * cin_:(t + 1) * cin_] = (
                        src_ref[i * wp + j:i * wp + j + m_, :].astype(bf16))
            return jnp.dot(lhs_scr[...], w_ref[...], preferred_element_type=f32), base_

        # ---- BasicBlock: conv1(+fused 1x1/s2 shortcut)+bias+ReLU -> conv2 -> + identity ----
        # (bn2 is never applied and there is no ReLU after the residual add, per the reference)
        def block(src_ref, g_in, g_out, cin_, cout_, stride, w1_ref, b1_ref, w2_ref,
                  mid_ref, lhs_in, lhs_out, dst_ref, dst_is_slab):
            v, base_in = conv(src_ref, g_in, cin_, w1_ref, lhs_in)
            c1v = jnp.maximum(v[:, :cout_] + b1_ref[...], 0.0)
            ident = v[:, cout_:] if stride == 2 else None
            for b in range(n):
                for oh in range(g_out["H"]):
                    for ow in range(g_out["W"]):
                        k = _irow(g_in, b, stride * oh, stride * ow) - base_in
                        d = _irow(g_out, b, oh, ow)
                        mid_ref[d:d + 1, :] = c1v[k:k + 1, :]
            v2, base_out = conv(mid_ref, g_out, cout_, w2_ref, lhs_out)
            for b in range(n):
                for oh in range(g_out["H"]):
                    for ow in range(g_out["W"]):
                        k2 = _irow(g_out, b, oh, ow) - base_out
                        if stride == 2:
                            ki = _irow(g_in, b, 2 * oh, 2 * ow) - base_in
                            idn = ident[ki:ki + 1, :]
                        else:
                            ri = _irow(g_in, b, oh, ow)
                            idn = src_ref[ri:ri + 1, :].astype(f32)
                        res = v2[k2:k2 + 1, :] + idn
                        if dst_is_slab:
                            d = _irow(g_out, b, oh, ow)
                            dst_ref[d:d + 1, :] = res
                        else:
                            d = (b * g_out["H"] + oh) * g_out["W"] + ow
                            dst_ref[d:d + 1, :] = res

        # layer1
        block(p_pool, g2, g3, c0, c1, 2, w11, b11, w12, p_l1m, lhs_a, lhs_b, p_l1o, True)
        block(p_l1o, g3, g3, c1, c1, 1, w21, b21, w22, p_l1m2, lhs_b, lhs_b, p_l1o2, True)
        # layer2
        block(p_l1o2, g3, g4, c1, c2, 2, w31, b31, w32, p_l2m, lhs_b, lhs_c, p_l2o, True)
        block(p_l2o, g4, g4, c2, c2, 1, w41, b41, w42, p_l2m2, lhs_c, lhs_c, final_ref, False)

        # ---- head: global average pool + Linear (GAP is linear -> pool after the matmul) ----
        logits = jnp.dot(final_ref[...].astype(bf16), fcw_ref[...], preferred_element_type=f32)
        hw = h4 * w4
        for b in range(n):
            out_ref[b:b + 1, :] = (jnp.mean(logits[b * hw:(b + 1) * hw, :], axis=0,
                                            keepdims=True) + fcb_ref[...])

    ins = [stem_lhs, stem_w, stem_b,
           l1b1_w1, l1b1_b1, l1b1_w2,
           l1b2_w1, l1b2_b1, l1b2_w2,
           l2b1_w1, l2b1_b1, l2b1_w2,
           l2b2_w1, l2b2_b1, l2b2_w2,
           fc_w, fc_b]

    scratch = [
        pltpu.VMEM((g1["R"], c0), jnp.float32),                       # stem-out slab
        pltpu.VMEM((g2["R"], c0), jnp.float32),                       # pool-out slab
        pltpu.VMEM((g3["R"], c1), jnp.float32),                       # l1b1 conv1-out slab
        pltpu.VMEM((g3["R"], c1), jnp.float32),                       # l1b1 block-out slab
        pltpu.VMEM((g3["R"], c1), jnp.float32),                       # l1b2 conv1-out slab
        pltpu.VMEM((g3["R"], c1), jnp.float32),                       # l1b2 block-out slab
        pltpu.VMEM((g4["R"], c2), jnp.float32),                       # l2b1 conv1-out slab
        pltpu.VMEM((g4["R"], c2), jnp.float32),                       # l2b1 block-out slab
        pltpu.VMEM((g4["R"], c2), jnp.float32),                       # l2b2 conv1-out slab
        pltpu.VMEM((n * h4 * w4, c2), jnp.float32),                   # final compact features
        pltpu.VMEM((g2["R"] - 2 * g2["base"], 9 * c0), jnp.bfloat16),  # im2col LHS (layer1.b1.conv1)
        pltpu.VMEM((g3["R"] - 2 * g3["base"], 9 * c1), jnp.bfloat16),  # im2col LHS (96-ch convs)
        pltpu.VMEM((g4["R"] - 2 * g4["base"], 9 * c2), jnp.bfloat16),  # im2col LHS (128-ch convs)
    ]

    return pl.pallas_call(
        kernel,
        out_shape=jax.ShapeDtypeStruct((n, out_dim), jnp.float32),
        in_specs=[_VMEM] * len(ins),
        out_specs=_VMEM,
        scratch_shapes=scratch,
    )(*ins)


# --------------------------------------------------------------------------- params
def init_params(key, in_channels=4, output_dim=128):
    keys = iter(jax.random.split(key, 64))

    def conv_w(kh, kw, ci, co):
        fan_in = kh * kw * ci
        return jax.random.normal(next(keys), (kh, kw, ci, co), jnp.float32) * (2.0 / fan_in) ** 0.5

    def bn_fold(c):
        gamma = jax.random.uniform(next(keys), (c,), jnp.float32, 0.5, 1.5)
        beta = jax.random.normal(next(keys), (c,), jnp.float32) * 0.1
        mean = jax.random.normal(next(keys), (c,), jnp.float32) * 0.1
        var = jax.random.uniform(next(keys), (c,), jnp.float32, 0.5, 1.5)
        scale = gamma / jnp.sqrt(var + BN_EPS)
        return scale, beta - mean * scale

    def block(ci, co, stride):
        p = {"conv1_w": conv_w(3, 3, ci, co), "conv2_w": conv_w(3, 3, co, co)}
        p["bn1_scale"], p["bn1_bias"] = bn_fold(co)
        if stride != 1 or ci != co:
            p["shortcut_w"] = conv_w(1, 1, ci, co)
        return p

    params = {"stem_w": conv_w(7, 7, in_channels, 64)}
    params["stem_bn_scale"], params["stem_bn_bias"] = bn_fold(64)
    params["l1b1"] = block(64, 96, 2)
    params["l1b2"] = block(96, 96, 1)
    params["l2b1"] = block(96, 128, 2)
    params["l2b2"] = block(128, 128, 1)
    params["fc_w"] = jax.random.normal(next(keys), (128, output_dim), jnp.float32) * (1.0 / 128.0) ** 0.5
    params["fc_b"] = jax.random.normal(next(keys), (output_dim,), jnp.float32) * 0.01
    return params


# --------------------------------------------------------------------------- main
if __name__ == "__main__":
    key = jax.random.PRNGKey(0)
    pkey, xkey = jax.random.split(key)
    params = init_params(pkey, in_channels=4, output_dim=128)
    x = jax.random.normal(xkey, (2, 4, 16, 16), jnp.float32)   # NCHW, like PyTorch

    fwd = jax.jit(feature_extractor)
    out = fwd(x, params)
    jax.block_until_ready(out)
    assert out.shape == (2, 128) and out.dtype == jnp.float32
    print("KERNEL_OK")
</pallas_src>

<mosaic_0001>
module attributes {stable_mosaic.version = 11 : i64} {
  func.func @kernel(%arg0: memref<128x196xbf16, #tpu.memory_space<vmem>>, %arg1: memref<196x64xbf16, #tpu.memory_space<vmem>>, %arg2: memref<1x64xf32, #tpu.memory_space<vmem>>, %arg3: memref<576x192xbf16, #tpu.memory_space<vmem>>, %arg4: memref<1x96xf32, #tpu.memory_space<vmem>>, %arg5: memref<864x96xbf16, #tpu.memory_space<vmem>>, %arg6: memref<864x96xbf16, #tpu.memory_space<vmem>>, %arg7: memref<1x96xf32, #tpu.memory_space<vmem>>, %arg8: memref<864x96xbf16, #tpu.memory_space<vmem>>, %arg9: memref<864x256xbf16, #tpu.memory_space<vmem>>, %arg10: memref<1x128xf32, #tpu.memory_space<vmem>>, %arg11: memref<1152x128xbf16, #tpu.memory_space<vmem>>, %arg12: memref<1152x128xbf16, #tpu.memory_space<vmem>>, %arg13: memref<1x128xf32, #tpu.memory_space<vmem>>, %arg14: memref<1152x128xbf16, #tpu.memory_space<vmem>>, %arg15: memref<128x128xbf16, #tpu.memory_space<vmem>>, %arg16: memref<1x128xf32, #tpu.memory_space<vmem>>, %arg17: memref<2x128xf32, #tpu.memory_space<vmem>>, %arg18: memref<200x64xf32, #tpu.memory_space<vmem>>, %arg19: memref<72x64xf32, #tpu.memory_space<vmem>>, %arg20: memref<32x96xf32, #tpu.memory_space<vmem>>, %arg21: memref<32x96xf32, #tpu.memory_space<vmem>>, %arg22: memref<32x96xf32, #tpu.memory_space<vmem>>, %arg23: memref<32x96xf32, #tpu.memory_space<vmem>>, %arg24: memref<18x128xf32, #tpu.memory_space<vmem>>, %arg25: memref<18x128xf32, #tpu.memory_space<vmem>>, %arg26: memref<18x128xf32, #tpu.memory_space<vmem>>, %arg27: memref<2x128xf32, #tpu.memory_space<vmem>>, %arg28: memref<58x576xbf16, #tpu.memory_space<vmem>>, %arg29: memref<22x864xbf16, #tpu.memory_space<vmem>>, %arg30: memref<10x1152xbf16, #tpu.memory_space<vmem>>) attributes {dimension_semantics = [], scalar_prefetch = 0 : i64, scratch_operands = 13 : i64, tpu.core_type = #tpu.core_type<tc>} {
    %cst = arith.constant 0.000000e+00 : f32
    %0 = vector.broadcast %cst : f32 to vector<200x64xf32>
    %c0 = arith.constant 0 : index
    %c0_0 = arith.constant 0 : index
    %1 = vector.load %arg18[%c0, %c0_0] : memref<200x64xf32, #tpu.memory_space<vmem>>, vector<200x64xf32>
    tpu.vector_store %arg18[%c0, %c0_0], %0 {strides = array<i32>} : memref<200x64xf32, #tpu.memory_space<vmem>>, vector<200x64xf32>,
    %cst_1 = arith.constant 0.000000e+00 : f32
    %2 = vector.broadcast %cst_1 : f32 to vector<72x64xf32>
    %c0_2 = arith.constant 0 : index
    %c0_3 = arith.constant 0 : index
    %3 = vector.load %arg19[%c0_2, %c0_3] : memref<72x64xf32, #tpu.memory_space<vmem>>, vector<72x64xf32>
    tpu.vector_store %arg19[%c0_2, %c0_3], %2 {strides = array<i32>} : memref<72x64xf32, #tpu.memory_space<vmem>>, vector<72x64xf32>,
    %cst_4 = arith.constant 0.000000e+00 : f32
    %4 = vector.broadcast %cst_4 : f32 to vector<32x96xf32>
    %c0_5 = arith.constant 0 : index
    %c0_6 = arith.constant 0 : index
    %5 = vector.load %arg20[%c0_5, %c0_6] : memref<32x96xf32, #tpu.memory_space<vmem>>, vector<32x96xf32>
    tpu.vector_store %arg20[%c0_5, %c0_6], %4 {strides = array<i32>} : memref<32x96xf32, #tpu.memory_space<vmem>>, vector<32x96xf32>,
    %cst_7 = arith.constant 0.000000e+00 : f32
    %6 = vector.broadcast %cst_7 : f32 to vector<32x96xf32>
    %c0_8 = arith.constant 0 : index
    %c0_9 = arith.constant 0 : index
    %7 = vector.load %arg21[%c0_8, %c0_9] : memref<32x96xf32, #tpu.memory_space<vmem>>, vector<32x96xf32>
    tpu.vector_store %arg21[%c0_8, %c0_9], %6 {strides = array<i32>} : memref<32x96xf32, #tpu.memory_space<vmem>>, vector<32x96xf32>,
    %cst_10 = arith.constant 0.000000e+00 : f32
    %8 = vector.broadcast %cst_10 : f32 to vector<32x96xf32>
    %c0_11 = arith.constant 0 : index
    %c0_12 = arith.constant 0 : index
    %9 = vector.load %arg22[%c0_11, %c0_12] : memref<32x96xf32, #tpu.memory_space<vmem>>, vector<32x96xf32>
    tpu.vector_store %arg22[%c0_11, %c0_12], %8 {strides = array<i32>} : memref<32x96xf32, #tpu.memory_space<vmem>>, vector<32x96xf32>,
    %cst_13 = arith.constant 0.000000e+00 : f32
    %10 = vector.broadcast %cst_13 : f32 to vector<32x96xf32>
    %c0_14 = arith.constant 0 : index
    %c0_15 = arith.constant 0 : index
    %11 = vector.load %arg23[%c0_14, %c0_15] : memref<32x96xf32, #tpu.memory_space<vmem>>, vector<32x96xf32>
    tpu.vector_store %arg23[%c0_14, %c0_15], %10 {strides = array<i32>} : memref<32x96xf32, #tpu.memory_space<vmem>>, vector<32x96xf32>,
    %cst_16 = arith.constant 0.000000e+00 : f32
    %12 = vector.broadcast %cst_16 : f32 to vector<18x128xf32>
    %c0_17 = arith.constant 0 : index
    %c0_18 = arith.constant 0 : index
    %13 = vector.load %arg24[%c0_17, %c0_18] : memref<18x128xf32, #tpu.memory_space<vmem>>, vector<18x128xf32>
    tpu.vector_store %arg24[%c0_17, %c0_18], %12 {strides = array<i32>} : memref<18x128xf32, #tpu.memory_space<vmem>>, vector<18x128xf32>,
    %cst_19 = arith.constant 0.000000e+00 : f32
    %14 = vector.broadcast %cst_19 : f32 to vector<18x128xf32>
    %c0_20 = arith.constant 0 : index
    %c0_21 = arith.constant 0 : index
    %15 = vector.load %arg25[%c0_20, %c0_21] : memref<18x128xf32, #tpu.memory_space<vmem>>, vector<18x128xf32>
    tpu.vector_store %arg25[%c0_20, %c0_21], %14 {strides = array<i32>} : memref<18x128xf32, #tpu.memory_space<vmem>>, vector<18x128xf32>,
    %cst_22 = arith.constant 0.000000e+00 : f32
    %16 = vector.broadcast %cst_22 : f32 to vector<18x128xf32>
    %c0_23 = arith.constant 0 : index
    %c0_24 = arith.constant 0 : index
    %17 = vector.load %arg26[%c0_23, %c0_24] : memref<18x128xf32, #tpu.memory_space<vmem>>, vector<18x128xf32>
    tpu.vector_store %arg26[%c0_23, %c0_24], %16 {strides = array<i32>} : memref<18x128xf32, #tpu.memory_space<vmem>>, vector<18x128xf32>,
    %c0_25 = arith.constant 0 : index
    %c0_26 = arith.constant 0 : index
    %18 = vector.load %arg0[%c0_25, %c0_26] : memref<128x196xbf16, #tpu.memory_space<vmem>>, vector<128x196xbf16>
    %c0_27 = arith.constant 0 : index
    %c0_28 = arith.constant 0 : index
    %19 = vector.load %arg1[%c0_27, %c0_28] : memref<196x64xbf16, #tpu.memory_space<vmem>>, vector<196x64xbf16>
    %cst_29 = arith.constant dense<0.000000e+00> : vector<128x64xf32>
    %20 = tpu.matmul %18, %19, %cst_29 {dimension_numbers = #tpu.dot_dimension_numbers<[1], [0], [0], [1], [0, 0, 1, 1], [], []>} : vector<128x196xbf16>, vector<196x64xbf16>, vector<128x64xf32> -> vector<128x64xf32>
    %c0_30 = arith.constant 0 : index
    %c0_31 = arith.constant 0 : index
    %21 = vector.load %arg2[%c0_30, %c0_31] : memref<1x64xf32, #tpu.memory_space<vmem>>, vector<1x64xf32>
    %22 = vector.broadcast %21 : vector<1x64xf32> to vector<128x64xf32>
    %23 = arith.addf %20, %22 : vector<128x64xf32>
    %cst_32 = arith.constant 0.000000e+00 : f32
    %24 = vector.broadcast %cst_32 : f32 to vector<128x64xf32>
    %25 = arith.maximumf %23, %24 : vector<128x64xf32>
    %26 = vector.extract_strided_slice %25 {offsets = [0, 0], sizes = [8, 64], strides = [1, 1]} : vector<128x64xf32> to vector<8x64xf32>
    %c11 = arith.constant 11 : index
    %c0_33 = arith.constant 0 : index
    %27 = vector.load %arg18[%c11, %c0_33] : memref<200x64xf32, #tpu.memory_space<vmem>>, vector<8x64xf32>
    tpu.vector_store %arg18[%c11, %c0_33], %26 {strides = array<i32>} : memref<200x64xf32, #tpu.memory_space<vmem>>, vector<8x64xf32>,
    %28 = vector.extract_strided_slice %25 {offsets = [8, 0], sizes = [8, 64], strides = [1, 1]} : vector<128x64xf32> to vector<8x64xf32>
    %c21 = arith.constant 21 : index
    %c0_34 = arith.constant 0 : index
    %29 = vector.load %arg18[%c21, %c0_34] : memref<200x64xf32, #tpu.memory_space<vmem>>, vector<8x64xf32>
    tpu.vector_store %arg18[%c21, %c0_34], %28 {strides = array<i32>} : memref<200x64xf32, #tpu.memory_space<vmem>>, vector<8x64xf32>,
    %30 = vector.extract_strided_slice %25 {offsets = [16, 0], sizes = [8, 64], strides = [1, 1]} : vector<128x64xf32> to vector<8x64xf32>
    %c31 = arith.constant 31 : index
    %c0_35 = arith.constant 0 : index
    %31 = vector.load %arg18[%c31, %c0_35] : memref<200x64xf32, #tpu.memory_space<vmem>>, vector<8x64xf32>
    tpu.vector_store %arg18[%c31, %c0_35], %30 {strides = array<i32>} : memref<200x64xf32, #tpu.memory_space<vmem>>, vector<8x64xf32>,
    %32 = vector.extract_strided_slice %25 {offsets = [24, 0], sizes = [8, 64], strides = [1, 1]} : vector<128x64xf32> to vector<8x64xf32>
    %c41 = arith.constant 41 : index
    %c0_36 = arith.constant 0 : index
    %33 = vector.load %arg18[%c41, %c0_36] : memref<200x64xf32, #tpu.memory_space<vmem>>, vector<8x64xf32>
    tpu.vector_store %arg18[%c41, %c0_36], %32 {strides = array<i32>} : memref<200x64xf32, #tpu.memory_space<vmem>>, vector<8x64xf32>,
    %34 = vector.extract_strided_slice %25 {offsets = [32, 0], sizes = [8, 64], strides = [1, 1]} : vector<128x64xf32> to vector<8x64xf32>
    %c51 = arith.constant 51 : index
    %c0_37 = arith.constant 0 : index
    %35 = vector.load %arg18[%c51, %c0_37] : memref<200x64xf32, #tpu.memory_space<vmem>>, vector<8x64xf32>
    tpu.vector_store %arg18[%c51, %c0_37], %34 {strides = array<i32>} : memref<200x64xf32, #tpu.memory_space<vmem>>, vector<8x64xf32>,
    %36 = vector.extract_strided_slice %25 {offsets = [40, 0], sizes = [8, 64], strides = [1, 1]} : vector<128x64xf32> to vector<8x64xf32>
    %c61 = arith.constant 61 : index
    %c0_38 = arith.constant 0 : index
    %37 = vector.load %arg18[%c61, %c0_38] : memref<200x64xf32, #tpu.memory_space<vmem>>, vector<8x64xf32>
    tpu.vector_store %arg18[%c61, %c0_38], %36 {strides = array<i32>} : memref<200x64xf32, #tpu.memory_space<vmem>>, vector<8x64xf32>,
    %38 = vector.extract_strided_slice %25 {offsets = [48, 0], sizes = [8, 64], strides = [1, 1]} : vector<128x64xf32> to vector<8x64xf32>
    %c71 = arith.constant 71 : index
    %c0_39 = arith.constant 0 : index
    %39 = vector.load %arg18[%c71, %c0_39] : memref<200x64xf32, #tpu.memory_space<vmem>>, vector<8x64xf32>
    tpu.vector_store %arg18[%c71, %c0_39], %38 {strides = array<i32>} : memref<200x64xf32, #tpu.memory_space<vmem>>, vector<8x64xf32>,
    %40 = vector.extract_strided_slice %25 {offsets = [56, 0], sizes = [8, 64], strides = [1, 1]} : vector<128x64xf32> to vector<8x64xf32>
    %c81 = arith.constant 81 : index
    %c0_40 = arith.constant 0 : index
    %41 = vector.load %arg18[%c81, %c0_40] : memref<200x64xf32, #tpu.memory_space<vmem>>, vector<8x64xf32>
    tpu.vector_store %arg18[%c81, %c0_40], %40 {strides = array<i32>} : memref<200x64xf32, #tpu.memory_space<vmem>>, vector<8x64xf32>,
    %42 = vector.extract_strided_slice %25 {offsets = [64, 0], sizes = [8, 64], strides = [1, 1]} : vector<128x64xf32> to vector<8x64xf32>
    %c111 = arith.constant 111 : index
    %c0_41 = arith.constant 0 : index
    %43 = vector.load %arg18[%c111, %c0_41] : memref<200x64xf32, #tpu.memory_space<vmem>>, vector<8x64xf32>
    tpu.vector_store %arg18[%c111, %c0_41], %42 {strides = array<i32>} : memref<200x64xf32, #tpu.memory_space<vmem>>, vector<8x64xf32>,
    %44 = vector.extract_strided_slice %25 {offsets = [72, 0], sizes = [8, 64], strides = [1, 1]} : vector<128x64xf32> to vector<8x64xf32>
    %c121 = arith.constant 121 : index
    %c0_42 = arith.constant 0 : index
    %45 = vector.load %arg18[%c121, %c0_42] : memref<200x64xf32, #tpu.memory_space<vmem>>, vector<8x64xf32>
    tpu.vector_store %arg18[%c121, %c0_42], %44 {strides = array<i32>} : memref<200x64xf32, #tpu.memory_space<vmem>>, vector<8x64xf32>,
    %46 = vector.extract_strided_slice %25 {offsets = [80, 0], sizes = [8, 64], strides = [1, 1]} : vector<128x64xf32> to vector<8x64xf32>
    %c131 = arith.constant 131 : index
    %c0_43 = arith.constant 0 : index
    %47 = vector.load %arg18[%c131, %c0_43] : memref<200x64xf32, #tpu.memory_space<vmem>>, vector<8x64xf32>
    tpu.vector_store %arg18[%c131, %c0_43], %46 {strides = array<i32>} : memref<200x64xf32, #tpu.memory_space<vmem>>, vector<8x64xf32>,
    %48 = vector.extract_strided_slice %25 {offsets = [88, 0], sizes = [8, 64], strides = [1, 1]} : vector<128x64xf32> to vector<8x64xf32>
    %c141 = arith.constant 141 : index
    %c0_44 = arith.constant 0 : index
    %49 = vector.load %arg18[%c141, %c0_44] : memref<200x64xf32, #tpu.memory_space<vmem>>, vector<8x64xf32>
    tpu.vector_store %arg18[%c141, %c0_44], %48 {strides = array<i32>} : memref<200x64xf32, #tpu.memory_space<vmem>>, vector<8x64xf32>,
    %50 = vector.extract_strided_slice %25 {offsets = [96, 0], sizes = [8, 64], strides = [1, 1]} : vector<128x64xf32> to vector<8x64xf32>
    %c151 = arith.constant 151 : index
    %c0_45 = arith.constant 0 : index
    %51 = vector.load %arg18[%c151, %c0_45] : memref<200x64xf32, #tpu.memory_space<vmem>>, vector<8x64xf32>
    tpu.vector_store %arg18[%c151, %c0_45], %50 {strides = array<i32>} : memref<200x64xf32, #tpu.memory_space<vmem>>, vector<8x64xf32>,
    %52 = vector.extract_strided_slice %25 {offsets = [104, 0], sizes = [8, 64], strides = [1, 1]} : vector<128x64xf32> to vector<8x64xf32>
    %c161 = arith.constant 161 : index
    %c0_46 = arith.constant 0 : index
    %53 = vector.load %arg18[%c161, %c0_46] : memref<200x64xf32, #tpu.memory_space<vmem>>, vector<8x64xf32>
    tpu.vector_store %arg18[%c161, %c0_46], %52 {strides = array<i32>} : memref<200x64xf32, #tpu.memory_space<vmem>>, vector<8x64xf32>,
    %54 = vector.extract_strided_slice %25 {offsets = [112, 0], sizes = [8, 64], strides = [1, 1]} : vector<128x64xf32> to vector<8x64xf32>
    %c171 = arith.constant 171 : index
    %c0_47 = arith.constant 0 : index
    %55 = vector.load %arg18[%c171, %c0_47] : memref<200x64xf32, #tpu.memory_space<vmem>>, vector<8x64xf32>
    tpu.vector_store %arg18[%c171, %c0_47], %54 {strides = array<i32>} : memref<200x64xf32, #tpu.memory_space<vmem>>, vector<8x64xf32>,
    %56 = vector.extract_strided_slice %25 {offsets = [120, 0], sizes = [8, 64], strides = [1, 1]} : vector<128x64xf32> to vector<8x64xf32>
    %c181 = arith.constant 181 : index
    %c0_48 = arith.constant 0 : index
    %57 = vector.load %arg18[%c181, %c0_48] : memref<200x64xf32, #tpu.memory_space<vmem>>, vector<8x64xf32>
    tpu.vector_store %arg18[%c181, %c0_48], %56 {strides = array<i32>} : memref<200x64xf32, #tpu.memory_space<vmem>>, vector<8x64xf32>,
    %c0_49 = arith.constant 0 : index
    %c0_50 = arith.constant 0 : index
    %58 = vector.load %arg18[%c0_49, %c0_50] : memref<200x64xf32, #tpu.memory_space<vmem>>, vector<178x64xf32>
    %c1 = arith.constant 1 : index
    %c0_51 = arith.constant 0 : index
    %59 = vector.load %arg18[%c1, %c0_51] : memref<200x64xf32, #tpu.memory_space<vmem>>, vector<178x64xf32>
    %60 = arith.maximumf %58, %59 : vector<178x64xf32>
    %c2 = arith.constant 2 : index
    %c0_52 = arith.constant 0 : index
    %61 = vector.load %arg18[%c2, %c0_52] : memref<200x64xf32, #tpu.memory_space<vmem>>, vector<178x64xf32>
    %62 = arith.maximumf %60, %61 : vector<178x64xf32>
    %c10 = arith.constant 10 : index
    %c0_53 = arith.constant 0 : index
    %63 = vector.load %arg18[%c10, %c0_53] : memref<200x64xf32, #tpu.memory_space<vmem>>, vector<178x64xf32>
    %64 = arith.maximumf %62, %63 : vector<178x64xf32>
    %c11_54 = arith.constant 11 : index
    %c0_55 = arith.constant 0 : index
    %65 = vector.load %arg18[%c11_54, %c0_55] : memref<200x64xf32, #tpu.memory_space<vmem>>, vector<178x64xf32>
    %66 = arith.maximumf %64, %65 : vector<178x64xf32>
    %c12 = arith.constant 12 : index
    %c0_56 = arith.constant 0 : index
    %67 = vector.load %arg18[%c12, %c0_56] : memref<200x64xf32, #tpu.memory_space<vmem>>, vector<178x64xf32>
    %68 = arith.maximumf %66, %67 : vector<178x64xf32>
    %c20 = arith.constant 20 : index
    %c0_57 = arith.constant 0 : index
    %69 = vector.load %arg18[%c20, %c0_57] : memref<200x64xf32, #tpu.memory_space<vmem>>, vector<178x64xf32>
    %70 = arith.maximumf %68, %69 : vector<178x64xf32>
    %c21_58 = arith.constant 21 : index
    %c0_59 = arith.constant 0 : index
    %71 = vector.load %arg18[%c21_58, %c0_59] : memref<200x64xf32, #tpu.memory_space<vmem>>, vector<178x64xf32>
    %72 = arith.maximumf %70, %71 : vector<178x64xf32>
    %c22 = arith.constant 22 : index
    %c0_60 = arith.constant 0 : index
    %73 = vector.load %arg18[%c22, %c0_60] : memref<200x64xf32, #tpu.memory_space<vmem>>, vector<178x64xf32>
    %74 = arith.maximumf %72, %73 : vector<178x64xf32>
    %75 = vector.extract_strided_slice %74 {offsets = [0, 0], sizes = [1, 64], strides = [1, 1]} : vector<178x64xf32> to vector<1x64xf32>
    %c7 = arith.constant 7 : index
    %c0_61 = arith.constant 0 : index
    %76 = vector.load %arg19[%c7, %c0_61] : memref<72x64xf32, #tpu.memory_space<vmem>>, vector<1x64xf32>
    tpu.vector_store %arg19[%c7, %c0_61], %75 {strides = array<i32>} : memref<72x64xf32, #tpu.memory_space<vmem>>, vector<1x64xf32>,
    %77 = vector.extract_strided_slice %74 {offsets = [2, 0], sizes = [1, 64], strides = [1, 1]} : vector<178x64xf32> to vector<1x64xf32>
    %c8 = arith.constant 8 : index
    %c0_62 = arith.constant 0 : index
    %78 = vector.load %arg19[%c8, %c0_62] : memref<72x64xf32, #tpu.memory_space<vmem>>, vector<1x64xf32>
    tpu.vector_store %arg19[%c8, %c0_62], %77 {strides = array<i32>} : memref<72x64xf32, #tpu.memory_space<vmem>>, vector<1x64xf32>,
    %79 = vector.extract_strided_slice %74 {offsets = [4, 0], sizes = [1, 64], strides = [1, 1]} : vector<178x64xf32> to vector<1x64xf32>
    %c9 = arith.constant 9 : index
    %c0_63 = arith.constant 0 : index
    %80 = vector.load %arg19[%c9, %c0_63] : memref<72x64xf32, #tpu.memory_space<vmem>>, vector<1x64xf32>
    tpu.vector_store %arg19[%c9, %c0_63], %79 {strides = array<i32>} : memref<72x64xf32, #tpu.memory_space<vmem>>, vector<1x64xf32>,
    %81 = vector.extract_strided_slice %74 {offsets = [6, 0], sizes = [1, 64], strides = [1, 1]} : vector<178x64xf32> to vector<1x64xf32>
    %c10_64 = arith.constant 10 : index
    %c0_65 = arith.constant 0 : index
    %82 = vector.load %arg19[%c10_64, %c0_65] : memref<72x64xf32, #tpu.memory_space<vmem>>, vector<1x64xf32>
    tpu.vector_store %arg19[%c10_64, %c0_65], %81 {strides = array<i32>} : memref<72x64xf32, #tpu.memory_space<vmem>>, vector<1x64xf32>,
    %83 = vector.extract_strided_slice %74 {offsets = [20, 0], sizes = [1, 64], strides = [1, 1]} : vector<178x64xf32> to vector<1x64xf32>
    %c13 = arith.constant 13 : index
    %c0_66 = arith.constant 0 : index
    %84 = vector.load %arg19[%c13, %c0_66] : memref<72x64xf32, #tpu.memory_space<vmem>>, vector<1x64xf32>
    tpu.vector_store %arg19[%c13, %c0_66], %83 {strides = array<i32>} : memref<72x64xf32, #tpu.memory_space<vmem>>, vector<1x64xf32>,
    %85 = vector.extract_strided_slice %74 {offsets = [22, 0], sizes = [1, 64], strides = [1, 1]} : vector<178x64xf32> to vector<1x64xf32>
    %c14 = arith.constant 14 : index
    %c0_67 = arith.constant 0 : index
    %86 = vector.load %arg19[%c14, %c0_67] : memref<72x64xf32, #tpu.memory_space<vmem>>, vector<1x64xf32>
    tpu.vector_store %arg19[%c14, %c0_67], %85 {strides = array<i32>} : memref<72x64xf32, #tpu.memory_space<vmem>>, vector<1x64xf32>,
    %87 = vector.extract_strided_slice %74 {offsets = [24, 0], sizes = [1, 64], strides = [1, 1]} : vector<178x64xf32> to vector<1x64xf32>
    %c15 = arith.constant 15 : index
    %c0_68 = arith.constant 0 : index
    %88 = vector.load %arg19[%c15, %c0_68] : memref<72x64xf32, #tpu.memory_space<vmem>>, vector<1x64xf32>
    tpu.vector_store %arg19[%c15, %c0_68], %87 {strides = array<i32>} : memref<72x64xf32, #tpu.memory_space<vmem>>, vector<1x64xf32>,
    %89 = vector.extract_strided_slice %74 {offsets = [26, 0], sizes = [1, 64], strides = [1, 1]} : vector<178x64xf32> to vector<1x64xf32>
    %c16 = arith.constant 16 : index
    %c0_69 = arith.constant 0 : index
    %90 = vector.load %arg19[%c16, %c0_69] : memref<72x64xf32, #tpu.memory_space<vmem>>, vector<1x64xf32>
    tpu.vector_store %arg19[%c16, %c0_69], %89 {strides = array<i32>} : memref<72x64xf32, #tpu.memory_space<vmem>>, vector<1x64xf32>,
    %91 = vector.extract_strided_slice %74 {offsets = [40, 0], sizes = [1, 64], strides = [1, 1]} : vector<178x64xf32> to vector<1x64xf32>
    %c19 = arith.constant 19 : index
    %c0_70 = arith.constant 0 : index
    %92 = vector.load %arg19[%c19, %c0_70] : memref<72x64xf32, #tpu.memory_space<vmem>>, vector<1x64xf32>
    tpu.vector_store %arg19[%c19, %c0_70], %91 {strides = array<i32>} : memref<72x64xf32, #tpu.memory_space<vmem>>, vector<1x64xf32>,
    %93 = vector.extract_strided_slice %74 {offsets = [42, 0], sizes = [1, 64], strides = [1, 1]} : vector<178x64xf32> to vector<1x64xf32>
    %c20_71 = arith.constant 20 : index
    %c0_72 = arith.constant 0 : index
    %94 = vector.load %arg19[%c20_71, %c0_72] : memref<72x64xf32, #tpu.memory_space<vmem>>, vector<1x64xf32>
    tpu.vector_store %arg19[%c20_71, %c0_72], %93 {strides = array<i32>} : memref<72x64xf32, #tpu.memory_space<vmem>>, vector<1x64xf32>,
    %95 = vector.extract_strided_slice %74 {offsets = [44, 0], sizes = [1, 64], strides = [1, 1]} : vector<178x64xf32> to vector<1x64xf32>
    %c21_73 = arith.constant 21 : index
    %c0_74 = arith.constant 0 : index
    %96 = vector.load %arg19[%c21_73, %c0_74] : memref<72x64xf32, #tpu.memory_space<vmem>>, vector<1x64xf32>
    tpu.vector_store %arg19[%c21_73, %c0_74], %95 {strides = array<i32>} : memref<72x64xf32, #tpu.memory_space<vmem>>, vector<1x64xf32>,
    %97 = vector.extract_strided_slice %74 {offsets = [46, 0], sizes = [1, 64], strides = [1, 1]} : vector<178x64xf32> to vector<1x64xf32>
    %c22_75 = arith.constant 22 : index
    %c0_76 = arith.constant 0 : index
    %98 = vector.load %arg19[%c22_75, %c0_76] : memref<72x64xf32, #tpu.memory_space<vmem>>, vector<1x64xf32>
    tpu.vector_store %arg19[%c22_75, %c0_76], %97 {strides = array<i32>} : memref<72x64xf32, #tpu.memory_space<vmem>>, vector<1x64xf32>,
    %99 = vector.extract_strided_slice %74 {offsets = [60, 0], sizes = [1, 64], strides = [1, 1]} : vector<178x64xf32> to vector<1x64xf32>
    %c25 = arith.constant 25 : index
    %c0_77 = arith.constant 0 : index
    %100 = vector.load %arg19[%c25, %c0_77] : memref<72x64xf32, #tpu.memory_space<vmem>>, vector<1x64xf32>
    tpu.vector_store %arg19[%c25, %c0_77], %99 {strides = array<i32>} : memref<72x64xf32, #tpu.memory_space<vmem>>, vector<1x64xf32>,
    %101 = vector.extract_strided_slice %74 {offsets = [62, 0], sizes = [1, 64], strides = [1, 1]} : vector<178x64xf32> to vector<1x64xf32>
    %c26 = arith.constant 26 : index
    %c0_78 = arith.constant 0 : index
    %102 = vector.load %arg19[%c26, %c0_78] : memref<72x64xf32, #tpu.memory_space<vmem>>, vector<1x64xf32>
    tpu.vector_store %arg19[%c26, %c0_78], %101 {strides = array<i32>} : memref<72x64xf32, #tpu.memory_space<vmem>>, vector<1x64xf32>,
    %103 = vector.extract_strided_slice %74 {offsets = [64, 0], sizes = [1, 64], strides = [1, 1]} : vector<178x64xf32> to vector<1x64xf32>
    %c27 = arith.constant 27 : index
    %c0_79 = arith.constant 0 : index
    %104 = vector.load %arg19[%c27, %c0_79] : memref<72x64xf32, #tpu.memory_space<vmem>>, vector<1x64xf32>
    tpu.vector_store %arg19[%c27, %c0_79], %103 {strides = array<i32>} : memref<72x64xf32, #tpu.memory_space<vmem>>, vector<1x64xf32>,
    %105 = vector.extract_strided_slice %74 {offsets = [66, 0], sizes = [1, 64], strides = [1, 1]} : vector<178x64xf32> to vector<1x64xf32>
    %c28 = arith.constant 28 : index
    %c0_80 = arith.constant 0 : index
    %106 = vector.load %arg19[%c28, %c0_80] : memref<72x64xf32, #tpu.memory_space<vmem>>, vector<1x64xf32>
    tpu.vector_store %arg19[%c28, %c0_80], %105 {strides = array<i32>} : memref<72x64xf32, #tpu.memory_space<vmem>>, vector<1x64xf32>,
    %107 = vector.extract_strided_slice %74 {offsets = [100, 0], sizes = [1, 64], strides = [1, 1]} : vector<178x64xf32> to vector<1x64xf32>
    %c43 = arith.constant 43 : index
    %c0_81 = arith.constant 0 : index
    %108 = vector.load %arg19[%c43, %c0_81] : memref<72x64xf32, #tpu.memory_space<vmem>>, vector<1x64xf32>
    tpu.vector_store %arg19[%c43, %c0_81], %107 {strides = array<i32>} : memref<72x64xf32, #tpu.memory_space<vmem>>, vector<1x64xf32>,
    %109 = vector.extract_strided_slice %74 {offsets = [102, 0], sizes = [1, 64], strides = [1, 1]} : vector<178x64xf32> to vector<1x64xf32>
    %c44 = arith.constant 44 : index
    %c0_82 = arith.constant 0 : index
    %110 = vector.load %arg19[%c44, %c0_82] : memref<72x64xf32, #tpu.memory_space<vmem>>, vector<1x64xf32>
    tpu.vector_store %arg19[%c44, %c0_82], %109 {strides = array<i32>} : memref<72x64xf32, #tpu.memory_space<vmem>>, vector<1x64xf32>,
    %111 = vector.extract_strided_slice %74 {offsets = [104, 0], sizes = [1, 64], strides = [1, 1]} : vector<178x64xf32> to vector<1x64xf32>
    %c45 = arith.constant 45 : index
    %c0_83 = arith.constant 0 : index
    %112 = vector.load %arg19[%c45, %c0_83] : memref<72x64xf32, #tpu.memory_space<vmem>>, vector<1x64xf32>
    tpu.vector_store %arg19[%c45, %c0_83], %111 {strides = array<i32>} : memref<72x64xf32, #tpu.memory_space<vmem>>, vector<1x64xf32>,
    %113 = vector.extract_strided_slice %74 {offsets = [106, 0], sizes = [1, 64], strides = [1, 1]} : vector<178x64xf32> to vector<1x64xf32>
    %c46 = arith.constant 46 : index
    %c0_84 = arith.constant 0 : index
    %114 = vector.load %arg19[%c46, %c0_84] : memref<72x64xf32, #tpu.memory_space<vmem>>, vector<1x64xf32>
    tpu.vector_store %arg19[%c46, %c0_84], %113 {strides = array<i32>} : memref<72x64xf32, #tpu.memory_space<vmem>>, vector<1x64xf32>,
    %115 = vector.extract_strided_slice %74 {offsets = [120, 0], sizes = [1, 64], strides = [1, 1]} : vector<178x64xf32> to vector<1x64xf32>
    %c49 = arith.constant 49 : index
    %c0_85 = arith.constant 0 : index
    %116 = vector.load %arg19[%c49, %c0_85] : memref<72x64xf32, #tpu.memory_space<vmem>>, vector<1x64xf32>
    tpu.vector_store %arg19[%c49, %c0_85], %115 {strides = array<i32>} : memref<72x64xf32, #tpu.memory_space<vmem>>, vector<1x64xf32>,
    %117 = vector.extract_strided_slice %74 {offsets = [122, 0], sizes = [1, 64], strides = [1, 1]} : vector<178x64xf32> to vector<1x64xf32>
    %c50 = arith.constant 50 : index
    %c0_86 = arith.constant 0 : index
    %118 = vector.load %arg19[%c50, %c0_86] : memref<72x64xf32, #tpu.memory_space<vmem>>, vector<1x64xf32>
    tpu.vector_store %arg19[%c50, %c0_86], %117 {strides = array<i32>} : memref<72x64xf32, #tpu.memory_space<vmem>>, vector<1x64xf32>,
    %119 = vector.extract_strided_slice %74 {offsets = [124, 0], sizes = [1, 64], strides = [1, 1]} : vector<178x64xf32> to vector<1x64xf32>
    %c51_87 = arith.constant 51 : index
    %c0_88 = arith.constant 0 : index
    %120 = vector.load %arg19[%c51_87, %c0_88] : memref<72x64xf32, #tpu.memory_space<vmem>>, vector<1x64xf32>
    tpu.vector_store %arg19[%c51_87, %c0_88], %119 {strides = array<i32>} : memref<72x64xf32, #tpu.memory_space<vmem>>, vector<1x64xf32>,
    %121 = vector.extract_strided_slice %74 {offsets = [126, 0], sizes = [1, 64], strides = [1, 1]} : vector<178x64xf32> to vector<1x64xf32>
    %c52 = arith.constant 52 : index
    %c0_89 = arith.constant 0 : index
    %122 = vector.load %arg19[%c52, %c0_89] : memref<72x64xf32, #tpu.memory_space<vmem>>, vector<1x64xf32>
    tpu.vector_store %arg19[%c52, %c0_89], %121 {strides = array<i32>} : memref<72x64xf32, #tpu.memory_space<vmem>>, vector<1x64xf32>,
    %123 = vector.extract_strided_slice %74 {offsets = [140, 0], sizes = [1, 64], strides = [1, 1]} : vector<178x64xf32> to vector<1x64xf32>
    %c55 = arith.constant 55 : index
    %c0_90 = arith.constant 0 : index
    %124 = vector.load %arg19[%c55, %c0_90] : memref<72x64xf32, #tpu.memory_space<vmem>>, vector<1x64xf32>
    tpu.vector_store %arg19[%c55, %c0_90], %123 {strides = array<i32>} : memref<72x64xf32, #tpu.memory_space<vmem>>, vector<1x64xf32>,
    %125 = vector.extract_strided_slice %74 {offsets = [142, 0], sizes = [1, 64], strides = [1, 1]} : vector<178x64xf32> to vector<1x64xf32>
    %c56 = arith.constant 56 : index
    %c0_91 = arith.constant 0 : index
    %126 = vector.load %arg19[%c56, %c0_91] : memref<72x64xf32, #tpu.memory_space<vmem>>, vector<1x64xf32>
    tpu.vector_store %arg19[%c56, %c0_91], %125 {strides = array<i32>} : memref<72x64xf32, #tpu.memory_space<vmem>>, vector<1x64xf32>,
    %127 = vector.extract_strided_slice %74 {offsets = [144, 0], sizes = [1, 64], strides = [1, 1]} : vector<178x64xf32> to vector<1x64xf32>
    %c57 = arith.constant 57 : index
    %c0_92 = arith.constant 0 : index
    %128 = vector.load %arg19[%c57, %c0_92] : memref<72x64xf32, #tpu.memory_space<vmem>>, vector<1x64xf32>
    tpu.vector_store %arg19[%c57, %c0_92], %127 {strides = array<i32>} : memref<72x64xf32, #tpu.memory_space<vmem>>, vector<1x64xf32>,
    %129 = vector.extract_strided_slice %74 {offsets = [146, 0], sizes = [1, 64], strides = [1, 1]} : vector<178x64xf32> to vector<1x64xf32>
    %c58 = arith.constant 58 : index
    %c0_93 = arith.constant 0 : index
    %130 = vector.load %arg19[%c58, %c0_93] : memref<72x64xf32, #tpu.memory_space<vmem>>, vector<1x64xf32>
    tpu.vector_store %arg19[%c58, %c0_93], %129 {strides = array<i32>} : memref<72x64xf32, #tpu.memory_space<vmem>>, vector<1x64xf32>,
    %131 = vector.extract_strided_slice %74 {offsets = [160, 0], sizes = [1, 64], strides = [1, 1]} : vector<178x64xf32> to vector<1x64xf32>
    %c61_94 = arith.constant 61 : index
    %c0_95 = arith.constant 0 : index
    %132 = vector.load %arg19[%c61_94, %c0_95] : memref<72x64xf32, #tpu.memory_space<vmem>>, vector<1x64xf32>
    tpu.vector_store %arg19[%c61_94, %c0_95], %131 {strides = array<i32>} : memref<72x64xf32, #tpu.memory_space<vmem>>, vector<1x64xf32>,
    %133 = vector.extract_strided_slice %74 {offsets = [162, 0], sizes = [1, 64], strides = [1, 1]} : vector<178x64xf32> to vector<1x64xf32>
    %c62 = arith.constant 62 : index
    %c0_96 = arith.constant 0 : index
    %134 = vector.load %arg19[%c62, %c0_96] : memref<72x64xf32, #tpu.memory_space<vmem>>, vector<1x64xf32>
    tpu.vector_store %arg19[%c62, %c0_96], %133 {strides = array<i32>} : memref<72x64xf32, #tpu.memory_space<vmem>>, vector<1x64xf32>,
    %135 = vector.extract_strided_slice %74 {offsets = [164, 0], sizes = [1, 64], strides = [1, 1]} : vector<178x64xf32> to vector<1x64xf32>
    %c63 = arith.constant 63 : index
    %c0_97 = arith.constant 0 : index
    %136 = vector.load %arg19[%c63, %c0_97] : memref<72x64xf32, #tpu.memory_space<vmem>>, vector<1x64xf32>
    tpu.vector_store %arg19[%c63, %c0_97], %135 {strides = array<i32>} : memref<72x64xf32, #tpu.memory_space<vmem>>, vector<1x64xf32>,
    %137 = vector.extract_strided_slice %74 {offsets = [166, 0], sizes = [1, 64], strides = [1, 1]} : vector<178x64xf32> to vector<1x64xf32>
    %c64 = arith.constant 64 : index
    %c0_98 = arith.constant 0 : index
    %138 = vector.load %arg19[%c64, %c0_98] : memref<72x64xf32, #tpu.memory_space<vmem>>, vector<1x64xf32>
    tpu.vector_store %arg19[%c64, %c0_98], %137 {strides = array<i32>} : memref<72x64xf32, #tpu.memory_space<vmem>>, vector<1x64xf32>,
    %c0_99 = arith.constant 0 : index
    %c0_100 = arith.constant 0 : index
    %139 = vector.load %arg19[%c0_99, %c0_100] : memref<72x64xf32, #tpu.memory_space<vmem>>, vector<58x64xf32>
    %140 = arith.truncf %139 : vector<58x64xf32> to vector<58x64xbf16>
    %c0_101 = arith.constant 0 : index
    %c0_102 = arith.constant 0 : index
    %141 = vector.load %arg28[%c0_101, %c0_102] : memref<58x576xbf16, #tpu.memory_space<vmem>>, vector<58x64xbf16>
    tpu.vector_store %arg28[%c0_101, %c0_102], %140 {strides = array<i32>} : memref<58x576xbf16, #tpu.memory_space<vmem>>, vector<58x64xbf16>,
    %c1_103 = arith.constant 1 : index
    %c0_104 = arith.constant 0 : index
    %142 = vector.load %arg19[%c1_103, %c0_104] : memref<72x64xf32, #tpu.memory_space<vmem>>, vector<58x64xf32>
    %143 = arith.truncf %142 : vector<58x64xf32> to vector<58x64xbf16>
    %c0_105 = arith.constant 0 : index
    %c64_106 = arith.constant 64 : index
    %144 = vector.load %arg28[%c0_105, %c64_106] : memref<58x576xbf16, #tpu.memory_space<vmem>>, vector<58x64xbf16>
    tpu.vector_store %arg28[%c0_105, %c64_106], %143 {strides = array<i32>} : memref<58x576xbf16, #tpu.memory_space<vmem>>, vector<58x64xbf16>,
    %c2_107 = arith.constant 2 : index
    %c0_108 = arith.constant 0 : index
    %145 = vector.load %arg19[%c2_107, %c0_108] : memref<72x64xf32, #tpu.memory_space<vmem>>, vector<58x64xf32>
    %146 = arith.truncf %145 : vector<58x64xf32> to vector<58x64xbf16>
    %c0_109 = arith.constant 0 : index
    %c128 = arith.constant 128 : index
    %147 = vector.load %arg28[%c0_109, %c128] : memref<58x576xbf16, #tpu.memory_space<vmem>>, vector<58x64xbf16>
    tpu.vector_store %arg28[%c0_109, %c128], %146 {strides = array<i32>} : memref<58x576xbf16, #tpu.memory_space<vmem>>, vector<58x64xbf16>,
    %c6 = arith.constant 6 : index
    %c0_110 = arith.constant 0 : index
    %148 = vector.load %arg19[%c6, %c0_110] : memref<72x64xf32, #tpu.memory_space<vmem>>, vector<58x64xf32>
    %149 = arith.truncf %148 : vector<58x64xf32> to vector<58x64xbf16>
    %c0_111 = arith.constant 0 : index
    %c192 = arith.constant 192 : index
    %150 = vector.load %arg28[%c0_111, %c192] : memref<58x576xbf16, #tpu.memory_space<vmem>>, vector<58x64xbf16>
    tpu.vector_store %arg28[%c0_111, %c192], %149 {strides = array<i32>} : memref<58x576xbf16, #tpu.memory_space<vmem>>, vector<58x64xbf16>,
    %c7_112 = arith.constant 7 : index
    %c0_113 = arith.constant 0 : index
    %151 = vector.load %arg19[%c7_112, %c0_113] : memref<72x64xf32, #tpu.memory_space<vmem>>, vector<58x64xf32>
    %152 = arith.truncf %151 : vector<58x64xf32> to vector<58x64xbf16>
    %c0_114 = arith.constant 0 : index
    %c256 = arith.constant 256 : index
    %153 = vector.load %arg28[%c0_114, %c256] : memref<58x576xbf16, #tpu.memory_space<vmem>>, vector<58x64xbf16>
    tpu.vector_store %arg28[%c0_114, %c256], %152 {strides = array<i32>} : memref<58x576xbf16, #tpu.memory_space<vmem>>, vector<58x64xbf16>,
    %c8_115 = arith.constant 8 : index
    %c0_116 = arith.constant 0 : index
    %154 = vector.load %arg19[%c8_115, %c0_116] : memref<72x64xf32, #tpu.memory_space<vmem>>, vector<58x64xf32>
    %155 = arith.truncf %154 : vector<58x64xf32> to vector<58x64xbf16>
    %c0_117 = arith.constant 0 : index
    %c320 = arith.constant 320 : index
    %156 = vector.load %arg28[%c0_117, %c320] : memref<58x576xbf16, #tpu.memory_space<vmem>>, vector<58x64xbf16>
    tpu.vector_store %arg28[%c0_117, %c320], %155 {strides = array<i32>} : memref<58x576xbf16, #tpu.memory_space<vmem>>, vector<58x64xbf16>,
    %c12_118 = arith.constant 12 : index
    %c0_119 = arith.constant 0 : index
    %157 = vector.load %arg19[%c12_118, %c0_119] : memref<72x64xf32, #tpu.memory_space<vmem>>, vector<58x64xf32>
    %158 = arith.truncf %157 : vector<58x64xf32> to vector<58x64xbf16>
    %c0_120 = arith.constant 0 : index
    %c384 = arith.constant 384 : index
    %159 = vector.load %arg28[%c0_120, %c384] : memref<58x576xbf16, #tpu.memory_space<vmem>>, vector<58x64xbf16>
    tpu.vector_store %arg28[%c0_120, %c384], %158 {strides = array<i32>} : memref<58x576xbf16, #tpu.memory_space<vmem>>, vector<58x64xbf16>,
    %c13_121 = arith.constant 13 : index
    %c0_122 = arith.constant 0 : index
    %160 = vector.load %arg19[%c13_121, %c0_122] : memref<72x64xf32, #tpu.memory_space<vmem>>, vector<58x64xf32>
    %161 = arith.truncf %160 : vector<58x64xf32> to vector<58x64xbf16>
    %c0_123 = arith.constant 0 : index
    %c448 = arith.constant 448 : index
    %162 = vector.load %arg28[%c0_123, %c448] : memref<58x576xbf16, #tpu.memory_space<vmem>>, vector<58x64xbf16>
    tpu.vector_store %arg28[%c0_123, %c448], %161 {strides = array<i32>} : memref<58x576xbf16, #tpu.memory_space<vmem>>, vector<58x64xbf16>,
    %c14_124 = arith.constant 14 : index
    %c0_125 = arith.constant 0 : index
    %163 = vector.load %arg19[%c14_124, %c0_125] : memref<72x64xf32, #tpu.memory_space<vmem>>, vector<58x64xf32>
    %164 = arith.truncf %163 : vector<58x64xf32> to vector<58x64xbf16>
    %c0_126 = arith.constant 0 : index
    %c512 = arith.constant 512 : index
    %165 = vector.load %arg28[%c0_126, %c512] : memref<58x576xbf16, #tpu.memory_space<vmem>>, vector<58x64xbf16>
    tpu.vector_store %arg28[%c0_126, %c512], %164 {strides = array<i32>} : memref<58x576xbf16, #tpu.memory_space<vmem>>, vector<58x64xbf16>,
    %c0_127 = arith.constant 0 : index
    %c0_128 = arith.constant 0 : index
    %166 = vector.load %arg28[%c0_127, %c0_128] : memref<58x576xbf16, #tpu.memory_space<vmem>>, vector<58x576xbf16>
    %c0_129 = arith.constant 0 : index
    %c0_130 = arith.constant 0 : index
    %167 = vector.load %arg3[%c0_129, %c0_130] : memref<576x192xbf16, #tpu.memory_space<vmem>>, vector<576x192xbf16>
    %cst_131 = arith.constant dense<0.000000e+00> : vector<58x192xf32>
    %168 = tpu.matmul %166, %167, %cst_131 {dimension_numbers = #tpu.dot_dimension_numbers<[1], [0], [0], [1], [0, 0, 1, 1], [], []>} : vector<58x576xbf16>, vector<576x192xbf16>, vector<58x192xf32> -> vector<58x192xf32>
    %169 = vector.extract_strided_slice %168 {offsets = [0, 0], sizes = [58, 96], strides = [1, 1]} : vector<58x192xf32> to vector<58x96xf32>
    %c0_132 = arith.constant 0 : index
    %c0_133 = arith.constant 0 : index
    %170 = vector.load %arg4[%c0_132, %c0_133] : memref<1x96xf32, #tpu.memory_space<vmem>>, vector<1x96xf32>
    %171 = vector.broadcast %170 : vector<1x96xf32> to vector<58x96xf32>
    %172 = arith.addf %169, %171 : vector<58x96xf32>
    %cst_134 = arith.constant 0.000000e+00 : f32
    %173 = vector.broadcast %cst_134 : f32 to vector<58x96xf32>
    %174 = arith.maximumf %172, %173 : vector<58x96xf32>
    %175 = vector.extract_strided_slice %168 {offsets = [0, 96], sizes = [58, 96], strides = [1, 1]} : vector<58x192xf32> to vector<58x96xf32>
    %176 = vector.extract_strided_slice %174 {offsets = [0, 0], sizes = [1, 96], strides = [1, 1]} : vector<58x96xf32> to vector<1x96xf32>
    %c5 = arith.constant 5 : index
    %c0_135 = arith.constant 0 : index
    %177 = vector.load %arg20[%c5, %c0_135] : memref<32x96xf32, #tpu.memory_space<vmem>>, vector<1x96xf32>
    tpu.vector_store %arg20[%c5, %c0_135], %176 {strides = array<i32>} : memref<32x96xf32, #tpu.memory_space<vmem>>, vector<1x96xf32>,
    %178 = vector.extract_strided_slice %174 {offsets = [2, 0], sizes = [1, 96], strides = [1, 1]} : vector<58x96xf32> to vector<1x96xf32>
    %c6_136 = arith.constant 6 : index
    %c0_137 = arith.constant 0 : index
    %179 = vector.load %arg20[%c6_136, %c0_137] : memref<32x96xf32, #tpu.memory_space<vmem>>, vector<1x96xf32>
    tpu.vector_store %arg20[%c6_136, %c0_137], %178 {strides = array<i32>} : memref<32x96xf32, #tpu.memory_space<vmem>>, vector<1x96xf32>,
    %180 = vector.extract_strided_slice %174 {offsets = [12, 0], sizes = [1, 96], strides = [1, 1]} : vector<58x96xf32> to vector<1x96xf32>
    %c9_138 = arith.constant 9 : index
    %c0_139 = arith.constant 0 : index
    %181 = vector.load %arg20[%c9_138, %c0_139] : memref<32x96xf32, #tpu.memory_space<vmem>>, vector<1x96xf32>
    tpu.vector_store %arg20[%c9_138, %c0_139], %180 {strides = array<i32>} : memref<32x96xf32, #tpu.memory_space<vmem>>, vector<1x96xf32>,
    %182 = vector.extract_strided_slice %174 {offsets = [14, 0], sizes = [1, 96], strides = [1, 1]} : vector<58x96xf32> to vector<1x96xf32>
    %c10_140 = arith.constant 10 : index
    %c0_141 = arith.constant 0 : index
    %183 = vector.load %arg20[%c10_140, %c0_141] : memref<32x96xf32, #tpu.memory_space<vmem>>, vector<1x96xf32>
    tpu.vector_store %arg20[%c10_140, %c0_141], %182 {strides = array<i32>} : memref<32x96xf32, #tpu.memory_space<vmem>>, vector<1x96xf32>,
    %184 = vector.extract_strided_slice %174 {offsets = [36, 0], sizes = [1, 96], strides = [1, 1]} : vector<58x96xf32> to vector<1x96xf32>
    %c21_142 = arith.constant 21 : index
    %c0_143 = arith.constant 0 : index
    %185 = vector.load %arg20[%c21_142, %c0_143] : memref<32x96xf32, #tpu.memory_space<vmem>>, vector<1x96xf32>
    tpu.vector_store %arg20[%c21_142, %c0_143], %184 {strides = array<i32>} : memref<32x96xf32, #tpu.memory_space<vmem>>, vector<1x96xf32>,
    %186 = vector.extract_strided_slice %174 {offsets = [38, 0], sizes = [1, 96], strides = [1, 1]} : vector<58x96xf32> to vector<1x96xf32>
    %c22_144 = arith.constant 22 : index
    %c0_145 = arith.constant 0 : index
    %187 = vector.load %arg20[%c22_144, %c0_145] : memref<32x96xf32, #tpu.memory_space<vmem>>, vector<1x96xf32>
    tpu.vector_store %arg20[%c22_144, %c0_145], %186 {strides = array<i32>} : memref<32x96xf32, #tpu.memory_space<vmem>>, vector<1x96xf32>,
    %188 = vector.extract_strided_slice %174 {offsets = [48, 0], sizes = [1, 96], strides = [1, 1]} : vector<58x96xf32> to vector<1x96xf32>
    %c25_146 = arith.constant 25 : index
    %c0_147 = arith.constant 0 : index
    %189 = vector.load %arg20[%c25_146, %c0_147] : memref<32x96xf32, #tpu.memory_space<vmem>>, vector<1x96xf32>
    tpu.vector_store %arg20[%c25_146, %c0_147], %188 {strides = array<i32>} : memref<32x96xf32, #tpu.memory_space<vmem>>, vector<1x96xf32>,
    %190 = vector.extract_strided_slice %174 {offsets = [50, 0], sizes = [1, 96], strides = [1, 1]} : vector<58x96xf32> to vector<1x96xf32>
    %c26_148 = arith.constant 26 : index
    %c0_149 = arith.constant 0 : index
    %191 = vector.load %arg20[%c26_148, %c0_149] : memref<32x96xf32, #tpu.memory_space<vmem>>, vector<1x96xf32>
    tpu.vector_store %arg20[%c26_148, %c0_149], %190 {strides = array<i32>} : memref<32x96xf32, #tpu.memory_space<vmem>>, vector<1x96xf32>,
    %c0_150 = arith.constant 0 : index
    %c0_151 = arith.constant 0 : index
    %192 = vector.load %arg20[%c0_150, %c0_151] : memref<32x96xf32, #tpu.memory_space<vmem>>, vector<22x96xf32>
    %193 = arith.truncf %192 : vector<22x96xf32> to vector<22x96xbf16>
    %c0_152 = arith.constant 0 : index
    %c0_153 = arith.constant 0 : index
    %194 = vector.load %arg29[%c0_152, %c0_153] : memref<22x864xbf16, #tpu.memory_space<vmem>>, vector<22x96xbf16>
    tpu.vector_store %arg29[%c0_152, %c0_153], %193 {strides = array<i32>} : memref<22x864xbf16, #tpu.memory_space<vmem>>, vector<22x96xbf16>,
    %c1_154 = arith.constant 1 : index
    %c0_155 = arith.constant 0 : index
    %195 = vector.load %arg20[%c1_154, %c0_155] : memref<32x96xf32, #tpu.memory_space<vmem>>, vector<22x96xf32>
    %196 = arith.truncf %195 : vector<22x96xf32> to vector<22x96xbf16>
    %c0_156 = arith.constant 0 : index
    %c96 = arith.constant 96 : index
    %197 = vector.load %arg29[%c0_156, %c96] : memref<22x864xbf16, #tpu.memory_space<vmem>>, vector<22x96xbf16>
    tpu.vector_store %arg29[%c0_156, %c96], %196 {strides = array<i32>} : memref<22x864xbf16, #tpu.memory_space<vmem>>, vector<22x96xbf16>,
    %c2_157 = arith.constant 2 : index
    %c0_158 = arith.constant 0 : index
    %198 = vector.load %arg20[%c2_157, %c0_158] : memref<32x96xf32, #tpu.memory_space<vmem>>, vector<22x96xf32>
    %199 = arith.truncf %198 : vector<22x96xf32> to vector<22x96xbf16>
    %c0_159 = arith.constant 0 : index
    %c192_160 = arith.constant 192 : index
    %200 = vector.load %arg29[%c0_159, %c192_160] : memref<22x864xbf16, #tpu.memory_space<vmem>>, vector<22x96xbf16>
    tpu.vector_store %arg29[%c0_159, %c192_160], %199 {strides = array<i32>} : memref<22x864xbf16, #tpu.memory_space<vmem>>, vector<22x96xbf16>,
    %c4 = arith.constant 4 : index
    %c0_161 = arith.constant 0 : index
    %201 = vector.load %arg20[%c4, %c0_161] : memref<32x96xf32, #tpu.memory_space<vmem>>, vector<22x96xf32>
    %202 = arith.truncf %201 : vector<22x96xf32> to vector<22x96xbf16>
    %c0_162 = arith.constant 0 : index
    %c288 = arith.constant 288 : index
    %203 = vector.load %arg29[%c0_162, %c288] : memref<22x864xbf16, #tpu.memory_space<vmem>>, vector<22x96xbf16>
    tpu.vector_store %arg29[%c0_162, %c288], %202 {strides = array<i32>} : memref<22x864xbf16, #tpu.memory_space<vmem>>, vector<22x96xbf16>,
    %c5_163 = arith.constant 5 : index
    %c0_164 = arith.constant 0 : index
    %204 = vector.load %arg20[%c5_163, %c0_164] : memref<32x96xf32, #tpu.memory_space<vmem>>, vector<22x96xf32>
    %205 = arith.truncf %204 : vector<22x96xf32> to vector<22x96xbf16>
    %c0_165 = arith.constant 0 : index
    %c384_166 = arith.constant 384 : index
    %206 = vector.load %arg29[%c0_165, %c384_166] : memref<22x864xbf16, #tpu.memory_space<vmem>>, vector<22x96xbf16>
    tpu.vector_store %arg29[%c0_165, %c384_166], %205 {strides = array<i32>} : memref<22x864xbf16, #tpu.memory_space<vmem>>, vector<22x96xbf16>,
    %c6_167 = arith.constant 6 : index
    %c0_168 = arith.constant 0 : index
    %207 = vector.load %arg20[%c6_167, %c0_168] : memref<32x96xf32, #tpu.memory_space<vmem>>, vector<22x96xf32>
    %208 = arith.truncf %207 : vector<22x96xf32> to vector<22x96xbf16>
    %c0_169 = arith.constant 0 : index
    %c480 = arith.constant 480 : index
    %209 = vector.load %arg29[%c0_169, %c480] : memref<22x864xbf16, #tpu.memory_space<vmem>>, vector<22x96xbf16>
    tpu.vector_store %arg29[%c0_169, %c480], %208 {strides = array<i32>} : memref<22x864xbf16, #tpu.memory_space<vmem>>, vector<22x96xbf16>,
    %c8_170 = arith.constant 8 : index
    %c0_171 = arith.constant 0 : index
    %210 = vector.load %arg20[%c8_170, %c0_171] : memref<32x96xf32, #tpu.memory_space<vmem>>, vector<22x96xf32>
    %211 = arith.truncf %210 : vector<22x96xf32> to vector<22x96xbf16>
    %c0_172 = arith.constant 0 : index
    %c576 = arith.constant 576 : index
    %212 = vector.load %arg29[%c0_172, %c576] : memref<22x864xbf16, #tpu.memory_space<vmem>>, vector<22x96xbf16>
    tpu.vector_store %arg29[%c0_172, %c576], %211 {strides = array<i32>} : memref<22x864xbf16, #tpu.memory_space<vmem>>, vector<22x96xbf16>,
    %c9_173 = arith.constant 9 : index
    %c0_174 = arith.constant 0 : index
    %213 = vector.load %arg20[%c9_173, %c0_174] : memref<32x96xf32, #tpu.memory_space<vmem>>, vector<22x96xf32>
    %214 = arith.truncf %213 : vector<22x96xf32> to vector<22x96xbf16>
    %c0_175 = arith.constant 0 : index
    %c672 = arith.constant 672 : index
    %215 = vector.load %arg29[%c0_175, %c672] : memref<22x864xbf16, #tpu.memory_space<vmem>>, vector<22x96xbf16>
    tpu.vector_store %arg29[%c0_175, %c672], %214 {strides = array<i32>} : memref<22x864xbf16, #tpu.memory_space<vmem>>, vector<22x96xbf16>,
    %c10_176 = arith.constant 10 : index
    %c0_177 = arith.constant 0 : index
    %216 = vector.load %arg20[%c10_176, %c0_177] : memref<32x96xf32, #tpu.memory_space<vmem>>, vector<22x96xf32>
    %217 = arith.truncf %216 : vector<22x96xf32> to vector<22x96xbf16>
    %c0_178 = arith.constant 0 : index
    %c768 = arith.constant 768 : index
    %218 = vector.load %arg29[%c0_178, %c768] : memref<22x864xbf16, #tpu.memory_space<vmem>>, vector<22x96xbf16>
    tpu.vector_store %arg29[%c0_178, %c768], %217 {strides = array<i32>} : memref<22x864xbf16, #tpu.memory_space<vmem>>, vector<22x96xbf16>,
    %c0_179 = arith.constant 0 : index
    %c0_180 = arith.constant 0 : index
    %219 = vector.load %arg29[%c0_179, %c0_180] : memref<22x864xbf16, #tpu.memory_space<vmem>>, vector<22x864xbf16>
    %c0_181 = arith.constant 0 : index
    %c0_182 = arith.constant 0 : index
    %220 = vector.load %arg5[%c0_181, %c0_182] : memref<864x96xbf16, #tpu.memory_space<vmem>>, vector<864x96xbf16>
    %cst_183 = arith.constant dense<0.000000e+00> : vector<22x96xf32>
    %221 = tpu.matmul %219, %220, %cst_183 {dimension_numbers = #tpu.dot_dimension_numbers<[1], [0], [0], [1], [0, 0, 1, 1], [], []>} : vector<22x864xbf16>, vector<864x96xbf16>, vector<22x96xf32> -> vector<22x96xf32>
    %222 = vector.extract_strided_slice %175 {offsets = [0, 0], sizes = [1, 96], strides = [1, 1]} : vector<58x96xf32> to vector<1x96xf32>
    %223 = vector.extract_strided_slice %221 {offsets = [0, 0], sizes = [1, 96], strides = [1, 1]} : vector<22x96xf32> to vector<1x96xf32>
    %224 = arith.addf %223, %222 : vector<1x96xf32>
    %c5_184 = arith.constant 5 : index
    %c0_185 = arith.constant 0 : index
    %225 = vector.load %arg21[%c5_184, %c0_185] : memref<32x96xf32, #tpu.memory_space<vmem>>, vector<1x96xf32>
    tpu.vector_store %arg21[%c5_184, %c0_185], %224 {strides = array<i32>} : memref<32x96xf32, #tpu.memory_space<vmem>>, vector<1x96xf32>,
    %226 = vector.extract_strided_slice %175 {offsets = [2, 0], sizes = [1, 96], strides = [1, 1]} : vector<58x96xf32> to vector<1x96xf32>
    %227 = vector.extract_strided_slice %221 {offsets = [1, 0], sizes = [1, 96], strides = [1, 1]} : vector<22x96xf32> to vector<1x96xf32>
    %228 = arith.addf %227, %226 : vector<1x96xf32>
    %c6_186 = arith.constant 6 : index
    %c0_187 = arith.constant 0 : index
    %229 = vector.load %arg21[%c6_186, %c0_187] : memref<32x96xf32, #tpu.memory_space<vmem>>, vector<1x96xf32>
    tpu.vector_store %arg21[%c6_186, %c0_187], %228 {strides = array<i32>} : memref<32x96xf32, #tpu.memory_space<vmem>>, vector<1x96xf32>,
    %230 = vector.extract_strided_slice %175 {offsets = [12, 0], sizes = [1, 96], strides = [1, 1]} : vector<58x96xf32> to vector<1x96xf32>
    %231 = vector.extract_strided_slice %221 {offsets = [4, 0], sizes = [1, 96], strides = [1, 1]} : vector<22x96xf32> to vector<1x96xf32>
    %232 = arith.addf %231, %230 : vector<1x96xf32>
    %c9_188 = arith.constant 9 : index
    %c0_189 = arith.constant 0 : index
    %233 = vector.load %arg21[%c9_188, %c0_189] : memref<32x96xf32, #tpu.memory_space<vmem>>, vector<1x96xf32>
    tpu.vector_store %arg21[%c9_188, %c0_189], %232 {strides = array<i32>} : memref<32x96xf32, #tpu.memory_space<vmem>>, vector<1x96xf32>,
    %234 = vector.extract_strided_slice %175 {offsets = [14, 0], sizes = [1, 96], strides = [1, 1]} : vector<58x96xf32> to vector<1x96xf32>
    %235 = vector.extract_strided_slice %221 {offsets = [5, 0], sizes = [1, 96], strides = [1, 1]} : vector<22x96xf32> to vector<1x96xf32>
    %236 = arith.addf %235, %234 : vector<1x96xf32>
    %c10_190 = arith.constant 10 : index
    %c0_191 = arith.constant 0 : index
    %237 = vector.load %arg21[%c10_190, %c0_191] : memref<32x96xf32, #tpu.memory_space<vmem>>, vector<1x96xf32>
    tpu.vector_store %arg21[%c10_190, %c0_191], %236 {strides = array<i32>} : memref<32x96xf32, #tpu.memory_space<vmem>>, vector<1x96xf32>,
    %238 = vector.extract_strided_slice %175 {offsets = [36, 0], sizes = [1, 96], strides = [1, 1]} : vector<58x96xf32> to vector<1x96xf32>
    %239 = vector.extract_strided_slice %221 {offsets = [16, 0], sizes = [1, 96], strides = [1, 1]} : vector<22x96xf32> to vector<1x96xf32>
    %240 = arith.addf %239, %238 : vector<1x96xf32>
    %c21_192 = arith.constant 21 : index
    %c0_193 = arith.constant 0 : index
    %241 = vector.load %arg21[%c21_192, %c0_193] : memref<32x96xf32, #tpu.memory_space<vmem>>, vector<1x96xf32>
    tpu.vector_store %arg21[%c21_192, %c0_193], %240 {strides = array<i32>} : memref<32x96xf32, #tpu.memory_space<vmem>>, vector<1x96xf32>,
    %242 = vector.extract_strided_slice %175 {offsets = [38, 0], sizes = [1, 96], strides = [1, 1]} : vector<58x96xf32> to vector<1x96xf32>
    %243 = vector.extract_strided_slice %221 {offsets = [17, 0], sizes = [1, 96], strides = [1, 1]} : vector<22x96xf32> to vector<1x96xf32>
    %244 = arith.addf %243, %242 : vector<1x96xf32>
    %c22_194 = arith.constant 22 : index
    %c0_195 = arith.constant 0 : index
    %245 = vector.load %arg21[%c22_194, %c0_195] : memref<32x96xf32, #tpu.memory_space<vmem>>, vector<1x96xf32>
    tpu.vector_store %arg21[%c22_194, %c0_195], %244 {strides = array<i32>} : memref<32x96xf32, #tpu.memory_space<vmem>>, vector<1x96xf32>,
    %246 = vector.extract_strided_slice %175 {offsets = [48, 0], sizes = [1, 96], strides = [1, 1]} : vector<58x96xf32> to vector<1x96xf32>
    %247 = vector.extract_strided_slice %221 {offsets = [20, 0], sizes = [1, 96], strides = [1, 1]} : vector<22x96xf32> to vector<1x96xf32>
    %248 = arith.addf %247, %246 : vector<1x96xf32>
    %c25_196 = arith.constant 25 : index
    %c0_197 = arith.constant 0 : index
    %249 = vector.load %arg21[%c25_196, %c0_197] : memref<32x96xf32, #tpu.memory_space<vmem>>, vector<1x96xf32>
    tpu.vector_store %arg21[%c25_196, %c0_197], %248 {strides = array<i32>} : memref<32x96xf32, #tpu.memory_space<vmem>>, vector<1x96xf32>,
    %250 = vector.extract_strided_slice %175 {offsets = [50, 0], sizes = [1, 96], strides = [1, 1]} : vector<58x96xf32> to vector<1x96xf32>
    %251 = vector.extract_strided_slice %221 {offsets = [21, 0], sizes = [1, 96], strides = [1, 1]} : vector<22x96xf32> to vector<1x96xf32>
    %252 = arith.addf %251, %250 : vector<1x96xf32>
    %c26_198 = arith.constant 26 : index
    %c0_199 = arith.constant 0 : index
    %253 = vector.load %arg21[%c26_198, %c0_199] : memref<32x96xf32, #tpu.memory_space<vmem>>, vector<1x96xf32>
    tpu.vector_store %arg21[%c26_198, %c0_199], %252 {strides = array<i32>} : memref<32x96xf32, #tpu.memory_space<vmem>>, vector<1x96xf32>,
    %c0_200 = arith.constant 0 : index
    %c0_201 = arith.constant 0 : index
    %254 = vector.load %arg21[%c0_200, %c0_201] : memref<32x96xf32, #tpu.memory_space<vmem>>, vector<22x96xf32>
    %255 = arith.truncf %254 : vector<22x96xf32> to vector<22x96xbf16>
    %c0_202 = arith.constant 0 : index
    %c0_203 = arith.constant 0 : index
    %256 = vector.load %arg29[%c0_202, %c0_203] : memref<22x864xbf16, #tpu.memory_space<vmem>>, vector<22x96xbf16>
    tpu.vector_store %arg29[%c0_202, %c0_203], %255 {strides = array<i32>} : memref<22x864xbf16, #tpu.memory_space<vmem>>, vector<22x96xbf16>,
    %c1_204 = arith.constant 1 : index
    %c0_205 = arith.constant 0 : index
    %257 = vector.load %arg21[%c1_204, %c0_205] : memref<32x96xf32, #tpu.memory_space<vmem>>, vector<22x96xf32>
    %258 = arith.truncf %257 : vector<22x96xf32> to vector<22x96xbf16>
    %c0_206 = arith.constant 0 : index
    %c96_207 = arith.constant 96 : index
    %259 = vector.load %arg29[%c0_206, %c96_207] : memref<22x864xbf16, #tpu.memory_space<vmem>>, vector<22x96xbf16>
    tpu.vector_store %arg29[%c0_206, %c96_207], %258 {strides = array<i32>} : memref<22x864xbf16, #tpu.memory_space<vmem>>, vector<22x96xbf16>,
    %c2_208 = arith.constant 2 : index
    %c0_209 = arith.constant 0 : index
    %260 = vector.load %arg21[%c2_208, %c0_209] : memref<32x96xf32, #tpu.memory_space<vmem>>, vector<22x96xf32>
    %261 = arith.truncf %260 : vector<22x96xf32> to vector<22x96xbf16>
    %c0_210 = arith.constant 0 : index
    %c192_211 = arith.constant 192 : index
    %262 = vector.load %arg29[%c0_210, %c192_211] : memref<22x864xbf16, #tpu.memory_space<vmem>>, vector<22x96xbf16>
    tpu.vector_store %arg29[%c0_210, %c192_211], %261 {strides = array<i32>} : memref<22x864xbf16, #tpu.memory_space<vmem>>, vector<22x96xbf16>,
    %c4_212 = arith.constant 4 : index
    %c0_213 = arith.constant 0 : index
    %263 = vector.load %arg21[%c4_212, %c0_213] : memref<32x96xf32, #tpu.memory_space<vmem>>, vector<22x96xf32>
    %264 = arith.truncf %263 : vector<22x96xf32> to vector<22x96xbf16>
    %c0_214 = arith.constant 0 : index
    %c288_215 = arith.constant 288 : index
    %265 = vector.load %arg29[%c0_214, %c288_215] : memref<22x864xbf16, #tpu.memory_space<vmem>>, vector<22x96xbf16>
    tpu.vector_store %arg29[%c0_214, %c288_215], %264 {strides = array<i32>} : memref<22x864xbf16, #tpu.memory_space<vmem>>, vector<22x96xbf16>,
    %c5_216 = arith.constant 5 : index
    %c0_217 = arith.constant 0 : index
    %266 = vector.load %arg21[%c5_216, %c0_217] : memref<32x96xf32, #tpu.memory_space<vmem>>, vector<22x96xf32>
    %267 = arith.truncf %266 : vector<22x96xf32> to vector<22x96xbf16>
    %c0_218 = arith.constant 0 : index
    %c384_219 = arith.constant 384 : index
    %268 = vector.load %arg29[%c0_218, %c384_219] : memref<22x864xbf16, #tpu.memory_space<vmem>>, vector<22x96xbf16>
    tpu.vector_store %arg29[%c0_218, %c384_219], %267 {strides = array<i32>} : memref<22x864xbf16, #tpu.memory_space<vmem>>, vector<22x96xbf16>,
    %c6_220 = arith.constant 6 : index
    %c0_221 = arith.constant 0 : index
    %269 = vector.load %arg21[%c6_220, %c0_221] : memref<32x96xf32, #tpu.memory_space<vmem>>, vector<22x96xf32>
    %270 = arith.truncf %269 : vector<22x96xf32> to vector<22x96xbf16>
    %c0_222 = arith.constant 0 : index
    %c480_223 = arith.constant 480 : index
    %271 = vector.load %arg29[%c0_222, %c480_223] : memref<22x864xbf16, #tpu.memory_space<vmem>>, vector<22x96xbf16>
    tpu.vector_store %arg29[%c0_222, %c480_223], %270 {strides = array<i32>} : memref<22x864xbf16, #tpu.memory_space<vmem>>, vector<22x96xbf16>,
    %c8_224 = arith.constant 8 : index
    %c0_225 = arith.constant 0 : index
    %272 = vector.load %arg21[%c8_224, %c0_225] : memref<32x96xf32, #tpu.memory_space<vmem>>, vector<22x96xf32>
    %273 = arith.truncf %272 : vector<22x96xf32> to vector<22x96xbf16>
    %c0_226 = arith.constant 0 : index
    %c576_227 = arith.constant 576 : index
    %274 = vector.load %arg29[%c0_226, %c576_227] : memref<22x864xbf16, #tpu.memory_space<vmem>>, vector<22x96xbf16>
    tpu.vector_store %arg29[%c0_226, %c576_227], %273 {strides = array<i32>} : memref<22x864xbf16, #tpu.memory_space<vmem>>, vector<22x96xbf16>,
    %c9_228 = arith.constant 9 : index
    %c0_229 = arith.constant 0 : index
    %275 = vector.load %arg21[%c9_228, %c0_229] : memref<32x96xf32, #tpu.memory_space<vmem>>, vector<22x96xf32>
    %276 = arith.truncf %275 : vector<22x96xf32> to vector<22x96xbf16>
    %c0_230 = arith.constant 0 : index
    %c672_231 = arith.constant 672 : index
    %277 = vector.load %arg29[%c0_230, %c672_231] : memref<22x864xbf16, #tpu.memory_space<vmem>>, vector<22x96xbf16>
    tpu.vector_store %arg29[%c0_230, %c672_231], %276 {strides = array<i32>} : memref<22x864xbf16, #tpu.memory_space<vmem>>, vector<22x96xbf16>,
    %c10_232 = arith.constant 10 : index
    %c0_233 = arith.constant 0 : index
    %278 = vector.load %arg21[%c10_232, %c0_233] : memref<32x96xf32, #tpu.memory_space<vmem>>, vector<22x96xf32>
    %279 = arith.truncf %278 : vector<22x96xf32> to vector<22x96xbf16>
    %c0_234 = arith.constant 0 : index
    %c768_235 = arith.constant 768 : index
    %280 = vector.load %arg29[%c0_234, %c768_235] : memref<22x864xbf16, #tpu.memory_space<vmem>>, vector<22x96xbf16>
    tpu.vector_store %arg29[%c0_234, %c768_235], %279 {strides = array<i32>} : memref<22x864xbf16, #tpu.memory_space<vmem>>, vector<22x96xbf16>,
    %c0_236 = arith.constant 0 : index
    %c0_237 = arith.constant 0 : index
    %281 = vector.load %arg29[%c0_236, %c0_237] : memref<22x864xbf16, #tpu.memory_space<vmem>>, vector<22x864xbf16>
    %c0_238 = arith.constant 0 : index
    %c0_239 = arith.constant 0 : index
    %282 = vector.load %arg6[%c0_238, %c0_239] : memref<864x96xbf16, #tpu.memory_space<vmem>>, vector<864x96xbf16>
    %cst_240 = arith.constant dense<0.000000e+00> : vector<22x96xf32>
    %283 = tpu.matmul %281, %282, %cst_240 {dimension_numbers = #tpu.dot_dimension_numbers<[1], [0], [0], [1], [0, 0, 1, 1], [], []>} : vector<22x864xbf16>, vector<864x96xbf16>, vector<22x96xf32> -> vector<22x96xf32>
    %c0_241 = arith.constant 0 : index
    %c0_242 = arith.constant 0 : index
    %284 = vector.load %arg7[%c0_241, %c0_242] : memref<1x96xf32, #tpu.memory_space<vmem>>, vector<1x96xf32>
    %285 = vector.broadcast %284 : vector<1x96xf32> to vector<22x96xf32>
    %286 = arith.addf %283, %285 : vector<22x96xf32>
    %cst_243 = arith.constant 0.000000e+00 : f32
    %287 = vector.broadcast %cst_243 : f32 to vector<22x96xf32>
    %288 = arith.maximumf %286, %287 : vector<22x96xf32>
    %289 = vector.extract_strided_slice %288 {offsets = [0, 0], sizes = [1, 96], strides = [1, 1]} : vector<22x96xf32> to vector<1x96xf32>
    %c5_244 = arith.constant 5 : index
    %c0_245 = arith.constant 0 : index
    %290 = vector.load %arg22[%c5_244, %c0_245] : memref<32x96xf32, #tpu.memory_space<vmem>>, vector<1x96xf32>
    tpu.vector_store %arg22[%c5_244, %c0_245], %289 {strides = array<i32>} : memref<32x96xf32, #tpu.memory_space<vmem>>, vector<1x96xf32>,
    %291 = vector.extract_strided_slice %288 {offsets = [1, 0], sizes = [1, 96], strides = [1, 1]} : vector<22x96xf32> to vector<1x96xf32>
    %c6_246 = arith.constant 6 : index
    %c0_247 = arith.constant 0 : index
    %292 = vector.load %arg22[%c6_246, %c0_247] : memref<32x96xf32, #tpu.memory_space<vmem>>, vector<1x96xf32>
    tpu.vector_store %arg22[%c6_246, %c0_247], %291 {strides = array<i32>} : memref<32x96xf32, #tpu.memory_space<vmem>>, vector<1x96xf32>,
    %293 = vector.extract_strided_slice %288 {offsets = [4, 0], sizes = [1, 96], strides = [1, 1]} : vector<22x96xf32> to vector<1x96xf32>
    %c9_248 = arith.constant 9 : index
    %c0_249 = arith.constant 0 : index
    %294 = vector.load %arg22[%c9_248, %c0_249] : memref<32x96xf32, #tpu.memory_space<vmem>>, vector<1x96xf32>
    tpu.vector_store %arg22[%c9_248, %c0_249], %293 {strides = array<i32>} : memref<32x96xf32, #tpu.memory_space<vmem>>, vector<1x96xf32>,
    %295 = vector.extract_strided_slice %288 {offsets = [5, 0], sizes = [1, 96], strides = [1, 1]} : vector<22x96xf32> to vector<1x96xf32>
    %c10_250 = arith.constant 10 : index
    %c0_251 = arith.constant 0 : index
    %296 = vector.load %arg22[%c10_250, %c0_251] : memref<32x96xf32, #tpu.memory_space<vmem>>, vector<1x96xf32>
    tpu.vector_store %arg22[%c10_250, %c0_251], %295 {strides = array<i32>} : memref<32x96xf32, #tpu.memory_space<vmem>>, vector<1x96xf32>,
    %297 = vector.extract_strided_slice %288 {offsets = [16, 0], sizes = [1, 96], strides = [1, 1]} : vector<22x96xf32> to vector<1x96xf32>
    %c21_252 = arith.constant 21 : index
    %c0_253 = arith.constant 0 : index
    %298 = vector.load %arg22[%c21_252, %c0_253] : memref<32x96xf32, #tpu.memory_space<vmem>>, vector<1x96xf32>
    tpu.vector_store %arg22[%c21_252, %c0_253], %297 {strides = array<i32>} : memref<32x96xf32, #tpu.memory_space<vmem>>, vector<1x96xf32>,
    %299 = vector.extract_strided_slice %288 {offsets = [17, 0], sizes = [1, 96], strides = [1, 1]} : vector<22x96xf32> to vector<1x96xf32>
    %c22_254 = arith.constant 22 : index
    %c0_255 = arith.constant 0 : index
    %300 = vector.load %arg22[%c22_254, %c0_255] : memref<32x96xf32, #tpu.memory_space<vmem>>, vector<1x96xf32>
    tpu.vector_store %arg22[%c22_254, %c0_255], %299 {strides = array<i32>} : memref<32x96xf32, #tpu.memory_space<vmem>>, vector<1x96xf32>,
    %301 = vector.extract_strided_slice %288 {offsets = [20, 0], sizes = [1, 96], strides = [1, 1]} : vector<22x96xf32> to vector<1x96xf32>
    %c25_256 = arith.constant 25 : index
    %c0_257 = arith.constant 0 : index
    %302 = vector.load %arg22[%c25_256, %c0_257] : memref<32x96xf32, #tpu.memory_space<vmem>>, vector<1x96xf32>
    tpu.vector_store %arg22[%c25_256, %c0_257], %301 {strides = array<i32>} : memref<32x96xf32, #tpu.memory_space<vmem>>, vector<1x96xf32>,
    %303 = vector.extract_strided_slice %288 {offsets = [21, 0], sizes = [1, 96], strides = [1, 1]} : vector<22x96xf32> to vector<1x96xf32>
    %c26_258 = arith.constant 26 : index
    %c0_259 = arith.constant 0 : index
    %304 = vector.load %arg22[%c26_258, %c0_259] : memref<32x96xf32, #tpu.memory_space<vmem>>, vector<1x96xf32>
    tpu.vector_store %arg22[%c26_258, %c0_259], %303 {strides = array<i32>} : memref<32x96xf32, #tpu.memory_space<vmem>>, vector<1x96xf32>,
    %c0_260 = arith.constant 0 : index
    %c0_261 = arith.constant 0 : index
    %305 = vector.load %arg22[%c0_260, %c0_261] : memref<32x96xf32, #tpu.memory_space<vmem>>, vector<22x96xf32>
    %306 = arith.truncf %305 : vector<22x96xf32> to vector<22x96xbf16>
    %c0_262 = arith.constant 0 : index
    %c0_263 = arith.constant 0 : index
    %307 = vector.load %arg29[%c0_262, %c0_263] : memref<22x864xbf16, #tpu.memory_space<vmem>>, vector<22x96xbf16>
    tpu.vector_store %arg29[%c0_262, %c0_263], %306 {strides = array<i32>} : memref<22x864xbf16, #tpu.memory_space<vmem>>, vector<22x96xbf16>,
    %c1_264 = arith.constant 1 : index
    %c0_265 = arith.constant 0 : index
    %308 = vector.load %arg22[%c1_264, %c0_265] : memref<32x96xf32, #tpu.memory_space<vmem>>, vector<22x96xf32>
    %309 = arith.truncf %308 : vector<22x96xf32> to vector<22x96xbf16>
    %c0_266 = arith.constant 0 : index
    %c96_267 = arith.constant 96 : index
    %310 = vector.load %arg29[%c0_266, %c96_267] : memref<22x864xbf16, #tpu.memory_space<vmem>>, vector<22x96xbf16>
    tpu.vector_store %arg29[%c0_266, %c96_267], %309 {strides = array<i32>} : memref<22x864xbf16, #tpu.memory_space<vmem>>, vector<22x96xbf16>,
    %c2_268 = arith.constant 2 : index
    %c0_269 = arith.constant 0 : index
    %311 = vector.load %arg22[%c2_268, %c0_269] : memref<32x96xf32, #tpu.memory_space<vmem>>, vector<22x96xf32>
    %312 = arith.truncf %311 : vector<22x96xf32> to vector<22x96xbf16>
    %c0_270 = arith.constant 0 : index
    %c192_271 = arith.constant 192 : index
    %313 = vector.load %arg29[%c0_270, %c192_271] : memref<22x864xbf16, #tpu.memory_space<vmem>>, vector<22x96xbf16>
    tpu.vector_store %arg29[%c0_270, %c192_271], %312 {strides = array<i32>} : memref<22x864xbf16, #tpu.memory_space<vmem>>, vector<22x96xbf16>,
    %c4_272 = arith.constant 4 : index
    %c0_273 = arith.constant 0 : index
    %314 = vector.load %arg22[%c4_272, %c0_273] : memref<32x96xf32, #tpu.memory_space<vmem>>, vector<22x96xf32>
    %315 = arith.truncf %314 : vector<22x96xf32> to vector<22x96xbf16>
    %c0_274 = arith.constant 0 : index
    %c288_275 = arith.constant 288 : index
    %316 = vector.load %arg29[%c0_274, %c288_275] : memref<22x864xbf16, #tpu.memory_space<vmem>>, vector<22x96xbf16>
    tpu.vector_store %arg29[%c0_274, %c288_275], %315 {strides = array<i32>} : memref<22x864xbf16, #tpu.memory_space<vmem>>, vector<22x96xbf16>,
    %c5_276 = arith.constant 5 : index
    %c0_277 = arith.constant 0 : index
    %317 = vector.load %arg22[%c5_276, %c0_277] : memref<32x96xf32, #tpu.memory_space<vmem>>, vector<22x96xf32>
    %318 = arith.truncf %317 : vector<22x96xf32> to vector<22x96xbf16>
    %c0_278 = arith.constant 0 : index
    %c384_279 = arith.constant 384 : index
    %319 = vector.load %arg29[%c0_278, %c384_279] : memref<22x864xbf16, #tpu.memory_space<vmem>>, vector<22x96xbf16>
    tpu.vector_store %arg29[%c0_278, %c384_279], %318 {strides = array<i32>} : memref<22x864xbf16, #tpu.memory_space<vmem>>, vector<22x96xbf16>,
    %c6_280 = arith.constant 6 : index
    %c0_281 = arith.constant 0 : index
    %320 = vector.load %arg22[%c6_280, %c0_281] : memref<32x96xf32, #tpu.memory_space<vmem>>, vector<22x96xf32>
    %321 = arith.truncf %320 : vector<22x96xf32> to vector<22x96xbf16>
    %c0_282 = arith.constant 0 : index
    %c480_283 = arith.constant 480 : index
    %322 = vector.load %arg29[%c0_282, %c480_283] : memref<22x864xbf16, #tpu.memory_space<vmem>>, vector<22x96xbf16>
    tpu.vector_store %arg29[%c0_282, %c480_283], %321 {strides = array<i32>} : memref<22x864xbf16, #tpu.memory_space<vmem>>, vector<22x96xbf16>,
    %c8_284 = arith.constant 8 : index
    %c0_285 = arith.constant 0 : index
    %323 = vector.load %arg22[%c8_284, %c0_285] : memref<32x96xf32, #tpu.memory_space<vmem>>, vector<22x96xf32>
    %324 = arith.truncf %323 : vector<22x96xf32> to vector<22x96xbf16>
    %c0_286 = arith.constant 0 : index
    %c576_287 = arith.constant 576 : index
    %325 = vector.load %arg29[%c0_286, %c576_287] : memref<22x864xbf16, #tpu.memory_space<vmem>>, vector<22x96xbf16>
    tpu.vector_store %arg29[%c0_286, %c576_287], %324 {strides = array<i32>} : memref<22x864xbf16, #tpu.memory_space<vmem>>, vector<22x96xbf16>,
    %c9_288 = arith.constant 9 : index
    %c0_289 = arith.constant 0 : index
    %326 = vector.load %arg22[%c9_288, %c0_289] : memref<32x96xf32, #tpu.memory_space<vmem>>, vector<22x96xf32>
    %327 = arith.truncf %326 : vector<22x96xf32> to vector<22x96xbf16>
    %c0_290 = arith.constant 0 : index
    %c672_291 = arith.constant 672 : index
    %328 = vector.load %arg29[%c0_290, %c672_291] : memref<22x864xbf16, #tpu.memory_space<vmem>>, vector<22x96xbf16>
    tpu.vector_store %arg29[%c0_290, %c672_291], %327 {strides = array<i32>} : memref<22x864xbf16, #tpu.memory_space<vmem>>, vector<22x96xbf16>,
    %c10_292 = arith.constant 10 : index
    %c0_293 = arith.constant 0 : index
    %329 = vector.load %arg22[%c10_292, %c0_293] : memref<32x96xf32, #tpu.memory_space<vmem>>, vector<22x96xf32>
    %330 = arith.truncf %329 : vector<22x96xf32> to vector<22x96xbf16>
    %c0_294 = arith.constant 0 : index
    %c768_295 = arith.constant 768 : index
    %331 = vector.load %arg29[%c0_294, %c768_295] : memref<22x864xbf16, #tpu.memory_space<vmem>>, vector<22x96xbf16>
    tpu.vector_store %arg29[%c0_294, %c768_295], %330 {strides = array<i32>} : memref<22x864xbf16, #tpu.memory_space<vmem>>, vector<22x96xbf16>,
    %c0_296 = arith.constant 0 : index
    %c0_297 = arith.constant 0 : index
    %332 = vector.load %arg29[%c0_296, %c0_297] : memref<22x864xbf16, #tpu.memory_space<vmem>>, vector<22x864xbf16>
    %c0_298 = arith.constant 0 : index
    %c0_299 = arith.constant 0 : index
    %333 = vector.load %arg8[%c0_298, %c0_299] : memref<864x96xbf16, #tpu.memory_space<vmem>>, vector<864x96xbf16>
    %cst_300 = arith.constant dense<0.000000e+00> : vector<22x96xf32>
    %334 = tpu.matmul %332, %333, %cst_300 {dimension_numbers = #tpu.dot_dimension_numbers<[1], [0], [0], [1], [0, 0, 1, 1], [], []>} : vector<22x864xbf16>, vector<864x96xbf16>, vector<22x96xf32> -> vector<22x96xf32>
    %c5_301 = arith.constant 5 : index
    %c0_302 = arith.constant 0 : index
    %335 = vector.load %arg21[%c5_301, %c0_302] : memref<32x96xf32, #tpu.memory_space<vmem>>, vector<1x96xf32>
    %336 = vector.extract_strided_slice %334 {offsets = [0, 0], sizes = [1, 96], strides = [1, 1]} : vector<22x96xf32> to vector<1x96xf32>
    %337 = arith.addf %336, %335 : vector<1x96xf32>
    %c5_303 = arith.constant 5 : index
    %c0_304 = arith.constant 0 : index
    %338 = vector.load %arg23[%c5_303, %c0_304] : memref<32x96xf32, #tpu.memory_space<vmem>>, vector<1x96xf32>
    tpu.vector_store %arg23[%c5_303, %c0_304], %337 {strides = array<i32>} : memref<32x96xf32, #tpu.memory_space<vmem>>, vector<1x96xf32>,
    %c6_305 = arith.constant 6 : index
    %c0_306 = arith.constant 0 : index
    %339 = vector.load %arg21[%c6_305, %c0_306] : memref<32x96xf32, #tpu.memory_space<vmem>>, vector<1x96xf32>
    %340 = vector.extract_strided_slice %334 {offsets = [1, 0], sizes = [1, 96], strides = [1, 1]} : vector<22x96xf32> to vector<1x96xf32>
    %341 = arith.addf %340, %339 : vector<1x96xf32>
    %c6_307 = arith.constant 6 : index
    %c0_308 = arith.constant 0 : index
    %342 = vector.load %arg23[%c6_307, %c0_308] : memref<32x96xf32, #tpu.memory_space<vmem>>, vector<1x96xf32>
    tpu.vector_store %arg23[%c6_307, %c0_308], %341 {strides = array<i32>} : memref<32x96xf32, #tpu.memory_space<vmem>>, vector<1x96xf32>,
    %c9_309 = arith.constant 9 : index
    %c0_310 = arith.constant 0 : index
    %343 = vector.load %arg21[%c9_309, %c0_310] : memref<32x96xf32, #tpu.memory_space<vmem>>, vector<1x96xf32>
    %344 = vector.extract_strided_slice %334 {offsets = [4, 0], sizes = [1, 96], strides = [1, 1]} : vector<22x96xf32> to vector<1x96xf32>
    %345 = arith.addf %344, %343 : vector<1x96xf32>
    %c9_311 = arith.constant 9 : index
    %c0_312 = arith.constant 0 : index
    %346 = vector.load %arg23[%c9_311, %c0_312] : memref<32x96xf32, #tpu.memory_space<vmem>>, vector<1x96xf32>
    tpu.vector_store %arg23[%c9_311, %c0_312], %345 {strides = array<i32>} : memref<32x96xf32, #tpu.memory_space<vmem>>, vector<1x96xf32>,
    %c10_313 = arith.constant 10 : index
    %c0_314 = arith.constant 0 : index
    %347 = vector.load %arg21[%c10_313, %c0_314] : memref<32x96xf32, #tpu.memory_space<vmem>>, vector<1x96xf32>
    %348 = vector.extract_strided_slice %334 {offsets = [5, 0], sizes = [1, 96], strides = [1, 1]} : vector<22x96xf32> to vector<1x96xf32>
    %349 = arith.addf %348, %347 : vector<1x96xf32>
    %c10_315 = arith.constant 10 : index
    %c0_316 = arith.constant 0 : index
    %350 = vector.load %arg23[%c10_315, %c0_316] : memref<32x96xf32, #tpu.memory_space<vmem>>, vector<1x96xf32>
    tpu.vector_store %arg23[%c10_315, %c0_316], %349 {strides = array<i32>} : memref<32x96xf32, #tpu.memory_space<vmem>>, vector<1x96xf32>,
    %c21_317 = arith.constant 21 : index
    %c0_318 = arith.constant 0 : index
    %351 = vector.load %arg21[%c21_317, %c0_318] : memref<32x96xf32, #tpu.memory_space<vmem>>, vector<1x96xf32>
    %352 = vector.extract_strided_slice %334 {offsets = [16, 0], sizes = [1, 96], strides = [1, 1]} : vector<22x96xf32> to vector<1x96xf32>
    %353 = arith.addf %352, %351 : vector<1x96xf32>
    %c21_319 = arith.constant 21 : index
    %c0_320 = arith.constant 0 : index
    %354 = vector.load %arg23[%c21_319, %c0_320] : memref<32x96xf32, #tpu.memory_space<vmem>>, vector<1x96xf32>
    tpu.vector_store %arg23[%c21_319, %c0_320], %353 {strides = array<i32>} : memref<32x96xf32, #tpu.memory_space<vmem>>, vector<1x96xf32>,
    %c22_321 = arith.constant 22 : index
    %c0_322 = arith.constant 0 : index
    %355 = vector.load %arg21[%c22_321, %c0_322] : memref<32x96xf32, #tpu.memory_space<vmem>>, vector<1x96xf32>
    %356 = vector.extract_strided_slice %334 {offsets = [17, 0], sizes = [1, 96], strides = [1, 1]} : vector<22x96xf32> to vector<1x96xf32>
    %357 = arith.addf %356, %355 : vector<1x96xf32>
    %c22_323 = arith.constant 22 : index
    %c0_324 = arith.constant 0 : index
    %358 = vector.load %arg23[%c22_323, %c0_324] : memref<32x96xf32, #tpu.memory_space<vmem>>, vector<1x96xf32>
    tpu.vector_store %arg23[%c22_323, %c0_324], %357 {strides = array<i32>} : memref<32x96xf32, #tpu.memory_space<vmem>>, vector<1x96xf32>,
    %c25_325 = arith.constant 25 : index
    %c0_326 = arith.constant 0 : index
    %359 = vector.load %arg21[%c25_325, %c0_326] : memref<32x96xf32, #tpu.memory_space<vmem>>, vector<1x96xf32>
    %360 = vector.extract_strided_slice %334 {offsets = [20, 0], sizes = [1, 96], strides = [1, 1]} : vector<22x96xf32> to vector<1x96xf32>
    %361 = arith.addf %360, %359 : vector<1x96xf32>
    %c25_327 = arith.constant 25 : index
    %c0_328 = arith.constant 0 : index
    %362 = vector.load %arg23[%c25_327, %c0_328] : memref<32x96xf32, #tpu.memory_space<vmem>>, vector<1x96xf32>
    tpu.vector_store %arg23[%c25_327, %c0_328], %361 {strides = array<i32>} : memref<32x96xf32, #tpu.memory_space<vmem>>, vector<1x96xf32>,
    %c26_329 = arith.constant 26 : index
    %c0_330 = arith.constant 0 : index
    %363 = vector.load %arg21[%c26_329, %c0_330] : memref<32x96xf32, #tpu.memory_space<vmem>>, vector<1x96xf32>
    %364 = vector.extract_strided_slice %334 {offsets = [21, 0], sizes = [1, 96], strides = [1, 1]} : vector<22x96xf32> to vector<1x96xf32>
    %365 = arith.addf %364, %363 : vector<1x96xf32>
    %c26_331 = arith.constant 26 : index
    %c0_332 = arith.constant 0 : index
    %366 = vector.load %arg23[%c26_331, %c0_332] : memref<32x96xf32, #tpu.memory_space<vmem>>, vector<1x96xf32>
    tpu.vector_store %arg23[%c26_331, %c0_332], %365 {strides = array<i32>} : memref<32x96xf32, #tpu.memory_space<vmem>>, vector<1x96xf32>,
    %c0_333 = arith.constant 0 : index
    %c0_334 = arith.constant 0 : index
    %367 = vector.load %arg23[%c0_333, %c0_334] : memref<32x96xf32, #tpu.memory_space<vmem>>, vector<22x96xf32>
    %368 = arith.truncf %367 : vector<22x96xf32> to vector<22x96xbf16>
    %c0_335 = arith.constant 0 : index
    %c0_336 = arith.constant 0 : index
    %369 = vector.load %arg29[%c0_335, %c0_336] : memref<22x864xbf16, #tpu.memory_space<vmem>>, vector<22x96xbf16>
    tpu.vector_store %arg29[%c0_335, %c0_336], %368 {strides = array<i32>} : memref<22x864xbf16, #tpu.memory_space<vmem>>, vector<22x96xbf16>,
    %c1_337 = arith.constant 1 : index
    %c0_338 = arith.constant 0 : index
    %370 = vector.load %arg23[%c1_337, %c0_338] : memref<32x96xf32, #tpu.memory_space<vmem>>, vector<22x96xf32>
    %371 = arith.truncf %370 : vector<22x96xf32> to vector<22x96xbf16>
    %c0_339 = arith.constant 0 : index
    %c96_340 = arith.constant 96 : index
    %372 = vector.load %arg29[%c0_339, %c96_340] : memref<22x864xbf16, #tpu.memory_space<vmem>>, vector<22x96xbf16>
    tpu.vector_store %arg29[%c0_339, %c96_340], %371 {strides = array<i32>} : memref<22x864xbf16, #tpu.memory_space<vmem>>, vector<22x96xbf16>,
    %c2_341 = arith.constant 2 : index
    %c0_342 = arith.constant 0 : index
    %373 = vector.load %arg23[%c2_341, %c0_342] : memref<32x96xf32, #tpu.memory_space<vmem>>, vector<22x96xf32>
    %374 = arith.truncf %373 : vector<22x96xf32> to vector<22x96xbf16>
    %c0_343 = arith.constant 0 : index
    %c192_344 = arith.constant 192 : index
    %375 = vector.load %arg29[%c0_343, %c192_344] : memref<22x864xbf16, #tpu.memory_space<vmem>>, vector<22x96xbf16>
    tpu.vector_store %arg29[%c0_343, %c192_344], %374 {strides = array<i32>} : memref<22x864xbf16, #tpu.memory_space<vmem>>, vector<22x96xbf16>,
    %c4_345 = arith.constant 4 : index
    %c0_346 = arith.constant 0 : index
    %376 = vector.load %arg23[%c4_345, %c0_346] : memref<32x96xf32, #tpu.memory_space<vmem>>, vector<22x96xf32>
    %377 = arith.truncf %376 : vector<22x96xf32> to vector<22x96xbf16>
    %c0_347 = arith.constant 0 : index
    %c288_348 = arith.constant 288 : index
    %378 = vector.load %arg29[%c0_347, %c288_348] : memref<22x864xbf16, #tpu.memory_space<vmem>>, vector<22x96xbf16>
    tpu.vector_store %arg29[%c0_347, %c288_348], %377 {strides = array<i32>} : memref<22x864xbf16, #tpu.memory_space<vmem>>, vector<22x96xbf16>,
    %c5_349 = arith.constant 5 : index
    %c0_350 = arith.constant 0 : index
    %379 = vector.load %arg23[%c5_349, %c0_350] : memref<32x96xf32, #tpu.memory_space<vmem>>, vector<22x96xf32>
    %380 = arith.truncf %379 : vector<22x96xf32> to vector<22x96xbf16>
    %c0_351 = arith.constant 0 : index
    %c384_352 = arith.constant 384 : index
    %381 = vector.load %arg29[%c0_351, %c384_352] : memref<22x864xbf16, #tpu.memory_space<vmem>>, vector<22x96xbf16>
    tpu.vector_store %arg29[%c0_351, %c384_352], %380 {strides = array<i32>} : memref<22x864xbf16, #tpu.memory_space<vmem>>, vector<22x96xbf16>,
    %c6_353 = arith.constant 6 : index
    %c0_354 = arith.constant 0 : index
    %382 = vector.load %arg23[%c6_353, %c0_354] : memref<32x96xf32, #tpu.memory_space<vmem>>, vector<22x96xf32>
    %383 = arith.truncf %382 : vector<22x96xf32> to vector<22x96xbf16>
    %c0_355 = arith.constant 0 : index
    %c480_356 = arith.constant 480 : index
    %384 = vector.load %arg29[%c0_355, %c480_356] : memref<22x864xbf16, #tpu.memory_space<vmem>>, vector<22x96xbf16>
    tpu.vector_store %arg29[%c0_355, %c480_356], %383 {strides = array<i32>} : memref<22x864xbf16, #tpu.memory_space<vmem>>, vector<22x96xbf16>,
    %c8_357 = arith.constant 8 : index
    %c0_358 = arith.constant 0 : index
    %385 = vector.load %arg23[%c8_357, %c0_358] : memref<32x96xf32, #tpu.memory_space<vmem>>, vector<22x96xf32>
    %386 = arith.truncf %385 : vector<22x96xf32> to vector<22x96xbf16>
    %c0_359 = arith.constant 0 : index
    %c576_360 = arith.constant 576 : index
    %387 = vector.load %arg29[%c0_359, %c576_360] : memref<22x864xbf16, #tpu.memory_space<vmem>>, vector<22x96xbf16>
    tpu.vector_store %arg29[%c0_359, %c576_360], %386 {strides = array<i32>} : memref<22x864xbf16, #tpu.memory_space<vmem>>, vector<22x96xbf16>,
    %c9_361 = arith.constant 9 : index
    %c0_362 = arith.constant 0 : index
    %388 = vector.load %arg23[%c9_361, %c0_362] : memref<32x96xf32, #tpu.memory_space<vmem>>, vector<22x96xf32>
    %389 = arith.truncf %388 : vector<22x96xf32> to vector<22x96xbf16>
    %c0_363 = arith.constant 0 : index
    %c672_364 = arith.constant 672 : index
    %390 = vector.load %arg29[%c0_363, %c672_364] : memref<22x864xbf16, #tpu.memory_space<vmem>>, vector<22x96xbf16>
    tpu.vector_store %arg29[%c0_363, %c672_364], %389 {strides = array<i32>} : memref<22x864xbf16, #tpu.memory_space<vmem>>, vector<22x96xbf16>,
    %c10_365 = arith.constant 10 : index
    %c0_366 = arith.constant 0 : index
    %391 = vector.load %arg23[%c10_365, %c0_366] : memref<32x96xf32, #tpu.memory_space<vmem>>, vector<22x96xf32>
    %392 = arith.truncf %391 : vector<22x96xf32> to vector<22x96xbf16>
    %c0_367 = arith.constant 0 : index
    %c768_368 = arith.constant 768 : index
    %393 = vector.load %arg29[%c0_367, %c768_368] : memref<22x864xbf16, #tpu.memory_space<vmem>>, vector<22x96xbf16>
    tpu.vector_store %arg29[%c0_367, %c768_368], %392 {strides = array<i32>} : memref<22x864xbf16, #tpu.memory_space<vmem>>, vector<22x96xbf16>,
    %c0_369 = arith.constant 0 : index
    %c0_370 = arith.constant 0 : index
    %394 = vector.load %arg29[%c0_369, %c0_370] : memref<22x864xbf16, #tpu.memory_space<vmem>>, vector<22x864xbf16>
    %c0_371 = arith.constant 0 : index
    %c0_372 = arith.constant 0 : index
    %395 = vector.load %arg9[%c0_371, %c0_372] : memref<864x256xbf16, #tpu.memory_space<vmem>>, vector<864x256xbf16>
    %cst_373 = arith.constant dense<0.000000e+00> : vector<22x256xf32>
    %396 = tpu.matmul %394, %395, %cst_373 {dimension_numbers = #tpu.dot_dimension_numbers<[1], [0], [0], [1], [0, 0, 1, 1], [], []>} : vector<22x864xbf16>, vector<864x256xbf16>, vector<22x256xf32> -> vector<22x256xf32>
    %397 = vector.extract_strided_slice %396 {offsets = [0, 0], sizes = [22, 128], strides = [1, 1]} : vector<22x256xf32> to vector<22x128xf32>
    %c0_374 = arith.constant 0 : index
    %c0_375 = arith.constant 0 : index
    %398 = vector.load %arg10[%c0_374, %c0_375] : memref<1x128xf32, #tpu.memory_space<vmem>>, vector<1x128xf32>
    %399 = vector.broadcast %398 : vector<1x128xf32> to vector<22x128xf32>
    %400 = arith.addf %397, %399 : vector<22x128xf32>
    %cst_376 = arith.constant 0.000000e+00 : f32
    %401 = vector.broadcast %cst_376 : f32 to vector<22x128xf32>
    %402 = arith.maximumf %400, %401 : vector<22x128xf32>
    %403 = vector.extract_strided_slice %396 {offsets = [0, 128], sizes = [22, 128], strides = [1, 1]} : vector<22x256xf32> to vector<22x128xf32>
    %404 = vector.extract_strided_slice %402 {offsets = [0, 0], sizes = [1, 128], strides = [1, 1]} : vector<22x128xf32> to vector<1x128xf32>
    %c4_377 = arith.constant 4 : index
    %c0_378 = arith.constant 0 : index
    %405 = vector.load %arg24[%c4_377, %c0_378] : memref<18x128xf32, #tpu.memory_space<vmem>>, vector<1x128xf32>
    tpu.vector_store %arg24[%c4_377, %c0_378], %404 {strides = array<i32>} : memref<18x128xf32, #tpu.memory_space<vmem>>, vector<1x128xf32>,
    %406 = vector.extract_strided_slice %402 {offsets = [16, 0], sizes = [1, 128], strides = [1, 1]} : vector<22x128xf32> to vector<1x128xf32>
    %c13_379 = arith.constant 13 : index
    %c0_380 = arith.constant 0 : index
    %407 = vector.load %arg24[%c13_379, %c0_380] : memref<18x128xf32, #tpu.memory_space<vmem>>, vector<1x128xf32>
    tpu.vector_store %arg24[%c13_379, %c0_380], %406 {strides = array<i32>} : memref<18x128xf32, #tpu.memory_space<vmem>>, vector<1x128xf32>,
    %c0_381 = arith.constant 0 : index
    %c0_382 = arith.constant 0 : index
    %408 = vector.load %arg24[%c0_381, %c0_382] : memref<18x128xf32, #tpu.memory_space<vmem>>, vector<10x128xf32>
    %409 = arith.truncf %408 : vector<10x128xf32> to vector<10x128xbf16>
    %c0_383 = arith.constant 0 : index
    %c0_384 = arith.constant 0 : index
    %410 = vector.load %arg30[%c0_383, %c0_384] : memref<10x1152xbf16, #tpu.memory_space<vmem>>, vector<10x128xbf16>
    tpu.vector_store %arg30[%c0_383, %c0_384], %409 {strides = array<i32>} : memref<10x1152xbf16, #tpu.memory_space<vmem>>, vector<10x128xbf16>,
    %c1_385 = arith.constant 1 : index
    %c0_386 = arith.constant 0 : index
    %411 = vector.load %arg24[%c1_385, %c0_386] : memref<18x128xf32, #tpu.memory_space<vmem>>, vector<10x128xf32>
    %412 = arith.truncf %411 : vector<10x128xf32> to vector<10x128xbf16>
    %c0_387 = arith.constant 0 : index
    %c128_388 = arith.constant 128 : index
    %413 = vector.load %arg30[%c0_387, %c128_388] : memref<10x1152xbf16, #tpu.memory_space<vmem>>, vector<10x128xbf16>
    tpu.vector_store %arg30[%c0_387, %c128_388], %412 {strides = array<i32>} : memref<10x1152xbf16, #tpu.memory_space<vmem>>, vector<10x128xbf16>,
    %c2_389 = arith.constant 2 : index
    %c0_390 = arith.constant 0 : index
    %414 = vector.load %arg24[%c2_389, %c0_390] : memref<18x128xf32, #tpu.memory_space<vmem>>, vector<10x128xf32>
    %415 = arith.truncf %414 : vector<10x128xf32> to vector<10x128xbf16>
    %c0_391 = arith.constant 0 : index
    %c256_392 = arith.constant 256 : index
    %416 = vector.load %arg30[%c0_391, %c256_392] : memref<10x1152xbf16, #tpu.memory_space<vmem>>, vector<10x128xbf16>
    tpu.vector_store %arg30[%c0_391, %c256_392], %415 {strides = array<i32>} : memref<10x1152xbf16, #tpu.memory_space<vmem>>, vector<10x128xbf16>,
    %c3 = arith.constant 3 : index
    %c0_393 = arith.constant 0 : index
    %417 = vector.load %arg24[%c3, %c0_393] : memref<18x128xf32, #tpu.memory_space<vmem>>, vector<10x128xf32>
    %418 = arith.truncf %417 : vector<10x128xf32> to vector<10x128xbf16>
    %c0_394 = arith.constant 0 : index
    %c384_395 = arith.constant 384 : index
    %419 = vector.load %arg30[%c0_394, %c384_395] : memref<10x1152xbf16, #tpu.memory_space<vmem>>, vector<10x128xbf16>
    tpu.vector_store %arg30[%c0_394, %c384_395], %418 {strides = array<i32>} : memref<10x1152xbf16, #tpu.memory_space<vmem>>, vector<10x128xbf16>,
    %c4_396 = arith.constant 4 : index
    %c0_397 = arith.constant 0 : index
    %420 = vector.load %arg24[%c4_396, %c0_397] : memref<18x128xf32, #tpu.memory_space<vmem>>, vector<10x128xf32>
    %421 = arith.truncf %420 : vector<10x128xf32> to vector<10x128xbf16>
    %c0_398 = arith.constant 0 : index
    %c512_399 = arith.constant 512 : index
    %422 = vector.load %arg30[%c0_398, %c512_399] : memref<10x1152xbf16, #tpu.memory_space<vmem>>, vector<10x128xbf16>
    tpu.vector_store %arg30[%c0_398, %c512_399], %421 {strides = array<i32>} : memref<10x1152xbf16, #tpu.memory_space<vmem>>, vector<10x128xbf16>,
    %c5_400 = arith.constant 5 : index
    %c0_401 = arith.constant 0 : index
    %423 = vector.load %arg24[%c5_400, %c0_401] : memref<18x128xf32, #tpu.memory_space<vmem>>, vector<10x128xf32>
    %424 = arith.truncf %423 : vector<10x128xf32> to vector<10x128xbf16>
    %c0_402 = arith.constant 0 : index
    %c640 = arith.constant 640 : index
    %425 = vector.load %arg30[%c0_402, %c640] : memref<10x1152xbf16, #tpu.memory_space<vmem>>, vector<10x128xbf16>
    tpu.vector_store %arg30[%c0_402, %c640], %424 {strides = array<i32>} : memref<10x1152xbf16, #tpu.memory_space<vmem>>, vector<10x128xbf16>,
    %c6_403 = arith.constant 6 : index
    %c0_404 = arith.constant 0 : index
    %426 = vector.load %arg24[%c6_403, %c0_404] : memref<18x128xf32, #tpu.memory_space<vmem>>, vector<10x128xf32>
    %427 = arith.truncf %426 : vector<10x128xf32> to vector<10x128xbf16>
    %c0_405 = arith.constant 0 : index
    %c768_406 = arith.constant 768 : index
    %428 = vector.load %arg30[%c0_405, %c768_406] : memref<10x1152xbf16, #tpu.memory_space<vmem>>, vector<10x128xbf16>
    tpu.vector_store %arg30[%c0_405, %c768_406], %427 {strides = array<i32>} : memref<10x1152xbf16, #tpu.memory_space<vmem>>, vector<10x128xbf16>,
    %c7_407 = arith.constant 7 : index
    %c0_408 = arith.constant 0 : index
    %429 = vector.load %arg24[%c7_407, %c0_408] : memref<18x128xf32, #tpu.memory_space<vmem>>, vector<10x128xf32>
    %430 = arith.truncf %429 : vector<10x128xf32> to vector<10x128xbf16>
    %c0_409 = arith.constant 0 : index
    %c896 = arith.constant 896 : index
    %431 = vector.load %arg30[%c0_409, %c896] : memref<10x1152xbf16, #tpu.memory_space<vmem>>, vector<10x128xbf16>
    tpu.vector_store %arg30[%c0_409, %c896], %430 {strides = array<i32>} : memref<10x1152xbf16, #tpu.memory_space<vmem>>, vector<10x128xbf16>,
    %c8_410 = arith.constant 8 : index
    %c0_411 = arith.constant 0 : index
    %432 = vector.load %arg24[%c8_410, %c0_411] : memref<18x128xf32, #tpu.memory_space<vmem>>, vector<10x128xf32>
    %433 = arith.truncf %432 : vector<10x128xf32> to vector<10x128xbf16>
    %c0_412 = arith.constant 0 : index
    %c1024 = arith.constant 1024 : index
    %434 = vector.load %arg30[%c0_412, %c1024] : memref<10x1152xbf16, #tpu.memory_space<vmem>>, vector<10x128xbf16>
    tpu.vector_store %arg30[%c0_412, %c1024], %433 {strides = array<i32>} : memref<10x1152xbf16, #tpu.memory_space<vmem>>, vector<10x128xbf16>,
    %c0_413 = arith.constant 0 : index
    %c0_414 = arith.constant 0 : index
    %435 = vector.load %arg30[%c0_413, %c0_414] : memref<10x1152xbf16, #tpu.memory_space<vmem>>, vector<10x1152xbf16>
    %c0_415 = arith.constant 0 : index
    %c0_416 = arith.constant 0 : index
    %436 = vector.load %arg11[%c0_415, %c0_416] : memref<1152x128xbf16, #tpu.memory_space<vmem>>, vector<1152x128xbf16>
    %cst_417 = arith.constant dense<0.000000e+00> : vector<10x128xf32>
    %437 = tpu.matmul %435, %436, %cst_417 {dimension_numbers = #tpu.dot_dimension_numbers<[1], [0], [0], [1], [0, 0, 1, 1], [], []>} : vector<10x1152xbf16>, vector<1152x128xbf16>, vector<10x128xf32> -> vector<10x128xf32>
    %438 = vector.extract_strided_slice %403 {offsets = [0, 0], sizes = [1, 128], strides = [1, 1]} : vector<22x128xf32> to vector<1x128xf32>
    %439 = vector.extract_strided_slice %437 {offsets = [0, 0], sizes = [1, 128], strides = [1, 1]} : vector<10x128xf32> to vector<1x128xf32>
    %440 = arith.addf %439, %438 : vector<1x128xf32>
    %c4_418 = arith.constant 4 : index
    %c0_419 = arith.constant 0 : index
    %441 = vector.load %arg25[%c4_418, %c0_419] : memref<18x128xf32, #tpu.memory_space<vmem>>, vector<1x128xf32>
    tpu.vector_store %arg25[%c4_418, %c0_419], %440 {strides = array<i32>} : memref<18x128xf32, #tpu.memory_space<vmem>>, vector<1x128xf32>,
    %442 = vector.extract_strided_slice %403 {offsets = [16, 0], sizes = [1, 128], strides = [1, 1]} : vector<22x128xf32> to vector<1x128xf32>
    %443 = vector.extract_strided_slice %437 {offsets = [9, 0], sizes = [1, 128], strides = [1, 1]} : vector<10x128xf32> to vector<1x128xf32>
    %444 = arith.addf %443, %442 : vector<1x128xf32>
    %c13_420 = arith.constant 13 : index
    %c0_421 = arith.constant 0 : index
    %445 = vector.load %arg25[%c13_420, %c0_421] : memref<18x128xf32, #tpu.memory_space<vmem>>, vector<1x128xf32>
    tpu.vector_store %arg25[%c13_420, %c0_421], %444 {strides = array<i32>} : memref<18x128xf32, #tpu.memory_space<vmem>>, vector<1x128xf32>,
    %c0_422 = arith.constant 0 : index
    %c0_423 = arith.constant 0 : index
    %446 = vector.load %arg25[%c0_422, %c0_423] : memref<18x128xf32, #tpu.memory_space<vmem>>, vector<10x128xf32>
    %447 = arith.truncf %446 : vector<10x128xf32> to vector<10x128xbf16>
    %c0_424 = arith.constant 0 : index
    %c0_425 = arith.constant 0 : index
    %448 = vector.load %arg30[%c0_424, %c0_425] : memref<10x1152xbf16, #tpu.memory_space<vmem>>, vector<10x128xbf16>
    tpu.vector_store %arg30[%c0_424, %c0_425], %447 {strides = array<i32>} : memref<10x1152xbf16, #tpu.memory_space<vmem>>, vector<10x128xbf16>,
    %c1_426 = arith.constant 1 : index
    %c0_427 = arith.constant 0 : index
    %449 = vector.load %arg25[%c1_426, %c0_427] : memref<18x128xf32, #tpu.memory_space<vmem>>, vector<10x128xf32>
    %450 = arith.truncf %449 : vector<10x128xf32> to vector<10x128xbf16>
    %c0_428 = arith.constant 0 : index
    %c128_429 = arith.constant 128 : index
    %451 = vector.load %arg30[%c0_428, %c128_429] : memref<10x1152xbf16, #tpu.memory_space<vmem>>, vector<10x128xbf16>
    tpu.vector_store %arg30[%c0_428, %c128_429], %450 {strides = array<i32>} : memref<10x1152xbf16, #tpu.memory_space<vmem>>, vector<10x128xbf16>,
    %c2_430 = arith.constant 2 : index
    %c0_431 = arith.constant 0 : index
    %452 = vector.load %arg25[%c2_430, %c0_431] : memref<18x128xf32, #tpu.memory_space<vmem>>, vector<10x128xf32>
    %453 = arith.truncf %452 : vector<10x128xf32> to vector<10x128xbf16>
    %c0_432 = arith.constant 0 : index
    %c256_433 = arith.constant 256 : index
    %454 = vector.load %arg30[%c0_432, %c256_433] : memref<10x1152xbf16, #tpu.memory_space<vmem>>, vector<10x128xbf16>
    tpu.vector_store %arg30[%c0_432, %c256_433], %453 {strides = array<i32>} : memref<10x1152xbf16, #tpu.memory_space<vmem>>, vector<10x128xbf16>,
    %c3_434 = arith.constant 3 : index
    %c0_435 = arith.constant 0 : index
    %455 = vector.load %arg25[%c3_434, %c0_435] : memref<18x128xf32, #tpu.memory_space<vmem>>, vector<10x128xf32>
    %456 = arith.truncf %455 : vector<10x128xf32> to vector<10x128xbf16>
    %c0_436 = arith.constant 0 : index
    %c384_437 = arith.constant 384 : index
    %457 = vector.load %arg30[%c0_436, %c384_437] : memref<10x1152xbf16, #tpu.memory_space<vmem>>, vector<10x128xbf16>
    tpu.vector_store %arg30[%c0_436, %c384_437], %456 {strides = array<i32>} : memref<10x1152xbf16, #tpu.memory_space<vmem>>, vector<10x128xbf16>,
    %c4_438 = arith.constant 4 : index
    %c0_439 = arith.constant 0 : index
    %458 = vector.load %arg25[%c4_438, %c0_439] : memref<18x128xf32, #tpu.memory_space<vmem>>, vector<10x128xf32>
    %459 = arith.truncf %458 : vector<10x128xf32> to vector<10x128xbf16>
    %c0_440 = arith.constant 0 : index
    %c512_441 = arith.constant 512 : index
    %460 = vector.load %arg30[%c0_440, %c512_441] : memref<10x1152xbf16, #tpu.memory_space<vmem>>, vector<10x128xbf16>
    tpu.vector_store %arg30[%c0_440, %c512_441], %459 {strides = array<i32>} : memref<10x1152xbf16, #tpu.memory_space<vmem>>, vector<10x128xbf16>,
    %c5_442 = arith.constant 5 : index
    %c0_443 = arith.constant 0 : index
    %461 = vector.load %arg25[%c5_442, %c0_443] : memref<18x128xf32, #tpu.memory_space<vmem>>, vector<10x128xf32>
    %462 = arith.truncf %461 : vector<10x128xf32> to vector<10x128xbf16>
    %c0_444 = arith.constant 0 : index
    %c640_445 = arith.constant 640 : index
    %463 = vector.load %arg30[%c0_444, %c640_445] : memref<10x1152xbf16, #tpu.memory_space<vmem>>, vector<10x128xbf16>
    tpu.vector_store %arg30[%c0_444, %c640_445], %462 {strides = array<i32>} : memref<10x1152xbf16, #tpu.memory_space<vmem>>, vector<10x128xbf16>,
    %c6_446 = arith.constant 6 : index
    %c0_447 = arith.constant 0 : index
    %464 = vector.load %arg25[%c6_446, %c0_447] : memref<18x128xf32, #tpu.memory_space<vmem>>, vector<10x128xf32>
    %465 = arith.truncf %464 : vector<10x128xf32> to vector<10x128xbf16>
    %c0_448 = arith.constant 0 : index
    %c768_449 = arith.constant 768 : index
    %466 = vector.load %arg30[%c0_448, %c768_449] : memref<10x1152xbf16, #tpu.memory_space<vmem>>, vector<10x128xbf16>
    tpu.vector_store %arg30[%c0_448, %c768_449], %465 {strides = array<i32>} : memref<10x1152xbf16, #tpu.memory_space<vmem>>, vector<10x128xbf16>,
    %c7_450 = arith.constant 7 : index
    %c0_451 = arith.constant 0 : index
    %467 = vector.load %arg25[%c7_450, %c0_451] : memref<18x128xf32, #tpu.memory_space<vmem>>, vector<10x128xf32>
    %468 = arith.truncf %467 : vector<10x128xf32> to vector<10x128xbf16>
    %c0_452 = arith.constant 0 : index
    %c896_453 = arith.constant 896 : index
    %469 = vector.load %arg30[%c0_452, %c896_453] : memref<10x1152xbf16, #tpu.memory_space<vmem>>, vector<10x128xbf16>
    tpu.vector_store %arg30[%c0_452, %c896_453], %468 {strides = array<i32>} : memref<10x1152xbf16, #tpu.memory_space<vmem>>, vector<10x128xbf16>,
    %c8_454 = arith.constant 8 : index
    %c0_455 = arith.constant 0 : index
    %470 = vector.load %arg25[%c8_454, %c0_455] : memref<18x128xf32, #tpu.memory_space<vmem>>, vector<10x128xf32>
    %471 = arith.truncf %470 : vector<10x128xf32> to vector<10x128xbf16>
    %c0_456 = arith.constant 0 : index
    %c1024_457 = arith.constant 1024 : index
    %472 = vector.load %arg30[%c0_456, %c1024_457] : memref<10x1152xbf16, #tpu.memory_space<vmem>>, vector<10x128xbf16>
    tpu.vector_store %arg30[%c0_456, %c1024_457], %471 {strides = array<i32>} : memref<10x1152xbf16, #tpu.memory_space<vmem>>, vector<10x128xbf16>,
    %c0_458 = arith.constant 0 : index
    %c0_459 = arith.constant 0 : index
    %473 = vector.load %arg30[%c0_458, %c0_459] : memref<10x1152xbf16, #tpu.memory_space<vmem>>, vector<10x1152xbf16>
    %c0_460 = arith.constant 0 : index
    %c0_461 = arith.constant 0 : index
    %474 = vector.load %arg12[%c0_460, %c0_461] : memref<1152x128xbf16, #tpu.memory_space<vmem>>, vector<1152x128xbf16>
    %cst_462 = arith.constant dense<0.000000e+00> : vector<10x128xf32>
    %475 = tpu.matmul %473, %474, %cst_462 {dimension_numbers = #tpu.dot_dimension_numbers<[1], [0], [0], [1], [0, 0, 1, 1], [], []>} : vector<10x1152xbf16>, vector<1152x128xbf16>, vector<10x128xf32> -> vector<10x128xf32>
    %c0_463 = arith.constant 0 : index
    %c0_464 = arith.constant 0 : index
    %476 = vector.load %arg13[%c0_463, %c0_464] : memref<1x128xf32, #tpu.memory_space<vmem>>, vector<1x128xf32>
    %477 = vector.broadcast %476 : vector<1x128xf32> to vector<10x128xf32>
    %478 = arith.addf %475, %477 : vector<10x128xf32>
    %cst_465 = arith.constant 0.000000e+00 : f32
    %479 = vector.broadcast %cst_465 : f32 to vector<10x128xf32>
    %480 = arith.maximumf %478, %479 : vector<10x128xf32>
    %481 = vector.extract_strided_slice %480 {offsets = [0, 0], sizes = [1, 128], strides = [1, 1]} : vector<10x128xf32> to vector<1x128xf32>
    %c4_466 = arith.constant 4 : index
    %c0_467 = arith.constant 0 : index
    %482 = vector.load %arg26[%c4_466, %c0_467] : memref<18x128xf32, #tpu.memory_space<vmem>>, vector<1x128xf32>
    tpu.vector_store %arg26[%c4_466, %c0_467], %481 {strides = array<i32>} : memref<18x128xf32, #tpu.memory_space<vmem>>, vector<1x128xf32>,
    %483 = vector.extract_strided_slice %480 {offsets = [9, 0], sizes = [1, 128], strides = [1, 1]} : vector<10x128xf32> to vector<1x128xf32>
    %c13_468 = arith.constant 13 : index
    %c0_469 = arith.constant 0 : index
    %484 = vector.load %arg26[%c13_468, %c0_469] : memref<18x128xf32, #tpu.memory_space<vmem>>, vector<1x128xf32>
    tpu.vector_store %arg26[%c13_468, %c0_469], %483 {strides = array<i32>} : memref<18x128xf32, #tpu.memory_space<vmem>>, vector<1x128xf32>,
    %c0_470 = arith.constant 0 : index
    %c0_471 = arith.constant 0 : index
    %485 = vector.load %arg26[%c0_470, %c0_471] : memref<18x128xf32, #tpu.memory_space<vmem>>, vector<10x128xf32>
    %486 = arith.truncf %485 : vector<10x128xf32> to vector<10x128xbf16>
    %c0_472 = arith.constant 0 : index
    %c0_473 = arith.constant 0 : index
    %487 = vector.load %arg30[%c0_472, %c0_473] : memref<10x1152xbf16, #tpu.memory_space<vmem>>, vector<10x128xbf16>
    tpu.vector_store %arg30[%c0_472, %c0_473], %486 {strides = array<i32>} : memref<10x1152xbf16, #tpu.memory_space<vmem>>, vector<10x128xbf16>,
    %c1_474 = arith.constant 1 : index
    %c0_475 = arith.constant 0 : index
    %488 = vector.load %arg26[%c1_474, %c0_475] : memref<18x128xf32, #tpu.memory_space<vmem>>, vector<10x128xf32>
    %489 = arith.truncf %488 : vector<10x128xf32> to vector<10x128xbf16>
    %c0_476 = arith.constant 0 : index
    %c128_477 = arith.constant 128 : index
    %490 = vector.load %arg30[%c0_476, %c128_477] : memref<10x1152xbf16, #tpu.memory_space<vmem>>, vector<10x128xbf16>
    tpu.vector_store %arg30[%c0_476, %c128_477], %489 {strides = array<i32>} : memref<10x1152xbf16, #tpu.memory_space<vmem>>, vector<10x128xbf16>,
    %c2_478 = arith.constant 2 : index
    %c0_479 = arith.constant 0 : index
    %491 = vector.load %arg26[%c2_478, %c0_479] : memref<18x128xf32, #tpu.memory_space<vmem>>, vector<10x128xf32>
    %492 = arith.truncf %491 : vector<10x128xf32> to vector<10x128xbf16>
    %c0_480 = arith.constant 0 : index
    %c256_481 = arith.constant 256 : index
    %493 = vector.load %arg30[%c0_480, %c256_481] : memref<10x1152xbf16, #tpu.memory_space<vmem>>, vector<10x128xbf16>
    tpu.vector_store %arg30[%c0_480, %c256_481], %492 {strides = array<i32>} : memref<10x1152xbf16, #tpu.memory_space<vmem>>, vector<10x128xbf16>,
    %c3_482 = arith.constant 3 : index
    %c0_483 = arith.constant 0 : index
    %494 = vector.load %arg26[%c3_482, %c0_483] : memref<18x128xf32, #tpu.memory_space<vmem>>, vector<10x128xf32>
    %495 = arith.truncf %494 : vector<10x128xf32> to vector<10x128xbf16>
    %c0_484 = arith.constant 0 : index
    %c384_485 = arith.constant 384 : index
    %496 = vector.load %arg30[%c0_484, %c384_485] : memref<10x1152xbf16, #tpu.memory_space<vmem>>, vector<10x128xbf16>
    tpu.vector_store %arg30[%c0_484, %c384_485], %495 {strides = array<i32>} : memref<10x1152xbf16, #tpu.memory_space<vmem>>, vector<10x128xbf16>,
    %c4_486 = arith.constant 4 : index
    %c0_487 = arith.constant 0 : index
    %497 = vector.load %arg26[%c4_486, %c0_487] : memref<18x128xf32, #tpu.memory_space<vmem>>, vector<10x128xf32>
    %498 = arith.truncf %497 : vector<10x128xf32> to vector<10x128xbf16>
    %c0_488 = arith.constant 0 : index
    %c512_489 = arith.constant 512 : index
    %499 = vector.load %arg30[%c0_488, %c512_489] : memref<10x1152xbf16, #tpu.memory_space<vmem>>, vector<10x128xbf16>
    tpu.vector_store %arg30[%c0_488, %c512_489], %498 {strides = array<i32>} : memref<10x1152xbf16, #tpu.memory_space<vmem>>, vector<10x128xbf16>,
    %c5_490 = arith.constant 5 : index
    %c0_491 = arith.constant 0 : index
    %500 = vector.load %arg26[%c5_490, %c0_491] : memref<18x128xf32, #tpu.memory_space<vmem>>, vector<10x128xf32>
    %501 = arith.truncf %500 : vector<10x128xf32> to vector<10x128xbf16>
    %c0_492 = arith.constant 0 : index
    %c640_493 = arith.constant 640 : index
    %502 = vector.load %arg30[%c0_492, %c640_493] : memref<10x1152xbf16, #tpu.memory_space<vmem>>, vector<10x128xbf16>
    tpu.vector_store %arg30[%c0_492, %c640_493], %501 {strides = array<i32>} : memref<10x1152xbf16, #tpu.memory_space<vmem>>, vector<10x128xbf16>,
    %c6_494 = arith.constant 6 : index
    %c0_495 = arith.constant 0 : index
    %503 = vector.load %arg26[%c6_494, %c0_495] : memref<18x128xf32, #tpu.memory_space<vmem>>, vector<10x128xf32>
    %504 = arith.truncf %503 : vector<10x128xf32> to vector<10x128xbf16>
    %c0_496 = arith.constant 0 : index
    %c768_497 = arith.constant 768 : index
    %505 = vector.load %arg30[%c0_496, %c768_497] : memref<10x1152xbf16, #tpu.memory_space<vmem>>, vector<10x128xbf16>
    tpu.vector_store %arg30[%c0_496, %c768_497], %504 {strides = array<i32>} : memref<10x1152xbf16, #tpu.memory_space<vmem>>, vector<10x128xbf16>,
    %c7_498 = arith.constant 7 : index
    %c0_499 = arith.constant 0 : index
    %506 = vector.load %arg26[%c7_498, %c0_499] : memref<18x128xf32, #tpu.memory_space<vmem>>, vector<10x128xf32>
    %507 = arith.truncf %506 : vector<10x128xf32> to vector<10x128xbf16>
    %c0_500 = arith.constant 0 : index
    %c896_501 = arith.constant 896 : index
    %508 = vector.load %arg30[%c0_500, %c896_501] : memref<10x1152xbf16, #tpu.memory_space<vmem>>, vector<10x128xbf16>
    tpu.vector_store %arg30[%c0_500, %c896_501], %507 {strides = array<i32>} : memref<10x1152xbf16, #tpu.memory_space<vmem>>, vector<10x128xbf16>,
    %c8_502 = arith.constant 8 : index
    %c0_503 = arith.constant 0 : index
    %509 = vector.load %arg26[%c8_502, %c0_503] : memref<18x128xf32, #tpu.memory_space<vmem>>, vector<10x128xf32>
    %510 = arith.truncf %509 : vector<10x128xf32> to vector<10x128xbf16>
    %c0_504 = arith.constant 0 : index
    %c1024_505 = arith.constant 1024 : index
    %511 = vector.load %arg30[%c0_504, %c1024_505] : memref<10x1152xbf16, #tpu.memory_space<vmem>>, vector<10x128xbf16>
    tpu.vector_store %arg30[%c0_504, %c1024_505], %510 {strides = array<i32>} : memref<10x1152xbf16, #tpu.memory_space<vmem>>, vector<10x128xbf16>,
    %c0_506 = arith.constant 0 : index
    %c0_507 = arith.constant 0 : index
    %512 = vector.load %arg30[%c0_506, %c0_507] : memref<10x1152xbf16, #tpu.memory_space<vmem>>, vector<10x1152xbf16>
    %c0_508 = arith.constant 0 : index
    %c0_509 = arith.constant 0 : index
    %513 = vector.load %arg14[%c0_508, %c0_509] : memref<1152x128xbf16, #tpu.memory_space<vmem>>, vector<1152x128xbf16>
    %cst_510 = arith.constant dense<0.000000e+00> : vector<10x128xf32>
    %514 = tpu.matmul %512, %513, %cst_510 {dimension_numbers = #tpu.dot_dimension_numbers<[1], [0], [0], [1], [0, 0, 1, 1], [], []>} : vector<10x1152xbf16>, vector<1152x128xbf16>, vector<10x128xf32> -> vector<10x128xf32>
    %c4_511 = arith.constant 4 : index
    %c0_512 = arith.constant 0 : index
    %515 = vector.load %arg25[%c4_511, %c0_512] : memref<18x128xf32, #tpu.memory_space<vmem>>, vector<1x128xf32>
    %516 = vector.extract_strided_slice %514 {offsets = [0, 0], sizes = [1, 128], strides = [1, 1]} : vector<10x128xf32> to vector<1x128xf32>
    %517 = arith.addf %516, %515 : vector<1x128xf32>
    %c0_513 = arith.constant 0 : index
    %c0_514 = arith.constant 0 : index
    %518 = vector.load %arg27[%c0_513, %c0_514] : memref<2x128xf32, #tpu.memory_space<vmem>>, vector<1x128xf32>
    tpu.vector_store %arg27[%c0_513, %c0_514], %517 {strides = array<i32>} : memref<2x128xf32, #tpu.memory_space<vmem>>, vector<1x128xf32>,
    %c13_515 = arith.constant 13 : index
    %c0_516 = arith.constant 0 : index
    %519 = vector.load %arg25[%c13_515, %c0_516] : memref<18x128xf32, #tpu.memory_space<vmem>>, vector<1x128xf32>
    %520 = vector.extract_strided_slice %514 {offsets = [9, 0], sizes = [1, 128], strides = [1, 1]} : vector<10x128xf32> to vector<1x128xf32>
    %521 = arith.addf %520, %519 : vector<1x128xf32>
    %c1_517 = arith.constant 1 : index
    %c0_518 = arith.constant 0 : index
    %522 = vector.load %arg27[%c1_517, %c0_518] : memref<2x128xf32, #tpu.memory_space<vmem>>, vector<1x128xf32>
    tpu.vector_store %arg27[%c1_517, %c0_518], %521 {strides = array<i32>} : memref<2x128xf32, #tpu.memory_space<vmem>>, vector<1x128xf32>,
    %c0_519 = arith.constant 0 : index
    %c0_520 = arith.constant 0 : index
    %523 = vector.load %arg27[%c0_519, %c0_520] : memref<2x128xf32, #tpu.memory_space<vmem>>, vector<2x128xf32>
    %524 = arith.truncf %523 : vector<2x128xf32> to vector<2x128xbf16>
    %c0_521 = arith.constant 0 : index
    %c0_522 = arith.constant 0 : index
    %525 = vector.load %arg15[%c0_521, %c0_522] : memref<128x128xbf16, #tpu.memory_space<vmem>>, vector<128x128xbf16>
    %cst_523 = arith.constant dense<0.000000e+00> : vector<2x128xf32>
    %526 = tpu.matmul %524, %525, %cst_523 {dimension_numbers = #tpu.dot_dimension_numbers<[1], [0], [0], [1], [0, 0, 1, 1], [], []>} : vector<2x128xbf16>, vector<128x128xbf16>, vector<2x128xf32> -> vector<2x128xf32>
    %527 = vector.extract_strided_slice %526 {offsets = [0, 0], sizes = [1, 128], strides = [1, 1]} : vector<2x128xf32> to vector<1x128xf32>
    %cst_524 = arith.constant dense<0.000000e+00> : vector<128xf32>
    %528 = vector.multi_reduction <add>, %527, %cst_524 [0] : vector<1x128xf32> to vector<128xf32>
    %529 = vector.shape_cast %528 : vector<128xf32> to vector<1x128xf32>
    %cst_525 = arith.constant 1.000000e+00 : f32
    %530 = vector.broadcast %cst_525 : f32 to vector<1x128xf32>
    %531 = arith.divf %529, %530 : vector<1x128xf32>
    %c0_526 = arith.constant 0 : index
    %c0_527 = arith.constant 0 : index
    %532 = vector.load %arg16[%c0_526, %c0_527] : memref<1x128xf32, #tpu.memory_space<vmem>>, vector<1x128xf32>
    %533 = arith.addf %531, %532 : vector<1x128xf32>
    %c0_528 = arith.constant 0 : index
    %c0_529 = arith.constant 0 : index
    %534 = vector.load %arg17[%c0_528, %c0_529] : memref<2x128xf32, #tpu.memory_space<vmem>>, vector<1x128xf32>
    tpu.vector_store %arg17[%c0_528, %c0_529], %533 {strides = array<i32>} : memref<2x128xf32, #tpu.memory_space<vmem>>, vector<1x128xf32>,
    %535 = vector.extract_strided_slice %526 {offsets = [1, 0], sizes = [1, 128], strides = [1, 1]} : vector<2x128xf32> to vector<1x128xf32>
    %cst_530 = arith.constant dense<0.000000e+00> : vector<128xf32>
    %536 = vector.multi_reduction <add>, %535, %cst_530 [0] : vector<1x128xf32> to vector<128xf32>
    %537 = vector.shape_cast %536 : vector<128xf32> to vector<1x128xf32>
    %cst_531 = arith.constant 1.000000e+00 : f32
    %538 = vector.broadcast %cst_531 : f32 to vector<1x128xf32>
    %539 = arith.divf %537, %538 : vector<1x128xf32>
    %c0_532 = arith.constant 0 : index
    %c0_533 = arith.constant 0 : index
    %540 = vector.load %arg16[%c0_532, %c0_533] : memref<1x128xf32, #tpu.memory_space<vmem>>, vector<1x128xf32>
    %541 = arith.addf %539, %540 : vector<1x128xf32>
    %c1_534 = arith.constant 1 : index
    %c0_535 = arith.constant 0 : index
    %542 = vector.load %arg17[%c1_534, %c0_535] : memref<2x128xf32, #tpu.memory_space<vmem>>, vector<1x128xf32>
    tpu.vector_store %arg17[%c1_534, %c0_535], %541 {strides = array<i32>} : memref<2x128xf32, #tpu.memory_space<vmem>>, vector<1x128xf32>,
    return
  }
}

</mosaic_0001>

<llo_original>
// kernel: feature_extractor.1
$region0: #{feature_extractor.1}
  #allocation0 [shape = 'u32[]', space=smem, size = 0x4, offset = 0x4, fixed_abs, tag = 'smem constant byte address 0x4 - core index']
  #allocation1 [shape = 'u32[144,128]{1,0:T(1,128)}', space=vmem, size = 0x12000, scoped, tag = 'internal scratch']
  #allocation2 [shape = 'f32[200,64]{1,0:T(8,128)}', space=vmem, size = 0x19000, scoped, tag = 'scratch operand']
  #allocation3 [shape = 'f32[72,64]{1,0:T(8,128)}', space=vmem, size = 0x9000, scoped, tag = 'scratch operand']
  #allocation4 [shape = 'f32[32,96]{1,0:T(8,128)}', space=vmem, size = 0x4000, scoped, tag = 'scratch operand']
  #allocation5 [shape = 'f32[32,96]{1,0:T(8,128)}', space=vmem, size = 0x4000, scoped, tag = 'scratch operand']
  #allocation6 [shape = 'f32[32,96]{1,0:T(8,128)}', space=vmem, size = 0x4000, scoped, tag = 'scratch operand']
  #allocation7 [shape = 'f32[32,96]{1,0:T(8,128)}', space=vmem, size = 0x4000, scoped, tag = 'scratch operand']
  #allocation8 [shape = 'f32[18,128]{1,0:T(8,128)}', space=vmem, size = 0x3000, scoped, tag = 'scratch operand']
  #allocation9 [shape = 'f32[18,128]{1,0:T(8,128)}', space=vmem, size = 0x3000, scoped, tag = 'scratch operand']
  #allocation10 [shape = 'f32[18,128]{1,0:T(8,128)}', space=vmem, size = 0x3000, scoped, tag = 'scratch operand']
  #allocation11 [shape = 'f32[2,128]{1,0:T(2,128)}', space=vmem, size = 0x400, scoped, tag = 'scratch operand']
  #allocation12 [shape = 'bf16[58,576]{1,0:T(8,128)(2,1)}', space=vmem, size = 0x14000, scoped, tag = 'scratch operand']
  #allocation13 [shape = 'bf16[22,864]{1,0:T(8,128)(2,1)}', space=vmem, size = 0xa800, scoped, tag = 'scratch operand']
  #allocation14 [shape = 'bf16[10,1152]{1,0:T(8,128)(2,1)}', space=vmem, size = 0x9000, scoped, tag = 'scratch operand']
  %s0 = inlined_call_operand.vmem [shape: bf16[128,196], index: 0, kind: input, shape index: {}]
  %s1 = inlined_call_operand.vmem [shape: bf16[196,64], index: 1, kind: input, shape index: {}]
  %s2 = inlined_call_operand.vmem [shape: f32[1,64], index: 2, kind: input, shape index: {}]
  %s3 = inlined_call_operand.vmem [shape: bf16[576,192], index: 3, kind: input, shape index: {}]
  %s4 = inlined_call_operand.vmem [shape: f32[1,96], index: 4, kind: input, shape index: {}]
  %s5 = inlined_call_operand.vmem [shape: bf16[864,96], index: 5, kind: input, shape index: {}]
  %s6 = inlined_call_operand.vmem [shape: bf16[864,96], index: 6, kind: input, shape index: {}]
  %s7 = inlined_call_operand.vmem [shape: f32[1,96], index: 7, kind: input, shape index: {}]
  %s8 = inlined_call_operand.vmem [shape: bf16[864,96], index: 8, kind: input, shape index: {}]
  %s9 = inlined_call_operand.vmem [shape: bf16[864,256], index: 9, kind: input, shape index: {}]
  %s10 = inlined_call_operand.vmem [shape: f32[1,128], index: 10, kind: input, shape index: {}]
  %s11 = inlined_call_operand.vmem [shape: bf16[1152,128], index: 11, kind: input, shape index: {}]
  %s12 = inlined_call_operand.vmem [shape: bf16[1152,128], index: 12, kind: input, shape index: {}]
  %s13 = inlined_call_operand.vmem [shape: f32[1,128], index: 13, kind: input, shape index: {}]
  %s14 = inlined_call_operand.vmem [shape: bf16[1152,128], index: 14, kind: input, shape index: {}]
  %s15 = inlined_call_operand.vmem [shape: bf16[128,128], index: 15, kind: input, shape index: {}]
  %s16 = inlined_call_operand.vmem [shape: f32[1,128], index: 16, kind: input, shape index: {}]
  %s17 = inlined_call_operand.hbm [shape: f32[2,128], index: 17, kind: output, shape index: {}]
  %s18 = sld [smem:[#allocation0]]
  $region78: #{feature_extractor.1} parent=0
    _
  %s20 = ssub.s32 1, %s18
  %s21 = scalar_select 0, %s20, %s18
  $region1: #{feature_extractor.1} parent=0
    #allocation15 [shape = 'u8[1024]{0}', space=vmem, size = 0x400, scoped, tag = 'output window, operand 0, single buffered']
    #allocation16 [shape = 's32[1]{0}', space=sflag, size = 0x4, scoped, tag = 'scoped memory for feature_extractor.1']
    %22 = vsyncpa [#allocation16], 0
    // Predicated region
    $region2: #{feature_extractor.1} parent=1 // pred_check
      _
    $region3: #{feature_extractor.1} parent=1 // pred_check_branch
      %24 = sbr.rel (0) target = $region5
    $region4: #{feature_extractor.1} parent=1 // pred_region
      _
    $region5: #{feature_extractor.1} parent=1 // pred_fallthru
      _
    // Predicated region
    $region6: #{feature_extractor.1} parent=1 // pred_check
      _
    $region7: #{feature_extractor.1} parent=1 // pred_check_branch
      %26 = sbr.rel (0) target = $region9
    $region8: #{feature_extractor.1} parent=1 // pred_region
      _
    $region9: #{feature_extractor.1} parent=1 // pred_fallthru
      _
    // Predicated region
    $region10: #{feature_extractor.1} parent=1 // pred_check
      _
    $region11: #{feature_extractor.1} parent=1 // pred_check_branch
      %28 = sbr.rel (0) target = $region13
    $region12: #{feature_extractor.1} parent=1 // pred_region
      _
    $region13: #{feature_extractor.1} parent=1 // pred_fallthru
      _
    // Predicated region
    $region14: #{feature_extractor.1} parent=1 // pred_check
      _
    $region15: #{feature_extractor.1} parent=1 // pred_check_branch
      %30 = sbr.rel (0) target = $region17
    $region16: #{feature_extractor.1} parent=1 // pred_region
      _
    $region17: #{feature_extractor.1} parent=1 // pred_fallthru
      _
    // Predicated region
    $region18: #{feature_extractor.1} parent=1 // pred_check
      _
    $region19: #{feature_extractor.1} parent=1 // pred_check_branch
      %32 = sbr.rel (0) target = $region21
    $region20: #{feature_extractor.1} parent=1 // pred_region
      _
    $region21: #{feature_extractor.1} parent=1 // pred_fallthru
      _
    // Predicated region
    $region22: #{feature_extractor.1} parent=1 // pred_check
      _
    $region23: #{feature_extractor.1} parent=1 // pred_check_branch
      %34 = sbr.rel (0) target = $region25
    $region24: #{feature_extractor.1} parent=1 // pred_region
      _
    $region25: #{feature_extractor.1} parent=1 // pred_fallthru
      _
    // Predicated region
    $region26: #{feature_extractor.1} parent=1 // pred_check
      _
    $region27: #{feature_extractor.1} parent=1 // pred_check_branch
      %36 = sbr.rel (0) target = $region29
    $region28: #{feature_extractor.1} parent=1 // pred_region
      _
    $region29: #{feature_extractor.1} parent=1 // pred_fallthru
      _
    // Predicated region
    $region30: #{feature_extractor.1} parent=1 // pred_check
      _
    $region31: #{feature_extractor.1} parent=1 // pred_check_branch
      %38 = sbr.rel (0) target = $region33
    $region32: #{feature_extractor.1} parent=1 // pred_region
      _
    $region33: #{feature_extractor.1} parent=1 // pred_fallthru
      _
    // Predicated region
    $region34: #{feature_extractor.1} parent=1 // pred_check
      _
    $region35: #{feature_extractor.1} parent=1 // pred_check_branch
      %40 = sbr.rel (0) target = $region37
    $region36: #{feature_extractor.1} parent=1 // pred_region
      _
    $region37: #{feature_extractor.1} parent=1 // pred_fallthru
      _
    // Predicated region
    $region38: #{feature_extractor.1} parent=1 // pred_check
      _
    $region39: #{feature_extractor.1} parent=1 // pred_check_branch
      %42 = sbr.rel (0) target = $region41
    $region40: #{feature_extractor.1} parent=1 // pred_region
      _
    $region41: #{feature_extractor.1} parent=1 // pred_fallthru
      _
    // Predicated region
    $region42: #{feature_extractor.1} parent=1 // pred_check
      _
    $region43: #{feature_extractor.1} parent=1 // pred_check_branch
      %44 = sbr.rel (0) target = $region45
    $region44: #{feature_extractor.1} parent=1 // pred_region
      _
    $region45: #{feature_extractor.1} parent=1 // pred_fallthru
      _
    // Predicated region
    $region46: #{feature_extractor.1} parent=1 // pred_check
      _
    $region47: #{feature_extractor.1} parent=1 // pred_check_branch
      %46 = sbr.rel (0) target = $region49
    $region48: #{feature_extractor.1} parent=1 // pred_region
      _
    $region49: #{feature_extractor.1} parent=1 // pred_fallthru
      _
    // Predicated region
    $region50: #{feature_extractor.1} parent=1 // pred_check
      _
    $region51: #{feature_extractor.1} parent=1 // pred_check_branch
      %48 = sbr.rel (0) target = $region53
    $region52: #{feature_extractor.1} parent=1 // pred_region
      _
    $region53: #{feature_extractor.1} parent=1 // pred_fallthru
      _
    // Predicated region
    $region54: #{feature_extractor.1} parent=1 // pred_check
      _
    $region55: #{feature_extractor.1} parent=1 // pred_check_branch
      %50 = sbr.rel (0) target = $region57
    $region56: #{feature_extractor.1} parent=1 // pred_region
      _
    $region57: #{feature_extractor.1} parent=1 // pred_fallthru
      _
    // Predicated region
    $region58: #{feature_extractor.1} parent=1 // pred_check
      _
    $region59: #{feature_extractor.1} parent=1 // pred_check_branch
      %52 = sbr.rel (0) target = $region61
    $region60: #{feature_extractor.1} parent=1 // pred_region
      _
    $region61: #{feature_extractor.1} parent=1 // pred_fallthru
      _
    // Predicated region
    $region62: #{feature_extractor.1} parent=1 // pred_check
      _
    $region63: #{feature_extractor.1} parent=1 // pred_check_branch
      %54 = sbr.rel (0) target = $region65
    $region64: #{feature_extractor.1} parent=1 // pred_region
      _
    $region65: #{feature_extractor.1} parent=1 // pred_fallthru
      _
    // Predicated region
    $region66: #{feature_extractor.1} parent=1 // pred_check
      _
    $region67: #{feature_extractor.1} parent=1 // pred_check_branch
      %56 = sbr.rel (0) target = $region69
    $region68: #{feature_extractor.1} parent=1 // pred_region
      _
    $region69: #{feature_extractor.1} parent=1 // pred_fallthru
      _
    %vm58 = vcmask 523264
    %59 = vst.msk [vmem:[#allocation2] sm:$0xff] %vm58, 0.0
    %60 = vst.msk [vmem:[#allocation2 + $0x8] sm:$0xff] %vm58, 0.0
    %61 = vst.msk [vmem:[#allocation2 + $0x10] sm:$0xff] %vm58, 0.0
    %62 = vst.msk [vmem:[#allocation2 + $0x18] sm:$0xff] %vm58, 0.0
    %63 = vst.msk [vmem:[#allocation2 + $0x20] sm:$0xff] %vm58, 0.0
    %64 = vst.msk [vmem:[#allocation2 + $0x28] sm:$0xff] %vm58, 0.0
    %65 = vst.msk [vmem:[#allocation2 + $0x30] sm:$0xff] %vm58, 0.0
    %66 = vst.msk [vmem:[#allocation2 + $0x38] sm:$0xff] %vm58, 0.0
    %67 = vst.msk [vmem:[#allocation2 + $0x40] sm:$0xff] %vm58, 0.0
    %68 = vst.msk [vmem:[#allocation2 + $0x48] sm:$0xff] %vm58, 0.0
    %69 = vst.msk [vmem:[#allocation2 + $0x50] sm:$0xff] %vm58, 0.0
    %70 = vst.msk [vmem:[#allocation2 + $0x58] sm:$0xff] %vm58, 0.0
    %71 = vst.msk [vmem:[#allocation2 + $0x60] sm:$0xff] %vm58, 0.0
    %72 = vst.msk [vmem:[#allocation2 + $0x68] sm:$0xff] %vm58, 0.0
    %73 = vst.msk [vmem:[#allocation2 + $0x70] sm:$0xff] %vm58, 0.0
    %74 = vst.msk [vmem:[#allocation2 + $0x78] sm:$0xff] %vm58, 0.0
    %75 = vst.msk [vmem:[#allocation2 + $0x80] sm:$0xff] %vm58, 0.0
    %76 = vst.msk [vmem:[#allocation2 + $0x88] sm:$0xff] %vm58, 0.0
    %77 = vst.msk [vmem:[#allocation2 + $0x90] sm:$0xff] %vm58, 0.0
    %78 = vst.msk [vmem:[#allocation2 + $0x98] sm:$0xff] %vm58, 0.0
    %79 = vst.msk [vmem:[#allocation2 + $0xa0] sm:$0xff] %vm58, 0.0
    %80 = vst.msk [vmem:[#allocation2 + $0xa8] sm:$0xff] %vm58, 0.0
    %81 = vst.msk [vmem:[#allocation2 + $0xb0] sm:$0xff] %vm58, 0.0
    %82 = vst.msk [vmem:[#allocation2 + $0xb8] sm:$0xff] %vm58, 0.0
    %83 = vst.msk [vmem:[#allocation2 + $0xc0] sm:$0xff] %vm58, 0.0
    %84 = vst.msk [vmem:[#allocation3] sm:$0xff] %vm58, 0.0
    %85 = vst.msk [vmem:[#allocation3 + $0x8] sm:$0xff] %vm58, 0.0
    %86 = vst.msk [vmem:[#allocation3 + $0x10] sm:$0xff] %vm58, 0.0
    %87 = vst.msk [vmem:[#allocation3 + $0x18] sm:$0xff] %vm58, 0.0
    %88 = vst.msk [vmem:[#allocation3 + $0x20] sm:$0xff] %vm58, 0.0
    %89 = vst.msk [vmem:[#allocation3 + $0x28] sm:$0xff] %vm58, 0.0
    %90 = vst.msk [vmem:[#allocation3 + $0x30] sm:$0xff] %vm58, 0.0
    %91 = vst.msk [vmem:[#allocation3 + $0x38] sm:$0xff] %vm58, 0.0
    %92 = vst.msk [vmem:[#allocation3 + $0x40] sm:$0xff] %vm58, 0.0
    %vm93 = vcmask 785408
    %94 = vst.msk [vmem:[#allocation4] sm:$0xff] %vm93, 0.0
    %95 = vst.msk [vmem:[#allocation4 + $0x8] sm:$0xff] %vm93, 0.0
    %96 = vst.msk [vmem:[#allocation4 + $0x10] sm:$0xff] %vm93, 0.0
    %97 = vst.msk [vmem:[#allocation4 + $0x18] sm:$0xff] %vm93, 0.0
    %98 = vst.msk [vmem:[#allocation5] sm:$0xff] %vm93, 0.0
    %99 = vst.msk [vmem:[#allocation5 + $0x8] sm:$0xff] %vm93, 0.0
    %100 = vst.msk [vmem:[#allocation5 + $0x10] sm:$0xff] %vm93, 0.0
    %101 = vst.msk [vmem:[#allocation5 + $0x18] sm:$0xff] %vm93, 0.0
    %102 = vst.msk [vmem:[#allocation6] sm:$0xff] %vm93, 0.0
    %103 = vst.msk [vmem:[#allocation6 + $0x8] sm:$0xff] %vm93, 0.0
    %104 = vst.msk [vmem:[#allocation6 + $0x10] sm:$0xff] %vm93, 0.0
    %105 = vst.msk [vmem:[#allocation6 + $0x18] sm:$0xff] %vm93, 0.0
    %106 = vst.msk [vmem:[#allocation7] sm:$0xff] %vm93, 0.0
    %107 = vst.msk [vmem:[#allocation7 + $0x8] sm:$0xff] %vm93, 0.0
    %108 = vst.msk [vmem:[#allocation7 + $0x10] sm:$0xff] %vm93, 0.0
    %109 = vst.msk [vmem:[#allocation7 + $0x18] sm:$0xff] %vm93, 0.0
    %110 = vst [vmem:[#allocation8] sm:$0xff] 0.0
    %111 = vst [vmem:[#allocation8 + $0x8] sm:$0xff] 0.0
    %112 = vst [vmem:[#allocation8 + $0x10] sm:$0x3] 0.0
    %113 = vst [vmem:[#allocation9] sm:$0xff] 0.0
    %114 = vst [vmem:[#allocation9 + $0x8] sm:$0xff] 0.0
    %115 = vst [vmem:[#allocation9 + $0x10] sm:$0x3] 0.0
    %116 = vst [vmem:[#allocation10] sm:$0xff] 0.0
    %117 = vst [vmem:[#allocation10 + $0x8] sm:$0xff] 0.0
    %118 = vst [vmem:[#allocation10 + $0x10] sm:$0x3] 0.0
    %v119 = vld [vmem:[%s0] sm:$0xff]
    %v120 = vld [vmem:[%s0 + $0x8] sm:$0xff]
    %v121 = vld [vmem:[%s0 + $0x10] sm:$0xff]
    %v122 = vld [vmem:[%s0 + $0x18] sm:$0xff]
    %v123 = vld [vmem:[%s0 + $0x20] sm:$0xff]
    %v124 = vld [vmem:[%s0 + $0x28] sm:$0xff]
    %v125 = vld [vmem:[%s0 + $0x30] sm:$0xff]
    %v126 = vld [vmem:[%s0 + $0x38] sm:$0xff]
    %v127 = vld [vmem:[%s0 + $0x40] sm:$0xff]
    %v128 = vld [vmem:[%s0 + $0x48] sm:$0xff]
    %v129 = vld [vmem:[%s0 + $0x50] sm:$0xff]
    %v130 = vld [vmem:[%s0 + $0x58] sm:$0xff]
    %v131 = vld [vmem:[%s0 + $0x60] sm:$0xff]
    %v132 = vld [vmem:[%s0 + $0x68] sm:$0xff]
    %v133 = vld [vmem:[%s0 + $0x70] sm:$0xff]
    %v134 = vld [vmem:[%s0 + $0x78] sm:$0xff]
    %v135 = vld [vmem:[%s1] sm:$0xf]
    %v136 = vld [vmem:[%s1 + $0x4] sm:$0xf]
    %v137 = vld [vmem:[%s1 + $0x8] sm:$0xf]
    %v138 = vld [vmem:[%s1 + $0xc] sm:$0xf]
    %v139 = vld [vmem:[%s1 + $0x10] sm:$0xf]
    %v140 = vld [vmem:[%s1 + $0x14] sm:$0xf]
    %v141 = vld [vmem:[%s1 + $0x18] sm:$0xf]
    %v142 = vld [vmem:[%s1 + $0x1c] sm:$0xf]
    %v143 = vld [vmem:[%s1 + $0x20] sm:$0xf]
    %v144 = vld [vmem:[%s1 + $0x24] sm:$0xf]
    %v145 = vld [vmem:[%s1 + $0x28] sm:$0xf]
    %v146 = vld [vmem:[%s1 + $0x2c] sm:$0xf]
    %v147 = vld [vmem:[%s1 + $0x30] sm:$0xf]
    %v148 = vld [vmem:[%s1 + $0x34] sm:$0xf]
    %v149 = vld [vmem:[%s1 + $0x38] sm:$0xf]
    %v150 = vld [vmem:[%s1 + $0x3c] sm:$0xf]
    %v151 = vld [vmem:[%s1 + $0x40] sm:$0xf]
    %v152 = vld [vmem:[%s1 + $0x44] sm:$0xf]
    %v153 = vld [vmem:[%s1 + $0x48] sm:$0xf]
    %v154 = vld [vmem:[%s1 + $0x4c] sm:$0xf]
    %v155 = vld [vmem:[%s1 + $0x50] sm:$0xf]
    %v156 = vld [vmem:[%s1 + $0x54] sm:$0xf]
    %v157 = vld [vmem:[%s1 + $0x58] sm:$0xf]
    %v158 = vld [vmem:[%s1 + $0x5c] sm:$0xf]
    %v159 = vld [vmem:[%s1 + $0x60] sm:$0x3]
    %v160 = vld [vmem:[%s2] sm:$0x1]
    %v162 = vlaneseq
    %v163 = vshrl.u32 %v162, 7
    %v164 = vsub.s32 0, %v163
    %v165 = vrot.slane %v160, %v164
    %v183 = vunpack.c.l.b16 %v119
    %v184 = vunpack.c.h.b16 %v119
    %v185 = vunpack.c.l.b16 %v120
    %v186 = vunpack.c.h.b16 %v120
    %v187 = vunpack.c.l.b16 %v121
    %v188 = vunpack.c.h.b16 %v121
    %v189 = vunpack.c.l.b16 %v122
    %v190 = vunpack.c.h.b16 %v122
    %v191 = vunpack.c.l.b16 %v123
    %v192 = vunpack.c.h.b16 %v123
    %v193 = vunpack.c.l.b16 %v124
    %v194 = vunpack.c.h.b16 %v124
    %v195 = vunpack.c.l.b16 %v125
    %v196 = vunpack.c.h.b16 %v125
    %v197 = vunpack.c.l.b16 %v126
    %v198 = vunpack.c.h.b16 %v126
    %v199 = vunpack.c.l.b16 %v127
    %v200 = vunpack.c.h.b16 %v127
    %v201 = vunpack.c.l.b16 %v128
    %v202 = vunpack.c.h.b16 %v128
    %v203 = vunpack.c.l.b16 %v129
    %v204 = vunpack.c.h.b16 %v129
    %v205 = vunpack.c.l.b16 %v130
    %v206 = vunpack.c.h.b16 %v130
    %v207 = vunpack.c.l.b16 %v131
    %v208 = vunpack.c.h.b16 %v131
    %v209 = vunpack.c.l.b16 %v132
    %v210 = vunpack.c.h.b16 %v132
    %v211 = vunpack.c.l.b16 %v133
    %v212 = vunpack.c.h.b16 %v133
    %v213 = vunpack.c.l.b16 %v134
    %v214 = vunpack.c.h.b16 %v134
    %v215 = vpack.c.b16 %v185, %v183
    %v216 = vpack.c.b16 %v186, %v184
    %v217 = vpack.c.b16 %v189, %v187
    %v218 = vpack.c.b16 %v190, %v188
    %v219 = vpack.c.b16 %v193, %v191
    %v220 = vpack.c.b16 %v194, %v192
    %v221 = vpack.c.b16 %v197, %v195
    %v222 = vpack.c.b16 %v198, %v196
    %v223 = vpack.c.b16 %v201, %v199
    %v224 = vpack.c.b16 %v202, %v200
    %v225 = vpack.c.b16 %v205, %v203
    %v226 = vpack.c.b16 %v206, %v204
    %v227 = vpack.c.b16 %v209, %v207
    %v228 = vpack.c.b16 %v210, %v208
    %v229 = vpack.c.b16 %v213, %v211
    %v230 = vpack.c.b16 %v214, %v212
    %v264 = vunpack.c.l.b16 %v135
    %v265 = vunpack.c.l.b16 %v136
    %v266 = vunpack.c.l.b16 %v137
    %v267 = vunpack.c.l.b16 %v138
    %v268 = vunpack.c.l.b16 %v139
    %v269 = vunpack.c.l.b16 %v140
    %v270 = vunpack.c.l.b16 %v141
    %v271 = vunpack.c.l.b16 %v142
    %v272 = vunpack.c.l.b16 %v143
    %v273 = vunpack.c.l.b16 %v144
    %v274 = vunpack.c.l.b16 %v145
    %v275 = vunpack.c.l.b16 %v146
    %v276 = vunpack.c.l.b16 %v147
    %v277 = vunpack.c.l.b16 %v148
    %v278 = vunpack.c.l.b16 %v149
    %v279 = vunpack.c.l.b16 %v150
    %v280 = vunpack.c.l.b16 %v151
    %v281 = vunpack.c.l.b16 %v152
    %v282 = vunpack.c.l.b16 %v153
    %v283 = vunpack.c.l.b16 %v154
    %v284 = vunpack.c.l.b16 %v155
    %v285 = vunpack.c.l.b16 %v156
    %v286 = vunpack.c.l.b16 %v157
    %v287 = vunpack.c.l.b16 %v158
    %v288 = vunpack.c.l.b16 %v159
    %v289 = vpack.c.b16 %v265, %v264
    %v290 = vpack.c.b16 %v267, %v266
    %v291 = vpack.c.b16 %v269, %v268
    %v292 = vpack.c.b16 %v271, %v270
    %v293 = vpack.c.b16 %v273, %v272
    %v294 = vpack.c.b16 %v275, %v274
    %v295 = vpack.c.b16 %v277, %v276
    %v296 = vpack.c.b16 %v279, %v278
    %v297 = vpack.c.b16 %v281, %v280
    %v298 = vpack.c.b16 %v283, %v282
    %v299 = vpack.c.b16 %v285, %v284
    %v300 = vpack.c.b16 %v287, %v286
    %v301 = vpack.c.b16 %v288, %v288
    %vm314 = vcmask 556032
    %v316 = vsel %vm314, %v216, 0
    %v319 = vsel %vm314, %v218, 0
    %v322 = vsel %vm314, %v220, 0
    %v325 = vsel %vm314, %v222, 0
    %v328 = vsel %vm314, %v224, 0
    %v331 = vsel %vm314, %v226, 0
    %v334 = vsel %vm314, %v228, 0
    %v337 = vsel %vm314, %v230, 0
    %vm339 = vcmask 1041408
    %v341 = vsel %vm339, %v301, 0
    %343 = vmatprep.subr.bf16.mxu0 0
    %344 = vmatpush1.bf16.msra.mxu0 %v296
    %345 = vmatprep.subr.bf16.mxu0 0
    %346 = vmatpush1.bf16.msra.mxu0 %v295
    %347 = vmatprep.subr.bf16.mxu0 0
    %348 = vmatpush1.bf16.msra.mxu0 %v294
    %349 = vmatprep.subr.bf16.mxu0 0
    %350 = vmatpush1.bf16.msra.mxu0 %v293
    %351 = vmatprep.subr.bf16.mxu0 0
    %352 = vmatpush1.bf16.msra.mxu0 %v292
    %353 = vmatprep.subr.bf16.mxu0 0
    %354 = vmatpush1.bf16.msra.mxu0 %v291
    %355 = vmatprep.subr.bf16.mxu0 0
    %356 = vmatpush1.bf16.msra.mxu0 %v290
    %357 = vmatprep.subr.bf16.mxu0 0
    %358 = vmatpush1.bf16.msra.mxu0 %v289
    %359 = vmatprep.subr.bf16.mxu0 0
    %360 = vmatpush2.bf16.msra.mxu0 0
    %361 = vmatprep.subr.bf16.mxu0 0
    %362 = vmatpush2.bf16.msra.mxu0 0
    %363 = vmatprep.subr.bf16.mxu0 0
    %364 = vmatpush2.bf16.msra.mxu0 0
    %365 = vmatprep.subr.bf16.mxu0 0
    %366 = vmatpush2.bf16.msra.mxu0 %v341
    %367 = vmatprep.subr.bf16.mxu0 0
    %368 = vmatpush2.bf16.msra.mxu0 %v300
    %369 = vmatprep.subr.bf16.mxu0 0
    %370 = vmatpush2.bf16.msra.mxu0 %v299
    %371 = vmatprep.subr.bf16.mxu0 0
    %372 = vmatpush2.bf16.msra.mxu0 %v298
    %373 = vmatprep.subr.bf16.mxu0 0
    %374 = vmatpush2.bf16.msra.mxu0 %v297
    %375 = vmatprep.mubr.bf16.mxu0 %v316
    %376 = vmatmul.mubr.bf16.gmra.mxu0 %v215
    %v377 = vpop.f32.mrf.mxu0
    %v378 = vadd.f32 %v165, %v377
    %v379 = vpop.f32.mrf.mxu0
    %v380 = vpop.f32.mrf.mxu0
    %v381 = vadd.f32 %v165, %v380
    %v382 = vpop.f32.mrf.mxu0
    %383 = vmatprep.mubr.bf16.mxu0 %v319
    %384 = vmatmul.mubr.bf16.gmra.mxu0 %v217
    %v385 = vpop.f32.mrf.mxu0
    %v386 = vadd.f32 %v165, %v385
    %v387 = vpop.f32.mrf.mxu0
    %v388 = vpop.f32.mrf.mxu0
    %v389 = vadd.f32 %v165, %v388
    %v390 = vpop.f32.mrf.mxu0
    %391 = vmatprep.mubr.bf16.mxu0 %v322
    %392 = vmatmul.mubr.bf16.gmra.mxu0 %v219
    %v393 = vpop.f32.mrf.mxu0
    %v394 = vadd.f32 %v165, %v393
    %v395 = vpop.f32.mrf.mxu0
    %v396 = vpop.f32.mrf.mxu0
    %v397 = vadd.f32 %v165, %v396
    %v398 = vpop.f32.mrf.mxu0
    %399 = vmatprep.mubr.bf16.mxu0 %v325
    %400 = vmatmul.mubr.bf16.gmra.mxu0 %v221
    %v401 = vpop.f32.mrf.mxu0
    %v402 = vadd.f32 %v165, %v401
    %v403 = vpop.f32.mrf.mxu0
    %v404 = vpop.f32.mrf.mxu0
    %v405 = vadd.f32 %v165, %v404
    %v406 = vpop.f32.mrf.mxu0
    %407 = vmatprep.mubr.bf16.mxu0 %v328
    %408 = vmatmul.mubr.bf16.gmra.mxu0 %v223
    %v409 = vpop.f32.mrf.mxu0
    %v410 = vadd.f32 %v165, %v409
    %v411 = vpop.f32.mrf.mxu0
    %v412 = vpop.f32.mrf.mxu0
    %v413 = vadd.f32 %v165, %v412
    %v414 = vpop.f32.mrf.mxu0
    %415 = vmatprep.mubr.bf16.mxu0 %v331
    %416 = vmatmul.mubr.bf16.gmra.mxu0 %v225
    %v417 = vpop.f32.mrf.mxu0
    %v418 = vadd.f32 %v165, %v417
    %v419 = vpop.f32.mrf.mxu0
    %v420 = vpop.f32.mrf.mxu0
    %v421 = vadd.f32 %v165, %v420
    %v422 = vpop.f32.mrf.mxu0
    %423 = vmatprep.mubr.bf16.mxu0 %v334
    %424 = vmatmul.mubr.bf16.gmra.mxu0 %v227
    %v425 = vpop.f32.mrf.mxu0
    %v426 = vadd.f32 %v165, %v425
    %v427 = vpop.f32.mrf.mxu0
    %v428 = vpop.f32.mrf.mxu0
    %v429 = vadd.f32 %v165, %v428
    %v430 = vpop.f32.mrf.mxu0
    %431 = vmatprep.mubr.bf16.mxu0 %v337
    %432 = vmatmul.mubr.bf16.gmra.mxu0 %v229
    %v433 = vpop.f32.mrf.mxu0
    %v434 = vadd.f32 %v165, %v433
    %v435 = vpop.f32.mrf.mxu0
    %v436 = vpop.f32.mrf.mxu0
    %v437 = vadd.f32 %v165, %v436
    %v438 = vpop.f32.mrf.mxu0
    %439 = vdwg.mxu0
    %v440 = vmax.f32 %v378, 0.0
    %v441 = vmax.f32 %v381, 0.0
    %v442 = vmax.f32 %v386, 0.0
    %v443 = vmax.f32 %v389, 0.0
    %v444 = vmax.f32 %v394, 0.0
    %v445 = vmax.f32 %v397, 0.0
    %v446 = vmax.f32 %v402, 0.0
    %v447 = vmax.f32 %v405, 0.0
    %v448 = vmax.f32 %v410, 0.0
    %v449 = vmax.f32 %v413, 0.0
    %v450 = vmax.f32 %v418, 0.0
    %v451 = vmax.f32 %v421, 0.0
    %v452 = vmax.f32 %v426, 0.0
    %v453 = vmax.f32 %v429, 0.0
    %v454 = vmax.f32 %v434, 0.0
    %v455 = vmax.f32 %v437, 0.0
    %456 = vst.msk [vmem:[#allocation2 + $0xb] sm:$0xff] %vm58, %v440
    %457 = vst.msk [vmem:[#allocation2 + $0x15] sm:$0xff] %vm58, %v441
    %458 = vst.msk [vmem:[#allocation2 + $0x1f] sm:$0xff] %vm58, %v442
    %459 = vst.msk [vmem:[#allocation2 + $0x29] sm:$0xff] %vm58, %v443
    %460 = vst.msk [vmem:[#allocation2 + $0x33] sm:$0xff] %vm58, %v444
    %461 = vst.msk [vmem:[#allocation2 + $0x3d] sm:$0xff] %vm58, %v445
    %462 = vst.msk [vmem:[#allocation2 + $0x47] sm:$0xff] %vm58, %v446
    %463 = vst.msk [vmem:[#allocation2 + $0x51] sm:$0xff] %vm58, %v447
    %464 = vst.msk [vmem:[#allocation2 + $0x6f] sm:$0xff] %vm58, %v448
    %465 = vst.msk [vmem:[#allocation2 + $0x79] sm:$0xff] %vm58, %v449
    %466 = vst.msk [vmem:[#allocation2 + $0x83] sm:$0xff] %vm58, %v450
    %467 = vst.msk [vmem:[#allocation2 + $0x8d] sm:$0xff] %vm58, %v451
    %468 = vst.msk [vmem:[#allocation2 + $0x97] sm:$0xff] %vm58, %v452
    %469 = vst.msk [vmem:[#allocation2 + $0xa1] sm:$0xff] %vm58, %v453
    %470 = vst.msk [vmem:[#allocation2 + $0xab] sm:$0xff] %vm58, %v454
    %471 = vst.msk [vmem:[#allocation2 + $0xb5] sm:$0xff] %vm58, %v455
    %v472 = vld [vmem:[#allocation2] sm:$0xff]
    %v473 = vld [vmem:[#allocation2 + $0x10] sm:$0xff]
    %v474 = vld [vmem:[#allocation2 + $0x18] sm:$0xff]
    %v475 = vld [vmem:[#allocation2 + $0x28] sm:$0xff]
    %v476 = vld [vmem:[#allocation2 + $0x38] sm:$0xff]
    %v477 = vld [vmem:[#allocation2 + $0x40] sm:$0xff]
    %v478 = vld [vmem:[#allocation2 + $0x60] sm:$0xff]
    %v479 = vld [vmem:[#allocation2 + $0x68] sm:$0xff]
    %v480 = vld [vmem:[#allocation2 + $0x78] sm:$0xff]
    %v481 = vld [vmem:[#allocation2 + $0x88] sm:$0xff]
    %v482 = vld [vmem:[#allocation2 + $0x90] sm:$0xff]
    %v483 = vld [vmem:[#allocation2 + $0xa0] sm:$0xff]
    %v484 = vld [vmem:[#allocation2 + $0x1] sm:$0xff]
    %v485 = vld [vmem:[#allocation2 + $0x11] sm:$0xff]
    %v486 = vld [vmem:[#allocation2 + $0x19] sm:$0xff]
    %v487 = vld [vmem:[#allocation2 + $0x29] sm:$0xff]
    %v488 = vld [vmem:[#allocation2 + $0x39] sm:$0xff]
    %v489 = vld [vmem:[#allocation2 + $0x41] sm:$0xff]
    %v490 = vld [vmem:[#allocation2 + $0x61] sm:$0xff]
    %v491 = vld [vmem:[#allocation2 + $0x69] sm:$0xff]
    %v492 = vld [vmem:[#allocation2 + $0x79] sm:$0xff]
    %v493 = vld [vmem:[#allocation2 + $0x89] sm:$0xff]
    %v494 = vld [vmem:[#allocation2 + $0x91] sm:$0xff]
    %v495 = vld [vmem:[#allocation2 + $0xa1] sm:$0xff]
    %v496 = vmax.f32 %v472, %v484
    %v497 = vmax.f32 %v473, %v485
    %v498 = vmax.f32 %v474, %v486
    %v499 = vmax.f32 %v475, %v487
    %v500 = vmax.f32 %v476, %v488
    %v501 = vmax.f32 %v477, %v489
    %v502 = vmax.f32 %v478, %v490
    %v503 = vmax.f32 %v479, %v491
    %v504 = vmax.f32 %v480, %v492
    %v505 = vmax.f32 %v481, %v493
    %v506 = vmax.f32 %v482, %v494
    %v507 = vmax.f32 %v483, %v495
    %v508 = vld [vmem:[#allocation2 + $0x2] sm:$0xff]
    %v509 = vld [vmem:[#allocation2 + $0x12] sm:$0xff]
    %v510 = vld [vmem:[#allocation2 + $0x1a] sm:$0xff]
    %v511 = vld [vmem:[#allocation2 + $0x2a] sm:$0xff]
    %v512 = vld [vmem:[#allocation2 + $0x3a] sm:$0xff]
    %v513 = vld [vmem:[#allocation2 + $0x42] sm:$0xff]
    %v514 = vld [vmem:[#allocation2 + $0x62] sm:$0xff]
    %v515 = vld [vmem:[#allocation2 + $0x6a] sm:$0xff]
    %v516 = vld [vmem:[#allocation2 + $0x7a] sm:$0xff]
    %v517 = vld [vmem:[#allocation2 + $0x8a] sm:$0xff]
    %v518 = vld [vmem:[#allocation2 + $0x92] sm:$0xff]
    %v519 = vld [vmem:[#allocation2 + $0xa2] sm:$0xff]
    %v520 = vmax.f32 %v496, %v508
    %v521 = vmax.f32 %v497, %v509
    %v522 = vmax.f32 %v498, %v510
    %v523 = vmax.f32 %v499, %v511
    %v524 = vmax.f32 %v500, %v512
    %v525 = vmax.f32 %v501, %v513
    %v526 = vmax.f32 %v502, %v514
    %v527 = vmax.f32 %v503, %v515
    %v528 = vmax.f32 %v504, %v516
    %v529 = vmax.f32 %v505, %v517
    %v530 = vmax.f32 %v506, %v518
    %v531 = vmax.f32 %v507, %v519
    %v532 = vld [vmem:[#allocation2 + $0xa] sm:$0xff]
    %v533 = vld [vmem:[#allocation2 + $0x22] sm:$0xff]
    %v534 = vld [vmem:[#allocation2 + $0x32] sm:$0xff]
    %v535 = vld [vmem:[#allocation2 + $0x4a] sm:$0xff]
    %v536 = vld [vmem:[#allocation2 + $0x72] sm:$0xff]
    %v537 = vld [vmem:[#allocation2 + $0x82] sm:$0xff]
    %v538 = vld [vmem:[#allocation2 + $0x9a] sm:$0xff]
    %v539 = vld [vmem:[#allocation2 + $0xaa] sm:$0xff]
    %v540 = vmax.f32 %v520, %v532
    %v541 = vmax.f32 %v521, %v510
    %v542 = vmax.f32 %v522, %v533
    %v543 = vmax.f32 %v523, %v534
    %v544 = vmax.f32 %v524, %v513
    %v545 = vmax.f32 %v525, %v535
    %v546 = vmax.f32 %v526, %v515
    %v547 = vmax.f32 %v527, %v536
    %v548 = vmax.f32 %v528, %v537
    %v549 = vmax.f32 %v529, %v518
    %v550 = vmax.f32 %v530, %v538
    %v551 = vmax.f32 %v531, %v539
    %v552 = vld [vmem:[#allocation2 + $0xb] sm:$0xff]
    %v553 = vld [vmem:[#allocation2 + $0x1b] sm:$0xff]
    %v554 = vld [vmem:[#allocation2 + $0x23] sm:$0xff]
    %v555 = vld [vmem:[#allocation2 + $0x33] sm:$0xff]
    %v556 = vld [vmem:[#allocation2 + $0x43] sm:$0xff]
    %v557 = vld [vmem:[#allocation2 + $0x4b] sm:$0xff]
    %v558 = vld [vmem:[#allocation2 + $0x6b] sm:$0xff]
    %v559 = vld [vmem:[#allocation2 + $0x73] sm:$0xff]
    %v560 = vld [vmem:[#allocation2 + $0x83] sm:$0xff]
    %v561 = vld [vmem:[#allocation2 + $0x93] sm:$0xff]
    %v562 = vld [vmem:[#allocation2 + $0x9b] sm:$0xff]
    %v563 = vld [vmem:[#allocation2 + $0xab] sm:$0xff]
    %v564 = vmax.f32 %v540, %v552
    %v565 = vmax.f32 %v541, %v553
    %v566 = vmax.f32 %v542, %v554
    %v567 = vmax.f32 %v543, %v555
    %v568 = vmax.f32 %v544, %v556
    %v569 = vmax.f32 %v545, %v557
    %v570 = vmax.f32 %v546, %v558
    %v571 = vmax.f32 %v547, %v559
    %v572 = vmax.f32 %v548, %v560
    %v573 = vmax.f32 %v549, %v561
    %v574 = vmax.f32 %v550, %v562
    %v575 = vmax.f32 %v551, %v563
    %v576 = vld [vmem:[#allocation2 + $0xc] sm:$0xff]
    %v577 = vld [vmem:[#allocation2 + $0x1c] sm:$0xff]
    %v578 = vld [vmem:[#allocation2 + $0x24] sm:$0xff]
    %v579 = vld [vmem:[#allocation2 + $0x34] sm:$0xff]
    %v580 = vld [vmem:[#allocation2 + $0x44] sm:$0xff]
    %v581 = vld [vmem:[#allocation2 + $0x4c] sm:$0xff]
    %v582 = vld [vmem:[#allocation2 + $0x6c] sm:$0xff]
    %v583 = vld [vmem:[#allocation2 + $0x74] sm:$0xff]
    %v584 = vld [vmem:[#allocation2 + $0x84] sm:$0xff]
    %v585 = vld [vmem:[#allocation2 + $0x94] sm:$0xff]
    %v586 = vld [vmem:[#allocation2 + $0x9c] sm:$0xff]
    %v587 = vld [vmem:[#allocation2 + $0xac] sm:$0xff]
    %v588 = vmax.f32 %v564, %v576
    %v589 = vmax.f32 %v565, %v577
    %v590 = vmax.f32 %v566, %v578
    %v591 = vmax.f32 %v567, %v579
    %v592 = vmax.f32 %v568, %v580
    %v593 = vmax.f32 %v569, %v581
    %v594 = vmax.f32 %v570, %v582
    %v595 = vmax.f32 %v571, %v583
    %v596 = vmax.f32 %v572, %v584
    %v597 = vmax.f32 %v573, %v585
    %v598 = vmax.f32 %v574, %v586
    %v599 = vmax.f32 %v575, %v587
    %v600 = vld [vmem:[#allocation2 + $0x14] sm:$0xff]
    %v601 = vld [vmem:[#allocation2 + $0x2c] sm:$0xff]
    %v602 = vld [vmem:[#allocation2 + $0x3c] sm:$0xff]
    %v603 = vld [vmem:[#allocation2 + $0x54] sm:$0xff]
    %v604 = vld [vmem:[#allocation2 + $0x7c] sm:$0xff]
    %v605 = vld [vmem:[#allocation2 + $0x8c] sm:$0xff]
    %v606 = vld [vmem:[#allocation2 + $0xa4] sm:$0xff]
    %v607 = vld [vmem:[#allocation2 + $0xb4] sm:$0xff]
    %v608 = vmax.f32 %v588, %v600
    %v609 = vmax.f32 %v589, %v578
    %v610 = vmax.f32 %v590, %v601
    %v611 = vmax.f32 %v591, %v602
    %v612 = vmax.f32 %v592, %v581
    %v613 = vmax.f32 %v593, %v603
    %v614 = vmax.f32 %v594, %v583
    %v615 = vmax.f32 %v595, %v604
    %v616 = vmax.f32 %v596, %v605
    %v617 = vmax.f32 %v597, %v586
    %v618 = vmax.f32 %v598, %v606
    %v619 = vmax.f32 %v599, %v607
    %v620 = vld [vmem:[#allocation2 + $0x15] sm:$0xff]
    %v621 = vld [vmem:[#allocation2 + $0x25] sm:$0xff]
    %v622 = vld [vmem:[#allocation2 + $0x2d] sm:$0xff]
    %v623 = vld [vmem:[#allocation2 + $0x3d] sm:$0xff]
    %v624 = vld [vmem:[#allocation2 + $0x4d] sm:$0xff]
    %v625 = vld [vmem:[#allocation2 + $0x55] sm:$0xff]
    %v626 = vld [vmem:[#allocation2 + $0x75] sm:$0xff]
    %v627 = vld [vmem:[#allocation2 + $0x7d] sm:$0xff]
    %v628 = vld [vmem:[#allocation2 + $0x8d] sm:$0xff]
    %v629 = vld [vmem:[#allocation2 + $0x9d] sm:$0xff]
    %v630 = vld [vmem:[#allocation2 + $0xa5] sm:$0xff]
    %v631 = vld [vmem:[#allocation2 + $0xb5] sm:$0xff]
    %v632 = vmax.f32 %v608, %v620
    %v633 = vmax.f32 %v609, %v621
    %v634 = vmax.f32 %v610, %v622
    %v635 = vmax.f32 %v611, %v623
    %v636 = vmax.f32 %v612, %v624
    %v637 = vmax.f32 %v613, %v625
    %v638 = vmax.f32 %v614, %v626
    %v639 = vmax.f32 %v615, %v627
    %v640 = vmax.f32 %v616, %v628
    %v641 = vmax.f32 %v617, %v629
    %v642 = vmax.f32 %v618, %v630
    %v643 = vmax.f32 %v619, %v631
    %v644 = vld [vmem:[#allocation2 + $0x16] sm:$0xff]
    %v645 = vld [vmem:[#allocation2 + $0x26] sm:$0xff]
    %v646 = vld [vmem:[#allocation2 + $0x2e] sm:$0xff]
    %v647 = vld [vmem:[#allocation2 + $0x3e] sm:$0xff]
    %v648 = vld [vmem:[#allocation2 + $0x4e] sm:$0xff]
    %v649 = vld [vmem:[#allocation2 + $0x56] sm:$0xff]
    %v650 = vld [vmem:[#allocation2 + $0x76] sm:$0xff]
    %v651 = vld [vmem:[#allocation2 + $0x7e] sm:$0xff]
    %v652 = vld [vmem:[#allocation2 + $0x8e] sm:$0xff]
    %v653 = vld [vmem:[#allocation2 + $0x9e] sm:$0xff]
    %v654 = vld [vmem:[#allocation2 + $0xa6] sm:$0xff]
    %v655 = vld [vmem:[#allocation2 + $0xb6] sm:$0xff]
    %v656 = vmax.f32 %v632, %v644
    %v657 = vmax.f32 %v633, %v645
    %v658 = vmax.f32 %v634, %v646
    %v659 = vmax.f32 %v635, %v647
    %v660 = vmax.f32 %v636, %v648
    %v661 = vmax.f32 %v637, %v649
    %v662 = vmax.f32 %v638, %v650
    %v663 = vmax.f32 %v639, %v651
    %v664 = vmax.f32 %v640, %v652
    %v665 = vmax.f32 %v641, %v653
    %v666 = vmax.f32 %v642, %v654
    %v667 = vmax.f32 %v643, %v655
    %vm668 = vcmask 516096
    %669 = vst.msk [vmem:[#allocation3 + $0x7] sm:$0x1] %vm668, %v656
    %vm670 = vcmask 518146
    %671 = vst.msk [vmem:[#allocation3 + $0x6] sm:$0x4] %vm670, %v656
    %vm672 = vcmask 520196
    %673 = vst.msk [vmem:[#allocation3 + $0x5] sm:$0x10] %vm672, %v656
    %vm674 = vcmask 522246
    %675 = vst.msk [vmem:[#allocation3 + $0x4] sm:$0x40] %vm674, %v656
    %676 = vst.msk [vmem:[#allocation3 + $0x9] sm:$0x10] %vm672, %v657
    %677 = vst.msk [vmem:[#allocation3 + $0x8] sm:$0x40] %vm674, %v657
    %678 = vst.msk [vmem:[#allocation3 + $0xf] sm:$0x1] %vm668, %v658
    %679 = vst.msk [vmem:[#allocation3 + $0xe] sm:$0x4] %vm670, %v658
    %680 = vst.msk [vmem:[#allocation3 + $0x13] sm:$0x1] %vm668, %v659
    %681 = vst.msk [vmem:[#allocation3 + $0x12] sm:$0x4] %vm670, %v659
    %682 = vst.msk [vmem:[#allocation3 + $0x11] sm:$0x10] %vm672, %v659
    %683 = vst.msk [vmem:[#allocation3 + $0x10] sm:$0x40] %vm674, %v659
    %684 = vst.msk [vmem:[#allocation3 + $0x15] sm:$0x10] %vm672, %v660
    %685 = vst.msk [vmem:[#allocation3 + $0x14] sm:$0x40] %vm674, %v660
    %686 = vst.msk [vmem:[#allocation3 + $0x1b] sm:$0x1] %vm668, %v661
    %687 = vst.msk [vmem:[#allocation3 + $0x1a] sm:$0x4] %vm670, %v661
    %688 = vst.msk [vmem:[#allocation3 + $0x27] sm:$0x10] %vm672, %v662
    %689 = vst.msk [vmem:[#allocation3 + $0x26] sm:$0x40] %vm674, %v662
    %690 = vst.msk [vmem:[#allocation3 + $0x2d] sm:$0x1] %vm668, %v663
    %691 = vst.msk [vmem:[#allocation3 + $0x2c] sm:$0x4] %vm670, %v663
    %692 = vst.msk [vmem:[#allocation3 + $0x31] sm:$0x1] %vm668, %v664
    %693 = vst.msk [vmem:[#allocation3 + $0x30] sm:$0x4] %vm670, %v664
    %694 = vst.msk [vmem:[#allocation3 + $0x2f] sm:$0x10] %vm672, %v664
    %695 = vst.msk [vmem:[#allocation3 + $0x2e] sm:$0x40] %vm674, %v664
    %696 = vst.msk [vmem:[#allocation3 + $0x33] sm:$0x10] %vm672, %v665
    %697 = vst.msk [vmem:[#allocation3 + $0x32] sm:$0x40] %vm674, %v665
    %698 = vst.msk [vmem:[#allocation3 + $0x39] sm:$0x1] %vm668, %v666
    %699 = vst.msk [vmem:[#allocation3 + $0x38] sm:$0x4] %vm670, %v666
    %700 = vst.msk [vmem:[#allocation3 + $0x3d] sm:$0x1] %vm668, %v667
    %701 = vst.msk [vmem:[#allocation3 + $0x3c] sm:$0x4] %vm670, %v667
    %702 = vst.msk [vmem:[#allocation3 + $0x3b] sm:$0x10] %vm672, %v667
    %703 = vst.msk [vmem:[#allocation3 + $0x3a] sm:$0x40] %vm674, %v667
    %v704 = vld [vmem:[#allocation3] sm:$0xff]
    %v705 = vld [vmem:[#allocation3 + $0x8] sm:$0xff]
    %v706 = vld [vmem:[#allocation3 + $0x10] sm:$0xff]
    %v707 = vld [vmem:[#allocation3 + $0x18] sm:$0xff]
    %v708 = vld [vmem:[#allocation3 + $0x20] sm:$0xff]
    %v709 = vld [vmem:[#allocation3 + $0x28] sm:$0xff]
    %v710 = vld [vmem:[#allocation3 + $0x30] sm:$0xff]
    %v711 = vld [vmem:[#allocation3 + $0x38] sm:$0x3]
    %v712 = vpack.c.bf16 %v705, %v704
    %v713 = vpack.c.bf16 %v707, %v706
    %v714 = vpack.c.bf16 %v709, %v708
    %v715 = vpack.c.bf16 %v711, %v710
    %v720 = vunpack.c.l.b16 %v712
    %v721 = vunpack.c.h.b16 %v712
    %v722 = vunpack.c.l.b16 %v713
    %v723 = vunpack.c.h.b16 %v713
    %v724 = vunpack.c.l.b16 %v714
    %v725 = vunpack.c.h.b16 %v714
    %v726 = vunpack.c.l.b16 %v715
    %v727 = vunpack.c.h.b16 %v715
    %v728 = vpack.c.b16 %v720, %v720
    %v729 = vpack.c.b16 %v721, %v721
    %v730 = vpack.c.b16 %v722, %v722
    %v731 = vpack.c.b16 %v723, %v723
    %v732 = vpack.c.b16 %v724, %v724
    %v733 = vpack.c.b16 %v725, %v725
    %v734 = vpack.c.b16 %v726, %v726
    %v735 = vpack.c.b16 %v727, %v727
    %vm744 = vcmask 519168
    %745 = vst.msk [vmem:[#allocation12] sm:$0xf] %vm744, %v728
    %746 = vst.msk [vmem:[#allocation12 + $0x14] sm:$0xf] %vm744, %v729
    %747 = vst.msk [vmem:[#allocation12 + $0x28] sm:$0xf] %vm744, %v730
    %748 = vst.msk [vmem:[#allocation12 + $0x3c] sm:$0xf] %vm744, %v731
    %749 = vst.msk [vmem:[#allocation12 + $0x50] sm:$0xf] %vm744, %v732
    %750 = vst.msk [vmem:[#allocation12 + $0x64] sm:$0xf] %vm744, %v733
    %751 = vst.msk [vmem:[#allocation12 + $0x78] sm:$0xf] %vm744, %v734
    %752 = vst.msk [vmem:[#allocation12 + $0x8c] sm:$0x1] %vm668, %v735
    %v753 = vld [vmem:[#allocation3 + $0x1] sm:$0xff]
    %v754 = vld [vmem:[#allocation3 + $0x9] sm:$0xff]
    %v755 = vld [vmem:[#allocation3 + $0x11] sm:$0xff]
    %v756 = vld [vmem:[#allocation3 + $0x19] sm:$0xff]
    %v757 = vld [vmem:[#allocation3 + $0x21] sm:$0xff]
    %v758 = vld [vmem:[#allocation3 + $0x29] sm:$0xff]
    %v759 = vld [vmem:[#allocation3 + $0x31] sm:$0xff]
    %v760 = vld [vmem:[#allocation3 + $0x39] sm:$0x3]
    %v761 = vpack.c.bf16 %v754, %v753
    %v762 = vpack.c.bf16 %v756, %v755
    %v763 = vpack.c.bf16 %v758, %v757
    %v764 = vpack.c.bf16 %v760, %v759
    %v769 = vunpack.c.l.b16 %v761
    %v770 = vunpack.c.h.b16 %v761
    %v771 = vunpack.c.l.b16 %v762
    %v772 = vunpack.c.h.b16 %v762
    %v773 = vunpack.c.l.b16 %v763
    %v774 = vunpack.c.h.b16 %v763
    %v775 = vunpack.c.l.b16 %v764
    %v776 = vunpack.c.h.b16 %v764
    %v777 = vpack.c.b16 %v769, %v769
    %v778 = vpack.c.b16 %v770, %v770
    %v779 = vpack.c.b16 %v771, %v771
    %v780 = vpack.c.b16 %v772, %v772
    %v781 = vpack.c.b16 %v773, %v773
    %v782 = vpack.c.b16 %v774, %v774
    %v783 = vpack.c.b16 %v775, %v775
    %v784 = vpack.c.b16 %v776, %v776
    %785 = vrot.lane.b32.xlu0 %v777, 64
    %v786 = vpop.permute.xlu0 %785
    %787 = vrot.lane.b32.xlu0 %v778, 64
    %v788 = vpop.permute.xlu0 %787
    %789 = vrot.lane.b32.xlu0 %v779, 64
    %v790 = vpop.permute.xlu0 %789
    %791 = vrot.lane.b32.xlu0 %v780, 64
    %v792 = vpop.permute.xlu0 %791
    %793 = vrot.lane.b32.xlu0 %v781, 64
    %v794 = vpop.permute.xlu0 %793
    %795 = vrot.lane.b32.xlu0 %v782, 64
    %v796 = vpop.permute.xlu0 %795
    %797 = vrot.lane.b32.xlu0 %v783, 64
    %v798 = vpop.permute.xlu0 %797
    %799 = vrot.lane.b32.xlu0 %v784, 64
    %v800 = vpop.permute.xlu0 %799
    %vm809 = vcmask 1043968
    %810 = vst.msk [vmem:[#allocation12] sm:$0xf] %vm809, %v786
    %811 = vst.msk [vmem:[#allocation12 + $0x14] sm:$0xf] %vm809, %v788
    %812 = vst.msk [vmem:[#allocation12 + $0x28] sm:$0xf] %vm809, %v790
    %813 = vst.msk [vmem:[#allocation12 + $0x3c] sm:$0xf] %vm809, %v792
    %814 = vst.msk [vmem:[#allocation12 + $0x50] sm:$0xf] %vm809, %v794
    %815 = vst.msk [vmem:[#allocation12 + $0x64] sm:$0xf] %vm809, %v796
    %816 = vst.msk [vmem:[#allocation12 + $0x78] sm:$0xf] %vm809, %v798
    %vm817 = vcmask 1040896
    %818 = vst.msk [vmem:[#allocation12 + $0x8c] sm:$0x1] %vm817, %v800
    %v819 = vld [vmem:[#allocation3 + $0x2] sm:$0xff]
    %v820 = vld [vmem:[#allocation3 + $0xa] sm:$0xff]
    %v821 = vld [vmem:[#allocation3 + $0x12] sm:$0xff]
    %v822 = vld [vmem:[#allocation3 + $0x1a] sm:$0xff]
    %v823 = vld [vmem:[#allocation3 + $0x22] sm:$0xff]
    %v824 = vld [vmem:[#allocation3 + $0x2a] sm:$0xff]
    %v825 = vld [vmem:[#allocation3 + $0x32] sm:$0xff]
    %v826 = vld [vmem:[#allocation3 + $0x3a] sm:$0x3]
    %v827 = vpack.c.bf16 %v820, %v819
    %v828 = vpack.c.bf16 %v822, %v821
    %v829 = vpack.c.bf16 %v824, %v823
    %v830 = vpack.c.bf16 %v826, %v825
    %v835 = vunpack.c.l.b16 %v827
    %v836 = vunpack.c.h.b16 %v827
    %v837 = vunpack.c.l.b16 %v828
    %v838 = vunpack.c.h.b16 %v828
    %v839 = vunpack.c.l.b16 %v829
    %v840 = vunpack.c.h.b16 %v829
    %v841 = vunpack.c.l.b16 %v830
    %v842 = vunpack.c.h.b16 %v830
    %v843 = vpack.c.b16 %v835, %v835
    %v844 = vpack.c.b16 %v836, %v836
    %v845 = vpack.c.b16 %v837, %v837
    %v846 = vpack.c.b16 %v838, %v838
    %v847 = vpack.c.b16 %v839, %v839
    %v848 = vpack.c.b16 %v840, %v840
    %v849 = vpack.c.b16 %v841, %v841
    %v850 = vpack.c.b16 %v842, %v842
    %859 = vst.msk [vmem:[#allocation12 + $0x4] sm:$0xf] %vm744, %v843
    %860 = vst.msk [vmem:[#allocation12 + $0x18] sm:$0xf] %vm744, %v844
    %861 = vst.msk [vmem:[#allocation12 + $0x2c] sm:$0xf] %vm744, %v845
    %862 = vst.msk [vmem:[#allocation12 + $0x40] sm:$0xf] %vm744, %v846
    %863 = vst.msk [vmem:[#allocation12 + $0x54] sm:$0xf] %vm744, %v847
    %864 = vst.msk [vmem:[#allocation12 + $0x68] sm:$0xf] %vm744, %v848
    %865 = vst.msk [vmem:[#allocation12 + $0x7c] sm:$0xf] %vm744, %v849
    %866 = vst.msk [vmem:[#allocation12 + $0x90] sm:$0x1] %vm668, %v850
    %v867 = vld [vmem:[#allocation3 + $0x6] sm:$0xff]
    %v868 = vld [vmem:[#allocation3 + $0xe] sm:$0xff]
    %v869 = vld [vmem:[#allocation3 + $0x16] sm:$0xff]
    %v870 = vld [vmem:[#allocation3 + $0x1e] sm:$0xff]
    %v871 = vld [vmem:[#allocation3 + $0x26] sm:$0xff]
    %v872 = vld [vmem:[#allocation3 + $0x2e] sm:$0xff]
    %v873 = vld [vmem:[#allocation3 + $0x36] sm:$0xff]
    %v874 = vld [vmem:[#allocation3 + $0x3e] sm:$0x3]
    %v875 = vpack.c.bf16 %v868, %v867
    %v876 = vpack.c.bf16 %v870, %v869
    %v877 = vpack.c.bf16 %v872, %v871
    %v878 = vpack.c.bf16 %v874, %v873
    %v883 = vunpack.c.l.b16 %v875
    %v884 = vunpack.c.h.b16 %v875
    %v885 = vunpack.c.l.b16 %v876
    %v886 = vunpack.c.h.b16 %v876
    %v887 = vunpack.c.l.b16 %v877
    %v888 = vunpack.c.h.b16 %v877
    %v889 = vunpack.c.l.b16 %v878
    %v890 = vunpack.c.h.b16 %v878
    %v891 = vpack.c.b16 %v883, %v883
    %v892 = vpack.c.b16 %v884, %v884
    %v893 = vpack.c.b16 %v885, %v885
    %v894 = vpack.c.b16 %v886, %v886
    %v895 = vpack.c.b16 %v887, %v887
    %v896 = vpack.c.b16 %v888, %v888
    %v897 = vpack.c.b16 %v889, %v889
    %v898 = vpack.c.b16 %v890, %v890
    %899 = vrot.lane.b32.xlu0 %v891, 64
    %v900 = vpop.permute.xlu0 %899
    %901 = vrot.lane.b32.xlu0 %v892, 64
    %v902 = vpop.permute.xlu0 %901
    %903 = vrot.lane.b32.xlu0 %v893, 64
    %v904 = vpop.permute.xlu0 %903
    %905 = vrot.lane.b32.xlu0 %v894, 64
    %v906 = vpop.permute.xlu0 %905
    %907 = vrot.lane.b32.xlu0 %v895, 64
    %v908 = vpop.permute.xlu0 %907
    %909 = vrot.lane.b32.xlu0 %v896, 64
    %v910 = vpop.permute.xlu0 %909
    %911 = vrot.lane.b32.xlu0 %v897, 64
    %v912 = vpop.permute.xlu0 %911
    %913 = vrot.lane.b32.xlu0 %v898, 64
    %v914 = vpop.permute.xlu0 %913
    %923 = vst.msk [vmem:[#allocation12 + $0x4] sm:$0xf] %vm809, %v900
    %924 = vst.msk [vmem:[#allocation12 + $0x18] sm:$0xf] %vm809, %v902
    %925 = vst.msk [vmem:[#allocation12 + $0x2c] sm:$0xf] %vm809, %v904
    %926 = vst.msk [vmem:[#allocation12 + $0x40] sm:$0xf] %vm809, %v906
    %927 = vst.msk [vmem:[#allocation12 + $0x54] sm:$0xf] %vm809, %v908
    %928 = vst.msk [vmem:[#allocation12 + $0x68] sm:$0xf] %vm809, %v910
    %929 = vst.msk [vmem:[#allocation12 + $0x7c] sm:$0xf] %vm809, %v912
    %930 = vst.msk [vmem:[#allocation12 + $0x90] sm:$0x1] %vm817, %v914
    %v931 = vld [vmem:[#allocation3 + $0x7] sm:$0xff]
    %v932 = vld [vmem:[#allocation3 + $0xf] sm:$0xff]
    %v933 = vld [vmem:[#allocation3 + $0x17] sm:$0xff]
    %v934 = vld [vmem:[#allocation3 + $0x1f] sm:$0xff]
    %v935 = vld [vmem:[#allocation3 + $0x27] sm:$0xff]
    %v936 = vld [vmem:[#allocation3 + $0x2f] sm:$0xff]
    %v937 = vld [vmem:[#allocation3 + $0x37] sm:$0xff]
    %v938 = vld [vmem:[#allocation3 + $0x3f] sm:$0x3]
    %v939 = vpack.c.bf16 %v932, %v931
    %v940 = vpack.c.bf16 %v934, %v933
    %v941 = vpack.c.bf16 %v936, %v935
    %v942 = vpack.c.bf16 %v938, %v937
    %v947 = vunpack.c.l.b16 %v939
    %v948 = vunpack.c.h.b16 %v939
    %v949 = vunpack.c.l.b16 %v940
    %v950 = vunpack.c.h.b16 %v940
    %v951 = vunpack.c.l.b16 %v941
    %v952 = vunpack.c.h.b16 %v941
    %v953 = vunpack.c.l.b16 %v942
    %v954 = vunpack.c.h.b16 %v942
    %v955 = vpack.c.b16 %v947, %v947
    %v956 = vpack.c.b16 %v948, %v948
    %v957 = vpack.c.b16 %v949, %v949
    %v958 = vpack.c.b16 %v950, %v950
    %v959 = vpack.c.b16 %v951, %v951
    %v960 = vpack.c.b16 %v952, %v952
    %v961 = vpack.c.b16 %v953, %v953
    %v962 = vpack.c.b16 %v954, %v954
    %971 = vst.msk [vmem:[#allocation12 + $0x8] sm:$0xf] %vm744, %v955
    %972 = vst.msk [vmem:[#allocation12 + $0x1c] sm:$0xf] %vm744, %v956
    %973 = vst.msk [vmem:[#allocation12 + $0x30] sm:$0xf] %vm744, %v957
    %974 = vst.msk [vmem:[#allocation12 + $0x44] sm:$0xf] %vm744, %v958
    %975 = vst.msk [vmem:[#allocation12 + $0x58] sm:$0xf] %vm744, %v959
    %976 = vst.msk [vmem:[#allocation12 + $0x6c] sm:$0xf] %vm744, %v960
    %977 = vst.msk [vmem:[#allocation12 + $0x80] sm:$0xf] %vm744, %v961
    %978 = vst.msk [vmem:[#allocation12 + $0x94] sm:$0x1] %vm668, %v962
    %v979 = vld [vmem:[#allocation3 + $0x8] sm:$0xff]
    %v980 = vld [vmem:[#allocation3 + $0x10] sm:$0xff]
    %v981 = vld [vmem:[#allocation3 + $0x18] sm:$0xff]
    %v982 = vld [vmem:[#allocation3 + $0x20] sm:$0xff]
    %v983 = vld [vmem:[#allocation3 + $0x28] sm:$0xff]
    %v984 = vld [vmem:[#allocation3 + $0x30] sm:$0xff]
    %v985 = vld [vmem:[#allocation3 + $0x38] sm:$0xff]
    %v986 = vld [vmem:[#allocation3 + $0x40] sm:$0x3]
    %v987 = vpack.c.bf16 %v980, %v979
    %v988 = vpack.c.bf16 %v982, %v981
    %v989 = vpack.c.bf16 %v984, %v983
    %v990 = vpack.c.bf16 %v986, %v985
    %v995 = vunpack.c.l.b16 %v987
    %v996 = vunpack.c.h.b16 %v987
    %v997 = vunpack.c.l.b16 %v988
    %v998 = vunpack.c.h.b16 %v988
    %v999 = vunpack.c.l.b16 %v989
    %v1000 = vunpack.c.h.b16 %v989
    %v1001 = vunpack.c.l.b16 %v990
    %v1002 = vunpack.c.h.b16 %v990
    %v1003 = vpack.c.b16 %v995, %v995
    %v1004 = vpack.c.b16 %v996, %v996
    %v1005 = vpack.c.b16 %v997, %v997
    %v1006 = vpack.c.b16 %v998, %v998
    %v1007 = vpack.c.b16 %v999, %v999
    %v1008 = vpack.c.b16 %v1000, %v1000
    %v1009 = vpack.c.b16 %v1001, %v1001
    %v1010 = vpack.c.b16 %v1002, %v1002
    %1011 = vrot.lane.b32.xlu0 %v1003, 64
    %v1012 = vpop.permute.xlu0 %1011
    %1013 = vrot.lane.b32.xlu0 %v1004, 64
    %v1014 = vpop.permute.xlu0 %1013
    %1015 = vrot.lane.b32.xlu0 %v1005, 64
    %v1016 = vpop.permute.xlu0 %1015
    %1017 = vrot.lane.b32.xlu0 %v1006, 64
    %v1018 = vpop.permute.xlu0 %1017
    %1019 = vrot.lane.b32.xlu0 %v1007, 64
    %v1020 = vpop.permute.xlu0 %1019
    %1021 = vrot.lane.b32.xlu0 %v1008, 64
    %v1022 = vpop.permute.xlu0 %1021
    %1023 = vrot.lane.b32.xlu0 %v1009, 64
    %v1024 = vpop.permute.xlu0 %1023
    %1025 = vrot.lane.b32.xlu0 %v1010, 64
    %v1026 = vpop.permute.xlu0 %1025
    %1035 = vst.msk [vmem:[#allocation12 + $0x8] sm:$0xf] %vm809, %v1012
    %1036 = vst.msk [vmem:[#allocation12 + $0x1c] sm:$0xf] %vm809, %v1014
    %1037 = vst.msk [vmem:[#allocation12 + $0x30] sm:$0xf] %vm809, %v1016
    %1038 = vst.msk [vmem:[#allocation12 + $0x44] sm:$0xf] %vm809, %v1018
    %1039 = vst.msk [vmem:[#allocation12 + $0x58] sm:$0xf] %vm809, %v1020
    %1040 = vst.msk [vmem:[#allocation12 + $0x6c] sm:$0xf] %vm809, %v1022
    %1041 = vst.msk [vmem:[#allocation12 + $0x80] sm:$0xf] %vm809, %v1024
    %1042 = vst.msk [vmem:[#allocation12 + $0x94] sm:$0x1] %vm817, %v1026
    %v1043 = vld [vmem:[#allocation3 + $0xc] sm:$0xff]
    %v1044 = vld [vmem:[#allocation3 + $0x14] sm:$0xff]
    %v1045 = vld [vmem:[#allocation3 + $0x1c] sm:$0xff]
    %v1046 = vld [vmem:[#allocation3 + $0x24] sm:$0xff]
    %v1047 = vld [vmem:[#allocation3 + $0x2c] sm:$0xff]
    %v1048 = vld [vmem:[#allocation3 + $0x34] sm:$0xff]
    %v1049 = vld [vmem:[#allocation3 + $0x3c] sm:$0xff]
    %v1050 = vld [vmem:[#allocation3 + $0x44] sm:$0x3]
    %v1051 = vpack.c.bf16 %v1044, %v1043
    %v1052 = vpack.c.bf16 %v1046, %v1045
    %v1053 = vpack.c.bf16 %v1048, %v1047
    %v1054 = vpack.c.bf16 %v1050, %v1049
    %v1059 = vunpack.c.l.b16 %v1051
    %v1060 = vunpack.c.h.b16 %v1051
    %v1061 = vunpack.c.l.b16 %v1052
    %v1062 = vunpack.c.h.b16 %v1052
    %v1063 = vunpack.c.l.b16 %v1053
    %v1064 = vunpack.c.h.b16 %v1053
    %v1065 = vunpack.c.l.b16 %v1054
    %v1066 = vunpack.c.h.b16 %v1054
    %v1067 = vpack.c.b16 %v1059, %v1059
    %v1068 = vpack.c.b16 %v1060, %v1060
    %v1069 = vpack.c.b16 %v1061, %v1061
    %v1070 = vpack.c.b16 %v1062, %v1062
    %v1071 = vpack.c.b16 %v1063, %v1063
    %v1072 = vpack.c.b16 %v1064, %v1064
    %v1073 = vpack.c.b16 %v1065, %v1065
    %v1074 = vpack.c.b16 %v1066, %v1066
    %1083 = vst.msk [vmem:[#allocation12 + $0xc] sm:$0xf] %vm744, %v1067
    %1084 = vst.msk [vmem:[#allocation12 + $0x20] sm:$0xf] %vm744, %v1068
    %1085 = vst.msk [vmem:[#allocation12 + $0x34] sm:$0xf] %vm744, %v1069
    %1086 = vst.msk [vmem:[#allocation12 + $0x48] sm:$0xf] %vm744, %v1070
    %1087 = vst.msk [vmem:[#allocation12 + $0x5c] sm:$0xf] %vm744, %v1071
    %1088 = vst.msk [vmem:[#allocation12 + $0x70] sm:$0xf] %vm744, %v1072
    %1089 = vst.msk [vmem:[#allocation12 + $0x84] sm:$0xf] %vm744, %v1073
    %1090 = vst.msk [vmem:[#allocation12 + $0x98] sm:$0x1] %vm668, %v1074
    %v1091 = vld [vmem:[#allocation3 + $0xd] sm:$0xff]
    %v1092 = vld [vmem:[#allocation3 + $0x15] sm:$0xff]
    %v1093 = vld [vmem:[#allocation3 + $0x1d] sm:$0xff]
    %v1094 = vld [vmem:[#allocation3 + $0x25] sm:$0xff]
    %v1095 = vld [vmem:[#allocation3 + $0x2d] sm:$0xff]
    %v1096 = vld [vmem:[#allocation3 + $0x35] sm:$0xff]
    %v1097 = vld [vmem:[#allocation3 + $0x3d] sm:$0xff]
    %v1098 = vld [vmem:[#allocation3 + $0x45] sm:$0x3]
    %v1099 = vpack.c.bf16 %v1092, %v1091
    %v1100 = vpack.c.bf16 %v1094, %v1093
    %v1101 = vpack.c.bf16 %v1096, %v1095
    %v1102 = vpack.c.bf16 %v1098, %v1097
    %v1107 = vunpack.c.l.b16 %v1099
    %v1108 = vunpack.c.h.b16 %v1099
    %v1109 = vunpack.c.l.b16 %v1100
    %v1110 = vunpack.c.h.b16 %v1100
    %v1111 = vunpack.c.l.b16 %v1101
    %v1112 = vunpack.c.h.b16 %v1101
    %v1113 = vunpack.c.l.b16 %v1102
    %v1114 = vunpack.c.h.b16 %v1102
    %v1115 = vpack.c.b16 %v1107, %v1107
    %v1116 = vpack.c.b16 %v1108, %v1108
    %v1117 = vpack.c.b16 %v1109, %v1109
    %v1118 = vpack.c.b16 %v1110, %v1110
    %v1119 = vpack.c.b16 %v1111, %v1111
    %v1120 = vpack.c.b16 %v1112, %v1112
    %v1121 = vpack.c.b16 %v1113, %v1113
    %v1122 = vpack.c.b16 %v1114, %v1114
    %1123 = vrot.lane.b32.xlu0 %v1115, 64
    %v1124 = vpop.permute.xlu0 %1123
    %1125 = vrot.lane.b32.xlu0 %v1116, 64
    %v1126 = vpop.permute.xlu0 %1125
    %1127 = vrot.lane.b32.xlu0 %v1117, 64
    %v1128 = vpop.permute.xlu0 %1127
    %1129 = vrot.lane.b32.xlu0 %v1118, 64
    %v1130 = vpop.permute.xlu0 %1129
    %1131 = vrot.lane.b32.xlu0 %v1119, 64
    %v1132 = vpop.permute.xlu0 %1131
    %1133 = vrot.lane.b32.xlu0 %v1120, 64
    %v1134 = vpop.permute.xlu0 %1133
    %1135 = vrot.lane.b32.xlu0 %v1121, 64
    %v1136 = vpop.permute.xlu0 %1135
    %1137 = vrot.lane.b32.xlu0 %v1122, 64
    %v1138 = vpop.permute.xlu0 %1137
    %1147 = vst.msk [vmem:[#allocation12 + $0xc] sm:$0xf] %vm809, %v1124
    %1148 = vst.msk [vmem:[#allocation12 + $0x20] sm:$0xf] %vm809, %v1126
    %1149 = vst.msk [vmem:[#allocation12 + $0x34] sm:$0xf] %vm809, %v1128
    %1150 = vst.msk [vmem:[#allocation12 + $0x48] sm:$0xf] %vm809, %v1130
    %1151 = vst.msk [vmem:[#allocation12 + $0x5c] sm:$0xf] %vm809, %v1132
    %1152 = vst.msk [vmem:[#allocation12 + $0x70] sm:$0xf] %vm809, %v1134
    %1153 = vst.msk [vmem:[#allocation12 + $0x84] sm:$0xf] %vm809, %v1136
    %1154 = vst.msk [vmem:[#allocation12 + $0x98] sm:$0x1] %vm817, %v1138
    %v1155 = vld [vmem:[#allocation3 + $0xe] sm:$0xff]
    %v1156 = vld [vmem:[#allocation3 + $0x16] sm:$0xff]
    %v1157 = vld [vmem:[#allocation3 + $0x1e] sm:$0xff]
    %v1158 = vld [vmem:[#allocation3 + $0x26] sm:$0xff]
    %v1159 = vld [vmem:[#allocation3 + $0x2e] sm:$0xff]
    %v1160 = vld [vmem:[#allocation3 + $0x36] sm:$0xff]
    %v1161 = vld [vmem:[#allocation3 + $0x3e] sm:$0xff]
    %v1162 = vld [vmem:[#allocation3 + $0x46] sm:$0x3]
    %v1163 = vpack.c.bf16 %v1156, %v1155
    %v1164 = vpack.c.bf16 %v1158, %v1157
    %v1165 = vpack.c.bf16 %v1160, %v1159
    %v1166 = vpack.c.bf16 %v1162, %v1161
    %v1171 = vunpack.c.l.b16 %v1163
    %v1172 = vunpack.c.h.b16 %v1163
    %v1173 = vunpack.c.l.b16 %v1164
    %v1174 = vunpack.c.h.b16 %v1164
    %v1175 = vunpack.c.l.b16 %v1165
    %v1176 = vunpack.c.h.b16 %v1165
    %v1177 = vunpack.c.l.b16 %v1166
    %v1178 = vunpack.c.h.b16 %v1166
    %v1179 = vpack.c.b16 %v1171, %v1171
    %v1180 = vpack.c.b16 %v1172, %v1172
    %v1181 = vpack.c.b16 %v1173, %v1173
    %v1182 = vpack.c.b16 %v1174, %v1174
    %v1183 = vpack.c.b16 %v1175, %v1175
    %v1184 = vpack.c.b16 %v1176, %v1176
    %v1185 = vpack.c.b16 %v1177, %v1177
    %v1186 = vpack.c.b16 %v1178, %v1178
    %1195 = vst.msk [vmem:[#allocation12 + $0x10] sm:$0xf] %vm744, %v1179
    %1196 = vst.msk [vmem:[#allocation12 + $0x24] sm:$0xf] %vm744, %v1180
    %1197 = vst.msk [vmem:[#allocation12 + $0x38] sm:$0xf] %vm744, %v1181
    %1198 = vst.msk [vmem:[#allocation12 + $0x4c] sm:$0xf] %vm744, %v1182
    %1199 = vst.msk [vmem:[#allocation12 + $0x60] sm:$0xf] %vm744, %v1183
    %1200 = vst.msk [vmem:[#allocation12 + $0x74] sm:$0xf] %vm744, %v1184
    %1201 = vst.msk [vmem:[#allocation12 + $0x88] sm:$0xf] %vm744, %v1185
    %1202 = vst.msk [vmem:[#allocation12 + $0x9c] sm:$0x1] %vm668, %v1186
    %v1203 = vld [vmem:[#allocation12] sm:$0xff]
    %v1204 = vld [vmem:[#allocation12 + $0x8] sm:$0xff]
    %v1205 = vld [vmem:[#allocation12 + $0x10] sm:$0xf]
    %v1206 = vld [vmem:[#allocation12 + $0x14] sm:$0xff]
    %v1207 = vld [vmem:[#allocation12 + $0x1c] sm:$0xff]
    %v1208 = vld [vmem:[#allocation12 + $0x24] sm:$0xf]
    %v1209 = vld [vmem:[#allocation12 + $0x28] sm:$0xff]
    %v1210 = vld [vmem:[#allocation12 + $0x30] sm:$0xff]
    %v1211 = vld [vmem:[#allocation12 + $0x38] sm:$0xf]
    %v1212 = vld [vmem:[#allocation12 + $0x3c] sm:$0xff]
    %v1213 = vld [vmem:[#allocation12 + $0x44] sm:$0xff]
    %v1214 = vld [vmem:[#allocation12 + $0x4c] sm:$0xf]
    %v1215 = vld [vmem:[#allocation12 + $0x50] sm:$0xff]
    %v1216 = vld [vmem:[#allocation12 + $0x58] sm:$0xff]
    %v1217 = vld [vmem:[#allocation12 + $0x60] sm:$0xf]
    %v1218 = vld [vmem:[#allocation12 + $0x64] sm:$0xff]
    %v1219 = vld [vmem:[#allocation12 + $0x6c] sm:$0xff]
    %v1220 = vld [vmem:[#allocation12 + $0x74] sm:$0xf]
    %v1221 = vld [vmem:[#allocation12 + $0x78] sm:$0xff]
    %v1222 = vld [vmem:[#allocation12 + $0x80] sm:$0xff]
    %v1223 = vld [vmem:[#allocation12 + $0x88] sm:$0xf]
    %v1224 = vld [vmem:[#allocation12 + $0x8c] sm:$0x11]
    %v1225 = vld [vmem:[#allocation12 + $0x94] sm:$0x11]
    %v1226 = vld [vmem:[#allocation12 + $0x9c] sm:$0x1]
    %v1227 = vld [vmem:[%s3] sm:$0xff]
    %v1228 = vld [vmem:[%s3 + $0x8] sm:$0xff]
    %v1229 = vld [vmem:[%s3 + $0x10] sm:$0xff]
    %v1230 = vld [vmem:[%s3 + $0x18] sm:$0xff]
    %v1231 = vld [vmem:[%s3 + $0x20] sm:$0xff]
    %v1232 = vld [vmem:[%s3 + $0x28] sm:$0xff]
    %v1233 = vld [vmem:[%s3 + $0x30] sm:$0xff]
    %v1234 = vld [vmem:[%s3 + $0x38] sm:$0xff]
    %v1235 = vld [vmem:[%s3 + $0x40] sm:$0xff]
    %v1236 = vld [vmem:[%s3 + $0x48] sm:$0xff]
    %v1237 = vld [vmem:[%s3 + $0x50] sm:$0xff]
    %v1238 = vld [vmem:[%s3 + $0x58] sm:$0xff]
    %v1239 = vld [vmem:[%s3 + $0x60] sm:$0xff]
    %v1240 = vld [vmem:[%s3 + $0x68] sm:$0xff]
    %v1241 = vld [vmem:[%s3 + $0x70] sm:$0xff]
    %v1242 = vld [vmem:[%s3 + $0x78] sm:$0xff]
    %v1243 = vld [vmem:[%s3 + $0x80] sm:$0xff]
    %v1244 = vld [vmem:[%s3 + $0x88] sm:$0xff]
    %v1245 = vld [vmem:[%s3 + $0x90] sm:$0xff]
    %v1246 = vld [vmem:[%s3 + $0x98] sm:$0xff]
    %v1247 = vld [vmem:[%s3 + $0xa0] sm:$0xff]
    %v1248 = vld [vmem:[%s3 + $0xa8] sm:$0xff]
    %v1249 = vld [vmem:[%s3 + $0xb0] sm:$0xff]
    %v1250 = vld [vmem:[%s3 + $0xb8] sm:$0xff]
    %v1251 = vld [vmem:[%s3 + $0xc0] sm:$0xff]
    %v1252 = vld [vmem:[%s3 + $0xc8] sm:$0xff]
    %v1253 = vld [vmem:[%s3 + $0xd0] sm:$0xff]
    %v1254 = vld [vmem:[%s3 + $0xd8] sm:$0xff]
    %v1255 = vld [vmem:[%s3 + $0xe0] sm:$0xff]
    %v1256 = vld [vmem:[%s3 + $0xe8] sm:$0xff]
    %v1257 = vld [vmem:[%s3 + $0xf0] sm:$0xff]
    %v1258 = vld [vmem:[%s3 + $0xf8] sm:$0xff]
    %v1259 = vld [vmem:[%s3 + $0x100] sm:$0xff]
    %v1260 = vld [vmem:[%s3 + $0x108] sm:$0xff]
    %v1261 = vld [vmem:[%s3 + $0x110] sm:$0xff]
    %v1262 = vld [vmem:[%s3 + $0x118] sm:$0xff]
    %v1263 = vld [vmem:[%s3 + $0x120] sm:$0xff]
    %v1264 = vld [vmem:[%s3 + $0x128] sm:$0xff]
    %v1265 = vld [vmem:[%s3 + $0x130] sm:$0xff]
    %v1266 = vld [vmem:[%s3 + $0x138] sm:$0xff]
    %v1267 = vld [vmem:[%s3 + $0x140] sm:$0xff]
    %v1268 = vld [vmem:[%s3 + $0x148] sm:$0xff]
    %v1269 = vld [vmem:[%s3 + $0x150] sm:$0xff]
    %v1270 = vld [vmem:[%s3 + $0x158] sm:$0xff]
    %v1271 = vld [vmem:[%s3 + $0x160] sm:$0xff]
    %v1272 = vld [vmem:[%s3 + $0x168] sm:$0xff]
    %v1273 = vld [vmem:[%s3 + $0x170] sm:$0xff]
    %v1274 = vld [vmem:[%s3 + $0x178] sm:$0xff]
    %v1275 = vld [vmem:[%s3 + $0x180] sm:$0xff]
    %v1276 = vld [vmem:[%s3 + $0x188] sm:$0xff]
    %v1277 = vld [vmem:[%s3 + $0x190] sm:$0xff]
    %v1278 = vld [vmem:[%s3 + $0x198] sm:$0xff]
    %v1279 = vld [vmem:[%s3 + $0x1a0] sm:$0xff]
    %v1280 = vld [vmem:[%s3 + $0x1a8] sm:$0xff]
    %v1281 = vld [vmem:[%s3 + $0x1b0] sm:$0xff]
    %v1282 = vld [vmem:[%s3 + $0x1b8] sm:$0xff]
    %v1283 = vld [vmem:[%s3 + $0x1c0] sm:$0xff]
    %v1284 = vld [vmem:[%s3 + $0x1c8] sm:$0xff]
    %v1285 = vld [vmem:[%s3 + $0x1d0] sm:$0xff]
    %v1286 = vld [vmem:[%s3 + $0x1d8] sm:$0xff]
    %v1287 = vld [vmem:[%s3 + $0x1e0] sm:$0xff]
    %v1288 = vld [vmem:[%s3 + $0x1e8] sm:$0xff]
    %v1289 = vld [vmem:[%s3 + $0x1f0] sm:$0xff]
    %v1290 = vld [vmem:[%s3 + $0x1f8] sm:$0xff]
    %v1291 = vld [vmem:[%s3 + $0x200] sm:$0xff]
    %v1292 = vld [vmem:[%s3 + $0x208] sm:$0xff]
    %v1293 = vld [vmem:[%s3 + $0x210] sm:$0xff]
    %v1294 = vld [vmem:[%s3 + $0x218] sm:$0xff]
    %v1295 = vld [vmem:[%s3 + $0x220] sm:$0xff]
    %v1296 = vld [vmem:[%s3 + $0x228] sm:$0xff]
    %v1297 = vld [vmem:[%s3 + $0x230] sm:$0xff]
    %v1298 = vld [vmem:[%s3 + $0x238] sm:$0xff]
    %v1323 = vunpack.c.l.b16 %v1203
    %v1324 = vunpack.c.h.b16 %v1203
    %v1325 = vunpack.c.l.b16 %v1204
    %v1326 = vunpack.c.h.b16 %v1204
    %v1327 = vunpack.c.l.b16 %v1205
    %v1328 = vunpack.c.l.b16 %v1206
    %v1329 = vunpack.c.h.b16 %v1206
    %v1330 = vunpack.c.l.b16 %v1207
    %v1331 = vunpack.c.h.b16 %v1207
    %v1332 = vunpack.c.l.b16 %v1208
    %v1333 = vunpack.c.l.b16 %v1209
    %v1334 = vunpack.c.h.b16 %v1209
    %v1335 = vunpack.c.l.b16 %v1210
    %v1336 = vunpack.c.h.b16 %v1210
    %v1337 = vunpack.c.l.b16 %v1211
    %v1338 = vunpack.c.l.b16 %v1212
    %v1339 = vunpack.c.h.b16 %v1212
    %v1340 = vunpack.c.l.b16 %v1213
    %v1341 = vunpack.c.h.b16 %v1213
    %v1342 = vunpack.c.l.b16 %v1214
    %v1343 = vunpack.c.l.b16 %v1215
    %v1344 = vunpack.c.h.b16 %v1215
    %v1345 = vunpack.c.l.b16 %v1216
    %v1346 = vunpack.c.h.b16 %v1216
    %v1347 = vunpack.c.l.b16 %v1217
    %v1348 = vunpack.c.l.b16 %v1218
    %v1349 = vunpack.c.h.b16 %v1218
    %v1350 = vunpack.c.l.b16 %v1219
    %v1351 = vunpack.c.h.b16 %v1219
    %v1352 = vunpack.c.l.b16 %v1220
    %v1353 = vunpack.c.l.b16 %v1221
    %v1354 = vunpack.c.h.b16 %v1221
    %v1355 = vunpack.c.l.b16 %v1222
    %v1356 = vunpack.c.h.b16 %v1222
    %v1357 = vunpack.c.l.b16 %v1223
    %v1358 = vunpack.c.l.b16 %v1224
    %v1359 = vunpack.c.h.b16 %v1224
    %v1360 = vunpack.c.l.b16 %v1225
    %v1361 = vunpack.c.h.b16 %v1225
    %v1362 = vunpack.c.l.b16 %v1226
    %v1363 = vpack.c.b16 %v1328, %v1323
    %v1364 = vpack.c.b16 %v1329, %v1324
    %v1365 = vpack.c.b16 %v1330, %v1325
    %v1366 = vpack.c.b16 %v1331, %v1326
    %v1367 = vpack.c.b16 %v1332, %v1327
    %v1368 = vpack.c.b16 %v1338, %v1333
    %v1369 = vpack.c.b16 %v1339, %v1334
    %v1370 = vpack.c.b16 %v1340, %v1335
    %v1371 = vpack.c.b16 %v1341, %v1336
    %v1372 = vpack.c.b16 %v1342, %v1337
    %v1373 = vpack.c.b16 %v1348, %v1343
    %v1374 = vpack.c.b16 %v1349, %v1344
    %v1375 = vpack.c.b16 %v1350, %v1345
    %v1376 = vpack.c.b16 %v1351, %v1346
    %v1377 = vpack.c.b16 %v1352, %v1347
    %v1378 = vpack.c.b16 %v1358, %v1353
    %v1379 = vpack.c.b16 %v1359, %v1354
    %v1380 = vpack.c.b16 %v1360, %v1355
    %v1381 = vpack.c.b16 %v1361, %v1356
    %v1382 = vpack.c.b16 %v1362, %v1357
    %v1471 = vunpack.c.l.b16 %v1227
    %v1472 = vunpack.c.h.b16 %v1227
    %v1473 = vunpack.c.l.b16 %v1228
    %v1474 = vunpack.c.h.b16 %v1228
    %v1475 = vunpack.c.l.b16 %v1229
    %v1476 = vunpack.c.h.b16 %v1229
    %v1477 = vunpack.c.l.b16 %v1230
    %v1478 = vunpack.c.h.b16 %v1230
    %v1479 = vunpack.c.l.b16 %v1231
    %v1480 = vunpack.c.h.b16 %v1231
    %v1481 = vunpack.c.l.b16 %v1232
    %v1482 = vunpack.c.h.b16 %v1232
    %v1483 = vunpack.c.l.b16 %v1233
    %v1484 = vunpack.c.h.b16 %v1233
    %v1485 = vunpack.c.l.b16 %v1234
    %v1486 = vunpack.c.h.b16 %v1234
    %v1487 = vunpack.c.l.b16 %v1235
    %v1488 = vunpack.c.h.b16 %v1235
    %v1489 = vunpack.c.l.b16 %v1236
    %v1490 = vunpack.c.h.b16 %v1236
    %v1491 = vunpack.c.l.b16 %v1237
    %v1492 = vunpack.c.h.b16 %v1237
    %v1493 = vunpack.c.l.b16 %v1238
    %v1494 = vunpack.c.h.b16 %v1238
    %v1495 = vunpack.c.l.b16 %v1239
    %v1496 = vunpack.c.h.b16 %v1239
    %v1497 = vunpack.c.l.b16 %v1240
    %v1498 = vunpack.c.h.b16 %v1240
    %v1499 = vunpack.c.l.b16 %v1241
    %v1500 = vunpack.c.h.b16 %v1241
    %v1501 = vunpack.c.l.b16 %v1242
    %v1502 = vunpack.c.h.b16 %v1242
    %v1503 = vunpack.c.l.b16 %v1243
    %v1504 = vunpack.c.h.b16 %v1243
    %v1505 = vunpack.c.l.b16 %v1244
    %v1506 = vunpack.c.h.b16 %v1244
    %v1507 = vunpack.c.l.b16 %v1245
    %v1508 = vunpack.c.h.b16 %v1245
    %v1509 = vunpack.c.l.b16 %v1246
    %v1510 = vunpack.c.h.b16 %v1246
    %v1511 = vunpack.c.l.b16 %v1247
    %v1512 = vunpack.c.h.b16 %v1247
    %v1513 = vunpack.c.l.b16 %v1248
    %v1514 = vunpack.c.h.b16 %v1248
    %v1515 = vunpack.c.l.b16 %v1249
    %v1516 = vunpack.c.h.b16 %v1249
    %v1517 = vunpack.c.l.b16 %v1250
    %v1518 = vunpack.c.h.b16 %v1250
    %v1519 = vunpack.c.l.b16 %v1251
    %v1520 = vunpack.c.h.b16 %v1251
    %v1521 = vunpack.c.l.b16 %v1252
    %v1522 = vunpack.c.h.b16 %v1252
    %v1523 = vunpack.c.l.b16 %v1253
    %v1524 = vunpack.c.h.b16 %v1253
    %v1525 = vunpack.c.l.b16 %v1254
    %v1526 = vunpack.c.h.b16 %v1254
    %v1527 = vunpack.c.l.b16 %v1255
    %v1528 = vunpack.c.h.b16 %v1255
    %v1529 = vunpack.c.l.b16 %v1256
    %v1530 = vunpack.c.h.b16 %v1256
    %v1531 = vunpack.c.l.b16 %v1257
    %v1532 = vunpack.c.h.b16 %v1257
    %v1533 = vunpack.c.l.b16 %v1258
    %v1534 = vunpack.c.h.b16 %v1258
    %v1535 = vunpack.c.l.b16 %v1259
    %v1536 = vunpack.c.h.b16 %v1259
    %v1537 = vunpack.c.l.b16 %v1260
    %v1538 = vunpack.c.h.b16 %v1260
    %v1539 = vunpack.c.l.b16 %v1261
    %v1540 = vunpack.c.h.b16 %v1261
    %v1541 = vunpack.c.l.b16 %v1262
    %v1542 = vunpack.c.h.b16 %v1262
    %v1543 = vunpack.c.l.b16 %v1263
    %v1544 = vunpack.c.h.b16 %v1263
    %v1545 = vunpack.c.l.b16 %v1264
    %v1546 = vunpack.c.h.b16 %v1264
    %v1547 = vunpack.c.l.b16 %v1265
    %v1548 = vunpack.c.h.b16 %v1265
    %v1549 = vunpack.c.l.b16 %v1266
    %v1550 = vunpack.c.h.b16 %v1266
    %v1551 = vunpack.c.l.b16 %v1267
    %v1552 = vunpack.c.h.b16 %v1267
    %v1553 = vunpack.c.l.b16 %v1268
    %v1554 = vunpack.c.h.b16 %v1268
    %v1555 = vunpack.c.l.b16 %v1269
    %v1556 = vunpack.c.h.b16 %v1269
    %v1557 = vunpack.c.l.b16 %v1270
    %v1558 = vunpack.c.h.b16 %v1270
    %v1559 = vunpack.c.l.b16 %v1271
    %v1560 = vunpack.c.h.b16 %v1271
    %v1561 = vunpack.c.l.b16 %v1272
    %v1562 = vunpack.c.h.b16 %v1272
    %v1563 = vunpack.c.l.b16 %v1273
    %v1564 = vunpack.c.h.b16 %v1273
    %v1565 = vunpack.c.l.b16 %v1274
    %v1566 = vunpack.c.h.b16 %v1274
    %v1567 = vunpack.c.l.b16 %v1275
    %v1568 = vunpack.c.h.b16 %v1275
    %v1569 = vunpack.c.l.b16 %v1276
    %v1570 = vunpack.c.h.b16 %v1276
    %v1571 = vunpack.c.l.b16 %v1277
    %v1572 = vunpack.c.h.b16 %v1277
    %v1573 = vunpack.c.l.b16 %v1278
    %v1574 = vunpack.c.h.b16 %v1278
    %v1575 = vunpack.c.l.b16 %v1279
    %v1576 = vunpack.c.h.b16 %v1279
    %v1577 = vunpack.c.l.b16 %v1280
    %v1578 = vunpack.c.h.b16 %v1280
    %v1579 = vunpack.c.l.b16 %v1281
    %v1580 = vunpack.c.h.b16 %v1281
    %v1581 = vunpack.c.l.b16 %v1282
    %v1582 = vunpack.c.h.b16 %v1282
    %v1583 = vunpack.c.l.b16 %v1283
    %v1584 = vunpack.c.h.b16 %v1283
    %v1585 = vunpack.c.l.b16 %v1284
    %v1586 = vunpack.c.h.b16 %v1284
    %v1587 = vunpack.c.l.b16 %v1285
    %v1588 = vunpack.c.h.b16 %v1285
    %v1589 = vunpack.c.l.b16 %v1286
    %v1590 = vunpack.c.h.b16 %v1286
    %v1591 = vunpack.c.l.b16 %v1287
    %v1592 = vunpack.c.h.b16 %v1287
    %v1593 = vunpack.c.l.b16 %v1288
    %v1594 = vunpack.c.h.b16 %v1288
    %v1595 = vunpack.c.l.b16 %v1289
    %v1596 = vunpack.c.h.b16 %v1289
    %v1597 = vunpack.c.l.b16 %v1290
    %v1598 = vunpack.c.h.b16 %v1290
    %v1599 = vunpack.c.l.b16 %v1291
    %v1600 = vunpack.c.h.b16 %v1291
    %v1601 = vunpack.c.l.b16 %v1292
    %v1602 = vunpack.c.h.b16 %v1292
    %v1603 = vunpack.c.l.b16 %v1293
    %v1604 = vunpack.c.h.b16 %v1293
    %v1605 = vunpack.c.l.b16 %v1294
    %v1606 = vunpack.c.h.b16 %v1294
    %v1607 = vunpack.c.l.b16 %v1295
    %v1608 = vunpack.c.h.b16 %v1295
    %v1609 = vunpack.c.l.b16 %v1296
    %v1610 = vunpack.c.h.b16 %v1296
    %v1611 = vunpack.c.l.b16 %v1297
    %v1612 = vunpack.c.h.b16 %v1297
    %v1613 = vunpack.c.l.b16 %v1298
    %v1614 = vunpack.c.h.b16 %v1298
    %v1615 = vpack.c.b16 %v1473, %v1471
    %v1616 = vpack.c.b16 %v1474, %v1472
    %v1617 = vpack.c.b16 %v1477, %v1475
    %v1618 = vpack.c.b16 %v1478, %v1476
    %v1619 = vpack.c.b16 %v1481, %v1479
    %v1620 = vpack.c.b16 %v1482, %v1480
    %v1621 = vpack.c.b16 %v1485, %v1483
    %v1622 = vpack.c.b16 %v1486, %v1484
    %v1623 = vpack.c.b16 %v1489, %v1487
    %v1624 = vpack.c.b16 %v1490, %v1488
    %v1625 = vpack.c.b16 %v1493, %v1491
    %v1626 = vpack.c.b16 %v1494, %v1492
    %v1627 = vpack.c.b16 %v1497, %v1495
    %v1628 = vpack.c.b16 %v1498, %v1496
    %v1629 = vpack.c.b16 %v1501, %v1499
    %v1630 = vpack.c.b16 %v1502, %v1500
    %v1631 = vpack.c.b16 %v1505, %v1503
    %v1632 = vpack.c.b16 %v1506, %v1504
    %v1633 = vpack.c.b16 %v1509, %v1507
    %v1634 = vpack.c.b16 %v1510, %v1508
    %v1635 = vpack.c.b16 %v1513, %v1511
    %v1636 = vpack.c.b16 %v1514, %v1512
    %v1637 = vpack.c.b16 %v1517, %v1515
    %v1638 = vpack.c.b16 %v1518, %v1516
    %v1639 = vpack.c.b16 %v1521, %v1519
    %v1640 = vpack.c.b16 %v1522, %v1520
    %v1641 = vpack.c.b16 %v1525, %v1523
    %v1642 = vpack.c.b16 %v1526, %v1524
    %v1643 = vpack.c.b16 %v1529, %v1527
    %v1644 = vpack.c.b16 %v1530, %v1528
    %v1645 = vpack.c.b16 %v1533, %v1531
    %v1646 = vpack.c.b16 %v1534, %v1532
    %v1647 = vpack.c.b16 %v1537, %v1535
    %v1648 = vpack.c.b16 %v1538, %v1536
    %v1649 = vpack.c.b16 %v1541, %v1539
    %v1650 = vpack.c.b16 %v1542, %v1540
    %v1651 = vpack.c.b16 %v1545, %v1543
    %v1652 = vpack.c.b16 %v1546, %v1544
    %v1653 = vpack.c.b16 %v1549, %v1547
    %v1654 = vpack.c.b16 %v1550, %v1548
    %v1655 = vpack.c.b16 %v1553, %v1551
    %v1656 = vpack.c.b16 %v1554, %v1552
    %v1657 = vpack.c.b16 %v1557, %v1555
    %v1658 = vpack.c.b16 %v1558, %v1556
    %v1659 = vpack.c.b16 %v1561, %v1559
    %v1660 = vpack.c.b16 %v1562, %v1560
    %v1661 = vpack.c.b16 %v1565, %v1563
    %v1662 = vpack.c.b16 %v1566, %v1564
    %v1663 = vpack.c.b16 %v1569, %v1567
    %v1664 = vpack.c.b16 %v1570, %v1568
    %v1665 = vpack.c.b16 %v1573, %v1571
    %v1666 = vpack.c.b16 %v1574, %v1572
    %v1667 = vpack.c.b16 %v1577, %v1575
    %v1668 = vpack.c.b16 %v1578, %v1576
    %v1669 = vpack.c.b16 %v1581, %v1579
    %v1670 = vpack.c.b16 %v1582, %v1580
    %v1671 = vpack.c.b16 %v1585, %v1583
    %v1672 = vpack.c.b16 %v1586, %v1584
    %v1673 = vpack.c.b16 %v1589, %v1587
    %v1674 = vpack.c.b16 %v1590, %v1588
    %v1675 = vpack.c.b16 %v1593, %v1591
    %v1676 = vpack.c.b16 %v1594, %v1592
    %v1677 = vpack.c.b16 %v1597, %v1595
    %v1678 = vpack.c.b16 %v1598, %v1596
    %v1679 = vpack.c.b16 %v1601, %v1599
    %v1680 = vpack.c.b16 %v1602, %v1600
    %v1681 = vpack.c.b16 %v1605, %v1603
    %v1682 = vpack.c.b16 %v1606, %v1604
    %v1683 = vpack.c.b16 %v1609, %v1607
    %v1684 = vpack.c.b16 %v1610, %v1608
    %v1685 = vpack.c.b16 %v1613, %v1611
    %v1686 = vpack.c.b16 %v1614, %v1612
    %v1760 = vsel %vm58, %v1367, 0
    %v1763 = vsel %vm58, %v1372, 0
    %v1766 = vsel %vm58, %v1377, 0
    %v1769 = vsel %vm58, %v1382, 0
    %1771 = vmatprep.subr.bf16.mxu0 %v1630
    %1772 = vmatpush1.bf16.msra.mxu0 %v1629
    %1773 = vmatprep.subr.bf16.mxu0 %v1628
    %1774 = vmatpush1.bf16.msra.mxu0 %v1627
    %1775 = vmatprep.subr.bf16.mxu0 %v1626
    %1776 = vmatpush1.bf16.msra.mxu0 %v1625
    %1777 = vmatprep.subr.bf16.mxu0 %v1624
    %1778 = vmatpush1.bf16.msra.mxu0 %v1623
    %1779 = vmatprep.subr.bf16.mxu0 %v1622
    %1780 = vmatpush1.bf16.msra.mxu0 %v1621
    %1781 = vmatprep.subr.bf16.mxu0 %v1620
    %1782 = vmatpush1.bf16.msra.mxu0 %v1619
    %1783 = vmatprep.subr.bf16.mxu0 %v1618
    %1784 = vmatpush1.bf16.msra.mxu0 %v1617
    %1785 = vmatprep.subr.bf16.mxu0 %v1616
    %1786 = vmatpush1.bf16.msra.mxu0 %v1615
    %1787 = vmatprep.subr.bf16.mxu0 %v1646
    %1788 = vmatpush2.bf16.msra.mxu0 %v1645
    %1789 = vmatprep.subr.bf16.mxu0 %v1644
    %1790 = vmatpush2.bf16.msra.mxu0 %v1643
    %1791 = vmatprep.subr.bf16.mxu0 %v1642
    %1792 = vmatpush2.bf16.msra.mxu0 %v1641
    %1793 = vmatprep.subr.bf16.mxu0 %v1640
    %1794 = vmatpush2.bf16.msra.mxu0 %v1639
    %1795 = vmatprep.subr.bf16.mxu0 %v1638
    %1796 = vmatpush2.bf16.msra.mxu0 %v1637
    %1797 = vmatprep.subr.bf16.mxu0 %v1636
    %1798 = vmatpush2.bf16.msra.mxu0 %v1635
    %1799 = vmatprep.subr.bf16.mxu0 %v1634
    %1800 = vmatpush2.bf16.msra.mxu0 %v1633
    %1801 = vmatprep.subr.bf16.mxu0 %v1632
    %1802 = vmatpush2.bf16.msra.mxu0 %v1631
    %1803 = vmatprep.mubr.bf16.mxu0 %v1364
    %1804 = vmatmul.mubr.bf16.gmra.mxu0 %v1363
    %v1805 = vpop.f32.mrf.mxu0
    %v1806 = vadd.f32 0.0, %v1805
    %v1807 = vpop.f32.mrf.mxu0
    %v1808 = vadd.f32 0.0, %v1807
    %v1809 = vpop.f32.mrf.mxu0
    %v1810 = vadd.f32 0.0, %v1809
    %v1811 = vpop.f32.mrf.mxu0
    %v1812 = vadd.f32 0.0, %v1811
    %1813 = vmatprep.mubr.bf16.mxu0 %v1369
    %1814 = vmatmul.mubr.bf16.gmra.mxu0 %v1368
    %v1815 = vpop.f32.mrf.mxu0
    %v1816 = vpop.f32.mrf.mxu0
    %v1817 = vpop.f32.mrf.mxu0
    %v1818 = vpop.f32.mrf.mxu0
    %1819 = vmatprep.mubr.bf16.mxu0 %v1374
    %1820 = vmatmul.mubr.bf16.gmra.mxu0 %v1373
    %v1821 = vpop.f32.mrf.mxu0
    %v1822 = vadd.f32 0.0, %v1821
    %v1823 = vpop.f32.mrf.mxu0
    %v1824 = vadd.f32 0.0, %v1823
    %v1825 = vpop.f32.mrf.mxu0
    %v1826 = vpop.f32.mrf.mxu0
    %1827 = vmatprep.mubr.bf16.mxu0 %v1379
    %1828 = vmatmul.mubr.bf16.gmra.mxu0 %v1378
    %v1829 = vpop.f32.mrf.mxu0
    %v1830 = vadd.f32 0.0, %v1829
    %v1831 = vpop.f32.mrf.mxu0
    %v1832 = vadd.f32 0.0, %v1831
    %v1833 = vpop.f32.mrf.mxu0
    %v1834 = vpop.f32.mrf.mxu0
    %1835 = vdwg.mxu0
    %1836 = vmatprep.subr.bf16.mxu0 %v1662
    %1837 = vmatpush1.bf16.msra.mxu0 %v1661
    %1838 = vmatprep.subr.bf16.mxu0 %v1660
    %1839 = vmatpush1.bf16.msra.mxu0 %v1659
    %1840 = vmatprep.subr.bf16.mxu0 %v1658
    %1841 = vmatpush1.bf16.msra.mxu0 %v1657
    %1842 = vmatprep.subr.bf16.mxu0 %v1656
    %1843 = vmatpush1.bf16.msra.mxu0 %v1655
    %1844 = vmatprep.subr.bf16.mxu0 %v1654
    %1845 = vmatpush1.bf16.msra.mxu0 %v1653
    %1846 = vmatprep.subr.bf16.mxu0 %v1652
    %1847 = vmatpush1.bf16.msra.mxu0 %v1651
    %1848 = vmatprep.subr.bf16.mxu0 %v1650
    %1849 = vmatpush1.bf16.msra.mxu0 %v1649
    %1850 = vmatprep.subr.bf16.mxu0 %v1648
    %1851 = vmatpush1.bf16.msra.mxu0 %v1647
    %1852 = vmatprep.subr.bf16.mxu0 %v1678
    %1853 = vmatpush2.bf16.msra.mxu0 %v1677
    %1854 = vmatprep.subr.bf16.mxu0 %v1676
    %1855 = vmatpush2.bf16.msra.mxu0 %v1675
    %1856 = vmatprep.subr.bf16.mxu0 %v1674
    %1857 = vmatpush2.bf16.msra.mxu0 %v1673
    %1858 = vmatprep.subr.bf16.mxu0 %v1672
    %1859 = vmatpush2.bf16.msra.mxu0 %v1671
    %1860 = vmatprep.subr.bf16.mxu0 %v1670
    %1861 = vmatpush2.bf16.msra.mxu0 %v1669
    %1862 = vmatprep.subr.bf16.mxu0 %v1668
    %1863 = vmatpush2.bf16.msra.mxu0 %v1667
    %1864 = vmatprep.subr.bf16.mxu0 %v1666
    %1865 = vmatpush2.bf16.msra.mxu0 %v1665
    %1866 = vmatprep.subr.bf16.mxu0 %v1664
    %1867 = vmatpush2.bf16.msra.mxu0 %v1663
    %1868 = vmatprep.mubr.bf16.mxu0 %v1366
    %1869 = vmatmul.mubr.bf16.gmra.mxu0 %v1365
    %v1870 = vpop.f32.mrf.mxu0
    %v1871 = vadd.f32 %v1806, %v1870
    %v1872 = vpop.f32.mrf.mxu0
    %v1873 = vadd.f32 %v1808, %v1872
    %v1874 = vpop.f32.mrf.mxu0
    %v1875 = vadd.f32 %v1810, %v1874
    %v1876 = vpop.f32.mrf.mxu0
    %v1877 = vadd.f32 %v1812, %v1876
    %1878 = vmatprep.mubr.bf16.mxu0 %v1371
    %1879 = vmatmul.mubr.bf16.gmra.mxu0 %v1370
    %v1880 = vpop.f32.mrf.mxu0
    %v1881 = vpop.f32.mrf.mxu0
    %v1882 = vpop.f32.mrf.mxu0
    %v1883 = vpop.f32.mrf.mxu0
    %1884 = vmatprep.mubr.bf16.mxu0 %v1376
    %1885 = vmatmul.mubr.bf16.gmra.mxu0 %v1375
    %v1886 = vpop.f32.mrf.mxu0
    %v1887 = vadd.f32 %v1822, %v1886
    %v1888 = vpop.f32.mrf.mxu0
    %v1889 = vadd.f32 %v1824, %v1888
    %v1890 = vpop.f32.mrf.mxu0
    %v1891 = vpop.f32.mrf.mxu0
    %1892 = vmatprep.mubr.bf16.mxu0 %v1381
    %1893 = vmatmul.mubr.bf16.gmra.mxu0 %v1380
    %v1894 = vpop.f32.mrf.mxu0
    %v1895 = vadd.f32 %v1830, %v1894
    %v1896 = vpop.f32.mrf.mxu0
    %v1897 = vadd.f32 %v1832, %v1896
    %v1898 = vpop.f32.mrf.mxu0
    %v1899 = vpop.f32.mrf.mxu0
    %1900 = vdwg.mxu0
    %1901 = vmatprep.subr.bf16.mxu0 0
    %1902 = vmatpush1.bf16.msra.mxu0 0
    %1903 = vmatprep.subr.bf16.mxu0 0
    %1904 = vmatpush1.bf16.msra.mxu0 0
    %1905 = vmatprep.subr.bf16.mxu0 0
    %1906 = vmatpush1.bf16.msra.mxu0 0
    %1907 = vmatprep.subr.bf16.mxu0 0
    %1908 = vmatpush1.bf16.msra.mxu0 0
    %1909 = vmatprep.subr.bf16.mxu0 %v1686
    %1910 = vmatpush1.bf16.msra.mxu0 %v1685
    %1911 = vmatprep.subr.bf16.mxu0 %v1684
    %1912 = vmatpush1.bf16.msra.mxu0 %v1683
    %1913 = vmatprep.subr.bf16.mxu0 %v1682
    %1914 = vmatpush1.bf16.msra.mxu0 %v1681
    %1915 = vmatprep.subr.bf16.mxu0 %v1680
    %1916 = vmatpush1.bf16.msra.mxu0 %v1679
    %1917 = vmatprep.subr.bf16.mxu0 0
    %1918 = vmatpush2.bf16.msra.mxu0 0
    %1919 = vmatprep.subr.bf16.mxu0 0
    %1920 = vmatpush2.bf16.msra.mxu0 0
    %1921 = vmatprep.subr.bf16.mxu0 0
    %1922 = vmatpush2.bf16.msra.mxu0 0
    %1923 = vmatprep.subr.bf16.mxu0 0
    %1924 = vmatpush2.bf16.msra.mxu0 0
    %1925 = vmatprep.subr.bf16.mxu0 0
    %1926 = vmatpush2.bf16.msra.mxu0 0
    %1927 = vmatprep.subr.bf16.mxu0 0
    %1928 = vmatpush2.bf16.msra.mxu0 0
    %1929 = vmatprep.subr.bf16.mxu0 0
    %1930 = vmatpush2.bf16.msra.mxu0 0
    %1931 = vmatprep.subr.bf16.mxu0 0
    %1932 = vmatpush2.bf16.msra.mxu0 0
    %1933 = vmatprep.mubr.bf16.mxu0 0
    %1934 = vmatmul.mubr.bf16.gmra.mxu0 %v1760
    %v1935 = vpop.f32.mrf.mxu0
    %v1936 = vadd.f32 %v1871, %v1935
    %v1937 = vpop.f32.mrf.mxu0
    %v1938 = vadd.f32 %v1873, %v1937
    %v1939 = vpop.f32.mrf.mxu0
    %v1940 = vadd.f32 %v1875, %v1939
    %v1941 = vpop.f32.mrf.mxu0
    %v1942 = vadd.f32 %v1877, %v1941
    %1943 = vmatprep.mubr.bf16.mxu0 0
    %1944 = vmatmul.mubr.bf16.gmra.mxu0 %v1763
    %v1945 = vpop.f32.mrf.mxu0
    %v1946 = vpop.f32.mrf.mxu0
    %v1947 = vpop.f32.mrf.mxu0
    %v1948 = vpop.f32.mrf.mxu0
    %1949 = vmatprep.mubr.bf16.mxu0 0
    %1950 = vmatmul.mubr.bf16.gmra.mxu0 %v1766
    %v1951 = vpop.f32.mrf.mxu0
    %v1952 = vadd.f32 %v1887, %v1951
    %v1953 = vpop.f32.mrf.mxu0
    %v1954 = vadd.f32 %v1889, %v1953
    %v1955 = vpop.f32.mrf.mxu0
    %v1956 = vpop.f32.mrf.mxu0
    %1957 = vmatprep.mubr.bf16.mxu0 0
    %1958 = vmatmul.mubr.bf16.gmra.mxu0 %v1769
    %v1959 = vpop.f32.mrf.mxu0
    %v1960 = vadd.f32 %v1895, %v1959
    %v1961 = vpop.f32.mrf.mxu0
    %v1962 = vadd.f32 %v1897, %v1961
    %v1963 = vpop.f32.mrf.mxu0
    %v1964 = vpop.f32.mrf.mxu0
    %1965 = vdwg.mxu0
    %v1966 = vld [vmem:[%s4] sm:$0x1]
    %v1968 = vlaneseq
    %v1969 = vshrl.u32 %v1968, 7
    %v1970 = vsub.s32 0, %v1969
    %v1971 = vrot.slane %v1966, %v1970
    %v1973 = vadd.f32 %v1936, %v1971
    %v1974 = vadd.f32 %v1940, %v1971
    %v1975 = vadd.f32 %v1952, %v1971
    %v1976 = vadd.f32 %v1960, %v1971
    %v1977 = vmax.f32 %v1973, 0.0
    %v1978 = vmax.f32 %v1974, 0.0
    %v1979 = vmax.f32 %v1975, 0.0
    %v1980 = vmax.f32 %v1976, 0.0
    %vm1981 = vcmask 778240
    %1982 = vst.msk [vmem:[#allocation4 + $0x5] sm:$0x1] %vm1981, %v1977
    %vm1983 = vcmask 780290
    %1984 = vst.msk [vmem:[#allocation4 + $0x4] sm:$0x4] %vm1983, %v1977
    %vm1985 = vcmask 782340
    %1986 = vst.msk [vmem:[#allocation4 + $0x5] sm:$0x10] %vm1985, %v1978
    %vm1987 = vcmask 784390
    %1988 = vst.msk [vmem:[#allocation4 + $0x4] sm:$0x40] %vm1987, %v1978
    %1989 = vst.msk [vmem:[#allocation4 + $0x11] sm:$0x10] %vm1985, %v1979
    %1990 = vst.msk [vmem:[#allocation4 + $0x10] sm:$0x40] %vm1987, %v1979
    %1991 = vst.msk [vmem:[#allocation4 + $0x19] sm:$0x1] %vm1981, %v1980
    %1992 = vst.msk [vmem:[#allocation4 + $0x18] sm:$0x4] %vm1983, %v1980
    %v1993 = vld [vmem:[#allocation4] sm:$0xff]
    %v1994 = vld [vmem:[#allocation4 + $0x8] sm:$0xff]
    %v1995 = vld [vmem:[#allocation4 + $0x10] sm:$0x3f]
    %v1996 = vpack.c.bf16 %v1994, %v1993
    %v1997 = vpack.c.bf16 %v1995, %v1995
    %v2000 = vunpack.c.l.b16 %v1996
    %v2001 = vunpack.c.h.b16 %v1996
    %v2002 = vunpack.c.l.b16 %v1997
    %v2003 = vpack.c.b16 %v2000, %v2000
    %v2004 = vpack.c.b16 %v2001, %v2001
    %v2005 = vpack.c.b16 %v2002, %v2002
    %vm2009 = vcmask 781312
    %2010 = vst.msk [vmem:[#allocation13] sm:$0xf] %vm2009, %v2003
    %2011 = vst.msk [vmem:[#allocation13 + $0x1c] sm:$0xf] %vm2009, %v2004
    %vm2012 = vcmask 780288
    %2013 = vst.msk [vmem:[#allocation13 + $0x38] sm:$0x7] %vm2012, %v2005
    %v2014 = vld [vmem:[#allocation4 + $0x1] sm:$0xff]
    %v2015 = vld [vmem:[#allocation4 + $0x9] sm:$0xff]
    %v2016 = vld [vmem:[#allocation4 + $0x11] sm:$0x3f]
    %v2017 = vpack.c.bf16 %v2015, %v2014
    %v2018 = vpack.c.bf16 %v2016, %v2016
    %v2021 = vunpack.c.l.b16 %v2017
    %v2022 = vunpack.c.h.b16 %v2017
    %v2023 = vunpack.c.l.b16 %v2018
    %v2024 = vpack.c.b16 %v2021, %v2021
    %v2025 = vpack.c.b16 %v2022, %v2022
    %v2026 = vpack.c.b16 %v2023, %v2023
    %2027 = vrot.lane.b32.xlu0 %v2024, 96
    %v2028 = vpop.permute.xlu0 %2027
    %2029 = vrot.lane.b32.xlu0 %v2025, 96
    %v2030 = vpop.permute.xlu0 %2029
    %2031 = vrot.lane.b32.xlu0 %v2026, 96
    %v2032 = vpop.permute.xlu0 %2031
    %v2033 = vrot.slane %v2028, 4
    %v2034 = vrot.slane %v2030, 4
    %v2035 = vrot.slane %v2032, 4
    %vm2036 = vcmask 785408
    %v2037 = vsel %vm2036, %v2033, %v2028
    %v2038 = vsel %vm2036, %v2034, %v2030
    %v2039 = vsel %vm2036, %v2035, %v2032
    %vm2043 = vcmask 1044224
    %vm2044 = vcmask 523268
    %vm2045 = vmor %vm2044, %vm2043
    %2046 = vst.msk [vmem:[#allocation13] sm:$0xff] %vm2045, %v2037
    %2047 = vst.msk [vmem:[#allocation13 + $0x1c] sm:$0xff] %vm2045, %v2038
    %vm2048 = vcmask 1043200
    %vm2049 = vcmask 522244
    %vm2050 = vmor %vm2049, %vm2048
    %2051 = vst.msk [vmem:[#allocation13 + $0x38] sm:$0x77] %vm2050, %v2039
    %v2052 = vld [vmem:[#allocation4 + $0x2] sm:$0xff]
    %v2053 = vld [vmem:[#allocation4 + $0xa] sm:$0xff]
    %v2054 = vld [vmem:[#allocation4 + $0x12] sm:$0x3f]
    %v2055 = vpack.c.bf16 %v2053, %v2052
    %v2056 = vpack.c.bf16 %v2054, %v2054
    %v2059 = vunpack.c.l.b16 %v2055
    %v2060 = vunpack.c.h.b16 %v2055
    %v2061 = vunpack.c.l.b16 %v2056
    %v2062 = vpack.c.b16 %v2059, %v2059
    %v2063 = vpack.c.b16 %v2060, %v2060
    %v2064 = vpack.c.b16 %v2061, %v2061
    %2065 = vrot.lane.b32.xlu0 %v2062, 64
    %v2066 = vpop.permute.xlu0 %2065
    %2067 = vrot.lane.b32.xlu0 %v2063, 64
    %v2068 = vpop.permute.xlu0 %2067
    %2069 = vrot.lane.b32.xlu0 %v2064, 64
    %v2070 = vpop.permute.xlu0 %2069
    %v2071 = vrot.slane %v2066, 4
    %v2072 = vrot.slane %v2068, 4
    %v2073 = vrot.slane %v2070, 4
    %vm2074 = vcmask 523264
    %v2075 = vsel %vm2074, %v2071, %v2066
    %v2076 = vsel %vm2074, %v2072, %v2068
    %v2077 = vsel %vm2074, %v2073, %v2070
    %vm2081 = vcmask 261124
    %vm2082 = vmor %vm2081, %vm809
    %2083 = vst.msk [vmem:[#allocation13 + $0x4] sm:$0xff] %vm2082, %v2075
    %2084 = vst.msk [vmem:[#allocation13 + $0x20] sm:$0xff] %vm2082, %v2076
    %vm2085 = vcmask 1042944
    %vm2086 = vcmask 260100
    %vm2087 = vmor %vm2086, %vm2085
    %2088 = vst.msk [vmem:[#allocation13 + $0x3c] sm:$0x77] %vm2087, %v2077
    %v2089 = vld [vmem:[#allocation4 + $0x4] sm:$0xff]
    %v2090 = vld [vmem:[#allocation4 + $0xc] sm:$0xff]
    %v2091 = vld [vmem:[#allocation4 + $0x14] sm:$0x3f]
    %v2092 = vpack.c.bf16 %v2090, %v2089
    %v2093 = vpack.c.bf16 %v2091, %v2091
    %v2096 = vunpack.c.l.b16 %v2092
    %v2097 = vunpack.c.h.b16 %v2092
    %v2098 = vunpack.c.l.b16 %v2093
    %v2099 = vpack.c.b16 %v2096, %v2096
    %v2100 = vpack.c.b16 %v2097, %v2097
    %v2101 = vpack.c.b16 %v2098, %v2098
    %2102 = vrot.lane.b32.xlu0 %v2099, 32
    %v2103 = vpop.permute.xlu0 %2102
    %2104 = vrot.lane.b32.xlu0 %v2100, 32
    %v2105 = vpop.permute.xlu0 %2104
    %2106 = vrot.lane.b32.xlu0 %v2101, 32
    %v2107 = vpop.permute.xlu0 %2106
    %vm2111 = vcmask 1043712
    %2112 = vst.msk [vmem:[#allocation13 + $0x8] sm:$0xf] %vm2111, %v2103
    %2113 = vst.msk [vmem:[#allocation13 + $0x24] sm:$0xf] %vm2111, %v2105
    %vm2114 = vcmask 1042688
    %2115 = vst.msk [vmem:[#allocation13 + $0x40] sm:$0x7] %vm2114, %v2107
    %v2116 = vld [vmem:[#allocation4 + $0x5] sm:$0xff]
    %v2117 = vld [vmem:[#allocation4 + $0xd] sm:$0xff]
    %v2118 = vld [vmem:[#allocation4 + $0x15] sm:$0x3f]
    %v2119 = vpack.c.bf16 %v2117, %v2116
    %v2120 = vpack.c.bf16 %v2118, %v2118
    %v2123 = vunpack.c.l.b16 %v2119
    %v2124 = vunpack.c.h.b16 %v2119
    %v2125 = vunpack.c.l.b16 %v2120
    %v2126 = vpack.c.b16 %v2123, %v2123
    %v2127 = vpack.c.b16 %v2124, %v2124
    %v2128 = vpack.c.b16 %v2125, %v2125
    %2132 = vst.msk [vmem:[#allocation13 + $0xc] sm:$0xf] %vm2009, %v2126
    %2133 = vst.msk [vmem:[#allocation13 + $0x28] sm:$0xf] %vm2009, %v2127
    %2134 = vst.msk [vmem:[#allocation13 + $0x44] sm:$0x7] %vm2012, %v2128
    %v2135 = vld [vmem:[#allocation4 + $0x6] sm:$0xff]
    %v2136 = vld [vmem:[#allocation4 + $0xe] sm:$0xff]
    %v2137 = vld [vmem:[#allocation4 + $0x16] sm:$0x3f]
    %v2138 = vpack.c.bf16 %v2136, %v2135
    %v2139 = vpack.c.bf16 %v2137, %v2137
    %v2142 = vunpack.c.l.b16 %v2138
    %v2143 = vunpack.c.h.b16 %v2138
    %v2144 = vunpack.c.l.b16 %v2139
    %v2145 = vpack.c.b16 %v2142, %v2142
    %v2146 = vpack.c.b16 %v2143, %v2143
    %v2147 = vpack.c.b16 %v2144, %v2144
    %2148 = vrot.lane.b32.xlu0 %v2145, 96
    %v2149 = vpop.permute.xlu0 %2148
    %2150 = vrot.lane.b32.xlu0 %v2146, 96
    %v2151 = vpop.permute.xlu0 %2150
    %2152 = vrot.lane.b32.xlu0 %v2147, 96
    %v2153 = vpop.permute.xlu0 %2152
    %v2154 = vrot.slane %v2149, 4
    %v2155 = vrot.slane %v2151, 4
    %v2156 = vrot.slane %v2153, 4
    %v2157 = vsel %vm2036, %v2154, %v2149
    %v2158 = vsel %vm2036, %v2155, %v2151
    %v2159 = vsel %vm2036, %v2156, %v2153
    %2163 = vst.msk [vmem:[#allocation13 + $0xc] sm:$0xff] %vm2045, %v2157
    %2164 = vst.msk [vmem:[#allocation13 + $0x28] sm:$0xff] %vm2045, %v2158
    %2165 = vst.msk [vmem:[#allocation13 + $0x44] sm:$0x77] %vm2050, %v2159
    %v2166 = vld [vmem:[#allocation4 + $0x8] sm:$0xff]
    %v2167 = vld [vmem:[#allocation4 + $0x10] sm:$0xff]
    %v2168 = vld [vmem:[#allocation4 + $0x18] sm:$0x3f]
    %v2169 = vpack.c.bf16 %v2167, %v2166
    %v2170 = vpack.c.bf16 %v2168, %v2168
    %v2173 = vunpack.c.l.b16 %v2169
    %v2174 = vunpack.c.h.b16 %v2169
    %v2175 = vunpack.c.l.b16 %v2170
    %v2176 = vpack.c.b16 %v2173, %v2173
    %v2177 = vpack.c.b16 %v2174, %v2174
    %v2178 = vpack.c.b16 %v2175, %v2175
    %2179 = vrot.lane.b32.xlu0 %v2176, 64
    %v2180 = vpop.permute.xlu0 %2179
    %2181 = vrot.lane.b32.xlu0 %v2177, 64
    %v2182 = vpop.permute.xlu0 %2181
    %2183 = vrot.lane.b32.xlu0 %v2178, 64
    %v2184 = vpop.permute.xlu0 %2183
    %v2185 = vrot.slane %v2180, 4
    %v2186 = vrot.slane %v2182, 4
    %v2187 = vrot.slane %v2184, 4
    %v2188 = vsel %vm2074, %v2185, %v2180
    %v2189 = vsel %vm2074, %v2186, %v2182
    %v2190 = vsel %vm2074, %v2187, %v2184
    %2194 = vst.msk [vmem:[#allocation13 + $0x10] sm:$0xff] %vm2082, %v2188
    %2195 = vst.msk [vmem:[#allocation13 + $0x2c] sm:$0xff] %vm2082, %v2189
    %2196 = vst.msk [vmem:[#allocation13 + $0x48] sm:$0x77] %vm2087, %v2190
    %v2197 = vld [vmem:[#allocation4 + $0x9] sm:$0xff]
    %v2198 = vld [vmem:[#allocation4 + $0x11] sm:$0xff]
    %v2199 = vld [vmem:[#allocation4 + $0x19] sm:$0x3f]
    %v2200 = vpack.c.bf16 %v2198, %v2197
    %v2201 = vpack.c.bf16 %v2199, %v2199
    %v2204 = vunpack.c.l.b16 %v2200
    %v2205 = vunpack.c.h.b16 %v2200
    %v2206 = vunpack.c.l.b16 %v2201
    %v2207 = vpack.c.b16 %v2204, %v2204
    %v2208 = vpack.c.b16 %v2205, %v2205
    %v2209 = vpack.c.b16 %v2206, %v2206
    %2210 = vrot.lane.b32.xlu0 %v2207, 32
    %v2211 = vpop.permute.xlu0 %2210
    %2212 = vrot.lane.b32.xlu0 %v2208, 32
    %v2213 = vpop.permute.xlu0 %2212
    %2214 = vrot.lane.b32.xlu0 %v2209, 32
    %v2215 = vpop.permute.xlu0 %2214
    %2219 = vst.msk [vmem:[#allocation13 + $0x14] sm:$0xf] %vm2111, %v2211
    %2220 = vst.msk [vmem:[#allocation13 + $0x30] sm:$0xf] %vm2111, %v2213
    %2221 = vst.msk [vmem:[#allocation13 + $0x4c] sm:$0x7] %vm2114, %v2215
    %v2222 = vld [vmem:[#allocation4 + $0xa] sm:$0xff]
    %v2223 = vld [vmem:[#allocation4 + $0x12] sm:$0xff]
    %v2224 = vld [vmem:[#allocation4 + $0x1a] sm:$0x3f]
    %v2225 = vpack.c.bf16 %v2223, %v2222
    %v2226 = vpack.c.bf16 %v2224, %v2224
    %v2229 = vunpack.c.l.b16 %v2225
    %v2230 = vunpack.c.h.b16 %v2225
    %v2231 = vunpack.c.l.b16 %v2226
    %v2232 = vpack.c.b16 %v2229, %v2229
    %v2233 = vpack.c.b16 %v2230, %v2230
    %v2234 = vpack.c.b16 %v2231, %v2231
    %2238 = vst.msk [vmem:[#allocation13 + $0x18] sm:$0xf] %vm2009, %v2232
    %2239 = vst.msk [vmem:[#allocation13 + $0x34] sm:$0xf] %vm2009, %v2233
    %2240 = vst.msk [vmem:[#allocation13 + $0x50] sm:$0x7] %vm2012, %v2234
    %v2241 = vld [vmem:[#allocation13] sm:$0xff]
    %v2242 = vld [vmem:[#allocation13 + $0x8] sm:$0xff]
    %v2243 = vld [vmem:[#allocation13 + $0x10] sm:$0xff]
    %v2244 = vld [vmem:[#allocation13 + $0x18] sm:$0xf]
    %v2245 = vld [vmem:[#allocation13 + $0x1c] sm:$0xff]
    %v2246 = vld [vmem:[#allocation13 + $0x24] sm:$0xff]
    %v2247 = vld [vmem:[#allocation13 + $0x2c] sm:$0xff]
    %v2248 = vld [vmem:[#allocation13 + $0x34] sm:$0xf]
    %v2249 = vld [vmem:[#allocation13 + $0x38] sm:$0x77]
    %v2250 = vld [vmem:[#allocation13 + $0x40] sm:$0x77]
    %v2251 = vld [vmem:[#allocation13 + $0x48] sm:$0x77]
    %v2252 = vld [vmem:[#allocation13 + $0x50] sm:$0x7]
    %v2253 = vld [vmem:[%s5] sm:$0xf]
    %v2254 = vld [vmem:[%s5 + $0x4] sm:$0xf]
    %v2255 = vld [vmem:[%s5 + $0x8] sm:$0xf]
    %v2256 = vld [vmem:[%s5 + $0xc] sm:$0xf]
    %v2257 = vld [vmem:[%s5 + $0x10] sm:$0xf]
    %v2258 = vld [vmem:[%s5 + $0x14] sm:$0xf]
    %v2259 = vld [vmem:[%s5 + $0x18] sm:$0xf]
    %v2260 = vld [vmem:[%s5 + $0x1c] sm:$0xf]
    %v2261 = vld [vmem:[%s5 + $0x20] sm:$0xf]
    %v2262 = vld [vmem:[%s5 + $0x24] sm:$0xf]
    %v2263 = vld [vmem:[%s5 + $0x28] sm:$0xf]
    %v2264 = vld [vmem:[%s5 + $0x2c] sm:$0xf]
    %v2265 = vld [vmem:[%s5 + $0x30] sm:$0xf]
    %v2266 = vld [vmem:[%s5 + $0x34] sm:$0xf]
    %v2267 = vld [vmem:[%s5 + $0x38] sm:$0xf]
    %v2268 = vld [vmem:[%s5 + $0x3c] sm:$0xf]
    %v2269 = vld [vmem:[%s5 + $0x40] sm:$0xf]
    %v2270 = vld [vmem:[%s5 + $0x44] sm:$0xf]
    %v2271 = vld [vmem:[%s5 + $0x48] sm:$0xf]
    %v2272 = vld [vmem:[%s5 + $0x4c] sm:$0xf]
    %v2273 = vld [vmem:[%s5 + $0x50] sm:$0xf]
    %v2274 = vld [vmem:[%s5 + $0x54] sm:$0xf]
    %v2275 = vld [vmem:[%s5 + $0x58] sm:$0xf]
    %v2276 = vld [vmem:[%s5 + $0x5c] sm:$0xf]
    %v2277 = vld [vmem:[%s5 + $0x60] sm:$0xf]
    %v2278 = vld [vmem:[%s5 + $0x64] sm:$0xf]
    %v2279 = vld [vmem:[%s5 + $0x68] sm:$0xf]
    %v2280 = vld [vmem:[%s5 + $0x6c] sm:$0xf]
    %v2281 = vld [vmem:[%s5 + $0x70] sm:$0xf]
    %v2282 = vld [vmem:[%s5 + $0x74] sm:$0xf]
    %v2283 = vld [vmem:[%s5 + $0x78] sm:$0xf]
    %v2284 = vld [vmem:[%s5 + $0x7c] sm:$0xf]
    %v2285 = vld [vmem:[%s5 + $0x80] sm:$0xf]
    %v2286 = vld [vmem:[%s5 + $0x84] sm:$0xf]
    %v2287 = vld [vmem:[%s5 + $0x88] sm:$0xf]
    %v2288 = vld [vmem:[%s5 + $0x8c] sm:$0xf]
    %v2289 = vld [vmem:[%s5 + $0x90] sm:$0xf]
    %v2290 = vld [vmem:[%s5 + $0x94] sm:$0xf]
    %v2291 = vld [vmem:[%s5 + $0x98] sm:$0xf]
    %v2292 = vld [vmem:[%s5 + $0x9c] sm:$0xf]
    %v2293 = vld [vmem:[%s5 + $0xa0] sm:$0xf]
    %v2294 = vld [vmem:[%s5 + $0xa4] sm:$0xf]
    %v2295 = vld [vmem:[%s5 + $0xa8] sm:$0xf]
    %v2296 = vld [vmem:[%s5 + $0xac] sm:$0xf]
    %v2297 = vld [vmem:[%s5 + $0xb0] sm:$0xf]
    %v2298 = vld [vmem:[%s5 + $0xb4] sm:$0xf]
    %v2299 = vld [vmem:[%s5 + $0xb8] sm:$0xf]
    %v2300 = vld [vmem:[%s5 + $0xbc] sm:$0xf]
    %v2301 = vld [vmem:[%s5 + $0xc0] sm:$0xf]
    %v2302 = vld [vmem:[%s5 + $0xc4] sm:$0xf]
    %v2303 = vld [vmem:[%s5 + $0xc8] sm:$0xf]
    %v2304 = vld [vmem:[%s5 + $0xcc] sm:$0xf]
    %v2305 = vld [vmem:[%s5 + $0xd0] sm:$0xf]
    %v2306 = vld [vmem:[%s5 + $0xd4] sm:$0xf]
    %v2307 = vld [vmem:[%s5 + $0xd8] sm:$0xf]
    %v2308 = vld [vmem:[%s5 + $0xdc] sm:$0xf]
    %v2309 = vld [vmem:[%s5 + $0xe0] sm:$0xf]
    %v2310 = vld [vmem:[%s5 + $0xe4] sm:$0xf]
    %v2311 = vld [vmem:[%s5 + $0xe8] sm:$0xf]
    %v2312 = vld [vmem:[%s5 + $0xec] sm:$0xf]
    %v2313 = vld [vmem:[%s5 + $0xf0] sm:$0xf]
    %v2314 = vld [vmem:[%s5 + $0xf4] sm:$0xf]
    %v2315 = vld [vmem:[%s5 + $0xf8] sm:$0xf]
    %v2316 = vld [vmem:[%s5 + $0xfc] sm:$0xf]
    %v2317 = vld [vmem:[%s5 + $0x100] sm:$0xf]
    %v2318 = vld [vmem:[%s5 + $0x104] sm:$0xf]
    %v2319 = vld [vmem:[%s5 + $0x108] sm:$0xf]
    %v2320 = vld [vmem:[%s5 + $0x10c] sm:$0xf]
    %v2321 = vld [vmem:[%s5 + $0x110] sm:$0xf]
    %v2322 = vld [vmem:[%s5 + $0x114] sm:$0xf]
    %v2323 = vld [vmem:[%s5 + $0x118] sm:$0xf]
    %v2324 = vld [vmem:[%s5 + $0x11c] sm:$0xf]
    %v2325 = vld [vmem:[%s5 + $0x120] sm:$0xf]
    %v2326 = vld [vmem:[%s5 + $0x124] sm:$0xf]
    %v2327 = vld [vmem:[%s5 + $0x128] sm:$0xf]
    %v2328 = vld [vmem:[%s5 + $0x12c] sm:$0xf]
    %v2329 = vld [vmem:[%s5 + $0x130] sm:$0xf]
    %v2330 = vld [vmem:[%s5 + $0x134] sm:$0xf]
    %v2331 = vld [vmem:[%s5 + $0x138] sm:$0xf]
    %v2332 = vld [vmem:[%s5 + $0x13c] sm:$0xf]
    %v2333 = vld [vmem:[%s5 + $0x140] sm:$0xf]
    %v2334 = vld [vmem:[%s5 + $0x144] sm:$0xf]
    %v2335 = vld [vmem:[%s5 + $0x148] sm:$0xf]
    %v2336 = vld [vmem:[%s5 + $0x14c] sm:$0xf]
    %v2337 = vld [vmem:[%s5 + $0x150] sm:$0xf]
    %v2338 = vld [vmem:[%s5 + $0x154] sm:$0xf]
    %v2339 = vld [vmem:[%s5 + $0x158] sm:$0xf]
    %v2340 = vld [vmem:[%s5 + $0x15c] sm:$0xf]
    %v2341 = vld [vmem:[%s5 + $0x160] sm:$0xf]
    %v2342 = vld [vmem:[%s5 + $0x164] sm:$0xf]
    %v2343 = vld [vmem:[%s5 + $0x168] sm:$0xf]
    %v2344 = vld [vmem:[%s5 + $0x16c] sm:$0xf]
    %v2345 = vld [vmem:[%s5 + $0x170] sm:$0xf]
    %v2346 = vld [vmem:[%s5 + $0x174] sm:$0xf]
    %v2347 = vld [vmem:[%s5 + $0x178] sm:$0xf]
    %v2348 = vld [vmem:[%s5 + $0x17c] sm:$0xf]
    %v2349 = vld [vmem:[%s5 + $0x180] sm:$0xf]
    %v2350 = vld [vmem:[%s5 + $0x184] sm:$0xf]
    %v2351 = vld [vmem:[%s5 + $0x188] sm:$0xf]
    %v2352 = vld [vmem:[%s5 + $0x18c] sm:$0xf]
    %v2353 = vld [vmem:[%s5 + $0x190] sm:$0xf]
    %v2354 = vld [vmem:[%s5 + $0x194] sm:$0xf]
    %v2355 = vld [vmem:[%s5 + $0x198] sm:$0xf]
    %v2356 = vld [vmem:[%s5 + $0x19c] sm:$0xf]
    %v2357 = vld [vmem:[%s5 + $0x1a0] sm:$0xf]
    %v2358 = vld [vmem:[%s5 + $0x1a4] sm:$0xf]
    %v2359 = vld [vmem:[%s5 + $0x1a8] sm:$0xf]
    %v2360 = vld [vmem:[%s5 + $0x1ac] sm:$0xf]
    %v2373 = vunpack.c.l.b16 %v2241
    %v2374 = vunpack.c.h.b16 %v2241
    %v2375 = vunpack.c.l.b16 %v2242
    %v2376 = vunpack.c.h.b16 %v2242
    %v2377 = vunpack.c.l.b16 %v2243
    %v2378 = vunpack.c.h.b16 %v2243
    %v2379 = vunpack.c.l.b16 %v2244
    %v2380 = vunpack.c.l.b16 %v2245
    %v2381 = vunpack.c.h.b16 %v2245
    %v2382 = vunpack.c.l.b16 %v2246
    %v2383 = vunpack.c.h.b16 %v2246
    %v2384 = vunpack.c.l.b16 %v2247
    %v2385 = vunpack.c.h.b16 %v2247
    %v2386 = vunpack.c.l.b16 %v2248
    %v2387 = vunpack.c.l.b16 %v2249
    %v2388 = vunpack.c.h.b16 %v2249
    %v2389 = vunpack.c.l.b16 %v2250
    %v2390 = vunpack.c.h.b16 %v2250
    %v2391 = vunpack.c.l.b16 %v2251
    %v2392 = vunpack.c.h.b16 %v2251
    %v2393 = vunpack.c.l.b16 %v2252
    %v2394 = vpack.c.b16 %v2380, %v2373
    %v2395 = vpack.c.b16 %v2381, %v2374
    %v2396 = vpack.c.b16 %v2382, %v2375
    %v2397 = vpack.c.b16 %v2383, %v2376
    %v2398 = vpack.c.b16 %v2384, %v2377
    %v2399 = vpack.c.b16 %v2385, %v2378
    %v2400 = vpack.c.b16 %v2386, %v2379
    %v2401 = vpack.c.b16 %v2387, %v2387
    %v2402 = vpack.c.b16 %v2388, %v2388
    %v2403 = vpack.c.b16 %v2389, %v2389
    %v2404 = vpack.c.b16 %v2390, %v2390
    %v2405 = vpack.c.b16 %v2391, %v2391
    %v2406 = vpack.c.b16 %v2392, %v2392
    %v2407 = vpack.c.b16 %v2393, %v2393
    %v2528 = vunpack.c.l.b16 %v2253
    %v2529 = vunpack.c.l.b16 %v2254
    %v2530 = vunpack.c.l.b16 %v2255
    %v2531 = vunpack.c.l.b16 %v2256
    %v2532 = vunpack.c.l.b16 %v2257
    %v2533 = vunpack.c.l.b16 %v2258
    %v2534 = vunpack.c.l.b16 %v2259
    %v2535 = vunpack.c.l.b16 %v2260
    %v2536 = vunpack.c.l.b16 %v2261
    %v2537 = vunpack.c.l.b16 %v2262
    %v2538 = vunpack.c.l.b16 %v2263
    %v2539 = vunpack.c.l.b16 %v2264
    %v2540 = vunpack.c.l.b16 %v2265
    %v2541 = vunpack.c.l.b16 %v2266
    %v2542 = vunpack.c.l.b16 %v2267
    %v2543 = vunpack.c.l.b16 %v2268
    %v2544 = vunpack.c.l.b16 %v2269
    %v2545 = vunpack.c.l.b16 %v2270
    %v2546 = vunpack.c.l.b16 %v2271
    %v2547 = vunpack.c.l.b16 %v2272
    %v2548 = vunpack.c.l.b16 %v2273
    %v2549 = vunpack.c.l.b16 %v2274
    %v2550 = vunpack.c.l.b16 %v2275
    %v2551 = vunpack.c.l.b16 %v2276
    %v2552 = vunpack.c.l.b16 %v2277
    %v2553 = vunpack.c.l.b16 %v2278
    %v2554 = vunpack.c.l.b16 %v2279
    %v2555 = vunpack.c.l.b16 %v2280
    %v2556 = vunpack.c.l.b16 %v2281
    %v2557 = vunpack.c.l.b16 %v2282
    %v2558 = vunpack.c.l.b16 %v2283
    %v2559 = vunpack.c.l.b16 %v2284
    %v2560 = vunpack.c.l.b16 %v2285
    %v2561 = vunpack.c.l.b16 %v2286
    %v2562 = vunpack.c.l.b16 %v2287
    %v2563 = vunpack.c.l.b16 %v2288
    %v2564 = vunpack.c.l.b16 %v2289
    %v2565 = vunpack.c.l.b16 %v2290
    %v2566 = vunpack.c.l.b16 %v2291
    %v2567 = vunpack.c.l.b16 %v2292
    %v2568 = vunpack.c.l.b16 %v2293
    %v2569 = vunpack.c.l.b16 %v2294
    %v2570 = vunpack.c.l.b16 %v2295
    %v2571 = vunpack.c.l.b16 %v2296
    %v2572 = vunpack.c.l.b16 %v2297
    %v2573 = vunpack.c.l.b16 %v2298
    %v2574 = vunpack.c.l.b16 %v2299
    %v2575 = vunpack.c.l.b16 %v2300
    %v2576 = vunpack.c.l.b16 %v2301
    %v2577 = vunpack.c.l.b16 %v2302
    %v2578 = vunpack.c.l.b16 %v2303
    %v2579 = vunpack.c.l.b16 %v2304
    %v2580 = vunpack.c.l.b16 %v2305
    %v2581 = vunpack.c.l.b16 %v2306
    %v2582 = vunpack.c.l.b16 %v2307
    %v2583 = vunpack.c.l.b16 %v2308
    %v2584 = vunpack.c.l.b16 %v2309
    %v2585 = vunpack.c.l.b16 %v2310
    %v2586 = vunpack.c.l.b16 %v2311
    %v2587 = vunpack.c.l.b16 %v2312
    %v2588 = vunpack.c.l.b16 %v2313
    %v2589 = vunpack.c.l.b16 %v2314
    %v2590 = vunpack.c.l.b16 %v2315
    %v2591 = vunpack.c.l.b16 %v2316
    %v2592 = vunpack.c.l.b16 %v2317
    %v2593 = vunpack.c.l.b16 %v2318
    %v2594 = vunpack.c.l.b16 %v2319
    %v2595 = vunpack.c.l.b16 %v2320
    %v2596 = vunpack.c.l.b16 %v2321
    %v2597 = vunpack.c.l.b16 %v2322
    %v2598 = vunpack.c.l.b16 %v2323
    %v2599 = vunpack.c.l.b16 %v2324
    %v2600 = vunpack.c.l.b16 %v2325
    %v2601 = vunpack.c.l.b16 %v2326
    %v2602 = vunpack.c.l.b16 %v2327
    %v2603 = vunpack.c.l.b16 %v2328
    %v2604 = vunpack.c.l.b16 %v2329
    %v2605 = vunpack.c.l.b16 %v2330
    %v2606 = vunpack.c.l.b16 %v2331
    %v2607 = vunpack.c.l.b16 %v2332
    %v2608 = vunpack.c.l.b16 %v2333
    %v2609 = vunpack.c.l.b16 %v2334
    %v2610 = vunpack.c.l.b16 %v2335
    %v2611 = vunpack.c.l.b16 %v2336
    %v2612 = vunpack.c.l.b16 %v2337
    %v2613 = vunpack.c.l.b16 %v2338
    %v2614 = vunpack.c.l.b16 %v2339
    %v2615 = vunpack.c.l.b16 %v2340
    %v2616 = vunpack.c.l.b16 %v2341
    %v2617 = vunpack.c.l.b16 %v2342
    %v2618 = vunpack.c.l.b16 %v2343
    %v2619 = vunpack.c.l.b16 %v2344
    %v2620 = vunpack.c.l.b16 %v2345
    %v2621 = vunpack.c.l.b16 %v2346
    %v2622 = vunpack.c.l.b16 %v2347
    %v2623 = vunpack.c.l.b16 %v2348
    %v2624 = vunpack.c.l.b16 %v2349
    %v2625 = vunpack.c.l.b16 %v2350
    %v2626 = vunpack.c.l.b16 %v2351
    %v2627 = vunpack.c.l.b16 %v2352
    %v2628 = vunpack.c.l.b16 %v2353
    %v2629 = vunpack.c.l.b16 %v2354
    %v2630 = vunpack.c.l.b16 %v2355
    %v2631 = vunpack.c.l.b16 %v2356
    %v2632 = vunpack.c.l.b16 %v2357
    %v2633 = vunpack.c.l.b16 %v2358
    %v2634 = vunpack.c.l.b16 %v2359
    %v2635 = vunpack.c.l.b16 %v2360
    %v2636 = vpack.c.b16 %v2529, %v2528
    %v2637 = vpack.c.b16 %v2531, %v2530
    %v2638 = vpack.c.b16 %v2533, %v2532
    %v2639 = vpack.c.b16 %v2535, %v2534
    %v2640 = vpack.c.b16 %v2537, %v2536
    %v2641 = vpack.c.b16 %v2539, %v2538
    %v2642 = vpack.c.b16 %v2541, %v2540
    %v2643 = vpack.c.b16 %v2543, %v2542
    %v2644 = vpack.c.b16 %v2545, %v2544
    %v2645 = vpack.c.b16 %v2547, %v2546
    %v2646 = vpack.c.b16 %v2549, %v2548
    %v2647 = vpack.c.b16 %v2551, %v2550
    %v2648 = vpack.c.b16 %v2553, %v2552
    %v2649 = vpack.c.b16 %v2555, %v2554
    %v2650 = vpack.c.b16 %v2557, %v2556
    %v2651 = vpack.c.b16 %v2559, %v2558
    %v2652 = vpack.c.b16 %v2561, %v2560
    %v2653 = vpack.c.b16 %v2563, %v2562
    %v2654 = vpack.c.b16 %v2565, %v2564
    %v2655 = vpack.c.b16 %v2567, %v2566
    %v2656 = vpack.c.b16 %v2569, %v2568
    %v2657 = vpack.c.b16 %v2571, %v2570
    %v2658 = vpack.c.b16 %v2573, %v2572
    %v2659 = vpack.c.b16 %v2575, %v2574
    %v2660 = vpack.c.b16 %v2577, %v2576
    %v2661 = vpack.c.b16 %v2579, %v2578
    %v2662 = vpack.c.b16 %v2581, %v2580
    %v2663 = vpack.c.b16 %v2583, %v2582
    %v2664 = vpack.c.b16 %v2585, %v2584
    %v2665 = vpack.c.b16 %v2587, %v2586
    %v2666 = vpack.c.b16 %v2589, %v2588
    %v2667 = vpack.c.b16 %v2591, %v2590
    %v2668 = vpack.c.b16 %v2593, %v2592
    %v2669 = vpack.c.b16 %v2595, %v2594
    %v2670 = vpack.c.b16 %v2597, %v2596
    %v2671 = vpack.c.b16 %v2599, %v2598
    %v2672 = vpack.c.b16 %v2601, %v2600
    %v2673 = vpack.c.b16 %v2603, %v2602
    %v2674 = vpack.c.b16 %v2605, %v2604
    %v2675 = vpack.c.b16 %v2607, %v2606
    %v2676 = vpack.c.b16 %v2609, %v2608
    %v2677 = vpack.c.b16 %v2611, %v2610
    %v2678 = vpack.c.b16 %v2613, %v2612
    %v2679 = vpack.c.b16 %v2615, %v2614
    %v2680 = vpack.c.b16 %v2617, %v2616
    %v2681 = vpack.c.b16 %v2619, %v2618
    %v2682 = vpack.c.b16 %v2621, %v2620
    %v2683 = vpack.c.b16 %v2623, %v2622
    %v2684 = vpack.c.b16 %v2625, %v2624
    %v2685 = vpack.c.b16 %v2627, %v2626
    %v2686 = vpack.c.b16 %v2629, %v2628
    %v2687 = vpack.c.b16 %v2631, %v2630
    %v2688 = vpack.c.b16 %v2633, %v2632
    %v2689 = vpack.c.b16 %v2635, %v2634
    %v2745 = vsel %vm93, %v2400, 0
    %v2748 = vsel %vm93, %v2407, 0
    %2750 = vmatprep.subr.bf16.mxu0 0
    %2751 = vmatpush1.bf16.msra.mxu0 %v2643
    %2752 = vmatprep.subr.bf16.mxu0 0
    %2753 = vmatpush1.bf16.msra.mxu0 %v2642
    %2754 = vmatprep.subr.bf16.mxu0 0
    %2755 = vmatpush1.bf16.msra.mxu0 %v2641
    %2756 = vmatprep.subr.bf16.mxu0 0
    %2757 = vmatpush1.bf16.msra.mxu0 %v2640
    %2758 = vmatprep.subr.bf16.mxu0 0
    %2759 = vmatpush1.bf16.msra.mxu0 %v2639
    %2760 = vmatprep.subr.bf16.mxu0 0
    %2761 = vmatpush1.bf16.msra.mxu0 %v2638
    %2762 = vmatprep.subr.bf16.mxu0 0
    %2763 = vmatpush1.bf16.msra.mxu0 %v2637
    %2764 = vmatprep.subr.bf16.mxu0 0
    %2765 = vmatpush1.bf16.msra.mxu0 %v2636
    %2766 = vmatprep.subr.bf16.mxu0 0
    %2767 = vmatpush2.bf16.msra.mxu0 %v2651
    %2768 = vmatprep.subr.bf16.mxu0 0
    %2769 = vmatpush2.bf16.msra.mxu0 %v2650
    %2770 = vmatprep.subr.bf16.mxu0 0
    %2771 = vmatpush2.bf16.msra.mxu0 %v2649
    %2772 = vmatprep.subr.bf16.mxu0 0
    %2773 = vmatpush2.bf16.msra.mxu0 %v2648
    %2774 = vmatprep.subr.bf16.mxu0 0
    %2775 = vmatpush2.bf16.msra.mxu0 %v2647
    %2776 = vmatprep.subr.bf16.mxu0 0
    %2777 = vmatpush2.bf16.msra.mxu0 %v2646
    %2778 = vmatprep.subr.bf16.mxu0 0
    %2779 = vmatpush2.bf16.msra.mxu0 %v2645
    %2780 = vmatprep.subr.bf16.mxu0 0
    %2781 = vmatpush2.bf16.msra.mxu0 %v2644
    %2782 = vmatprep.mubr.bf16.mxu0 %v2395
    %2783 = vmatmul.mubr.bf16.gmra.mxu0 %v2394
    %v2784 = vpop.f32.mrf.mxu0
    %v2785 = vadd.f32 0.0, %v2784
    %v2786 = vpop.f32.mrf.mxu0
    %v2787 = vpop.f32.mrf.mxu0
    %v2788 = vpop.f32.mrf.mxu0
    %2789 = vmatprep.mubr.bf16.mxu0 %v2402
    %2790 = vmatmul.mubr.bf16.gmra.mxu0 %v2401
    %v2791 = vpop.f32.mrf.mxu0
    %v2792 = vadd.f32 0.0, %v2791
    %v2793 = vpop.f32.mrf.mxu0
    %v2794 = vpop.f32.mrf.mxu0
    %v2795 = vpop.f32.mrf.mxu0
    %2796 = vdwg.mxu0
    %2797 = vmatprep.subr.bf16.mxu0 0
    %2798 = vmatpush1.bf16.msra.mxu0 %v2659
    %2799 = vmatprep.subr.bf16.mxu0 0
    %2800 = vmatpush1.bf16.msra.mxu0 %v2658
    %2801 = vmatprep.subr.bf16.mxu0 0
    %2802 = vmatpush1.bf16.msra.mxu0 %v2657
    %2803 = vmatprep.subr.bf16.mxu0 0
    %2804 = vmatpush1.bf16.msra.mxu0 %v2656
    %2805 = vmatprep.subr.bf16.mxu0 0
    %2806 = vmatpush1.bf16.msra.mxu0 %v2655
    %2807 = vmatprep.subr.bf16.mxu0 0
    %2808 = vmatpush1.bf16.msra.mxu0 %v2654
    %2809 = vmatprep.subr.bf16.mxu0 0
    %2810 = vmatpush1.bf16.msra.mxu0 %v2653
    %2811 = vmatprep.subr.bf16.mxu0 0
    %2812 = vmatpush1.bf16.msra.mxu0 %v2652
    %2813 = vmatprep.subr.bf16.mxu0 0
    %2814 = vmatpush2.bf16.msra.mxu0 %v2667
    %2815 = vmatprep.subr.bf16.mxu0 0
    %2816 = vmatpush2.bf16.msra.mxu0 %v2666
    %2817 = vmatprep.subr.bf16.mxu0 0
    %2818 = vmatpush2.bf16.msra.mxu0 %v2665
    %2819 = vmatprep.subr.bf16.mxu0 0
    %2820 = vmatpush2.bf16.msra.mxu0 %v2664
    %2821 = vmatprep.subr.bf16.mxu0 0
    %2822 = vmatpush2.bf16.msra.mxu0 %v2663
    %2823 = vmatprep.subr.bf16.mxu0 0
    %2824 = vmatpush2.bf16.msra.mxu0 %v2662
    %2825 = vmatprep.subr.bf16.mxu0 0
    %2826 = vmatpush2.bf16.msra.mxu0 %v2661
    %2827 = vmatprep.subr.bf16.mxu0 0
    %2828 = vmatpush2.bf16.msra.mxu0 %v2660
    %2829 = vmatprep.mubr.bf16.mxu0 %v2397
    %2830 = vmatmul.mubr.bf16.gmra.mxu0 %v2396
    %v2831 = vpop.f32.mrf.mxu0
    %v2832 = vadd.f32 %v2785, %v2831
    %v2833 = vpop.f32.mrf.mxu0
    %v2834 = vpop.f32.mrf.mxu0
    %v2835 = vpop.f32.mrf.mxu0
    %2836 = vmatprep.mubr.bf16.mxu0 %v2404
    %2837 = vmatmul.mubr.bf16.gmra.mxu0 %v2403
    %v2838 = vpop.f32.mrf.mxu0
    %v2839 = vadd.f32 %v2792, %v2838
    %v2840 = vpop.f32.mrf.mxu0
    %v2841 = vpop.f32.mrf.mxu0
    %v2842 = vpop.f32.mrf.mxu0
    %2843 = vdwg.mxu0
    %2844 = vmatprep.subr.bf16.mxu0 0
    %2845 = vmatpush1.bf16.msra.mxu0 %v2675
    %2846 = vmatprep.subr.bf16.mxu0 0
    %2847 = vmatpush1.bf16.msra.mxu0 %v2674
    %2848 = vmatprep.subr.bf16.mxu0 0
    %2849 = vmatpush1.bf16.msra.mxu0 %v2673
    %2850 = vmatprep.subr.bf16.mxu0 0
    %2851 = vmatpush1.bf16.msra.mxu0 %v2672
    %2852 = vmatprep.subr.bf16.mxu0 0
    %2853 = vmatpush1.bf16.msra.mxu0 %v2671
    %2854 = vmatprep.subr.bf16.mxu0 0
    %2855 = vmatpush1.bf16.msra.mxu0 %v2670
    %2856 = vmatprep.subr.bf16.mxu0 0
    %2857 = vmatpush1.bf16.msra.mxu0 %v2669
    %2858 = vmatprep.subr.bf16.mxu0 0
    %2859 = vmatpush1.bf16.msra.mxu0 %v2668
    %2860 = vmatprep.subr.bf16.mxu0 0
    %2861 = vmatpush2.bf16.msra.mxu0 %v2683
    %2862 = vmatprep.subr.bf16.mxu0 0
    %2863 = vmatpush2.bf16.msra.mxu0 %v2682
    %2864 = vmatprep.subr.bf16.mxu0 0
    %2865 = vmatpush2.bf16.msra.mxu0 %v2681
    %2866 = vmatprep.subr.bf16.mxu0 0
    %2867 = vmatpush2.bf16.msra.mxu0 %v2680
    %2868 = vmatprep.subr.bf16.mxu0 0
    %2869 = vmatpush2.bf16.msra.mxu0 %v2679
    %2870 = vmatprep.subr.bf16.mxu0 0
    %2871 = vmatpush2.bf16.msra.mxu0 %v2678
    %2872 = vmatprep.subr.bf16.mxu0 0
    %2873 = vmatpush2.bf16.msra.mxu0 %v2677
    %2874 = vmatprep.subr.bf16.mxu0 0
    %2875 = vmatpush2.bf16.msra.mxu0 %v2676
    %2876 = vmatprep.mubr.bf16.mxu0 %v2399
    %2877 = vmatmul.mubr.bf16.gmra.mxu0 %v2398
    %v2878 = vpop.f32.mrf.mxu0
    %v2879 = vadd.f32 %v2832, %v2878
    %v2880 = vpop.f32.mrf.mxu0
    %v2881 = vpop.f32.mrf.mxu0
    %v2882 = vpop.f32.mrf.mxu0
    %2883 = vmatprep.mubr.bf16.mxu0 %v2406
    %2884 = vmatmul.mubr.bf16.gmra.mxu0 %v2405
    %v2885 = vpop.f32.mrf.mxu0
    %v2886 = vadd.f32 %v2839, %v2885
    %v2887 = vpop.f32.mrf.mxu0
    %v2888 = vpop.f32.mrf.mxu0
    %v2889 = vpop.f32.mrf.mxu0
    %2890 = vdwg.mxu0
    %2891 = vmatprep.subr.bf16.mxu0 0
    %2892 = vmatpush1.bf16.msra.mxu0 0
    %2893 = vmatprep.subr.bf16.mxu0 0
    %2894 = vmatpush1.bf16.msra.mxu0 0
    %2895 = vmatprep.subr.bf16.mxu0 0
    %2896 = vmatpush1.bf16.msra.mxu0 %v2689
    %2897 = vmatprep.subr.bf16.mxu0 0
    %2898 = vmatpush1.bf16.msra.mxu0 %v2688
    %2899 = vmatprep.subr.bf16.mxu0 0
    %2900 = vmatpush1.bf16.msra.mxu0 %v2687
    %2901 = vmatprep.subr.bf16.mxu0 0
    %2902 = vmatpush1.bf16.msra.mxu0 %v2686
    %2903 = vmatprep.subr.bf16.mxu0 0
    %2904 = vmatpush1.bf16.msra.mxu0 %v2685
    %2905 = vmatprep.subr.bf16.mxu0 0
    %2906 = vmatpush1.bf16.msra.mxu0 %v2684
    %2907 = vmatprep.subr.bf16.mxu0 0
    %2908 = vmatpush2.bf16.msra.mxu0 0
    %2909 = vmatprep.subr.bf16.mxu0 0
    %2910 = vmatpush2.bf16.msra.mxu0 0
    %2911 = vmatprep.subr.bf16.mxu0 0
    %2912 = vmatpush2.bf16.msra.mxu0 0
    %2913 = vmatprep.subr.bf16.mxu0 0
    %2914 = vmatpush2.bf16.msra.mxu0 0
    %2915 = vmatprep.subr.bf16.mxu0 0
    %2916 = vmatpush2.bf16.msra.mxu0 0
    %2917 = vmatprep.subr.bf16.mxu0 0
    %2918 = vmatpush2.bf16.msra.mxu0 0
    %2919 = vmatprep.subr.bf16.mxu0 0
    %2920 = vmatpush2.bf16.msra.mxu0 0
    %2921 = vmatprep.subr.bf16.mxu0 0
    %2922 = vmatpush2.bf16.msra.mxu0 0
    %2923 = vmatprep.mubr.bf16.mxu0 0
    %2924 = vmatmul.mubr.bf16.gmra.mxu0 %v2745
    %v2925 = vpop.f32.mrf.mxu0
    %v2926 = vadd.f32 %v2879, %v2925
    %v2927 = vpop.f32.mrf.mxu0
    %v2928 = vpop.f32.mrf.mxu0
    %v2929 = vpop.f32.mrf.mxu0
    %2930 = vmatprep.mubr.bf16.mxu0 0
    %2931 = vmatmul.mubr.bf16.gmra.mxu0 %v2748
    %v2932 = vpop.f32.mrf.mxu0
    %v2933 = vadd.f32 %v2886, %v2932
    %v2934 = vpop.f32.mrf.mxu0
    %v2935 = vpop.f32.mrf.mxu0
    %v2936 = vpop.f32.mrf.mxu0
    %2937 = vdwg.mxu0
    %2940 = vrot.lane.b32.xlu0 %v1936, 32
    %v2941 = vpop.permute.xlu0 %2940
    %2942 = vrot.lane.b32.xlu0 %v1938, 32
    %v2943 = vpop.permute.xlu0 %2942
    %vm2944 = vcmask 261120
    %v2945 = vsel %vm2944, %v2941, %v2943
    %v2947 = vadd.f32 %v2926, %v2945
    %2948 = vst.msk [vmem:[#allocation5 + $0x5] sm:$0x1] %vm1981, %v2947
    %v2949 = vrot.slane %v1936, 1
    %v2950 = vrot.slane %v1938, 1
    %2951 = vrot.lane.b32.xlu0 %v2949, 32
    %v2952 = vpop.permute.xlu0 %2951
    %2953 = vrot.lane.b32.xlu0 %v2950, 32
    %v2954 = vpop.permute.xlu0 %2953
    %v2955 = vsel %vm2944, %v2952, %v2954
    %v2957 = vadd.f32 %v2926, %v2955
    %vm2958 = vcmask 779265
    %2959 = vst.msk [vmem:[#allocation5 + $0x5] sm:$0x2] %vm2958, %v2957
    %2962 = vrot.lane.b32.xlu0 %v1940, 32
    %v2963 = vpop.permute.xlu0 %2962
    %2964 = vrot.lane.b32.xlu0 %v1942, 32
    %v2965 = vpop.permute.xlu0 %2964
    %v2966 = vsel %vm2944, %v2963, %v2965
    %v2968 = vadd.f32 %v2926, %v2966
    %2969 = vst.msk [vmem:[#allocation5 + $0x5] sm:$0x10] %vm1985, %v2968
    %v2970 = vrot.slane %v1940, 1
    %v2971 = vrot.slane %v1942, 1
    %2972 = vrot.lane.b32.xlu0 %v2970, 32
    %v2973 = vpop.permute.xlu0 %2972
    %2974 = vrot.lane.b32.xlu0 %v2971, 32
    %v2975 = vpop.permute.xlu0 %2974
    %v2976 = vsel %vm2944, %v2973, %v2975
    %v2978 = vadd.f32 %v2926, %v2976
    %vm2979 = vcmask 783365
    %2980 = vst.msk [vmem:[#allocation5 + $0x5] sm:$0x20] %vm2979, %v2978
    %v2983 = vrot.slane %v1952, 4
    %v2984 = vrot.slane %v1954, 4
    %2985 = vrot.lane.b32.xlu0 %v2983, 32
    %v2986 = vpop.permute.xlu0 %2985
    %2987 = vrot.lane.b32.xlu0 %v2984, 32
    %v2988 = vpop.permute.xlu0 %2987
    %v2989 = vsel %vm2944, %v2986, %v2988
    %v2991 = vadd.f32 %v2933, %v2989
    %2992 = vst.msk [vmem:[#allocation5 + $0x15] sm:$0x1] %vm1981, %v2991
    %v2993 = vrot.slane %v1952, 5
    %v2994 = vrot.slane %v1954, 5
    %2995 = vrot.lane.b32.xlu0 %v2993, 32
    %v2996 = vpop.permute.xlu0 %2995
    %2997 = vrot.lane.b32.xlu0 %v2994, 32
    %v2998 = vpop.permute.xlu0 %2997
    %v2999 = vsel %vm2944, %v2996, %v2998
    %v3001 = vadd.f32 %v2933, %v2999
    %3002 = vst.msk [vmem:[#allocation5 + $0x15] sm:$0x2] %vm2958, %v3001
    %v3005 = vrot.slane %v1960, 4
    %v3006 = vrot.slane %v1962, 4
    %3007 = vrot.lane.b32.xlu0 %v3005, 32
    %v3008 = vpop.permute.xlu0 %3007
    %3009 = vrot.lane.b32.xlu0 %v3006, 32
    %v3010 = vpop.permute.xlu0 %3009
    %v3011 = vsel %vm2944, %v3008, %v3010
    %v3013 = vadd.f32 %v2933, %v3011
    %3014 = vst.msk [vmem:[#allocation5 + $0x15] sm:$0x10] %vm1985, %v3013
    %v3015 = vrot.slane %v1960, 5
    %v3016 = vrot.slane %v1962, 5
    %3017 = vrot.lane.b32.xlu0 %v3015, 32
    %v3018 = vpop.permute.xlu0 %3017
    %3019 = vrot.lane.b32.xlu0 %v3016, 32
    %v3020 = vpop.permute.xlu0 %3019
    %v3021 = vsel %vm2944, %v3018, %v3020
    %v3023 = vadd.f32 %v2933, %v3021
    %3024 = vst.msk [vmem:[#allocation5 + $0x15] sm:$0x20] %vm2979, %v3023
    %v3025 = vld [vmem:[#allocation5] sm:$0xff]
    %v3026 = vld [vmem:[#allocation5 + $0x8] sm:$0xff]
    %v3027 = vld [vmem:[#allocation5 + $0x10] sm:$0x3f]
    %v3028 = vpack.c.bf16 %v3026, %v3025
    %v3029 = vpack.c.bf16 %v3027, %v3027
    %v3032 = vunpack.c.l.b16 %v3028
    %v3033 = vunpack.c.h.b16 %v3028
    %v3034 = vunpack.c.l.b16 %v3029
    %v3035 = vpack.c.b16 %v3032, %v3032
    %v3036 = vpack.c.b16 %v3033, %v3033
    %v3037 = vpack.c.b16 %v3034, %v3034
    %3041 = vst.msk [vmem:[#allocation13] sm:$0xf] %vm2009, %v3035
    %3042 = vst.msk [vmem:[#allocation13 + $0x1c] sm:$0xf] %vm2009, %v3036
    %3043 = vst.msk [vmem:[#allocation13 + $0x38] sm:$0x7] %vm2012, %v3037
    %v3044 = vld [vmem:[#allocation5 + $0x1] sm:$0xff]
    %v3045 = vld [vmem:[#allocation5 + $0x9] sm:$0xff]
    %v3046 = vld [vmem:[#allocation5 + $0x11] sm:$0x3f]
    %v3047 = vpack.c.bf16 %v3045, %v3044
    %v3048 = vpack.c.bf16 %v3046, %v3046
    %v3051 = vunpack.c.l.b16 %v3047
    %v3052 = vunpack.c.h.b16 %v3047
    %v3053 = vunpack.c.l.b16 %v3048
    %v3054 = vpack.c.b16 %v3051, %v3051
    %v3055 = vpack.c.b16 %v3052, %v3052
    %v3056 = vpack.c.b16 %v3053, %v3053
    %3057 = vrot.lane.b32.xlu0 %v3054, 96
    %v3058 = vpop.permute.xlu0 %3057
    %3059 = vrot.lane.b32.xlu0 %v3055, 96
    %v3060 = vpop.permute.xlu0 %3059
    %3061 = vrot.lane.b32.xlu0 %v3056, 96
    %v3062 = vpop.permute.xlu0 %3061
    %v3063 = vrot.slane %v3058, 4
    %v3064 = vrot.slane %v3060, 4
    %v3065 = vrot.slane %v3062, 4
    %v3066 = vsel %vm2036, %v3063, %v3058
    %v3067 = vsel %vm2036, %v3064, %v3060
    %v3068 = vsel %vm2036, %v3065, %v3062
    %3072 = vst.msk [vmem:[#allocation13] sm:$0xff] %vm2045, %v3066
    %3073 = vst.msk [vmem:[#allocation13 + $0x1c] sm:$0xff] %vm2045, %v3067
    %3074 = vst.msk [vmem:[#allocation13 + $0x38] sm:$0x77] %vm2050, %v3068
    %v3075 = vld [vmem:[#allocation5 + $0x2] sm:$0xff]
    %v3076 = vld [vmem:[#allocation5 + $0xa] sm:$0xff]
    %v3077 = vld [vmem:[#allocation5 + $0x12] sm:$0x3f]
    %v3078 = vpack.c.bf16 %v3076, %v3075
    %v3079 = vpack.c.bf16 %v3077, %v3077
    %v3082 = vunpack.c.l.b16 %v3078
    %v3083 = vunpack.c.h.b16 %v3078
    %v3084 = vunpack.c.l.b16 %v3079
    %v3085 = vpack.c.b16 %v3082, %v3082
    %v3086 = vpack.c.b16 %v3083, %v3083
    %v3087 = vpack.c.b16 %v3084, %v3084
    %3088 = vrot.lane.b32.xlu0 %v3085, 64
    %v3089 = vpop.permute.xlu0 %3088
    %3090 = vrot.lane.b32.xlu0 %v3086, 64
    %v3091 = vpop.permute.xlu0 %3090
    %3092 = vrot.lane.b32.xlu0 %v3087, 64
    %v3093 = vpop.permute.xlu0 %3092
    %v3094 = vrot.slane %v3089, 4
    %v3095 = vrot.slane %v3091, 4
    %v3096 = vrot.slane %v3093, 4
    %v3097 = vsel %vm2074, %v3094, %v3089
    %v3098 = vsel %vm2074, %v3095, %v3091
    %v3099 = vsel %vm2074, %v3096, %v3093
    %3103 = vst.msk [vmem:[#allocation13 + $0x4] sm:$0xff] %vm2082, %v3097
    %3104 = vst.msk [vmem:[#allocation13 + $0x20] sm:$0xff] %vm2082, %v3098
    %3105 = vst.msk [vmem:[#allocation13 + $0x3c] sm:$0x77] %vm2087, %v3099
    %v3106 = vld [vmem:[#allocation5 + $0x4] sm:$0xff]
    %v3107 = vld [vmem:[#allocation5 + $0xc] sm:$0xff]
    %v3108 = vld [vmem:[#allocation5 + $0x14] sm:$0x3f]
    %v3109 = vpack.c.bf16 %v3107, %v3106
    %v3110 = vpack.c.bf16 %v3108, %v3108
    %v3113 = vunpack.c.l.b16 %v3109
    %v3114 = vunpack.c.h.b16 %v3109
    %v3115 = vunpack.c.l.b16 %v3110
    %v3116 = vpack.c.b16 %v3113, %v3113
    %v3117 = vpack.c.b16 %v3114, %v3114
    %v3118 = vpack.c.b16 %v3115, %v3115
    %3119 = vrot.lane.b32.xlu0 %v3116, 32
    %v3120 = vpop.permute.xlu0 %3119
    %3121 = vrot.lane.b32.xlu0 %v3117, 32
    %v3122 = vpop.permute.xlu0 %3121
    %3123 = vrot.lane.b32.xlu0 %v3118, 32
    %v3124 = vpop.permute.xlu0 %3123
    %3128 = vst.msk [vmem:[#allocation13 + $0x8] sm:$0xf] %vm2111, %v3120
    %3129 = vst.msk [vmem:[#allocation13 + $0x24] sm:$0xf] %vm2111, %v3122
    %3130 = vst.msk [vmem:[#allocation13 + $0x40] sm:$0x7] %vm2114, %v3124
    %v3131 = vld [vmem:[#allocation5 + $0x5] sm:$0xff]
    %v3132 = vld [vmem:[#allocation5 + $0xd] sm:$0xff]
    %v3133 = vld [vmem:[#allocation5 + $0x15] sm:$0x3f]
    %v3134 = vpack.c.bf16 %v3132, %v3131
    %v3135 = vpack.c.bf16 %v3133, %v3133
    %v3138 = vunpack.c.l.b16 %v3134
    %v3139 = vunpack.c.h.b16 %v3134
    %v3140 = vunpack.c.l.b16 %v3135
    %v3141 = vpack.c.b16 %v3138, %v3138
    %v3142 = vpack.c.b16 %v3139, %v3139
    %v3143 = vpack.c.b16 %v3140, %v3140
    %3147 = vst.msk [vmem:[#allocation13 + $0xc] sm:$0xf] %vm2009, %v3141
    %3148 = vst.msk [vmem:[#allocation13 + $0x28] sm:$0xf] %vm2009, %v3142
    %3149 = vst.msk [vmem:[#allocation13 + $0x44] sm:$0x7] %vm2012, %v3143
    %v3150 = vld [vmem:[#allocation5 + $0x6] sm:$0xff]
    %v3151 = vld [vmem:[#allocation5 + $0xe] sm:$0xff]
    %v3152 = vld [vmem:[#allocation5 + $0x16] sm:$0x3f]
    %v3153 = vpack.c.bf16 %v3151, %v3150
    %v3154 = vpack.c.bf16 %v3152, %v3152
    %v3157 = vunpack.c.l.b16 %v3153
    %v3158 = vunpack.c.h.b16 %v3153
    %v3159 = vunpack.c.l.b16 %v3154
    %v3160 = vpack.c.b16 %v3157, %v3157
    %v3161 = vpack.c.b16 %v3158, %v3158
    %v3162 = vpack.c.b16 %v3159, %v3159
    %3163 = vrot.lane.b32.xlu0 %v3160, 96
    %v3164 = vpop.permute.xlu0 %3163
    %3165 = vrot.lane.b32.xlu0 %v3161, 96
    %v3166 = vpop.permute.xlu0 %3165
    %3167 = vrot.lane.b32.xlu0 %v3162, 96
    %v3168 = vpop.permute.xlu0 %3167
    %v3169 = vrot.slane %v3164, 4
    %v3170 = vrot.slane %v3166, 4
    %v3171 = vrot.slane %v3168, 4
    %v3172 = vsel %vm2036, %v3169, %v3164
    %v3173 = vsel %vm2036, %v3170, %v3166
    %v3174 = vsel %vm2036, %v3171, %v3168
    %3178 = vst.msk [vmem:[#allocation13 + $0xc] sm:$0xff] %vm2045, %v3172
    %3179 = vst.msk [vmem:[#allocation13 + $0x28] sm:$0xff] %vm2045, %v3173
    %3180 = vst.msk [vmem:[#allocation13 + $0x44] sm:$0x77] %vm2050, %v3174
    %v3181 = vld [vmem:[#allocation5 + $0x8] sm:$0xff]
    %v3182 = vld [vmem:[#allocation5 + $0x10] sm:$0xff]
    %v3183 = vld [vmem:[#allocation5 + $0x18] sm:$0x3f]
    %v3184 = vpack.c.bf16 %v3182, %v3181
    %v3185 = vpack.c.bf16 %v3183, %v3183
    %v3188 = vunpack.c.l.b16 %v3184
    %v3189 = vunpack.c.h.b16 %v3184
    %v3190 = vunpack.c.l.b16 %v3185
    %v3191 = vpack.c.b16 %v3188, %v3188
    %v3192 = vpack.c.b16 %v3189, %v3189
    %v3193 = vpack.c.b16 %v3190, %v3190
    %3194 = vrot.lane.b32.xlu0 %v3191, 64
    %v3195 = vpop.permute.xlu0 %3194
    %3196 = vrot.lane.b32.xlu0 %v3192, 64
    %v3197 = vpop.permute.xlu0 %3196
    %3198 = vrot.lane.b32.xlu0 %v3193, 64
    %v3199 = vpop.permute.xlu0 %3198
    %v3200 = vrot.slane %v3195, 4
    %v3201 = vrot.slane %v3197, 4
    %v3202 = vrot.slane %v3199, 4
    %v3203 = vsel %vm2074, %v3200, %v3195
    %v3204 = vsel %vm2074, %v3201, %v3197
    %v3205 = vsel %vm2074, %v3202, %v3199
    %3209 = vst.msk [vmem:[#allocation13 + $0x10] sm:$0xff] %vm2082, %v3203
    %3210 = vst.msk [vmem:[#allocation13 + $0x2c] sm:$0xff] %vm2082, %v3204
    %3211 = vst.msk [vmem:[#allocation13 + $0x48] sm:$0x77] %vm2087, %v3205
    %v3212 = vld [vmem:[#allocation5 + $0x9] sm:$0xff]
    %v3213 = vld [vmem:[#allocation5 + $0x11] sm:$0xff]
    %v3214 = vld [vmem:[#allocation5 + $0x19] sm:$0x3f]
    %v3215 = vpack.c.bf16 %v3213, %v3212
    %v3216 = vpack.c.bf16 %v3214, %v3214
    %v3219 = vunpack.c.l.b16 %v3215
    %v3220 = vunpack.c.h.b16 %v3215
    %v3221 = vunpack.c.l.b16 %v3216
    %v3222 = vpack.c.b16 %v3219, %v3219
    %v3223 = vpack.c.b16 %v3220, %v3220
    %v3224 = vpack.c.b16 %v3221, %v3221
    %3225 = vrot.lane.b32.xlu0 %v3222, 32
    %v3226 = vpop.permute.xlu0 %3225
    %3227 = vrot.lane.b32.xlu0 %v3223, 32
    %v3228 = vpop.permute.xlu0 %3227
    %3229 = vrot.lane.b32.xlu0 %v3224, 32
    %v3230 = vpop.permute.xlu0 %3229
    %3234 = vst.msk [vmem:[#allocation13 + $0x14] sm:$0xf] %vm2111, %v3226
    %3235 = vst.msk [vmem:[#allocation13 + $0x30] sm:$0xf] %vm2111, %v3228
    %3236 = vst.msk [vmem:[#allocation13 + $0x4c] sm:$0x7] %vm2114, %v3230
    %v3237 = vld [vmem:[#allocation5 + $0xa] sm:$0xff]
    %v3238 = vld [vmem:[#allocation5 + $0x12] sm:$0xff]
    %v3239 = vld [vmem:[#allocation5 + $0x1a] sm:$0x3f]
    %v3240 = vpack.c.bf16 %v3238, %v3237
    %v3241 = vpack.c.bf16 %v3239, %v3239
    %v3244 = vunpack.c.l.b16 %v3240
    %v3245 = vunpack.c.h.b16 %v3240
    %v3246 = vunpack.c.l.b16 %v3241
    %v3247 = vpack.c.b16 %v3244, %v3244
    %v3248 = vpack.c.b16 %v3245, %v3245
    %v3249 = vpack.c.b16 %v3246, %v3246
    %3253 = vst.msk [vmem:[#allocation13 + $0x18] sm:$0xf] %vm2009, %v3247
    %3254 = vst.msk [vmem:[#allocation13 + $0x34] sm:$0xf] %vm2009, %v3248
    %3255 = vst.msk [vmem:[#allocation13 + $0x50] sm:$0x7] %vm2012, %v3249
    %v3256 = vld [vmem:[#allocation13] sm:$0xff]
    %v3257 = vld [vmem:[#allocation13 + $0x8] sm:$0xff]
    %v3258 = vld [vmem:[#allocation13 + $0x10] sm:$0xff]
    %v3259 = vld [vmem:[#allocation13 + $0x18] sm:$0xf]
    %v3260 = vld [vmem:[#allocation13 + $0x1c] sm:$0xff]
    %v3261 = vld [vmem:[#allocation13 + $0x24] sm:$0xff]
    %v3262 = vld [vmem:[#allocation13 + $0x2c] sm:$0xff]
    %v3263 = vld [vmem:[#allocation13 + $0x34] sm:$0xf]
    %v3264 = vld [vmem:[#allocation13 + $0x38] sm:$0x77]
    %v3265 = vld [vmem:[#allocation13 + $0x40] sm:$0x77]
    %v3266 = vld [vmem:[#allocation13 + $0x48] sm:$0x77]
    %v3267 = vld [vmem:[#allocation13 + $0x50] sm:$0x7]
    %v3268 = vld [vmem:[%s6] sm:$0xf]
    %v3269 = vld [vmem:[%s6 + $0x4] sm:$0xf]
    %v3270 = vld [vmem:[%s6 + $0x8] sm:$0xf]
    %v3271 = vld [vmem:[%s6 + $0xc] sm:$0xf]
    %v3272 = vld [vmem:[%s6 + $0x10] sm:$0xf]
    %v3273 = vld [vmem:[%s6 + $0x14] sm:$0xf]
    %v3274 = vld [vmem:[%s6 + $0x18] sm:$0xf]
    %v3275 = vld [vmem:[%s6 + $0x1c] sm:$0xf]
    %v3276 = vld [vmem:[%s6 + $0x20] sm:$0xf]
    %v3277 = vld [vmem:[%s6 + $0x24] sm:$0xf]
    %v3278 = vld [vmem:[%s6 + $0x28] sm:$0xf]
    %v3279 = vld [vmem:[%s6 + $0x2c] sm:$0xf]
    %v3280 = vld [vmem:[%s6 + $0x30] sm:$0xf]
    %v3281 = vld [vmem:[%s6 + $0x34] sm:$0xf]
    %v3282 = vld [vmem:[%s6 + $0x38] sm:$0xf]
    %v3283 = vld [vmem:[%s6 + $0x3c] sm:$0xf]
    %v3284 = vld [vmem:[%s6 + $0x40] sm:$0xf]
    %v3285 = vld [vmem:[%s6 + $0x44] sm:$0xf]
    %v3286 = vld [vmem:[%s6 + $0x48] sm:$0xf]
    %v3287 = vld [vmem:[%s6 + $0x4c] sm:$0xf]
    %v3288 = vld [vmem:[%s6 + $0x50] sm:$0xf]
    %v3289 = vld [vmem:[%s6 + $0x54] sm:$0xf]
    %v3290 = vld [vmem:[%s6 + $0x58] sm:$0xf]
    %v3291 = vld [vmem:[%s6 + $0x5c] sm:$0xf]
    %v3292 = vld [vmem:[%s6 + $0x60] sm:$0xf]
    %v3293 = vld [vmem:[%s6 + $0x64] sm:$0xf]
    %v3294 = vld [vmem:[%s6 + $0x68] sm:$0xf]
    %v3295 = vld [vmem:[%s6 + $0x6c] sm:$0xf]
    %v3296 = vld [vmem:[%s6 + $0x70] sm:$0xf]
    %v3297 = vld [vmem:[%s6 + $0x74] sm:$0xf]
    %v3298 = vld [vmem:[%s6 + $0x78] sm:$0xf]
    %v3299 = vld [vmem:[%s6 + $0x7c] sm:$0xf]
    %v3300 = vld [vmem:[%s6 + $0x80] sm:$0xf]
    %v3301 = vld [vmem:[%s6 + $0x84] sm:$0xf]
    %v3302 = vld [vmem:[%s6 + $0x88] sm:$0xf]
    %v3303 = vld [vmem:[%s6 + $0x8c] sm:$0xf]
    %v3304 = vld [vmem:[%s6 + $0x90] sm:$0xf]
    %v3305 = vld [vmem:[%s6 + $0x94] sm:$0xf]
    %v3306 = vld [vmem:[%s6 + $0x98] sm:$0xf]
    %v3307 = vld [vmem:[%s6 + $0x9c] sm:$0xf]
    %v3308 = vld [vmem:[%s6 + $0xa0] sm:$0xf]
    %v3309 = vld [vmem:[%s6 + $0xa4] sm:$0xf]
    %v3310 = vld [vmem:[%s6 + $0xa8] sm:$0xf]
    %v3311 = vld [vmem:[%s6 + $0xac] sm:$0xf]
    %v3312 = vld [vmem:[%s6 + $0xb0] sm:$0xf]
    %v3313 = vld [vmem:[%s6 + $0xb4] sm:$0xf]
    %v3314 = vld [vmem:[%s6 + $0xb8] sm:$0xf]
    %v3315 = vld [vmem:[%s6 + $0xbc] sm:$0xf]
    %v3316 = vld [vmem:[%s6 + $0xc0] sm:$0xf]
    %v3317 = vld [vmem:[%s6 + $0xc4] sm:$0xf]
    %v3318 = vld [vmem:[%s6 + $0xc8] sm:$0xf]
    %v3319 = vld [vmem:[%s6 + $0xcc] sm:$0xf]
    %v3320 = vld [vmem:[%s6 + $0xd0] sm:$0xf]
    %v3321 = vld [vmem:[%s6 + $0xd4] sm:$0xf]
    %v3322 = vld [vmem:[%s6 + $0xd8] sm:$0xf]
    %v3323 = vld [vmem:[%s6 + $0xdc] sm:$0xf]
    %v3324 = vld [vmem:[%s6 + $0xe0] sm:$0xf]
    %v3325 = vld [vmem:[%s6 + $0xe4] sm:$0xf]
    %v3326 = vld [vmem:[%s6 + $0xe8] sm:$0xf]
    %v3327 = vld [vmem:[%s6 + $0xec] sm:$0xf]
    %v3328 = vld [vmem:[%s6 + $0xf0] sm:$0xf]
    %v3329 = vld [vmem:[%s6 + $0xf4] sm:$0xf]
    %v3330 = vld [vmem:[%s6 + $0xf8] sm:$0xf]
    %v3331 = vld [vmem:[%s6 + $0xfc] sm:$0xf]
    %v3332 = vld [vmem:[%s6 + $0x100] sm:$0xf]
    %v3333 = vld [vmem:[%s6 + $0x104] sm:$0xf]
    %v3334 = vld [vmem:[%s6 + $0x108] sm:$0xf]
    %v3335 = vld [vmem:[%s6 + $0x10c] sm:$0xf]
    %v3336 = vld [vmem:[%s6 + $0x110] sm:$0xf]
    %v3337 = vld [vmem:[%s6 + $0x114] sm:$0xf]
    %v3338 = vld [vmem:[%s6 + $0x118] sm:$0xf]
    %v3339 = vld [vmem:[%s6 + $0x11c] sm:$0xf]
    %v3340 = vld [vmem:[%s6 + $0x120] sm:$0xf]
    %v3341 = vld [vmem:[%s6 + $0x124] sm:$0xf]
    %v3342 = vld [vmem:[%s6 + $0x128] sm:$0xf]
    %v3343 = vld [vmem:[%s6 + $0x12c] sm:$0xf]
    %v3344 = vld [vmem:[%s6 + $0x130] sm:$0xf]
    %v3345 = vld [vmem:[%s6 + $0x134] sm:$0xf]
    %v3346 = vld [vmem:[%s6 + $0x138] sm:$0xf]
    %v3347 = vld [vmem:[%s6 + $0x13c] sm:$0xf]
    %v3348 = vld [vmem:[%s6 + $0x140] sm:$0xf]
    %v3349 = vld [vmem:[%s6 + $0x144] sm:$0xf]
    %v3350 = vld [vmem:[%s6 + $0x148] sm:$0xf]
    %v3351 = vld [vmem:[%s6 + $0x14c] sm:$0xf]
    %v3352 = vld [vmem:[%s6 + $0x150] sm:$0xf]
    %v3353 = vld [vmem:[%s6 + $0x154] sm:$0xf]
    %v3354 = vld [vmem:[%s6 + $0x158] sm:$0xf]
    %v3355 = vld [vmem:[%s6 + $0x15c] sm:$0xf]
    %v3356 = vld [vmem:[%s6 + $0x160] sm:$0xf]
    %v3357 = vld [vmem:[%s6 + $0x164] sm:$0xf]
    %v3358 = vld [vmem:[%s6 + $0x168] sm:$0xf]
    %v3359 = vld [vmem:[%s6 + $0x16c] sm:$0xf]
    %v3360 = vld [vmem:[%s6 + $0x170] sm:$0xf]
    %v3361 = vld [vmem:[%s6 + $0x174] sm:$0xf]
    %v3362 = vld [vmem:[%s6 + $0x178] sm:$0xf]
    %v3363 = vld [vmem:[%s6 + $0x17c] sm:$0xf]
    %v3364 = vld [vmem:[%s6 + $0x180] sm:$0xf]
    %v3365 = vld [vmem:[%s6 + $0x184] sm:$0xf]
    %v3366 = vld [vmem:[%s6 + $0x188] sm:$0xf]
    %v3367 = vld [vmem:[%s6 + $0x18c] sm:$0xf]
    %v3368 = vld [vmem:[%s6 + $0x190] sm:$0xf]
    %v3369 = vld [vmem:[%s6 + $0x194] sm:$0xf]
    %v3370 = vld [vmem:[%s6 + $0x198] sm:$0xf]
    %v3371 = vld [vmem:[%s6 + $0x19c] sm:$0xf]
    %v3372 = vld [vmem:[%s6 + $0x1a0] sm:$0xf]
    %v3373 = vld [vmem:[%s6 + $0x1a4] sm:$0xf]
    %v3374 = vld [vmem:[%s6 + $0x1a8] sm:$0xf]
    %v3375 = vld [vmem:[%s6 + $0x1ac] sm:$0xf]
    %v3376 = vld [vmem:[%s7] sm:$0x1]
    %v3378 = vlaneseq
    %v3379 = vshrl.u32 %v3378, 7
    %v3380 = vsub.s32 0, %v3379
    %v3381 = vrot.slane %v3376, %v3380
    %v3395 = vunpack.c.l.b16 %v3256
    %v3396 = vunpack.c.h.b16 %v3256
    %v3397 = vunpack.c.l.b16 %v3257
    %v3398 = vunpack.c.h.b16 %v3257
    %v3399 = vunpack.c.l.b16 %v3258
    %v3400 = vunpack.c.h.b16 %v3258
    %v3401 = vunpack.c.l.b16 %v3259
    %v3402 = vunpack.c.l.b16 %v3260
    %v3403 = vunpack.c.h.b16 %v3260
    %v3404 = vunpack.c.l.b16 %v3261
    %v3405 = vunpack.c.h.b16 %v3261
    %v3406 = vunpack.c.l.b16 %v3262
    %v3407 = vunpack.c.h.b16 %v3262
    %v3408 = vunpack.c.l.b16 %v3263
    %v3409 = vunpack.c.l.b16 %v3264
    %v3410 = vunpack.c.h.b16 %v3264
    %v3411 = vunpack.c.l.b16 %v3265
    %v3412 = vunpack.c.h.b16 %v3265
    %v3413 = vunpack.c.l.b16 %v3266
    %v3414 = vunpack.c.h.b16 %v3266
    %v3415 = vunpack.c.l.b16 %v3267
    %v3416 = vpack.c.b16 %v3402, %v3395
    %v3417 = vpack.c.b16 %v3403, %v3396
    %v3418 = vpack.c.b16 %v3404, %v3397
    %v3419 = vpack.c.b16 %v3405, %v3398
    %v3420 = vpack.c.b16 %v3406, %v3399
    %v3421 = vpack.c.b16 %v3407, %v3400
    %v3422 = vpack.c.b16 %v3408, %v3401
    %v3423 = vpack.c.b16 %v3409, %v3409
    %v3424 = vpack.c.b16 %v3410, %v3410
    %v3425 = vpack.c.b16 %v3411, %v3411
    %v3426 = vpack.c.b16 %v3412, %v3412
    %v3427 = vpack.c.b16 %v3413, %v3413
    %v3428 = vpack.c.b16 %v3414, %v3414
    %v3429 = vpack.c.b16 %v3415, %v3415
    %v3550 = vunpack.c.l.b16 %v3268
    %v3551 = vunpack.c.l.b16 %v3269
    %v3552 = vunpack.c.l.b16 %v3270
    %v3553 = vunpack.c.l.b16 %v3271
    %v3554 = vunpack.c.l.b16 %v3272
    %v3555 = vunpack.c.l.b16 %v3273
    %v3556 = vunpack.c.l.b16 %v3274
    %v3557 = vunpack.c.l.b16 %v3275
    %v3558 = vunpack.c.l.b16 %v3276
    %v3559 = vunpack.c.l.b16 %v3277
    %v3560 = vunpack.c.l.b16 %v3278
    %v3561 = vunpack.c.l.b16 %v3279
    %v3562 = vunpack.c.l.b16 %v3280
    %v3563 = vunpack.c.l.b16 %v3281
    %v3564 = vunpack.c.l.b16 %v3282
    %v3565 = vunpack.c.l.b16 %v3283
    %v3566 = vunpack.c.l.b16 %v3284
    %v3567 = vunpack.c.l.b16 %v3285
    %v3568 = vunpack.c.l.b16 %v3286
    %v3569 = vunpack.c.l.b16 %v3287
    %v3570 = vunpack.c.l.b16 %v3288
    %v3571 = vunpack.c.l.b16 %v3289
    %v3572 = vunpack.c.l.b16 %v3290
    %v3573 = vunpack.c.l.b16 %v3291
    %v3574 = vunpack.c.l.b16 %v3292
    %v3575 = vunpack.c.l.b16 %v3293
    %v3576 = vunpack.c.l.b16 %v3294
    %v3577 = vunpack.c.l.b16 %v3295
    %v3578 = vunpack.c.l.b16 %v3296
    %v3579 = vunpack.c.l.b16 %v3297
    %v3580 = vunpack.c.l.b16 %v3298
    %v3581 = vunpack.c.l.b16 %v3299
    %v3582 = vunpack.c.l.b16 %v3300
    %v3583 = vunpack.c.l.b16 %v3301
    %v3584 = vunpack.c.l.b16 %v3302
    %v3585 = vunpack.c.l.b16 %v3303
    %v3586 = vunpack.c.l.b16 %v3304
    %v3587 = vunpack.c.l.b16 %v3305
    %v3588 = vunpack.c.l.b16 %v3306
    %v3589 = vunpack.c.l.b16 %v3307
    %v3590 = vunpack.c.l.b16 %v3308
    %v3591 = vunpack.c.l.b16 %v3309
    %v3592 = vunpack.c.l.b16 %v3310
    %v3593 = vunpack.c.l.b16 %v3311
    %v3594 = vunpack.c.l.b16 %v3312
    %v3595 = vunpack.c.l.b16 %v3313
    %v3596 = vunpack.c.l.b16 %v3314
    %v3597 = vunpack.c.l.b16 %v3315
    %v3598 = vunpack.c.l.b16 %v3316
    %v3599 = vunpack.c.l.b16 %v3317
    %v3600 = vunpack.c.l.b16 %v3318
    %v3601 = vunpack.c.l.b16 %v3319
    %v3602 = vunpack.c.l.b16 %v3320
    %v3603 = vunpack.c.l.b16 %v3321
    %v3604 = vunpack.c.l.b16 %v3322
    %v3605 = vunpack.c.l.b16 %v3323
    %v3606 = vunpack.c.l.b16 %v3324
    %v3607 = vunpack.c.l.b16 %v3325
    %v3608 = vunpack.c.l.b16 %v3326
    %v3609 = vunpack.c.l.b16 %v3327
    %v3610 = vunpack.c.l.b16 %v3328
    %v3611 = vunpack.c.l.b16 %v3329
    %v3612 = vunpack.c.l.b16 %v3330
    %v3613 = vunpack.c.l.b16 %v3331
    %v3614 = vunpack.c.l.b16 %v3332
    %v3615 = vunpack.c.l.b16 %v3333
    %v3616 = vunpack.c.l.b16 %v3334
    %v3617 = vunpack.c.l.b16 %v3335
    %v3618 = vunpack.c.l.b16 %v3336
    %v3619 = vunpack.c.l.b16 %v3337
    %v3620 = vunpack.c.l.b16 %v3338
    %v3621 = vunpack.c.l.b16 %v3339
    %v3622 = vunpack.c.l.b16 %v3340
    %v3623 = vunpack.c.l.b16 %v3341
    %v3624 = vunpack.c.l.b16 %v3342
    %v3625 = vunpack.c.l.b16 %v3343
    %v3626 = vunpack.c.l.b16 %v3344
    %v3627 = vunpack.c.l.b16 %v3345
    %v3628 = vunpack.c.l.b16 %v3346
    %v3629 = vunpack.c.l.b16 %v3347
    %v3630 = vunpack.c.l.b16 %v3348
    %v3631 = vunpack.c.l.b16 %v3349
    %v3632 = vunpack.c.l.b16 %v3350
    %v3633 = vunpack.c.l.b16 %v3351
    %v3634 = vunpack.c.l.b16 %v3352
    %v3635 = vunpack.c.l.b16 %v3353
    %v3636 = vunpack.c.l.b16 %v3354
    %v3637 = vunpack.c.l.b16 %v3355
    %v3638 = vunpack.c.l.b16 %v3356
    %v3639 = vunpack.c.l.b16 %v3357
    %v3640 = vunpack.c.l.b16 %v3358
    %v3641 = vunpack.c.l.b16 %v3359
    %v3642 = vunpack.c.l.b16 %v3360
    %v3643 = vunpack.c.l.b16 %v3361
    %v3644 = vunpack.c.l.b16 %v3362
    %v3645 = vunpack.c.l.b16 %v3363
    %v3646 = vunpack.c.l.b16 %v3364
    %v3647 = vunpack.c.l.b16 %v3365
    %v3648 = vunpack.c.l.b16 %v3366
    %v3649 = vunpack.c.l.b16 %v3367
    %v3650 = vunpack.c.l.b16 %v3368
    %v3651 = vunpack.c.l.b16 %v3369
    %v3652 = vunpack.c.l.b16 %v3370
    %v3653 = vunpack.c.l.b16 %v3371
    %v3654 = vunpack.c.l.b16 %v3372
    %v3655 = vunpack.c.l.b16 %v3373
    %v3656 = vunpack.c.l.b16 %v3374
    %v3657 = vunpack.c.l.b16 %v3375
    %v3658 = vpack.c.b16 %v3551, %v3550
    %v3659 = vpack.c.b16 %v3553, %v3552
    %v3660 = vpack.c.b16 %v3555, %v3554
    %v3661 = vpack.c.b16 %v3557, %v3556
    %v3662 = vpack.c.b16 %v3559, %v3558
    %v3663 = vpack.c.b16 %v3561, %v3560
    %v3664 = vpack.c.b16 %v3563, %v3562
    %v3665 = vpack.c.b16 %v3565, %v3564
    %v3666 = vpack.c.b16 %v3567, %v3566
    %v3667 = vpack.c.b16 %v3569, %v3568
    %v3668 = vpack.c.b16 %v3571, %v3570
    %v3669 = vpack.c.b16 %v3573, %v3572
    %v3670 = vpack.c.b16 %v3575, %v3574
    %v3671 = vpack.c.b16 %v3577, %v3576
    %v3672 = vpack.c.b16 %v3579, %v3578
    %v3673 = vpack.c.b16 %v3581, %v3580
    %v3674 = vpack.c.b16 %v3583, %v3582
    %v3675 = vpack.c.b16 %v3585, %v3584
    %v3676 = vpack.c.b16 %v3587, %v3586
    %v3677 = vpack.c.b16 %v3589, %v3588
    %v3678 = vpack.c.b16 %v3591, %v3590
    %v3679 = vpack.c.b16 %v3593, %v3592
    %v3680 = vpack.c.b16 %v3595, %v3594
    %v3681 = vpack.c.b16 %v3597, %v3596
    %v3682 = vpack.c.b16 %v3599, %v3598
    %v3683 = vpack.c.b16 %v3601, %v3600
    %v3684 = vpack.c.b16 %v3603, %v3602
    %v3685 = vpack.c.b16 %v3605, %v3604
    %v3686 = vpack.c.b16 %v3607, %v3606
    %v3687 = vpack.c.b16 %v3609, %v3608
    %v3688 = vpack.c.b16 %v3611, %v3610
    %v3689 = vpack.c.b16 %v3613, %v3612
    %v3690 = vpack.c.b16 %v3615, %v3614
    %v3691 = vpack.c.b16 %v3617, %v3616
    %v3692 = vpack.c.b16 %v3619, %v3618
    %v3693 = vpack.c.b16 %v3621, %v3620
    %v3694 = vpack.c.b16 %v3623, %v3622
    %v3695 = vpack.c.b16 %v3625, %v3624
    %v3696 = vpack.c.b16 %v3627, %v3626
    %v3697 = vpack.c.b16 %v3629, %v3628
    %v3698 = vpack.c.b16 %v3631, %v3630
    %v3699 = vpack.c.b16 %v3633, %v3632
    %v3700 = vpack.c.b16 %v3635, %v3634
    %v3701 = vpack.c.b16 %v3637, %v3636
    %v3702 = vpack.c.b16 %v3639, %v3638
    %v3703 = vpack.c.b16 %v3641, %v3640
    %v3704 = vpack.c.b16 %v3643, %v3642
    %v3705 = vpack.c.b16 %v3645, %v3644
    %v3706 = vpack.c.b16 %v3647, %v3646
    %v3707 = vpack.c.b16 %v3649, %v3648
    %v3708 = vpack.c.b16 %v3651, %v3650
    %v3709 = vpack.c.b16 %v3653, %v3652
    %v3710 = vpack.c.b16 %v3655, %v3654
    %v3711 = vpack.c.b16 %v3657, %v3656
    %v3767 = vsel %vm93, %v3422, 0
    %v3770 = vsel %vm93, %v3429, 0
    %3772 = vmatprep.subr.bf16.mxu0 0
    %3773 = vmatpush1.bf16.msra.mxu0 %v3665
    %3774 = vmatprep.subr.bf16.mxu0 0
    %3775 = vmatpush1.bf16.msra.mxu0 %v3664
    %3776 = vmatprep.subr.bf16.mxu0 0
    %3777 = vmatpush1.bf16.msra.mxu0 %v3663
    %3778 = vmatprep.subr.bf16.mxu0 0
    %3779 = vmatpush1.bf16.msra.mxu0 %v3662
    %3780 = vmatprep.subr.bf16.mxu0 0
    %3781 = vmatpush1.bf16.msra.mxu0 %v3661
    %3782 = vmatprep.subr.bf16.mxu0 0
    %3783 = vmatpush1.bf16.msra.mxu0 %v3660
    %3784 = vmatprep.subr.bf16.mxu0 0
    %3785 = vmatpush1.bf16.msra.mxu0 %v3659
    %3786 = vmatprep.subr.bf16.mxu0 0
    %3787 = vmatpush1.bf16.msra.mxu0 %v3658
    %3788 = vmatprep.subr.bf16.mxu0 0
    %3789 = vmatpush2.bf16.msra.mxu0 %v3673
    %3790 = vmatprep.subr.bf16.mxu0 0
    %3791 = vmatpush2.bf16.msra.mxu0 %v3672
    %3792 = vmatprep.subr.bf16.mxu0 0
    %3793 = vmatpush2.bf16.msra.mxu0 %v3671
    %3794 = vmatprep.subr.bf16.mxu0 0
    %3795 = vmatpush2.bf16.msra.mxu0 %v3670
    %3796 = vmatprep.subr.bf16.mxu0 0
    %3797 = vmatpush2.bf16.msra.mxu0 %v3669
    %3798 = vmatprep.subr.bf16.mxu0 0
    %3799 = vmatpush2.bf16.msra.mxu0 %v3668
    %3800 = vmatprep.subr.bf16.mxu0 0
    %3801 = vmatpush2.bf16.msra.mxu0 %v3667
    %3802 = vmatprep.subr.bf16.mxu0 0
    %3803 = vmatpush2.bf16.msra.mxu0 %v3666
    %3804 = vmatprep.mubr.bf16.mxu0 %v3417
    %3805 = vmatmul.mubr.bf16.gmra.mxu0 %v3416
    %v3806 = vpop.f32.mrf.mxu0
    %v3807 = vadd.f32 %v3381, %v3806
    %v3808 = vpop.f32.mrf.mxu0
    %v3809 = vpop.f32.mrf.mxu0
    %v3810 = vpop.f32.mrf.mxu0
    %3811 = vmatprep.mubr.bf16.mxu0 %v3424
    %3812 = vmatmul.mubr.bf16.gmra.mxu0 %v3423
    %v3813 = vpop.f32.mrf.mxu0
    %v3814 = vadd.f32 %v3381, %v3813
    %v3815 = vpop.f32.mrf.mxu0
    %v3816 = vpop.f32.mrf.mxu0
    %v3817 = vpop.f32.mrf.mxu0
    %3818 = vdwg.mxu0
    %3819 = vmatprep.subr.bf16.mxu0 0
    %3820 = vmatpush1.bf16.msra.mxu0 %v3681
    %3821 = vmatprep.subr.bf16.mxu0 0
    %3822 = vmatpush1.bf16.msra.mxu0 %v3680
    %3823 = vmatprep.subr.bf16.mxu0 0
    %3824 = vmatpush1.bf16.msra.mxu0 %v3679
    %3825 = vmatprep.subr.bf16.mxu0 0
    %3826 = vmatpush1.bf16.msra.mxu0 %v3678
    %3827 = vmatprep.subr.bf16.mxu0 0
    %3828 = vmatpush1.bf16.msra.mxu0 %v3677
    %3829 = vmatprep.subr.bf16.mxu0 0
    %3830 = vmatpush1.bf16.msra.mxu0 %v3676
    %3831 = vmatprep.subr.bf16.mxu0 0
    %3832 = vmatpush1.bf16.msra.mxu0 %v3675
    %3833 = vmatprep.subr.bf16.mxu0 0
    %3834 = vmatpush1.bf16.msra.mxu0 %v3674
    %3835 = vmatprep.subr.bf16.mxu0 0
    %3836 = vmatpush2.bf16.msra.mxu0 %v3689
    %3837 = vmatprep.subr.bf16.mxu0 0
    %3838 = vmatpush2.bf16.msra.mxu0 %v3688
    %3839 = vmatprep.subr.bf16.mxu0 0
    %3840 = vmatpush2.bf16.msra.mxu0 %v3687
    %3841 = vmatprep.subr.bf16.mxu0 0
    %3842 = vmatpush2.bf16.msra.mxu0 %v3686
    %3843 = vmatprep.subr.bf16.mxu0 0
    %3844 = vmatpush2.bf16.msra.mxu0 %v3685
    %3845 = vmatprep.subr.bf16.mxu0 0
    %3846 = vmatpush2.bf16.msra.mxu0 %v3684
    %3847 = vmatprep.subr.bf16.mxu0 0
    %3848 = vmatpush2.bf16.msra.mxu0 %v3683
    %3849 = vmatprep.subr.bf16.mxu0 0
    %3850 = vmatpush2.bf16.msra.mxu0 %v3682
    %3851 = vmatprep.mubr.bf16.mxu0 %v3419
    %3852 = vmatmul.mubr.bf16.gmra.mxu0 %v3418
    %v3853 = vpop.f32.mrf.mxu0
    %v3854 = vadd.f32 %v3807, %v3853
    %v3855 = vpop.f32.mrf.mxu0
    %v3856 = vpop.f32.mrf.mxu0
    %v3857 = vpop.f32.mrf.mxu0
    %3858 = vmatprep.mubr.bf16.mxu0 %v3426
    %3859 = vmatmul.mubr.bf16.gmra.mxu0 %v3425
    %v3860 = vpop.f32.mrf.mxu0
    %v3861 = vadd.f32 %v3814, %v3860
    %v3862 = vpop.f32.mrf.mxu0
    %v3863 = vpop.f32.mrf.mxu0
    %v3864 = vpop.f32.mrf.mxu0
    %3865 = vdwg.mxu0
    %3866 = vmatprep.subr.bf16.mxu0 0
    %3867 = vmatpush1.bf16.msra.mxu0 %v3697
    %3868 = vmatprep.subr.bf16.mxu0 0
    %3869 = vmatpush1.bf16.msra.mxu0 %v3696
    %3870 = vmatprep.subr.bf16.mxu0 0
    %3871 = vmatpush1.bf16.msra.mxu0 %v3695
    %3872 = vmatprep.subr.bf16.mxu0 0
    %3873 = vmatpush1.bf16.msra.mxu0 %v3694
    %3874 = vmatprep.subr.bf16.mxu0 0
    %3875 = vmatpush1.bf16.msra.mxu0 %v3693
    %3876 = vmatprep.subr.bf16.mxu0 0
    %3877 = vmatpush1.bf16.msra.mxu0 %v3692
    %3878 = vmatprep.subr.bf16.mxu0 0
    %3879 = vmatpush1.bf16.msra.mxu0 %v3691
    %3880 = vmatprep.subr.bf16.mxu0 0
    %3881 = vmatpush1.bf16.msra.mxu0 %v3690
    %3882 = vmatprep.subr.bf16.mxu0 0
    %3883 = vmatpush2.bf16.msra.mxu0 %v3705
    %3884 = vmatprep.subr.bf16.mxu0 0
    %3885 = vmatpush2.bf16.msra.mxu0 %v3704
    %3886 = vmatprep.subr.bf16.mxu0 0
    %3887 = vmatpush2.bf16.msra.mxu0 %v3703
    %3888 = vmatprep.subr.bf16.mxu0 0
    %3889 = vmatpush2.bf16.msra.mxu0 %v3702
    %3890 = vmatprep.subr.bf16.mxu0 0
    %3891 = vmatpush2.bf16.msra.mxu0 %v3701
    %3892 = vmatprep.subr.bf16.mxu0 0
    %3893 = vmatpush2.bf16.msra.mxu0 %v3700
    %3894 = vmatprep.subr.bf16.mxu0 0
    %3895 = vmatpush2.bf16.msra.mxu0 %v3699
    %3896 = vmatprep.subr.bf16.mxu0 0
    %3897 = vmatpush2.bf16.msra.mxu0 %v3698
    %3898 = vmatprep.mubr.bf16.mxu0 %v3421
    %3899 = vmatmul.mubr.bf16.gmra.mxu0 %v3420
    %v3900 = vpop.f32.mrf.mxu0
    %v3901 = vadd.f32 %v3854, %v3900
    %v3902 = vpop.f32.mrf.mxu0
    %v3903 = vpop.f32.mrf.mxu0
    %v3904 = vpop.f32.mrf.mxu0
    %3905 = vmatprep.mubr.bf16.mxu0 %v3428
    %3906 = vmatmul.mubr.bf16.gmra.mxu0 %v3427
    %v3907 = vpop.f32.mrf.mxu0
    %v3908 = vadd.f32 %v3861, %v3907
    %v3909 = vpop.f32.mrf.mxu0
    %v3910 = vpop.f32.mrf.mxu0
    %v3911 = vpop.f32.mrf.mxu0
    %3912 = vdwg.mxu0
    %3913 = vmatprep.subr.bf16.mxu0 0
    %3914 = vmatpush1.bf16.msra.mxu0 0
    %3915 = vmatprep.subr.bf16.mxu0 0
    %3916 = vmatpush1.bf16.msra.mxu0 0
    %3917 = vmatprep.subr.bf16.mxu0 0
    %3918 = vmatpush1.bf16.msra.mxu0 %v3711
    %3919 = vmatprep.subr.bf16.mxu0 0
    %3920 = vmatpush1.bf16.msra.mxu0 %v3710
    %3921 = vmatprep.subr.bf16.mxu0 0
    %3922 = vmatpush1.bf16.msra.mxu0 %v3709
    %3923 = vmatprep.subr.bf16.mxu0 0
    %3924 = vmatpush1.bf16.msra.mxu0 %v3708
    %3925 = vmatprep.subr.bf16.mxu0 0
    %3926 = vmatpush1.bf16.msra.mxu0 %v3707
    %3927 = vmatprep.subr.bf16.mxu0 0
    %3928 = vmatpush1.bf16.msra.mxu0 %v3706
    %3929 = vmatprep.subr.bf16.mxu0 0
    %3930 = vmatpush2.bf16.msra.mxu0 0
    %3931 = vmatprep.subr.bf16.mxu0 0
    %3932 = vmatpush2.bf16.msra.mxu0 0
    %3933 = vmatprep.subr.bf16.mxu0 0
    %3934 = vmatpush2.bf16.msra.mxu0 0
    %3935 = vmatprep.subr.bf16.mxu0 0
    %3936 = vmatpush2.bf16.msra.mxu0 0
    %3937 = vmatprep.subr.bf16.mxu0 0
    %3938 = vmatpush2.bf16.msra.mxu0 0
    %3939 = vmatprep.subr.bf16.mxu0 0
    %3940 = vmatpush2.bf16.msra.mxu0 0
    %3941 = vmatprep.subr.bf16.mxu0 0
    %3942 = vmatpush2.bf16.msra.mxu0 0
    %3943 = vmatprep.subr.bf16.mxu0 0
    %3944 = vmatpush2.bf16.msra.mxu0 0
    %3945 = vmatprep.mubr.bf16.mxu0 0
    %3946 = vmatmul.mubr.bf16.gmra.mxu0 %v3767
    %v3947 = vpop.f32.mrf.mxu0
    %v3948 = vadd.f32 %v3901, %v3947
    %v3949 = vpop.f32.mrf.mxu0
    %v3950 = vpop.f32.mrf.mxu0
    %v3951 = vpop.f32.mrf.mxu0
    %3952 = vmatprep.mubr.bf16.mxu0 0
    %3953 = vmatmul.mubr.bf16.gmra.mxu0 %v3770
    %v3954 = vpop.f32.mrf.mxu0
    %v3955 = vadd.f32 %v3908, %v3954
    %v3956 = vpop.f32.mrf.mxu0
    %v3957 = vpop.f32.mrf.mxu0
    %v3958 = vpop.f32.mrf.mxu0
    %3959 = vdwg.mxu0
    %v3960 = vmax.f32 %v3948, 0.0
    %v3961 = vmax.f32 %v3955, 0.0
    %3962 = vst.msk [vmem:[#allocation6 + $0x5] sm:$0x1] %vm1981, %v3960
    %3963 = vst.msk [vmem:[#allocation6 + $0x5] sm:$0x2] %vm2958, %v3960
    %3964 = vst.msk [vmem:[#allocation6 + $0x5] sm:$0x10] %vm1985, %v3960
    %3965 = vst.msk [vmem:[#allocation6 + $0x5] sm:$0x20] %vm2979, %v3960
    %3966 = vst.msk [vmem:[#allocation6 + $0x15] sm:$0x1] %vm1981, %v3961
    %3967 = vst.msk [vmem:[#allocation6 + $0x15] sm:$0x2] %vm2958, %v3961
    %3968 = vst.msk [vmem:[#allocation6 + $0x15] sm:$0x10] %vm1985, %v3961
    %3969 = vst.msk [vmem:[#allocation6 + $0x15] sm:$0x20] %vm2979, %v3961
    %v3970 = vld [vmem:[#allocation6] sm:$0xff]
    %v3971 = vld [vmem:[#allocation6 + $0x8] sm:$0xff]
    %v3972 = vld [vmem:[#allocation6 + $0x10] sm:$0x3f]
    %v3973 = vpack.c.bf16 %v3971, %v3970
    %v3974 = vpack.c.bf16 %v3972, %v3972
    %v3977 = vunpack.c.l.b16 %v3973
    %v3978 = vunpack.c.h.b16 %v3973
    %v3979 = vunpack.c.l.b16 %v3974
    %v3980 = vpack.c.b16 %v3977, %v3977
    %v3981 = vpack.c.b16 %v3978, %v3978
    %v3982 = vpack.c.b16 %v3979, %v3979
    %3986 = vst.msk [vmem:[#allocation13] sm:$0xf] %vm2009, %v3980
    %3987 = vst.msk [vmem:[#allocation13 + $0x1c] sm:$0xf] %vm2009, %v3981
    %3988 = vst.msk [vmem:[#allocation13 + $0x38] sm:$0x7] %vm2012, %v3982
    %v3989 = vld [vmem:[#allocation6 + $0x1] sm:$0xff]
    %v3990 = vld [vmem:[#allocation6 + $0x9] sm:$0xff]
    %v3991 = vld [vmem:[#allocation6 + $0x11] sm:$0x3f]
    %v3992 = vpack.c.bf16 %v3990, %v3989
    %v3993 = vpack.c.bf16 %v3991, %v3991
    %v3996 = vunpack.c.l.b16 %v3992
    %v3997 = vunpack.c.h.b16 %v3992
    %v3998 = vunpack.c.l.b16 %v3993
    %v3999 = vpack.c.b16 %v3996, %v3996
    %v4000 = vpack.c.b16 %v3997, %v3997
    %v4001 = vpack.c.b16 %v3998, %v3998
    %4002 = vrot.lane.b32.xlu0 %v3999, 96
    %v4003 = vpop.permute.xlu0 %4002
    %4004 = vrot.lane.b32.xlu0 %v4000, 96
    %v4005 = vpop.permute.xlu0 %4004
    %4006 = vrot.lane.b32.xlu0 %v4001, 96
    %v4007 = vpop.permute.xlu0 %4006
    %v4008 = vrot.slane %v4003, 4
    %v4009 = vrot.slane %v4005, 4
    %v4010 = vrot.slane %v4007, 4
    %v4011 = vsel %vm2036, %v4008, %v4003
    %v4012 = vsel %vm2036, %v4009, %v4005
    %v4013 = vsel %vm2036, %v4010, %v4007
    %4017 = vst.msk [vmem:[#allocation13] sm:$0xff] %vm2045, %v4011
    %4018 = vst.msk [vmem:[#allocation13 + $0x1c] sm:$0xff] %vm2045, %v4012
    %4019 = vst.msk [vmem:[#allocation13 + $0x38] sm:$0x77] %vm2050, %v4013
    %v4020 = vld [vmem:[#allocation6 + $0x2] sm:$0xff]
    %v4021 = vld [vmem:[#allocation6 + $0xa] sm:$0xff]
    %v4022 = vld [vmem:[#allocation6 + $0x12] sm:$0x3f]
    %v4023 = vpack.c.bf16 %v4021, %v4020
    %v4024 = vpack.c.bf16 %v4022, %v4022
    %v4027 = vunpack.c.l.b16 %v4023
    %v4028 = vunpack.c.h.b16 %v4023
    %v4029 = vunpack.c.l.b16 %v4024
    %v4030 = vpack.c.b16 %v4027, %v4027
    %v4031 = vpack.c.b16 %v4028, %v4028
    %v4032 = vpack.c.b16 %v4029, %v4029
    %4033 = vrot.lane.b32.xlu0 %v4030, 64
    %v4034 = vpop.permute.xlu0 %4033
    %4035 = vrot.lane.b32.xlu0 %v4031, 64
    %v4036 = vpop.permute.xlu0 %4035
    %4037 = vrot.lane.b32.xlu0 %v4032, 64
    %v4038 = vpop.permute.xlu0 %4037
    %v4039 = vrot.slane %v4034, 4
    %v4040 = vrot.slane %v4036, 4
    %v4041 = vrot.slane %v4038, 4
    %v4042 = vsel %vm2074, %v4039, %v4034
    %v4043 = vsel %vm2074, %v4040, %v4036
    %v4044 = vsel %vm2074, %v4041, %v4038
    %4048 = vst.msk [vmem:[#allocation13 + $0x4] sm:$0xff] %vm2082, %v4042
    %4049 = vst.msk [vmem:[#allocation13 + $0x20] sm:$0xff] %vm2082, %v4043
    %4050 = vst.msk [vmem:[#allocation13 + $0x3c] sm:$0x77] %vm2087, %v4044
    %v4051 = vld [vmem:[#allocation6 + $0x4] sm:$0xff]
    %v4052 = vld [vmem:[#allocation6 + $0xc] sm:$0xff]
    %v4053 = vld [vmem:[#allocation6 + $0x14] sm:$0x3f]
    %v4054 = vpack.c.bf16 %v4052, %v4051
    %v4055 = vpack.c.bf16 %v4053, %v4053
    %v4058 = vunpack.c.l.b16 %v4054
    %v4059 = vunpack.c.h.b16 %v4054
    %v4060 = vunpack.c.l.b16 %v4055
    %v4061 = vpack.c.b16 %v4058, %v4058
    %v4062 = vpack.c.b16 %v4059, %v4059
    %v4063 = vpack.c.b16 %v4060, %v4060
    %4064 = vrot.lane.b32.xlu0 %v4061, 32
    %v4065 = vpop.permute.xlu0 %4064
    %4066 = vrot.lane.b32.xlu0 %v4062, 32
    %v4067 = vpop.permute.xlu0 %4066
    %4068 = vrot.lane.b32.xlu0 %v4063, 32
    %v4069 = vpop.permute.xlu0 %4068
    %4073 = vst.msk [vmem:[#allocation13 + $0x8] sm:$0xf] %vm2111, %v4065
    %4074 = vst.msk [vmem:[#allocation13 + $0x24] sm:$0xf] %vm2111, %v4067
    %4075 = vst.msk [vmem:[#allocation13 + $0x40] sm:$0x7] %vm2114, %v4069
    %v4076 = vld [vmem:[#allocation6 + $0x5] sm:$0xff]
    %v4077 = vld [vmem:[#allocation6 + $0xd] sm:$0xff]
    %v4078 = vld [vmem:[#allocation6 + $0x15] sm:$0x3f]
    %v4079 = vpack.c.bf16 %v4077, %v4076
    %v4080 = vpack.c.bf16 %v4078, %v4078
    %v4083 = vunpack.c.l.b16 %v4079
    %v4084 = vunpack.c.h.b16 %v4079
    %v4085 = vunpack.c.l.b16 %v4080
    %v4086 = vpack.c.b16 %v4083, %v4083
    %v4087 = vpack.c.b16 %v4084, %v4084
    %v4088 = vpack.c.b16 %v4085, %v4085
    %4092 = vst.msk [vmem:[#allocation13 + $0xc] sm:$0xf] %vm2009, %v4086
    %4093 = vst.msk [vmem:[#allocation13 + $0x28] sm:$0xf] %vm2009, %v4087
    %4094 = vst.msk [vmem:[#allocation13 + $0x44] sm:$0x7] %vm2012, %v4088
    %v4095 = vld [vmem:[#allocation6 + $0x6] sm:$0xff]
    %v4096 = vld [vmem:[#allocation6 + $0xe] sm:$0xff]
    %v4097 = vld [vmem:[#allocation6 + $0x16] sm:$0x3f]
    %v4098 = vpack.c.bf16 %v4096, %v4095
    %v4099 = vpack.c.bf16 %v4097, %v4097
    %v4102 = vunpack.c.l.b16 %v4098
    %v4103 = vunpack.c.h.b16 %v4098
    %v4104 = vunpack.c.l.b16 %v4099
    %v4105 = vpack.c.b16 %v4102, %v4102
    %v4106 = vpack.c.b16 %v4103, %v4103
    %v4107 = vpack.c.b16 %v4104, %v4104
    %4108 = vrot.lane.b32.xlu0 %v4105, 96
    %v4109 = vpop.permute.xlu0 %4108
    %4110 = vrot.lane.b32.xlu0 %v4106, 96
    %v4111 = vpop.permute.xlu0 %4110
    %4112 = vrot.lane.b32.xlu0 %v4107, 96
    %v4113 = vpop.permute.xlu0 %4112
    %v4114 = vrot.slane %v4109, 4
    %v4115 = vrot.slane %v4111, 4
    %v4116 = vrot.slane %v4113, 4
    %v4117 = vsel %vm2036, %v4114, %v4109
    %v4118 = vsel %vm2036, %v4115, %v4111
    %v4119 = vsel %vm2036, %v4116, %v4113
    %4123 = vst.msk [vmem:[#allocation13 + $0xc] sm:$0xff] %vm2045, %v4117
    %4124 = vst.msk [vmem:[#allocation13 + $0x28] sm:$0xff] %vm2045, %v4118
    %4125 = vst.msk [vmem:[#allocation13 + $0x44] sm:$0x77] %vm2050, %v4119
    %v4126 = vld [vmem:[#allocation6 + $0x8] sm:$0xff]
    %v4127 = vld [vmem:[#allocation6 + $0x10] sm:$0xff]
    %v4128 = vld [vmem:[#allocation6 + $0x18] sm:$0x3f]
    %v4129 = vpack.c.bf16 %v4127, %v4126
    %v4130 = vpack.c.bf16 %v4128, %v4128
    %v4133 = vunpack.c.l.b16 %v4129
    %v4134 = vunpack.c.h.b16 %v4129
    %v4135 = vunpack.c.l.b16 %v4130
    %v4136 = vpack.c.b16 %v4133, %v4133
    %v4137 = vpack.c.b16 %v4134, %v4134
    %v4138 = vpack.c.b16 %v4135, %v4135
    %4139 = vrot.lane.b32.xlu0 %v4136, 64
    %v4140 = vpop.permute.xlu0 %4139
    %4141 = vrot.lane.b32.xlu0 %v4137, 64
    %v4142 = vpop.permute.xlu0 %4141
    %4143 = vrot.lane.b32.xlu0 %v4138, 64
    %v4144 = vpop.permute.xlu0 %4143
    %v4145 = vrot.slane %v4140, 4
    %v4146 = vrot.slane %v4142, 4
    %v4147 = vrot.slane %v4144, 4
    %v4148 = vsel %vm2074, %v4145, %v4140
    %v4149 = vsel %vm2074, %v4146, %v4142
    %v4150 = vsel %vm2074, %v4147, %v4144
    %4154 = vst.msk [vmem:[#allocation13 + $0x10] sm:$0xff] %vm2082, %v4148
    %4155 = vst.msk [vmem:[#allocation13 + $0x2c] sm:$0xff] %vm2082, %v4149
    %4156 = vst.msk [vmem:[#allocation13 + $0x48] sm:$0x77] %vm2087, %v4150
    %v4157 = vld [vmem:[#allocation6 + $0x9] sm:$0xff]
    %v4158 = vld [vmem:[#allocation6 + $0x11] sm:$0xff]
    %v4159 = vld [vmem:[#allocation6 + $0x19] sm:$0x3f]
    %v4160 = vpack.c.bf16 %v4158, %v4157
    %v4161 = vpack.c.bf16 %v4159, %v4159
    %v4164 = vunpack.c.l.b16 %v4160
    %v4165 = vunpack.c.h.b16 %v4160
    %v4166 = vunpack.c.l.b16 %v4161
    %v4167 = vpack.c.b16 %v4164, %v4164
    %v4168 = vpack.c.b16 %v4165, %v4165
    %v4169 = vpack.c.b16 %v4166, %v4166
    %4170 = vrot.lane.b32.xlu0 %v4167, 32
    %v4171 = vpop.permute.xlu0 %4170
    %4172 = vrot.lane.b32.xlu0 %v4168, 32
    %v4173 = vpop.permute.xlu0 %4172
    %4174 = vrot.lane.b32.xlu0 %v4169, 32
    %v4175 = vpop.permute.xlu0 %4174
    %4179 = vst.msk [vmem:[#allocation13 + $0x14] sm:$0xf] %vm2111, %v4171
    %4180 = vst.msk [vmem:[#allocation13 + $0x30] sm:$0xf] %vm2111, %v4173
    %4181 = vst.msk [vmem:[#allocation13 + $0x4c] sm:$0x7] %vm2114, %v4175
    %v4182 = vld [vmem:[#allocation6 + $0xa] sm:$0xff]
    %v4183 = vld [vmem:[#allocation6 + $0x12] sm:$0xff]
    %v4184 = vld [vmem:[#allocation6 + $0x1a] sm:$0x3f]
    %v4185 = vpack.c.bf16 %v4183, %v4182
    %v4186 = vpack.c.bf16 %v4184, %v4184
    %v4189 = vunpack.c.l.b16 %v4185
    %v4190 = vunpack.c.h.b16 %v4185
    %v4191 = vunpack.c.l.b16 %v4186
    %v4192 = vpack.c.b16 %v4189, %v4189
    %v4193 = vpack.c.b16 %v4190, %v4190
    %v4194 = vpack.c.b16 %v4191, %v4191
    %4198 = vst.msk [vmem:[#allocation13 + $0x18] sm:$0xf] %vm2009, %v4192
    %4199 = vst.msk [vmem:[#allocation13 + $0x34] sm:$0xf] %vm2009, %v4193
    %4200 = vst.msk [vmem:[#allocation13 + $0x50] sm:$0x7] %vm2012, %v4194
    %v4201 = vld [vmem:[#allocation13] sm:$0xff]
    %v4202 = vld [vmem:[#allocation13 + $0x8] sm:$0xff]
    %v4203 = vld [vmem:[#allocation13 + $0x10] sm:$0xff]
    %v4204 = vld [vmem:[#allocation13 + $0x18] sm:$0xf]
    %v4205 = vld [vmem:[#allocation13 + $0x1c] sm:$0xff]
    %v4206 = vld [vmem:[#allocation13 + $0x24] sm:$0xff]
    %v4207 = vld [vmem:[#allocation13 + $0x2c] sm:$0xff]
    %v4208 = vld [vmem:[#allocation13 + $0x34] sm:$0xf]
    %v4209 = vld [vmem:[#allocation13 + $0x38] sm:$0x77]
    %v4210 = vld [vmem:[#allocation13 + $0x40] sm:$0x77]
    %v4211 = vld [vmem:[#allocation13 + $0x48] sm:$0x77]
    %v4212 = vld [vmem:[#allocation13 + $0x50] sm:$0x7]
    %v4213 = vld [vmem:[%s8] sm:$0xf]
    %v4214 = vld [vmem:[%s8 + $0x4] sm:$0xf]
    %v4215 = vld [vmem:[%s8 + $0x8] sm:$0xf]
    %v4216 = vld [vmem:[%s8 + $0xc] sm:$0xf]
    %v4217 = vld [vmem:[%s8 + $0x10] sm:$0xf]
    %v4218 = vld [vmem:[%s8 + $0x14] sm:$0xf]
    %v4219 = vld [vmem:[%s8 + $0x18] sm:$0xf]
    %v4220 = vld [vmem:[%s8 + $0x1c] sm:$0xf]
    %v4221 = vld [vmem:[%s8 + $0x20] sm:$0xf]
    %v4222 = vld [vmem:[%s8 + $0x24] sm:$0xf]
    %v4223 = vld [vmem:[%s8 + $0x28] sm:$0xf]
    %v4224 = vld [vmem:[%s8 + $0x2c] sm:$0xf]
    %v4225 = vld [vmem:[%s8 + $0x30] sm:$0xf]
    %v4226 = vld [vmem:[%s8 + $0x34] sm:$0xf]
    %v4227 = vld [vmem:[%s8 + $0x38] sm:$0xf]
    %v4228 = vld [vmem:[%s8 + $0x3c] sm:$0xf]
    %v4229 = vld [vmem:[%s8 + $0x40] sm:$0xf]
    %v4230 = vld [vmem:[%s8 + $0x44] sm:$0xf]
    %v4231 = vld [vmem:[%s8 + $0x48] sm:$0xf]
    %v4232 = vld [vmem:[%s8 + $0x4c] sm:$0xf]
    %v4233 = vld [vmem:[%s8 + $0x50] sm:$0xf]
    %v4234 = vld [vmem:[%s8 + $0x54] sm:$0xf]
    %v4235 = vld [vmem:[%s8 + $0x58] sm:$0xf]
    %v4236 = vld [vmem:[%s8 + $0x5c] sm:$0xf]
    %v4237 = vld [vmem:[%s8 + $0x60] sm:$0xf]
    %v4238 = vld [vmem:[%s8 + $0x64] sm:$0xf]
    %v4239 = vld [vmem:[%s8 + $0x68] sm:$0xf]
    %v4240 = vld [vmem:[%s8 + $0x6c] sm:$0xf]
    %v4241 = vld [vmem:[%s8 + $0x70] sm:$0xf]
    %v4242 = vld [vmem:[%s8 + $0x74] sm:$0xf]
    %v4243 = vld [vmem:[%s8 + $0x78] sm:$0xf]
    %v4244 = vld [vmem:[%s8 + $0x7c] sm:$0xf]
    %v4245 = vld [vmem:[%s8 + $0x80] sm:$0xf]
    %v4246 = vld [vmem:[%s8 + $0x84] sm:$0xf]
    %v4247 = vld [vmem:[%s8 + $0x88] sm:$0xf]
    %v4248 = vld [vmem:[%s8 + $0x8c] sm:$0xf]
    %v4249 = vld [vmem:[%s8 + $0x90] sm:$0xf]
    %v4250 = vld [vmem:[%s8 + $0x94] sm:$0xf]
    %v4251 = vld [vmem:[%s8 + $0x98] sm:$0xf]
    %v4252 = vld [vmem:[%s8 + $0x9c] sm:$0xf]
    %v4253 = vld [vmem:[%s8 + $0xa0] sm:$0xf]
    %v4254 = vld [vmem:[%s8 + $0xa4] sm:$0xf]
    %v4255 = vld [vmem:[%s8 + $0xa8] sm:$0xf]
    %v4256 = vld [vmem:[%s8 + $0xac] sm:$0xf]
    %v4257 = vld [vmem:[%s8 + $0xb0] sm:$0xf]
    %v4258 = vld [vmem:[%s8 + $0xb4] sm:$0xf]
    %v4259 = vld [vmem:[%s8 + $0xb8] sm:$0xf]
    %v4260 = vld [vmem:[%s8 + $0xbc] sm:$0xf]
    %v4261 = vld [vmem:[%s8 + $0xc0] sm:$0xf]
    %v4262 = vld [vmem:[%s8 + $0xc4] sm:$0xf]
    %v4263 = vld [vmem:[%s8 + $0xc8] sm:$0xf]
    %v4264 = vld [vmem:[%s8 + $0xcc] sm:$0xf]
    %v4265 = vld [vmem:[%s8 + $0xd0] sm:$0xf]
    %v4266 = vld [vmem:[%s8 + $0xd4] sm:$0xf]
    %v4267 = vld [vmem:[%s8 + $0xd8] sm:$0xf]
    %v4268 = vld [vmem:[%s8 + $0xdc] sm:$0xf]
    %v4269 = vld [vmem:[%s8 + $0xe0] sm:$0xf]
    %v4270 = vld [vmem:[%s8 + $0xe4] sm:$0xf]
    %v4271 = vld [vmem:[%s8 + $0xe8] sm:$0xf]
    %v4272 = vld [vmem:[%s8 + $0xec] sm:$0xf]
    %v4273 = vld [vmem:[%s8 + $0xf0] sm:$0xf]
    %v4274 = vld [vmem:[%s8 + $0xf4] sm:$0xf]
    %v4275 = vld [vmem:[%s8 + $0xf8] sm:$0xf]
    %v4276 = vld [vmem:[%s8 + $0xfc] sm:$0xf]
    %v4277 = vld [vmem:[%s8 + $0x100] sm:$0xf]
    %v4278 = vld [vmem:[%s8 + $0x104] sm:$0xf]
    %v4279 = vld [vmem:[%s8 + $0x108] sm:$0xf]
    %v4280 = vld [vmem:[%s8 + $0x10c] sm:$0xf]
    %v4281 = vld [vmem:[%s8 + $0x110] sm:$0xf]
    %v4282 = vld [vmem:[%s8 + $0x114] sm:$0xf]
    %v4283 = vld [vmem:[%s8 + $0x118] sm:$0xf]
    %v4284 = vld [vmem:[%s8 + $0x11c] sm:$0xf]
    %v4285 = vld [vmem:[%s8 + $0x120] sm:$0xf]
    %v4286 = vld [vmem:[%s8 + $0x124] sm:$0xf]
    %v4287 = vld [vmem:[%s8 + $0x128] sm:$0xf]
    %v4288 = vld [vmem:[%s8 + $0x12c] sm:$0xf]
    %v4289 = vld [vmem:[%s8 + $0x130] sm:$0xf]
    %v4290 = vld [vmem:[%s8 + $0x134] sm:$0xf]
    %v4291 = vld [vmem:[%s8 + $0x138] sm:$0xf]
    %v4292 = vld [vmem:[%s8 + $0x13c] sm:$0xf]
    %v4293 = vld [vmem:[%s8 + $0x140] sm:$0xf]
    %v4294 = vld [vmem:[%s8 + $0x144] sm:$0xf]
    %v4295 = vld [vmem:[%s8 + $0x148] sm:$0xf]
    %v4296 = vld [vmem:[%s8 + $0x14c] sm:$0xf]
    %v4297 = vld [vmem:[%s8 + $0x150] sm:$0xf]
    %v4298 = vld [vmem:[%s8 + $0x154] sm:$0xf]
    %v4299 = vld [vmem:[%s8 + $0x158] sm:$0xf]
    %v4300 = vld [vmem:[%s8 + $0x15c] sm:$0xf]
    %v4301 = vld [vmem:[%s8 + $0x160] sm:$0xf]
    %v4302 = vld [vmem:[%s8 + $0x164] sm:$0xf]
    %v4303 = vld [vmem:[%s8 + $0x168] sm:$0xf]
    %v4304 = vld [vmem:[%s8 + $0x16c] sm:$0xf]
    %v4305 = vld [vmem:[%s8 + $0x170] sm:$0xf]
    %v4306 = vld [vmem:[%s8 + $0x174] sm:$0xf]
    %v4307 = vld [vmem:[%s8 + $0x178] sm:$0xf]
    %v4308 = vld [vmem:[%s8 + $0x17c] sm:$0xf]
    %v4309 = vld [vmem:[%s8 + $0x180] sm:$0xf]
    %v4310 = vld [vmem:[%s8 + $0x184] sm:$0xf]
    %v4311 = vld [vmem:[%s8 + $0x188] sm:$0xf]
    %v4312 = vld [vmem:[%s8 + $0x18c] sm:$0xf]
    %v4313 = vld [vmem:[%s8 + $0x190] sm:$0xf]
    %v4314 = vld [vmem:[%s8 + $0x194] sm:$0xf]
    %v4315 = vld [vmem:[%s8 + $0x198] sm:$0xf]
    %v4316 = vld [vmem:[%s8 + $0x19c] sm:$0xf]
    %v4317 = vld [vmem:[%s8 + $0x1a0] sm:$0xf]
    %v4318 = vld [vmem:[%s8 + $0x1a4] sm:$0xf]
    %v4319 = vld [vmem:[%s8 + $0x1a8] sm:$0xf]
    %v4320 = vld [vmem:[%s8 + $0x1ac] sm:$0xf]
    %v4333 = vunpack.c.l.b16 %v4201
    %v4334 = vunpack.c.h.b16 %v4201
    %v4335 = vunpack.c.l.b16 %v4202
    %v4336 = vunpack.c.h.b16 %v4202
    %v4337 = vunpack.c.l.b16 %v4203
    %v4338 = vunpack.c.h.b16 %v4203
    %v4339 = vunpack.c.l.b16 %v4204
    %v4340 = vunpack.c.l.b16 %v4205
    %v4341 = vunpack.c.h.b16 %v4205
    %v4342 = vunpack.c.l.b16 %v4206
    %v4343 = vunpack.c.h.b16 %v4206
    %v4344 = vunpack.c.l.b16 %v4207
    %v4345 = vunpack.c.h.b16 %v4207
    %v4346 = vunpack.c.l.b16 %v4208
    %v4347 = vunpack.c.l.b16 %v4209
    %v4348 = vunpack.c.h.b16 %v4209
    %v4349 = vunpack.c.l.b16 %v4210
    %v4350 = vunpack.c.h.b16 %v4210
    %v4351 = vunpack.c.l.b16 %v4211
    %v4352 = vunpack.c.h.b16 %v4211
    %v4353 = vunpack.c.l.b16 %v4212
    %v4354 = vpack.c.b16 %v4340, %v4333
    %v4355 = vpack.c.b16 %v4341, %v4334
    %v4356 = vpack.c.b16 %v4342, %v4335
    %v4357 = vpack.c.b16 %v4343, %v4336
    %v4358 = vpack.c.b16 %v4344, %v4337
    %v4359 = vpack.c.b16 %v4345, %v4338
    %v4360 = vpack.c.b16 %v4346, %v4339
    %v4361 = vpack.c.b16 %v4347, %v4347
    %v4362 = vpack.c.b16 %v4348, %v4348
    %v4363 = vpack.c.b16 %v4349, %v4349
    %v4364 = vpack.c.b16 %v4350, %v4350
    %v4365 = vpack.c.b16 %v4351, %v4351
    %v4366 = vpack.c.b16 %v4352, %v4352
    %v4367 = vpack.c.b16 %v4353, %v4353
    %v4488 = vunpack.c.l.b16 %v4213
    %v4489 = vunpack.c.l.b16 %v4214
    %v4490 = vunpack.c.l.b16 %v4215
    %v4491 = vunpack.c.l.b16 %v4216
    %v4492 = vunpack.c.l.b16 %v4217
    %v4493 = vunpack.c.l.b16 %v4218
    %v4494 = vunpack.c.l.b16 %v4219
    %v4495 = vunpack.c.l.b16 %v4220
    %v4496 = vunpack.c.l.b16 %v4221
    %v4497 = vunpack.c.l.b16 %v4222
    %v4498 = vunpack.c.l.b16 %v4223
    %v4499 = vunpack.c.l.b16 %v4224
    %v4500 = vunpack.c.l.b16 %v4225
    %v4501 = vunpack.c.l.b16 %v4226
    %v4502 = vunpack.c.l.b16 %v4227
    %v4503 = vunpack.c.l.b16 %v4228
    %v4504 = vunpack.c.l.b16 %v4229
    %v4505 = vunpack.c.l.b16 %v4230
    %v4506 = vunpack.c.l.b16 %v4231
    %v4507 = vunpack.c.l.b16 %v4232
    %v4508 = vunpack.c.l.b16 %v4233
    %v4509 = vunpack.c.l.b16 %v4234
    %v4510 = vunpack.c.l.b16 %v4235
    %v4511 = vunpack.c.l.b16 %v4236
    %v4512 = vunpack.c.l.b16 %v4237
    %v4513 = vunpack.c.l.b16 %v4238
    %v4514 = vunpack.c.l.b16 %v4239
    %v4515 = vunpack.c.l.b16 %v4240
    %v4516 = vunpack.c.l.b16 %v4241
    %v4517 = vunpack.c.l.b16 %v4242
    %v4518 = vunpack.c.l.b16 %v4243
    %v4519 = vunpack.c.l.b16 %v4244
    %v4520 = vunpack.c.l.b16 %v4245
    %v4521 = vunpack.c.l.b16 %v4246
    %v4522 = vunpack.c.l.b16 %v4247
    %v4523 = vunpack.c.l.b16 %v4248
    %v4524 = vunpack.c.l.b16 %v4249
    %v4525 = vunpack.c.l.b16 %v4250
    %v4526 = vunpack.c.l.b16 %v4251
    %v4527 = vunpack.c.l.b16 %v4252
    %v4528 = vunpack.c.l.b16 %v4253
    %v4529 = vunpack.c.l.b16 %v4254
    %v4530 = vunpack.c.l.b16 %v4255
    %v4531 = vunpack.c.l.b16 %v4256
    %v4532 = vunpack.c.l.b16 %v4257
    %v4533 = vunpack.c.l.b16 %v4258
    %v4534 = vunpack.c.l.b16 %v4259
    %v4535 = vunpack.c.l.b16 %v4260
    %v4536 = vunpack.c.l.b16 %v4261
    %v4537 = vunpack.c.l.b16 %v4262
    %v4538 = vunpack.c.l.b16 %v4263
    %v4539 = vunpack.c.l.b16 %v4264
    %v4540 = vunpack.c.l.b16 %v4265
    %v4541 = vunpack.c.l.b16 %v4266
    %v4542 = vunpack.c.l.b16 %v4267
    %v4543 = vunpack.c.l.b16 %v4268
    %v4544 = vunpack.c.l.b16 %v4269
    %v4545 = vunpack.c.l.b16 %v4270
    %v4546 = vunpack.c.l.b16 %v4271
    %v4547 = vunpack.c.l.b16 %v4272
    %v4548 = vunpack.c.l.b16 %v4273
    %v4549 = vunpack.c.l.b16 %v4274
    %v4550 = vunpack.c.l.b16 %v4275
    %v4551 = vunpack.c.l.b16 %v4276
    %v4552 = vunpack.c.l.b16 %v4277
    %v4553 = vunpack.c.l.b16 %v4278
    %v4554 = vunpack.c.l.b16 %v4279
    %v4555 = vunpack.c.l.b16 %v4280
    %v4556 = vunpack.c.l.b16 %v4281
    %v4557 = vunpack.c.l.b16 %v4282
    %v4558 = vunpack.c.l.b16 %v4283
    %v4559 = vunpack.c.l.b16 %v4284
    %v4560 = vunpack.c.l.b16 %v4285
    %v4561 = vunpack.c.l.b16 %v4286
    %v4562 = vunpack.c.l.b16 %v4287
    %v4563 = vunpack.c.l.b16 %v4288
    %v4564 = vunpack.c.l.b16 %v4289
    %v4565 = vunpack.c.l.b16 %v4290
    %v4566 = vunpack.c.l.b16 %v4291
    %v4567 = vunpack.c.l.b16 %v4292
    %v4568 = vunpack.c.l.b16 %v4293
    %v4569 = vunpack.c.l.b16 %v4294
    %v4570 = vunpack.c.l.b16 %v4295
    %v4571 = vunpack.c.l.b16 %v4296
    %v4572 = vunpack.c.l.b16 %v4297
    %v4573 = vunpack.c.l.b16 %v4298
    %v4574 = vunpack.c.l.b16 %v4299
    %v4575 = vunpack.c.l.b16 %v4300
    %v4576 = vunpack.c.l.b16 %v4301
    %v4577 = vunpack.c.l.b16 %v4302
    %v4578 = vunpack.c.l.b16 %v4303
    %v4579 = vunpack.c.l.b16 %v4304
    %v4580 = vunpack.c.l.b16 %v4305
    %v4581 = vunpack.c.l.b16 %v4306
    %v4582 = vunpack.c.l.b16 %v4307
    %v4583 = vunpack.c.l.b16 %v4308
    %v4584 = vunpack.c.l.b16 %v4309
    %v4585 = vunpack.c.l.b16 %v4310
    %v4586 = vunpack.c.l.b16 %v4311
    %v4587 = vunpack.c.l.b16 %v4312
    %v4588 = vunpack.c.l.b16 %v4313
    %v4589 = vunpack.c.l.b16 %v4314
    %v4590 = vunpack.c.l.b16 %v4315
    %v4591 = vunpack.c.l.b16 %v4316
    %v4592 = vunpack.c.l.b16 %v4317
    %v4593 = vunpack.c.l.b16 %v4318
    %v4594 = vunpack.c.l.b16 %v4319
    %v4595 = vunpack.c.l.b16 %v4320
    %v4596 = vpack.c.b16 %v4489, %v4488
    %v4597 = vpack.c.b16 %v4491, %v4490
    %v4598 = vpack.c.b16 %v4493, %v4492
    %v4599 = vpack.c.b16 %v4495, %v4494
    %v4600 = vpack.c.b16 %v4497, %v4496
    %v4601 = vpack.c.b16 %v4499, %v4498
    %v4602 = vpack.c.b16 %v4501, %v4500
    %v4603 = vpack.c.b16 %v4503, %v4502
    %v4604 = vpack.c.b16 %v4505, %v4504
    %v4605 = vpack.c.b16 %v4507, %v4506
    %v4606 = vpack.c.b16 %v4509, %v4508
    %v4607 = vpack.c.b16 %v4511, %v4510
    %v4608 = vpack.c.b16 %v4513, %v4512
    %v4609 = vpack.c.b16 %v4515, %v4514
    %v4610 = vpack.c.b16 %v4517, %v4516
    %v4611 = vpack.c.b16 %v4519, %v4518
    %v4612 = vpack.c.b16 %v4521, %v4520
    %v4613 = vpack.c.b16 %v4523, %v4522
    %v4614 = vpack.c.b16 %v4525, %v4524
    %v4615 = vpack.c.b16 %v4527, %v4526
    %v4616 = vpack.c.b16 %v4529, %v4528
    %v4617 = vpack.c.b16 %v4531, %v4530
    %v4618 = vpack.c.b16 %v4533, %v4532
    %v4619 = vpack.c.b16 %v4535, %v4534
    %v4620 = vpack.c.b16 %v4537, %v4536
    %v4621 = vpack.c.b16 %v4539, %v4538
    %v4622 = vpack.c.b16 %v4541, %v4540
    %v4623 = vpack.c.b16 %v4543, %v4542
    %v4624 = vpack.c.b16 %v4545, %v4544
    %v4625 = vpack.c.b16 %v4547, %v4546
    %v4626 = vpack.c.b16 %v4549, %v4548
    %v4627 = vpack.c.b16 %v4551, %v4550
    %v4628 = vpack.c.b16 %v4553, %v4552
    %v4629 = vpack.c.b16 %v4555, %v4554
    %v4630 = vpack.c.b16 %v4557, %v4556
    %v4631 = vpack.c.b16 %v4559, %v4558
    %v4632 = vpack.c.b16 %v4561, %v4560
    %v4633 = vpack.c.b16 %v4563, %v4562
    %v4634 = vpack.c.b16 %v4565, %v4564
    %v4635 = vpack.c.b16 %v4567, %v4566
    %v4636 = vpack.c.b16 %v4569, %v4568
    %v4637 = vpack.c.b16 %v4571, %v4570
    %v4638 = vpack.c.b16 %v4573, %v4572
    %v4639 = vpack.c.b16 %v4575, %v4574
    %v4640 = vpack.c.b16 %v4577, %v4576
    %v4641 = vpack.c.b16 %v4579, %v4578
    %v4642 = vpack.c.b16 %v4581, %v4580
    %v4643 = vpack.c.b16 %v4583, %v4582
    %v4644 = vpack.c.b16 %v4585, %v4584
    %v4645 = vpack.c.b16 %v4587, %v4586
    %v4646 = vpack.c.b16 %v4589, %v4588
    %v4647 = vpack.c.b16 %v4591, %v4590
    %v4648 = vpack.c.b16 %v4593, %v4592
    %v4649 = vpack.c.b16 %v4595, %v4594
    %v4705 = vsel %vm93, %v4360, 0
    %v4708 = vsel %vm93, %v4367, 0
    %4710 = vmatprep.subr.bf16.mxu0 0
    %4711 = vmatpush1.bf16.msra.mxu0 %v4603
    %4712 = vmatprep.subr.bf16.mxu0 0
    %4713 = vmatpush1.bf16.msra.mxu0 %v4602
    %4714 = vmatprep.subr.bf16.mxu0 0
    %4715 = vmatpush1.bf16.msra.mxu0 %v4601
    %4716 = vmatprep.subr.bf16.mxu0 0
    %4717 = vmatpush1.bf16.msra.mxu0 %v4600
    %4718 = vmatprep.subr.bf16.mxu0 0
    %4719 = vmatpush1.bf16.msra.mxu0 %v4599
    %4720 = vmatprep.subr.bf16.mxu0 0
    %4721 = vmatpush1.bf16.msra.mxu0 %v4598
    %4722 = vmatprep.subr.bf16.mxu0 0
    %4723 = vmatpush1.bf16.msra.mxu0 %v4597
    %4724 = vmatprep.subr.bf16.mxu0 0
    %4725 = vmatpush1.bf16.msra.mxu0 %v4596
    %4726 = vmatprep.subr.bf16.mxu0 0
    %4727 = vmatpush2.bf16.msra.mxu0 %v4611
    %4728 = vmatprep.subr.bf16.mxu0 0
    %4729 = vmatpush2.bf16.msra.mxu0 %v4610
    %4730 = vmatprep.subr.bf16.mxu0 0
    %4731 = vmatpush2.bf16.msra.mxu0 %v4609
    %4732 = vmatprep.subr.bf16.mxu0 0
    %4733 = vmatpush2.bf16.msra.mxu0 %v4608
    %4734 = vmatprep.subr.bf16.mxu0 0
    %4735 = vmatpush2.bf16.msra.mxu0 %v4607
    %4736 = vmatprep.subr.bf16.mxu0 0
    %4737 = vmatpush2.bf16.msra.mxu0 %v4606
    %4738 = vmatprep.subr.bf16.mxu0 0
    %4739 = vmatpush2.bf16.msra.mxu0 %v4605
    %4740 = vmatprep.subr.bf16.mxu0 0
    %4741 = vmatpush2.bf16.msra.mxu0 %v4604
    %4742 = vmatprep.mubr.bf16.mxu0 %v4355
    %4743 = vmatmul.mubr.bf16.gmra.mxu0 %v4354
    %v4744 = vpop.f32.mrf.mxu0
    %v4745 = vadd.f32 0.0, %v4744
    %v4746 = vpop.f32.mrf.mxu0
    %v4747 = vpop.f32.mrf.mxu0
    %v4748 = vpop.f32.mrf.mxu0
    %4749 = vmatprep.mubr.bf16.mxu0 %v4362
    %4750 = vmatmul.mubr.bf16.gmra.mxu0 %v4361
    %v4751 = vpop.f32.mrf.mxu0
    %v4752 = vadd.f32 0.0, %v4751
    %v4753 = vpop.f32.mrf.mxu0
    %v4754 = vpop.f32.mrf.mxu0
    %v4755 = vpop.f32.mrf.mxu0
    %4756 = vdwg.mxu0
    %4757 = vmatprep.subr.bf16.mxu0 0
    %4758 = vmatpush1.bf16.msra.mxu0 %v4619
    %4759 = vmatprep.subr.bf16.mxu0 0
    %4760 = vmatpush1.bf16.msra.mxu0 %v4618
    %4761 = vmatprep.subr.bf16.mxu0 0
    %4762 = vmatpush1.bf16.msra.mxu0 %v4617
    %4763 = vmatprep.subr.bf16.mxu0 0
    %4764 = vmatpush1.bf16.msra.mxu0 %v4616
    %4765 = vmatprep.subr.bf16.mxu0 0
    %4766 = vmatpush1.bf16.msra.mxu0 %v4615
    %4767 = vmatprep.subr.bf16.mxu0 0
    %4768 = vmatpush1.bf16.msra.mxu0 %v4614
    %4769 = vmatprep.subr.bf16.mxu0 0
    %4770 = vmatpush1.bf16.msra.mxu0 %v4613
    %4771 = vmatprep.subr.bf16.mxu0 0
    %4772 = vmatpush1.bf16.msra.mxu0 %v4612
    %4773 = vmatprep.subr.bf16.mxu0 0
    %4774 = vmatpush2.bf16.msra.mxu0 %v4627
    %4775 = vmatprep.subr.bf16.mxu0 0
    %4776 = vmatpush2.bf16.msra.mxu0 %v4626
    %4777 = vmatprep.subr.bf16.mxu0 0
    %4778 = vmatpush2.bf16.msra.mxu0 %v4625
    %4779 = vmatprep.subr.bf16.mxu0 0
    %4780 = vmatpush2.bf16.msra.mxu0 %v4624
    %4781 = vmatprep.subr.bf16.mxu0 0
    %4782 = vmatpush2.bf16.msra.mxu0 %v4623
    %4783 = vmatprep.subr.bf16.mxu0 0
    %4784 = vmatpush2.bf16.msra.mxu0 %v4622
    %4785 = vmatprep.subr.bf16.mxu0 0
    %4786 = vmatpush2.bf16.msra.mxu0 %v4621
    %4787 = vmatprep.subr.bf16.mxu0 0
    %4788 = vmatpush2.bf16.msra.mxu0 %v4620
    %4789 = vmatprep.mubr.bf16.mxu0 %v4357
    %4790 = vmatmul.mubr.bf16.gmra.mxu0 %v4356
    %v4791 = vpop.f32.mrf.mxu0
    %v4792 = vadd.f32 %v4745, %v4791
    %v4793 = vpop.f32.mrf.mxu0
    %v4794 = vpop.f32.mrf.mxu0
    %v4795 = vpop.f32.mrf.mxu0
    %4796 = vmatprep.mubr.bf16.mxu0 %v4364
    %4797 = vmatmul.mubr.bf16.gmra.mxu0 %v4363
    %v4798 = vpop.f32.mrf.mxu0
    %v4799 = vadd.f32 %v4752, %v4798
    %v4800 = vpop.f32.mrf.mxu0
    %v4801 = vpop.f32.mrf.mxu0
    %v4802 = vpop.f32.mrf.mxu0
    %4803 = vdwg.mxu0
    %4804 = vmatprep.subr.bf16.mxu0 0
    %4805 = vmatpush1.bf16.msra.mxu0 %v4635
    %4806 = vmatprep.subr.bf16.mxu0 0
    %4807 = vmatpush1.bf16.msra.mxu0 %v4634
    %4808 = vmatprep.subr.bf16.mxu0 0
    %4809 = vmatpush1.bf16.msra.mxu0 %v4633
    %4810 = vmatprep.subr.bf16.mxu0 0
    %4811 = vmatpush1.bf16.msra.mxu0 %v4632
    %4812 = vmatprep.subr.bf16.mxu0 0
    %4813 = vmatpush1.bf16.msra.mxu0 %v4631
    %4814 = vmatprep.subr.bf16.mxu0 0
    %4815 = vmatpush1.bf16.msra.mxu0 %v4630
    %4816 = vmatprep.subr.bf16.mxu0 0
    %4817 = vmatpush1.bf16.msra.mxu0 %v4629
    %4818 = vmatprep.subr.bf16.mxu0 0
    %4819 = vmatpush1.bf16.msra.mxu0 %v4628
    %4820 = vmatprep.subr.bf16.mxu0 0
    %4821 = vmatpush2.bf16.msra.mxu0 %v4643
    %4822 = vmatprep.subr.bf16.mxu0 0
    %4823 = vmatpush2.bf16.msra.mxu0 %v4642
    %4824 = vmatprep.subr.bf16.mxu0 0
    %4825 = vmatpush2.bf16.msra.mxu0 %v4641
    %4826 = vmatprep.subr.bf16.mxu0 0
    %4827 = vmatpush2.bf16.msra.mxu0 %v4640
    %4828 = vmatprep.subr.bf16.mxu0 0
    %4829 = vmatpush2.bf16.msra.mxu0 %v4639
    %4830 = vmatprep.subr.bf16.mxu0 0
    %4831 = vmatpush2.bf16.msra.mxu0 %v4638
    %4832 = vmatprep.subr.bf16.mxu0 0
    %4833 = vmatpush2.bf16.msra.mxu0 %v4637
    %4834 = vmatprep.subr.bf16.mxu0 0
    %4835 = vmatpush2.bf16.msra.mxu0 %v4636
    %4836 = vmatprep.mubr.bf16.mxu0 %v4359
    %4837 = vmatmul.mubr.bf16.gmra.mxu0 %v4358
    %v4838 = vpop.f32.mrf.mxu0
    %v4839 = vadd.f32 %v4792, %v4838
    %v4840 = vpop.f32.mrf.mxu0
    %v4841 = vpop.f32.mrf.mxu0
    %v4842 = vpop.f32.mrf.mxu0
    %4843 = vmatprep.mubr.bf16.mxu0 %v4366
    %4844 = vmatmul.mubr.bf16.gmra.mxu0 %v4365
    %v4845 = vpop.f32.mrf.mxu0
    %v4846 = vadd.f32 %v4799, %v4845
    %v4847 = vpop.f32.mrf.mxu0
    %v4848 = vpop.f32.mrf.mxu0
    %v4849 = vpop.f32.mrf.mxu0
    %4850 = vdwg.mxu0
    %4851 = vmatprep.subr.bf16.mxu0 0
    %4852 = vmatpush1.bf16.msra.mxu0 0
    %4853 = vmatprep.subr.bf16.mxu0 0
    %4854 = vmatpush1.bf16.msra.mxu0 0
    %4855 = vmatprep.subr.bf16.mxu0 0
    %4856 = vmatpush1.bf16.msra.mxu0 %v4649
    %4857 = vmatprep.subr.bf16.mxu0 0
    %4858 = vmatpush1.bf16.msra.mxu0 %v4648
    %4859 = vmatprep.subr.bf16.mxu0 0
    %4860 = vmatpush1.bf16.msra.mxu0 %v4647
    %4861 = vmatprep.subr.bf16.mxu0 0
    %4862 = vmatpush1.bf16.msra.mxu0 %v4646
    %4863 = vmatprep.subr.bf16.mxu0 0
    %4864 = vmatpush1.bf16.msra.mxu0 %v4645
    %4865 = vmatprep.subr.bf16.mxu0 0
    %4866 = vmatpush1.bf16.msra.mxu0 %v4644
    %4867 = vmatprep.subr.bf16.mxu0 0
    %4868 = vmatpush2.bf16.msra.mxu0 0
    %4869 = vmatprep.subr.bf16.mxu0 0
    %4870 = vmatpush2.bf16.msra.mxu0 0
    %4871 = vmatprep.subr.bf16.mxu0 0
    %4872 = vmatpush2.bf16.msra.mxu0 0
    %4873 = vmatprep.subr.bf16.mxu0 0
    %4874 = vmatpush2.bf16.msra.mxu0 0
    %4875 = vmatprep.subr.bf16.mxu0 0
    %4876 = vmatpush2.bf16.msra.mxu0 0
    %4877 = vmatprep.subr.bf16.mxu0 0
    %4878 = vmatpush2.bf16.msra.mxu0 0
    %4879 = vmatprep.subr.bf16.mxu0 0
    %4880 = vmatpush2.bf16.msra.mxu0 0
    %4881 = vmatprep.subr.bf16.mxu0 0
    %4882 = vmatpush2.bf16.msra.mxu0 0
    %4883 = vmatprep.mubr.bf16.mxu0 0
    %4884 = vmatmul.mubr.bf16.gmra.mxu0 %v4705
    %v4885 = vpop.f32.mrf.mxu0
    %v4886 = vadd.f32 %v4839, %v4885
    %v4887 = vpop.f32.mrf.mxu0
    %v4888 = vpop.f32.mrf.mxu0
    %v4889 = vpop.f32.mrf.mxu0
    %4890 = vmatprep.mubr.bf16.mxu0 0
    %4891 = vmatmul.mubr.bf16.gmra.mxu0 %v4708
    %v4892 = vpop.f32.mrf.mxu0
    %v4893 = vadd.f32 %v4846, %v4892
    %v4894 = vpop.f32.mrf.mxu0
    %v4895 = vpop.f32.mrf.mxu0
    %v4896 = vpop.f32.mrf.mxu0
    %4897 = vdwg.mxu0
    %v4898 = vld [vmem:[#allocation5 + $0x5] sm:$0x1]
    %v4899 = vadd.f32 %v4886, %v4898
    %4900 = vst.msk [vmem:[#allocation7 + $0x5] sm:$0x1] %vm1981, %v4899
    %v4901 = vld [vmem:[#allocation5 + $0x6] sm:$0x1]
    %v4903 = vrot.slane %v4901, 7
    %v4905 = vadd.f32 %v4886, %v4903
    %4906 = vst.msk [vmem:[#allocation7 + $0x5] sm:$0x2] %vm2958, %v4905
    %v4907 = vld [vmem:[#allocation5 + $0x9] sm:$0x1]
    %v4909 = vrot.slane %v4907, 4
    %v4911 = vadd.f32 %v4886, %v4909
    %4912 = vst.msk [vmem:[#allocation7 + $0x5] sm:$0x10] %vm1985, %v4911
    %v4913 = vld [vmem:[#allocation5 + $0xa] sm:$0x1]
    %v4915 = vrot.slane %v4913, 3
    %v4917 = vadd.f32 %v4886, %v4915
    %4918 = vst.msk [vmem:[#allocation7 + $0x5] sm:$0x20] %vm2979, %v4917
    %v4919 = vld [vmem:[#allocation5 + $0x15] sm:$0x1]
    %v4920 = vadd.f32 %v4893, %v4919
    %4921 = vst.msk [vmem:[#allocation7 + $0x15] sm:$0x1] %vm1981, %v4920
    %v4922 = vld [vmem:[#allocation5 + $0x16] sm:$0x1]
    %v4924 = vrot.slane %v4922, 7
    %v4926 = vadd.f32 %v4893, %v4924
    %4927 = vst.msk [vmem:[#allocation7 + $0x15] sm:$0x2] %vm2958, %v4926
    %v4928 = vld [vmem:[#allocation5 + $0x19] sm:$0x1]
    %v4930 = vrot.slane %v4928, 4
    %v4932 = vadd.f32 %v4893, %v4930
    %4933 = vst.msk [vmem:[#allocation7 + $0x15] sm:$0x10] %vm1985, %v4932
    %v4934 = vld [vmem:[#allocation5 + $0x1a] sm:$0x1]
    %v4936 = vrot.slane %v4934, 3
    %v4938 = vadd.f32 %v4893, %v4936
    %4939 = vst.msk [vmem:[#allocation7 + $0x15] sm:$0x20] %vm2979, %v4938
    %v4940 = vld [vmem:[#allocation7] sm:$0xff]
    %v4941 = vld [vmem:[#allocation7 + $0x8] sm:$0xff]
    %v4942 = vld [vmem:[#allocation7 + $0x10] sm:$0x3f]
    %v4943 = vpack.c.bf16 %v4941, %v4940
    %v4944 = vpack.c.bf16 %v4942, %v4942
    %v4947 = vunpack.c.l.b16 %v4943
    %v4948 = vunpack.c.h.b16 %v4943
    %v4949 = vunpack.c.l.b16 %v4944
    %v4950 = vpack.c.b16 %v4947, %v4947
    %v4951 = vpack.c.b16 %v4948, %v4948
    %v4952 = vpack.c.b16 %v4949, %v4949
    %4956 = vst.msk [vmem:[#allocation13] sm:$0xf] %vm2009, %v4950
    %4957 = vst.msk [vmem:[#allocation13 + $0x1c] sm:$0xf] %vm2009, %v4951
    %4958 = vst.msk [vmem:[#allocation13 + $0x38] sm:$0x7] %vm2012, %v4952
    %v4959 = vld [vmem:[#allocation7 + $0x1] sm:$0xff]
    %v4960 = vld [vmem:[#allocation7 + $0x9] sm:$0xff]
    %v4961 = vld [vmem:[#allocation7 + $0x11] sm:$0x3f]
    %v4962 = vpack.c.bf16 %v4960, %v4959
    %v4963 = vpack.c.bf16 %v4961, %v4961
    %v4966 = vunpack.c.l.b16 %v4962
    %v4967 = vunpack.c.h.b16 %v4962
    %v4968 = vunpack.c.l.b16 %v4963
    %v4969 = vpack.c.b16 %v4966, %v4966
    %v4970 = vpack.c.b16 %v4967, %v4967
    %v4971 = vpack.c.b16 %v4968, %v4968
    %4972 = vrot.lane.b32.xlu0 %v4969, 96
    %v4973 = vpop.permute.xlu0 %4972
    %4974 = vrot.lane.b32.xlu0 %v4970, 96
    %v4975 = vpop.permute.xlu0 %4974
    %4976 = vrot.lane.b32.xlu0 %v4971, 96
    %v4977 = vpop.permute.xlu0 %4976
    %v4978 = vrot.slane %v4973, 4
    %v4979 = vrot.slane %v4975, 4
    %v4980 = vrot.slane %v4977, 4
    %v4981 = vsel %vm2036, %v4978, %v4973
    %v4982 = vsel %vm2036, %v4979, %v4975
    %v4983 = vsel %vm2036, %v4980, %v4977
    %4987 = vst.msk [vmem:[#allocation13] sm:$0xff] %vm2045, %v4981
    %4988 = vst.msk [vmem:[#allocation13 + $0x1c] sm:$0xff] %vm2045, %v4982
    %4989 = vst.msk [vmem:[#allocation13 + $0x38] sm:$0x77] %vm2050, %v4983
    %v4990 = vld [vmem:[#allocation7 + $0x2] sm:$0xff]
    %v4991 = vld [vmem:[#allocation7 + $0xa] sm:$0xff]
    %v4992 = vld [vmem:[#allocation7 + $0x12] sm:$0x3f]
    %v4993 = vpack.c.bf16 %v4991, %v4990
    %v4994 = vpack.c.bf16 %v4992, %v4992
    %v4997 = vunpack.c.l.b16 %v4993
    %v4998 = vunpack.c.h.b16 %v4993
    %v4999 = vunpack.c.l.b16 %v4994
    %v5000 = vpack.c.b16 %v4997, %v4997
    %v5001 = vpack.c.b16 %v4998, %v4998
    %v5002 = vpack.c.b16 %v4999, %v4999
    %5003 = vrot.lane.b32.xlu0 %v5000, 64
    %v5004 = vpop.permute.xlu0 %5003
    %5005 = vrot.lane.b32.xlu0 %v5001, 64
    %v5006 = vpop.permute.xlu0 %5005
    %5007 = vrot.lane.b32.xlu0 %v5002, 64
    %v5008 = vpop.permute.xlu0 %5007
    %v5009 = vrot.slane %v5004, 4
    %v5010 = vrot.slane %v5006, 4
    %v5011 = vrot.slane %v5008, 4
    %v5012 = vsel %vm2074, %v5009, %v5004
    %v5013 = vsel %vm2074, %v5010, %v5006
    %v5014 = vsel %vm2074, %v5011, %v5008
    %5018 = vst.msk [vmem:[#allocation13 + $0x4] sm:$0xff] %vm2082, %v5012
    %5019 = vst.msk [vmem:[#allocation13 + $0x20] sm:$0xff] %vm2082, %v5013
    %5020 = vst.msk [vmem:[#allocation13 + $0x3c] sm:$0x77] %vm2087, %v5014
    %v5021 = vld [vmem:[#allocation7 + $0x4] sm:$0xff]
    %v5022 = vld [vmem:[#allocation7 + $0xc] sm:$0xff]
    %v5023 = vld [vmem:[#allocation7 + $0x14] sm:$0x3f]
    %v5024 = vpack.c.bf16 %v5022, %v5021
    %v5025 = vpack.c.bf16 %v5023, %v5023
    %v5028 = vunpack.c.l.b16 %v5024
    %v5029 = vunpack.c.h.b16 %v5024
    %v5030 = vunpack.c.l.b16 %v5025
    %v5031 = vpack.c.b16 %v5028, %v5028
    %v5032 = vpack.c.b16 %v5029, %v5029
    %v5033 = vpack.c.b16 %v5030, %v5030
    %5034 = vrot.lane.b32.xlu0 %v5031, 32
    %v5035 = vpop.permute.xlu0 %5034
    %5036 = vrot.lane.b32.xlu0 %v5032, 32
    %v5037 = vpop.permute.xlu0 %5036
    %5038 = vrot.lane.b32.xlu0 %v5033, 32
    %v5039 = vpop.permute.xlu0 %5038
    %5043 = vst.msk [vmem:[#allocation13 + $0x8] sm:$0xf] %vm2111, %v5035
    %5044 = vst.msk [vmem:[#allocation13 + $0x24] sm:$0xf] %vm2111, %v5037
    %5045 = vst.msk [vmem:[#allocation13 + $0x40] sm:$0x7] %vm2114, %v5039
    %v5046 = vld [vmem:[#allocation7 + $0x5] sm:$0xff]
    %v5047 = vld [vmem:[#allocation7 + $0xd] sm:$0xff]
    %v5048 = vld [vmem:[#allocation7 + $0x15] sm:$0x3f]
    %v5049 = vpack.c.bf16 %v5047, %v5046
    %v5050 = vpack.c.bf16 %v5048, %v5048
    %v5053 = vunpack.c.l.b16 %v5049
    %v5054 = vunpack.c.h.b16 %v5049
    %v5055 = vunpack.c.l.b16 %v5050
    %v5056 = vpack.c.b16 %v5053, %v5053
    %v5057 = vpack.c.b16 %v5054, %v5054
    %v5058 = vpack.c.b16 %v5055, %v5055
    %5062 = vst.msk [vmem:[#allocation13 + $0xc] sm:$0xf] %vm2009, %v5056
    %5063 = vst.msk [vmem:[#allocation13 + $0x28] sm:$0xf] %vm2009, %v5057
    %5064 = vst.msk [vmem:[#allocation13 + $0x44] sm:$0x7] %vm2012, %v5058
    %v5065 = vld [vmem:[#allocation7 + $0x6] sm:$0xff]
    %v5066 = vld [vmem:[#allocation7 + $0xe] sm:$0xff]
    %v5067 = vld [vmem:[#allocation7 + $0x16] sm:$0x3f]
    %v5068 = vpack.c.bf16 %v5066, %v5065
    %v5069 = vpack.c.bf16 %v5067, %v5067
    %v5072 = vunpack.c.l.b16 %v5068
    %v5073 = vunpack.c.h.b16 %v5068
    %v5074 = vunpack.c.l.b16 %v5069
    %v5075 = vpack.c.b16 %v5072, %v5072
    %v5076 = vpack.c.b16 %v5073, %v5073
    %v5077 = vpack.c.b16 %v5074, %v5074
    %5078 = vrot.lane.b32.xlu0 %v5075, 96
    %v5079 = vpop.permute.xlu0 %5078
    %5080 = vrot.lane.b32.xlu0 %v5076, 96
    %v5081 = vpop.permute.xlu0 %5080
    %5082 = vrot.lane.b32.xlu0 %v5077, 96
    %v5083 = vpop.permute.xlu0 %5082
    %v5084 = vrot.slane %v5079, 4
    %v5085 = vrot.slane %v5081, 4
    %v5086 = vrot.slane %v5083, 4
    %v5087 = vsel %vm2036, %v5084, %v5079
    %v5088 = vsel %vm2036, %v5085, %v5081
    %v5089 = vsel %vm2036, %v5086, %v5083
    %5093 = vst.msk [vmem:[#allocation13 + $0xc] sm:$0xff] %vm2045, %v5087
    %5094 = vst.msk [vmem:[#allocation13 + $0x28] sm:$0xff] %vm2045, %v5088
    %5095 = vst.msk [vmem:[#allocation13 + $0x44] sm:$0x77] %vm2050, %v5089
    %v5096 = vld [vmem:[#allocation7 + $0x8] sm:$0xff]
    %v5097 = vld [vmem:[#allocation7 + $0x10] sm:$0xff]
    %v5098 = vld [vmem:[#allocation7 + $0x18] sm:$0x3f]
    %v5099 = vpack.c.bf16 %v5097, %v5096
    %v5100 = vpack.c.bf16 %v5098, %v5098
    %v5103 = vunpack.c.l.b16 %v5099
    %v5104 = vunpack.c.h.b16 %v5099
    %v5105 = vunpack.c.l.b16 %v5100
    %v5106 = vpack.c.b16 %v5103, %v5103
    %v5107 = vpack.c.b16 %v5104, %v5104
    %v5108 = vpack.c.b16 %v5105, %v5105
    %5109 = vrot.lane.b32.xlu0 %v5106, 64
    %v5110 = vpop.permute.xlu0 %5109
    %5111 = vrot.lane.b32.xlu0 %v5107, 64
    %v5112 = vpop.permute.xlu0 %5111
    %5113 = vrot.lane.b32.xlu0 %v5108, 64
    %v5114 = vpop.permute.xlu0 %5113
    %v5115 = vrot.slane %v5110, 4
    %v5116 = vrot.slane %v5112, 4
    %v5117 = vrot.slane %v5114, 4
    %v5118 = vsel %vm2074, %v5115, %v5110
    %v5119 = vsel %vm2074, %v5116, %v5112
    %v5120 = vsel %vm2074, %v5117, %v5114
    %5124 = vst.msk [vmem:[#allocation13 + $0x10] sm:$0xff] %vm2082, %v5118
    %5125 = vst.msk [vmem:[#allocation13 + $0x2c] sm:$0xff] %vm2082, %v5119
    %5126 = vst.msk [vmem:[#allocation13 + $0x48] sm:$0x77] %vm2087, %v5120
    %v5127 = vld [vmem:[#allocation7 + $0x9] sm:$0xff]
    %v5128 = vld [vmem:[#allocation7 + $0x11] sm:$0xff]
    %v5129 = vld [vmem:[#allocation7 + $0x19] sm:$0x3f]
    %v5130 = vpack.c.bf16 %v5128, %v5127
    %v5131 = vpack.c.bf16 %v5129, %v5129
    %v5134 = vunpack.c.l.b16 %v5130
    %v5135 = vunpack.c.h.b16 %v5130
    %v5136 = vunpack.c.l.b16 %v5131
    %v5137 = vpack.c.b16 %v5134, %v5134
    %v5138 = vpack.c.b16 %v5135, %v5135
    %v5139 = vpack.c.b16 %v5136, %v5136
    %5140 = vrot.lane.b32.xlu0 %v5137, 32
    %v5141 = vpop.permute.xlu0 %5140
    %5142 = vrot.lane.b32.xlu0 %v5138, 32
    %v5143 = vpop.permute.xlu0 %5142
    %5144 = vrot.lane.b32.xlu0 %v5139, 32
    %v5145 = vpop.permute.xlu0 %5144
    %5149 = vst.msk [vmem:[#allocation13 + $0x14] sm:$0xf] %vm2111, %v5141
    %5150 = vst.msk [vmem:[#allocation13 + $0x30] sm:$0xf] %vm2111, %v5143
    %5151 = vst.msk [vmem:[#allocation13 + $0x4c] sm:$0x7] %vm2114, %v5145
    %v5152 = vld [vmem:[#allocation7 + $0xa] sm:$0xff]
    %v5153 = vld [vmem:[#allocation7 + $0x12] sm:$0xff]
    %v5154 = vld [vmem:[#allocation7 + $0x1a] sm:$0x3f]
    %v5155 = vpack.c.bf16 %v5153, %v5152
    %v5156 = vpack.c.bf16 %v5154, %v5154
    %v5159 = vunpack.c.l.b16 %v5155
    %v5160 = vunpack.c.h.b16 %v5155
    %v5161 = vunpack.c.l.b16 %v5156
    %v5162 = vpack.c.b16 %v5159, %v5159
    %v5163 = vpack.c.b16 %v5160, %v5160
    %v5164 = vpack.c.b16 %v5161, %v5161
    %5168 = vst.msk [vmem:[#allocation13 + $0x18] sm:$0xf] %vm2009, %v5162
    %5169 = vst.msk [vmem:[#allocation13 + $0x34] sm:$0xf] %vm2009, %v5163
    %5170 = vst.msk [vmem:[#allocation13 + $0x50] sm:$0x7] %vm2012, %v5164
    %v5171 = vld [vmem:[#allocation13] sm:$0xff]
    %v5172 = vld [vmem:[#allocation13 + $0x8] sm:$0xff]
    %v5173 = vld [vmem:[#allocation13 + $0x10] sm:$0xff]
    %v5174 = vld [vmem:[#allocation13 + $0x18] sm:$0xf]
    %v5175 = vld [vmem:[#allocation13 + $0x1c] sm:$0xff]
    %v5176 = vld [vmem:[#allocation13 + $0x24] sm:$0xff]
    %v5177 = vld [vmem:[#allocation13 + $0x2c] sm:$0xff]
    %v5178 = vld [vmem:[#allocation13 + $0x34] sm:$0xf]
    %v5179 = vld [vmem:[#allocation13 + $0x38] sm:$0x77]
    %v5180 = vld [vmem:[#allocation13 + $0x40] sm:$0x77]
    %v5181 = vld [vmem:[#allocation13 + $0x48] sm:$0x77]
    %v5182 = vld [vmem:[#allocation13 + $0x50] sm:$0x7]
    %v5183 = vld [vmem:[%s9] sm:$0xff]
    %v5184 = vld [vmem:[%s9 + $0x8] sm:$0xff]
    %v5185 = vld [vmem:[%s9 + $0x10] sm:$0xff]
    %v5186 = vld [vmem:[%s9 + $0x18] sm:$0xff]
    %v5187 = vld [vmem:[%s9 + $0x20] sm:$0xff]
    %v5188 = vld [vmem:[%s9 + $0x28] sm:$0xff]
    %v5189 = vld [vmem:[%s9 + $0x30] sm:$0xff]
    %v5190 = vld [vmem:[%s9 + $0x38] sm:$0xff]
    %v5191 = vld [vmem:[%s9 + $0x40] sm:$0xff]
    %v5192 = vld [vmem:[%s9 + $0x48] sm:$0xff]
    %v5193 = vld [vmem:[%s9 + $0x50] sm:$0xff]
    %v5194 = vld [vmem:[%s9 + $0x58] sm:$0xff]
    %v5195 = vld [vmem:[%s9 + $0x60] sm:$0xff]
    %v5196 = vld [vmem:[%s9 + $0x68] sm:$0xff]
    %v5197 = vld [vmem:[%s9 + $0x70] sm:$0xff]
    %v5198 = vld [vmem:[%s9 + $0x78] sm:$0xff]
    %v5199 = vld [vmem:[%s9 + $0x80] sm:$0xff]
    %v5200 = vld [vmem:[%s9 + $0x88] sm:$0xff]
    %v5201 = vld [vmem:[%s9 + $0x90] sm:$0xff]
    %v5202 = vld [vmem:[%s9 + $0x98] sm:$0xff]
    %v5203 = vld [vmem:[%s9 + $0xa0] sm:$0xff]
    %v5204 = vld [vmem:[%s9 + $0xa8] sm:$0xff]
    %v5205 = vld [vmem:[%s9 + $0xb0] sm:$0xff]
    %v5206 = vld [vmem:[%s9 + $0xb8] sm:$0xff]
    %v5207 = vld [vmem:[%s9 + $0xc0] sm:$0xff]
    %v5208 = vld [vmem:[%s9 + $0xc8] sm:$0xff]
    %v5209 = vld [vmem:[%s9 + $0xd0] sm:$0xff]
    %v5210 = vld [vmem:[%s9 + $0xd8] sm:$0xff]
    %v5211 = vld [vmem:[%s9 + $0xe0] sm:$0xff]
    %v5212 = vld [vmem:[%s9 + $0xe8] sm:$0xff]
    %v5213 = vld [vmem:[%s9 + $0xf0] sm:$0xff]
    %v5214 = vld [vmem:[%s9 + $0xf8] sm:$0xff]
    %v5215 = vld [vmem:[%s9 + $0x100] sm:$0xff]
    %v5216 = vld [vmem:[%s9 + $0x108] sm:$0xff]
    %v5217 = vld [vmem:[%s9 + $0x110] sm:$0xff]
    %v5218 = vld [vmem:[%s9 + $0x118] sm:$0xff]
    %v5219 = vld [vmem:[%s9 + $0x120] sm:$0xff]
    %v5220 = vld [vmem:[%s9 + $0x128] sm:$0xff]
    %v5221 = vld [vmem:[%s9 + $0x130] sm:$0xff]
    %v5222 = vld [vmem:[%s9 + $0x138] sm:$0xff]
    %v5223 = vld [vmem:[%s9 + $0x140] sm:$0xff]
    %v5224 = vld [vmem:[%s9 + $0x148] sm:$0xff]
    %v5225 = vld [vmem:[%s9 + $0x150] sm:$0xff]
    %v5226 = vld [vmem:[%s9 + $0x158] sm:$0xff]
    %v5227 = vld [vmem:[%s9 + $0x160] sm:$0xff]
    %v5228 = vld [vmem:[%s9 + $0x168] sm:$0xff]
    %v5229 = vld [vmem:[%s9 + $0x170] sm:$0xff]
    %v5230 = vld [vmem:[%s9 + $0x178] sm:$0xff]
    %v5231 = vld [vmem:[%s9 + $0x180] sm:$0xff]
    %v5232 = vld [vmem:[%s9 + $0x188] sm:$0xff]
    %v5233 = vld [vmem:[%s9 + $0x190] sm:$0xff]
    %v5234 = vld [vmem:[%s9 + $0x198] sm:$0xff]
    %v5235 = vld [vmem:[%s9 + $0x1a0] sm:$0xff]
    %v5236 = vld [vmem:[%s9 + $0x1a8] sm:$0xff]
    %v5237 = vld [vmem:[%s9 + $0x1b0] sm:$0xff]
    %v5238 = vld [vmem:[%s9 + $0x1b8] sm:$0xff]
    %v5239 = vld [vmem:[%s9 + $0x1c0] sm:$0xff]
    %v5240 = vld [vmem:[%s9 + $0x1c8] sm:$0xff]
    %v5241 = vld [vmem:[%s9 + $0x1d0] sm:$0xff]
    %v5242 = vld [vmem:[%s9 + $0x1d8] sm:$0xff]
    %v5243 = vld [vmem:[%s9 + $0x1e0] sm:$0xff]
    %v5244 = vld [vmem:[%s9 + $0x1e8] sm:$0xff]
    %v5245 = vld [vmem:[%s9 + $0x1f0] sm:$0xff]
    %v5246 = vld [vmem:[%s9 + $0x1f8] sm:$0xff]
    %v5247 = vld [vmem:[%s9 + $0x200] sm:$0xff]
    %v5248 = vld [vmem:[%s9 + $0x208] sm:$0xff]
    %v5249 = vld [vmem:[%s9 + $0x210] sm:$0xff]
    %v5250 = vld [vmem:[%s9 + $0x218] sm:$0xff]
    %v5251 = vld [vmem:[%s9 + $0x220] sm:$0xff]
    %v5252 = vld [vmem:[%s9 + $0x228] sm:$0xff]
    %v5253 = vld [vmem:[%s9 + $0x230] sm:$0xff]
    %v5254 = vld [vmem:[%s9 + $0x238] sm:$0xff]
    %v5255 = vld [vmem:[%s9 + $0x240] sm:$0xff]
    %v5256 = vld [vmem:[%s9 + $0x248] sm:$0xff]
    %v5257 = vld [vmem:[%s9 + $0x250] sm:$0xff]
    %v5258 = vld [vmem:[%s9 + $0x258] sm:$0xff]
    %v5259 = vld [vmem:[%s9 + $0x260] sm:$0xff]
    %v5260 = vld [vmem:[%s9 + $0x268] sm:$0xff]
    %v5261 = vld [vmem:[%s9 + $0x270] sm:$0xff]
    %v5262 = vld [vmem:[%s9 + $0x278] sm:$0xff]
    %v5263 = vld [vmem:[%s9 + $0x280] sm:$0xff]
    %v5264 = vld [vmem:[%s9 + $0x288] sm:$0xff]
    %v5265 = vld [vmem:[%s9 + $0x290] sm:$0xff]
    %v5266 = vld [vmem:[%s9 + $0x298] sm:$0xff]
    %v5267 = vld [vmem:[%s9 + $0x2a0] sm:$0xff]
    %v5268 = vld [vmem:[%s9 + $0x2a8] sm:$0xff]
    %v5269 = vld [vmem:[%s9 + $0x2b0] sm:$0xff]
    %v5270 = vld [vmem:[%s9 + $0x2b8] sm:$0xff]
    %v5271 = vld [vmem:[%s9 + $0x2c0] sm:$0xff]
    %v5272 = vld [vmem:[%s9 + $0x2c8] sm:$0xff]
    %v5273 = vld [vmem:[%s9 + $0x2d0] sm:$0xff]
    %v5274 = vld [vmem:[%s9 + $0x2d8] sm:$0xff]
    %v5275 = vld [vmem:[%s9 + $0x2e0] sm:$0xff]
    %v5276 = vld [vmem:[%s9 + $0x2e8] sm:$0xff]
    %v5277 = vld [vmem:[%s9 + $0x2f0] sm:$0xff]
    %v5278 = vld [vmem:[%s9 + $0x2f8] sm:$0xff]
    %v5279 = vld [vmem:[%s9 + $0x300] sm:$0xff]
    %v5280 = vld [vmem:[%s9 + $0x308] sm:$0xff]
    %v5281 = vld [vmem:[%s9 + $0x310] sm:$0xff]
    %v5282 = vld [vmem:[%s9 + $0x318] sm:$0xff]
    %v5283 = vld [vmem:[%s9 + $0x320] sm:$0xff]
    %v5284 = vld [vmem:[%s9 + $0x328] sm:$0xff]
    %v5285 = vld [vmem:[%s9 + $0x330] sm:$0xff]
    %v5286 = vld [vmem:[%s9 + $0x338] sm:$0xff]
    %v5287 = vld [vmem:[%s9 + $0x340] sm:$0xff]
    %v5288 = vld [vmem:[%s9 + $0x348] sm:$0xff]
    %v5289 = vld [vmem:[%s9 + $0x350] sm:$0xff]
    %v5290 = vld [vmem:[%s9 + $0x358] sm:$0xff]
    %v5303 = vunpack.c.l.b16 %v5171
    %v5304 = vunpack.c.h.b16 %v5171
    %v5305 = vunpack.c.l.b16 %v5172
    %v5306 = vunpack.c.h.b16 %v5172
    %v5307 = vunpack.c.l.b16 %v5173
    %v5308 = vunpack.c.h.b16 %v5173
    %v5309 = vunpack.c.l.b16 %v5174
    %v5310 = vunpack.c.l.b16 %v5175
    %v5311 = vunpack.c.h.b16 %v5175
    %v5312 = vunpack.c.l.b16 %v5176
    %v5313 = vunpack.c.h.b16 %v5176
    %v5314 = vunpack.c.l.b16 %v5177
    %v5315 = vunpack.c.h.b16 %v5177
    %v5316 = vunpack.c.l.b16 %v5178
    %v5317 = vunpack.c.l.b16 %v5179
    %v5318 = vunpack.c.h.b16 %v5179
    %v5319 = vunpack.c.l.b16 %v5180
    %v5320 = vunpack.c.h.b16 %v5180
    %v5321 = vunpack.c.l.b16 %v5181
    %v5322 = vunpack.c.h.b16 %v5181
    %v5323 = vunpack.c.l.b16 %v5182
    %v5324 = vpack.c.b16 %v5310, %v5303
    %v5325 = vpack.c.b16 %v5311, %v5304
    %v5326 = vpack.c.b16 %v5312, %v5305
    %v5327 = vpack.c.b16 %v5313, %v5306
    %v5328 = vpack.c.b16 %v5314, %v5307
    %v5329 = vpack.c.b16 %v5315, %v5308
    %v5330 = vpack.c.b16 %v5316, %v5309
    %v5331 = vpack.c.b16 %v5317, %v5317
    %v5332 = vpack.c.b16 %v5318, %v5318
    %v5333 = vpack.c.b16 %v5319, %v5319
    %v5334 = vpack.c.b16 %v5320, %v5320
    %v5335 = vpack.c.b16 %v5321, %v5321
    %v5336 = vpack.c.b16 %v5322, %v5322
    %v5337 = vpack.c.b16 %v5323, %v5323
    %v5458 = vunpack.c.l.b16 %v5183
    %v5459 = vunpack.c.h.b16 %v5183
    %v5460 = vunpack.c.l.b16 %v5184
    %v5461 = vunpack.c.h.b16 %v5184
    %v5462 = vunpack.c.l.b16 %v5185
    %v5463 = vunpack.c.h.b16 %v5185
    %v5464 = vunpack.c.l.b16 %v5186
    %v5465 = vunpack.c.h.b16 %v5186
    %v5466 = vunpack.c.l.b16 %v5187
    %v5467 = vunpack.c.h.b16 %v5187
    %v5468 = vunpack.c.l.b16 %v5188
    %v5469 = vunpack.c.h.b16 %v5188
    %v5470 = vunpack.c.l.b16 %v5189
    %v5471 = vunpack.c.h.b16 %v5189
    %v5472 = vunpack.c.l.b16 %v5190
    %v5473 = vunpack.c.h.b16 %v5190
    %v5474 = vunpack.c.l.b16 %v5191
    %v5475 = vunpack.c.h.b16 %v5191
    %v5476 = vunpack.c.l.b16 %v5192
    %v5477 = vunpack.c.h.b16 %v5192
    %v5478 = vunpack.c.l.b16 %v5193
    %v5479 = vunpack.c.h.b16 %v5193
    %v5480 = vunpack.c.l.b16 %v5194
    %v5481 = vunpack.c.h.b16 %v5194
    %v5482 = vunpack.c.l.b16 %v5195
    %v5483 = vunpack.c.h.b16 %v5195
    %v5484 = vunpack.c.l.b16 %v5196
    %v5485 = vunpack.c.h.b16 %v5196
    %v5486 = vunpack.c.l.b16 %v5197
    %v5487 = vunpack.c.h.b16 %v5197
    %v5488 = vunpack.c.l.b16 %v5198
    %v5489 = vunpack.c.h.b16 %v5198
    %v5490 = vunpack.c.l.b16 %v5199
    %v5491 = vunpack.c.h.b16 %v5199
    %v5492 = vunpack.c.l.b16 %v5200
    %v5493 = vunpack.c.h.b16 %v5200
    %v5494 = vunpack.c.l.b16 %v5201
    %v5495 = vunpack.c.h.b16 %v5201
    %v5496 = vunpack.c.l.b16 %v5202
    %v5497 = vunpack.c.h.b16 %v5202
    %v5498 = vunpack.c.l.b16 %v5203
    %v5499 = vunpack.c.h.b16 %v5203
    %v5500 = vunpack.c.l.b16 %v5204
    %v5501 = vunpack.c.h.b16 %v5204
    %v5502 = vunpack.c.l.b16 %v5205
    %v5503 = vunpack.c.h.b16 %v5205
    %v5504 = vunpack.c.l.b16 %v5206
    %v5505 = vunpack.c.h.b16 %v5206
    %v5506 = vunpack.c.l.b16 %v5207
    %v5507 = vunpack.c.h.b16 %v5207
    %v5508 = vunpack.c.l.b16 %v5208
    %v5509 = vunpack.c.h.b16 %v5208
    %v5510 = vunpack.c.l.b16 %v5209
    %v5511 = vunpack.c.h.b16 %v5209
    %v5512 = vunpack.c.l.b16 %v5210
    %v5513 = vunpack.c.h.b16 %v5210
    %v5514 = vunpack.c.l.b16 %v5211
    %v5515 = vunpack.c.h.b16 %v5211
    %v5516 = vunpack.c.l.b16 %v5212
    %v5517 = vunpack.c.h.b16 %v5212
    %v5518 = vunpack.c.l.b16 %v5213
    %v5519 = vunpack.c.h.b16 %v5213
    %v5520 = vunpack.c.l.b16 %v5214
    %v5521 = vunpack.c.h.b16 %v5214
    %v5522 = vunpack.c.l.b16 %v5215
    %v5523 = vunpack.c.h.b16 %v5215
    %v5524 = vunpack.c.l.b16 %v5216
    %v5525 = vunpack.c.h.b16 %v5216
    %v5526 = vunpack.c.l.b16 %v5217
    %v5527 = vunpack.c.h.b16 %v5217
    %v5528 = vunpack.c.l.b16 %v5218
    %v5529 = vunpack.c.h.b16 %v5218
    %v5530 = vunpack.c.l.b16 %v5219
    %v5531 = vunpack.c.h.b16 %v5219
    %v5532 = vunpack.c.l.b16 %v5220
    %v5533 = vunpack.c.h.b16 %v5220
    %v5534 = vunpack.c.l.b16 %v5221
    %v5535 = vunpack.c.h.b16 %v5221
    %v5536 = vunpack.c.l.b16 %v5222
    %v5537 = vunpack.c.h.b16 %v5222
    %v5538 = vunpack.c.l.b16 %v5223
    %v5539 = vunpack.c.h.b16 %v5223
    %v5540 = vunpack.c.l.b16 %v5224
    %v5541 = vunpack.c.h.b16 %v5224
    %v5542 = vunpack.c.l.b16 %v5225
    %v5543 = vunpack.c.h.b16 %v5225
    %v5544 = vunpack.c.l.b16 %v5226
    %v5545 = vunpack.c.h.b16 %v5226
    %v5546 = vunpack.c.l.b16 %v5227
    %v5547 = vunpack.c.h.b16 %v5227
    %v5548 = vunpack.c.l.b16 %v5228
    %v5549 = vunpack.c.h.b16 %v5228
    %v5550 = vunpack.c.l.b16 %v5229
    %v5551 = vunpack.c.h.b16 %v5229
    %v5552 = vunpack.c.l.b16 %v5230
    %v5553 = vunpack.c.h.b16 %v5230
    %v5554 = vunpack.c.l.b16 %v5231
    %v5555 = vunpack.c.h.b16 %v5231
    %v5556 = vunpack.c.l.b16 %v5232
    %v5557 = vunpack.c.h.b16 %v5232
    %v5558 = vunpack.c.l.b16 %v5233
    %v5559 = vunpack.c.h.b16 %v5233
    %v5560 = vunpack.c.l.b16 %v5234
    %v5561 = vunpack.c.h.b16 %v5234
    %v5562 = vunpack.c.l.b16 %v5235
    %v5563 = vunpack.c.h.b16 %v5235
    %v5564 = vunpack.c.l.b16 %v5236
    %v5565 = vunpack.c.h.b16 %v5236
    %v5566 = vunpack.c.l.b16 %v5237
    %v5567 = vunpack.c.h.b16 %v5237
    %v5568 = vunpack.c.l.b16 %v5238
    %v5569 = vunpack.c.h.b16 %v5238
    %v5570 = vunpack.c.l.b16 %v5239
    %v5571 = vunpack.c.h.b16 %v5239
    %v5572 = vunpack.c.l.b16 %v5240
    %v5573 = vunpack.c.h.b16 %v5240
    %v5574 = vunpack.c.l.b16 %v5241
    %v5575 = vunpack.c.h.b16 %v5241
    %v5576 = vunpack.c.l.b16 %v5242
    %v5577 = vunpack.c.h.b16 %v5242
    %v5578 = vunpack.c.l.b16 %v5243
    %v5579 = vunpack.c.h.b16 %v5243
    %v5580 = vunpack.c.l.b16 %v5244
    %v5581 = vunpack.c.h.b16 %v5244
    %v5582 = vunpack.c.l.b16 %v5245
    %v5583 = vunpack.c.h.b16 %v5245
    %v5584 = vunpack.c.l.b16 %v5246
    %v5585 = vunpack.c.h.b16 %v5246
    %v5586 = vunpack.c.l.b16 %v5247
    %v5587 = vunpack.c.h.b16 %v5247
    %v5588 = vunpack.c.l.b16 %v5248
    %v5589 = vunpack.c.h.b16 %v5248
    %v5590 = vunpack.c.l.b16 %v5249
    %v5591 = vunpack.c.h.b16 %v5249
    %v5592 = vunpack.c.l.b16 %v5250
    %v5593 = vunpack.c.h.b16 %v5250
    %v5594 = vunpack.c.l.b16 %v5251
    %v5595 = vunpack.c.h.b16 %v5251
    %v5596 = vunpack.c.l.b16 %v5252
    %v5597 = vunpack.c.h.b16 %v5252
    %v5598 = vunpack.c.l.b16 %v5253
    %v5599 = vunpack.c.h.b16 %v5253
    %v5600 = vunpack.c.l.b16 %v5254
    %v5601 = vunpack.c.h.b16 %v5254
    %v5602 = vunpack.c.l.b16 %v5255
    %v5603 = vunpack.c.h.b16 %v5255
    %v5604 = vunpack.c.l.b16 %v5256
    %v5605 = vunpack.c.h.b16 %v5256
    %v5606 = vunpack.c.l.b16 %v5257
    %v5607 = vunpack.c.h.b16 %v5257
    %v5608 = vunpack.c.l.b16 %v5258
    %v5609 = vunpack.c.h.b16 %v5258
    %v5610 = vunpack.c.l.b16 %v5259
    %v5611 = vunpack.c.h.b16 %v5259
    %v5612 = vunpack.c.l.b16 %v5260
    %v5613 = vunpack.c.h.b16 %v5260
    %v5614 = vunpack.c.l.b16 %v5261
    %v5615 = vunpack.c.h.b16 %v5261
    %v5616 = vunpack.c.l.b16 %v5262
    %v5617 = vunpack.c.h.b16 %v5262
    %v5618 = vunpack.c.l.b16 %v5263
    %v5619 = vunpack.c.h.b16 %v5263
    %v5620 = vunpack.c.l.b16 %v5264
    %v5621 = vunpack.c.h.b16 %v5264
    %v5622 = vunpack.c.l.b16 %v5265
    %v5623 = vunpack.c.h.b16 %v5265
    %v5624 = vunpack.c.l.b16 %v5266
    %v5625 = vunpack.c.h.b16 %v5266
    %v5626 = vunpack.c.l.b16 %v5267
    %v5627 = vunpack.c.h.b16 %v5267
    %v5628 = vunpack.c.l.b16 %v5268
    %v5629 = vunpack.c.h.b16 %v5268
    %v5630 = vunpack.c.l.b16 %v5269
    %v5631 = vunpack.c.h.b16 %v5269
    %v5632 = vunpack.c.l.b16 %v5270
    %v5633 = vunpack.c.h.b16 %v5270
    %v5634 = vunpack.c.l.b16 %v5271
    %v5635 = vunpack.c.h.b16 %v5271
    %v5636 = vunpack.c.l.b16 %v5272
    %v5637 = vunpack.c.h.b16 %v5272
    %v5638 = vunpack.c.l.b16 %v5273
    %v5639 = vunpack.c.h.b16 %v5273
    %v5640 = vunpack.c.l.b16 %v5274
    %v5641 = vunpack.c.h.b16 %v5274
    %v5642 = vunpack.c.l.b16 %v5275
    %v5643 = vunpack.c.h.b16 %v5275
    %v5644 = vunpack.c.l.b16 %v5276
    %v5645 = vunpack.c.h.b16 %v5276
    %v5646 = vunpack.c.l.b16 %v5277
    %v5647 = vunpack.c.h.b16 %v5277
    %v5648 = vunpack.c.l.b16 %v5278
    %v5649 = vunpack.c.h.b16 %v5278
    %v5650 = vunpack.c.l.b16 %v5279
    %v5651 = vunpack.c.h.b16 %v5279
    %v5652 = vunpack.c.l.b16 %v5280
    %v5653 = vunpack.c.h.b16 %v5280
    %v5654 = vunpack.c.l.b16 %v5281
    %v5655 = vunpack.c.h.b16 %v5281
    %v5656 = vunpack.c.l.b16 %v5282
    %v5657 = vunpack.c.h.b16 %v5282
    %v5658 = vunpack.c.l.b16 %v5283
    %v5659 = vunpack.c.h.b16 %v5283
    %v5660 = vunpack.c.l.b16 %v5284
    %v5661 = vunpack.c.h.b16 %v5284
    %v5662 = vunpack.c.l.b16 %v5285
    %v5663 = vunpack.c.h.b16 %v5285
    %v5664 = vunpack.c.l.b16 %v5286
    %v5665 = vunpack.c.h.b16 %v5286
    %v5666 = vunpack.c.l.b16 %v5287
    %v5667 = vunpack.c.h.b16 %v5287
    %v5668 = vunpack.c.l.b16 %v5288
    %v5669 = vunpack.c.h.b16 %v5288
    %v5670 = vunpack.c.l.b16 %v5289
    %v5671 = vunpack.c.h.b16 %v5289
    %v5672 = vunpack.c.l.b16 %v5290
    %v5673 = vunpack.c.h.b16 %v5290
    %v5674 = vpack.c.b16 %v5460, %v5458
    %v5675 = vpack.c.b16 %v5461, %v5459
    %v5676 = vpack.c.b16 %v5464, %v5462
    %v5677 = vpack.c.b16 %v5465, %v5463
    %v5678 = vpack.c.b16 %v5468, %v5466
    %v5679 = vpack.c.b16 %v5469, %v5467
    %v5680 = vpack.c.b16 %v5472, %v5470
    %v5681 = vpack.c.b16 %v5473, %v5471
    %v5682 = vpack.c.b16 %v5476, %v5474
    %v5683 = vpack.c.b16 %v5477, %v5475
    %v5684 = vpack.c.b16 %v5480, %v5478
    %v5685 = vpack.c.b16 %v5481, %v5479
    %v5686 = vpack.c.b16 %v5484, %v5482
    %v5687 = vpack.c.b16 %v5485, %v5483
    %v5688 = vpack.c.b16 %v5488, %v5486
    %v5689 = vpack.c.b16 %v5489, %v5487
    %v5690 = vpack.c.b16 %v5492, %v5490
    %v5691 = vpack.c.b16 %v5493, %v5491
    %v5692 = vpack.c.b16 %v5496, %v5494
    %v5693 = vpack.c.b16 %v5497, %v5495
    %v5694 = vpack.c.b16 %v5500, %v5498
    %v5695 = vpack.c.b16 %v5501, %v5499
    %v5696 = vpack.c.b16 %v5504, %v5502
    %v5697 = vpack.c.b16 %v5505, %v5503
    %v5698 = vpack.c.b16 %v5508, %v5506
    %v5699 = vpack.c.b16 %v5509, %v5507
    %v5700 = vpack.c.b16 %v5512, %v5510
    %v5701 = vpack.c.b16 %v5513, %v5511
    %v5702 = vpack.c.b16 %v5516, %v5514
    %v5703 = vpack.c.b16 %v5517, %v5515
    %v5704 = vpack.c.b16 %v5520, %v5518
    %v5705 = vpack.c.b16 %v5521, %v5519
    %v5706 = vpack.c.b16 %v5524, %v5522
    %v5707 = vpack.c.b16 %v5525, %v5523
    %v5708 = vpack.c.b16 %v5528, %v5526
    %v5709 = vpack.c.b16 %v5529, %v5527
    %v5710 = vpack.c.b16 %v5532, %v5530
    %v5711 = vpack.c.b16 %v5533, %v5531
    %v5712 = vpack.c.b16 %v5536, %v5534
    %v5713 = vpack.c.b16 %v5537, %v5535
    %v5714 = vpack.c.b16 %v5540, %v5538
    %v5715 = vpack.c.b16 %v5541, %v5539
    %v5716 = vpack.c.b16 %v5544, %v5542
    %v5717 = vpack.c.b16 %v5545, %v5543
    %v5718 = vpack.c.b16 %v5548, %v5546
    %v5719 = vpack.c.b16 %v5549, %v5547
    %v5720 = vpack.c.b16 %v5552, %v5550
    %v5721 = vpack.c.b16 %v5553, %v5551
    %v5722 = vpack.c.b16 %v5556, %v5554
    %v5723 = vpack.c.b16 %v5557, %v5555
    %v5724 = vpack.c.b16 %v5560, %v5558
    %v5725 = vpack.c.b16 %v5561, %v5559
    %v5726 = vpack.c.b16 %v5564, %v5562
    %v5727 = vpack.c.b16 %v5565, %v5563
    %v5728 = vpack.c.b16 %v5568, %v5566
    %v5729 = vpack.c.b16 %v5569, %v5567
    %v5730 = vpack.c.b16 %v5572, %v5570
    %v5731 = vpack.c.b16 %v5573, %v5571
    %v5732 = vpack.c.b16 %v5576, %v5574
    %v5733 = vpack.c.b16 %v5577, %v5575
    %v5734 = vpack.c.b16 %v5580, %v5578
    %v5735 = vpack.c.b16 %v5581, %v5579
    %v5736 = vpack.c.b16 %v5584, %v5582
    %v5737 = vpack.c.b16 %v5585, %v5583
    %v5738 = vpack.c.b16 %v5588, %v5586
    %v5739 = vpack.c.b16 %v5589, %v5587
    %v5740 = vpack.c.b16 %v5592, %v5590
    %v5741 = vpack.c.b16 %v5593, %v5591
    %v5742 = vpack.c.b16 %v5596, %v5594
    %v5743 = vpack.c.b16 %v5597, %v5595
    %v5744 = vpack.c.b16 %v5600, %v5598
    %v5745 = vpack.c.b16 %v5601, %v5599
    %v5746 = vpack.c.b16 %v5604, %v5602
    %v5747 = vpack.c.b16 %v5605, %v5603
    %v5748 = vpack.c.b16 %v5608, %v5606
    %v5749 = vpack.c.b16 %v5609, %v5607
    %v5750 = vpack.c.b16 %v5612, %v5610
    %v5751 = vpack.c.b16 %v5613, %v5611
    %v5752 = vpack.c.b16 %v5616, %v5614
    %v5753 = vpack.c.b16 %v5617, %v5615
    %v5754 = vpack.c.b16 %v5620, %v5618
    %v5755 = vpack.c.b16 %v5621, %v5619
    %v5756 = vpack.c.b16 %v5624, %v5622
    %v5757 = vpack.c.b16 %v5625, %v5623
    %v5758 = vpack.c.b16 %v5628, %v5626
    %v5759 = vpack.c.b16 %v5629, %v5627
    %v5760 = vpack.c.b16 %v5632, %v5630
    %v5761 = vpack.c.b16 %v5633, %v5631
    %v5762 = vpack.c.b16 %v5636, %v5634
    %v5763 = vpack.c.b16 %v5637, %v5635
    %v5764 = vpack.c.b16 %v5640, %v5638
    %v5765 = vpack.c.b16 %v5641, %v5639
    %v5766 = vpack.c.b16 %v5644, %v5642
    %v5767 = vpack.c.b16 %v5645, %v5643
    %v5768 = vpack.c.b16 %v5648, %v5646
    %v5769 = vpack.c.b16 %v5649, %v5647
    %v5770 = vpack.c.b16 %v5652, %v5650
    %v5771 = vpack.c.b16 %v5653, %v5651
    %v5772 = vpack.c.b16 %v5656, %v5654
    %v5773 = vpack.c.b16 %v5657, %v5655
    %v5774 = vpack.c.b16 %v5660, %v5658
    %v5775 = vpack.c.b16 %v5661, %v5659
    %v5776 = vpack.c.b16 %v5664, %v5662
    %v5777 = vpack.c.b16 %v5665, %v5663
    %v5778 = vpack.c.b16 %v5668, %v5666
    %v5779 = vpack.c.b16 %v5669, %v5667
    %v5780 = vpack.c.b16 %v5672, %v5670
    %v5781 = vpack.c.b16 %v5673, %v5671
    %v5891 = vsel %vm93, %v5330, 0
    %v5894 = vsel %vm93, %v5337, 0
    %5896 = vmatprep.subr.bf16.mxu0 %v5689
    %5897 = vmatpush1.bf16.msra.mxu0 %v5688
    %5898 = vmatprep.subr.bf16.mxu0 %v5687
    %5899 = vmatpush1.bf16.msra.mxu0 %v5686
    %5900 = vmatprep.subr.bf16.mxu0 %v5685
    %5901 = vmatpush1.bf16.msra.mxu0 %v5684
    %5902 = vmatprep.subr.bf16.mxu0 %v5683
    %5903 = vmatpush1.bf16.msra.mxu0 %v5682
    %5904 = vmatprep.subr.bf16.mxu0 %v5681
    %5905 = vmatpush1.bf16.msra.mxu0 %v5680
    %5906 = vmatprep.subr.bf16.mxu0 %v5679
    %5907 = vmatpush1.bf16.msra.mxu0 %v5678
    %5908 = vmatprep.subr.bf16.mxu0 %v5677
    %5909 = vmatpush1.bf16.msra.mxu0 %v5676
    %5910 = vmatprep.subr.bf16.mxu0 %v5675
    %5911 = vmatpush1.bf16.msra.mxu0 %v5674
    %5912 = vmatprep.subr.bf16.mxu0 %v5705
    %5913 = vmatpush2.bf16.msra.mxu0 %v5704
    %5914 = vmatprep.subr.bf16.mxu0 %v5703
    %5915 = vmatpush2.bf16.msra.mxu0 %v5702
    %5916 = vmatprep.subr.bf16.mxu0 %v5701
    %5917 = vmatpush2.bf16.msra.mxu0 %v5700
    %5918 = vmatprep.subr.bf16.mxu0 %v5699
    %5919 = vmatpush2.bf16.msra.mxu0 %v5698
    %5920 = vmatprep.subr.bf16.mxu0 %v5697
    %5921 = vmatpush2.bf16.msra.mxu0 %v5696
    %5922 = vmatprep.subr.bf16.mxu0 %v5695
    %5923 = vmatpush2.bf16.msra.mxu0 %v5694
    %5924 = vmatprep.subr.bf16.mxu0 %v5693
    %5925 = vmatpush2.bf16.msra.mxu0 %v5692
    %5926 = vmatprep.subr.bf16.mxu0 %v5691
    %5927 = vmatpush2.bf16.msra.mxu0 %v5690
    %5928 = vmatprep.mubr.bf16.mxu0 %v5325
    %5929 = vmatmul.mubr.bf16.gmra.mxu0 %v5324
    %v5930 = vpop.f32.mrf.mxu0
    %v5931 = vadd.f32 0.0, %v5930
    %v5932 = vpop.f32.mrf.mxu0
    %v5933 = vadd.f32 0.0, %v5932
    %v5934 = vpop.f32.mrf.mxu0
    %v5935 = vpop.f32.mrf.mxu0
    %5936 = vmatprep.mubr.bf16.mxu0 %v5332
    %5937 = vmatmul.mubr.bf16.gmra.mxu0 %v5331
    %v5938 = vpop.f32.mrf.mxu0
    %v5939 = vadd.f32 0.0, %v5938
    %v5940 = vpop.f32.mrf.mxu0
    %v5941 = vadd.f32 0.0, %v5940
    %v5942 = vpop.f32.mrf.mxu0
    %v5943 = vpop.f32.mrf.mxu0
    %5944 = vdwg.mxu0
    %5945 = vmatprep.subr.bf16.mxu0 %v5721
    %5946 = vmatpush1.bf16.msra.mxu0 %v5720
    %5947 = vmatprep.subr.bf16.mxu0 %v5719
    %5948 = vmatpush1.bf16.msra.mxu0 %v5718
    %5949 = vmatprep.subr.bf16.mxu0 %v5717
    %5950 = vmatpush1.bf16.msra.mxu0 %v5716
    %5951 = vmatprep.subr.bf16.mxu0 %v5715
    %5952 = vmatpush1.bf16.msra.mxu0 %v5714
    %5953 = vmatprep.subr.bf16.mxu0 %v5713
    %5954 = vmatpush1.bf16.msra.mxu0 %v5712
    %5955 = vmatprep.subr.bf16.mxu0 %v5711
    %5956 = vmatpush1.bf16.msra.mxu0 %v5710
    %5957 = vmatprep.subr.bf16.mxu0 %v5709
    %5958 = vmatpush1.bf16.msra.mxu0 %v5708
    %5959 = vmatprep.subr.bf16.mxu0 %v5707
    %5960 = vmatpush1.bf16.msra.mxu0 %v5706
    %5961 = vmatprep.subr.bf16.mxu0 %v5737
    %5962 = vmatpush2.bf16.msra.mxu0 %v5736
    %5963 = vmatprep.subr.bf16.mxu0 %v5735
    %5964 = vmatpush2.bf16.msra.mxu0 %v5734
    %5965 = vmatprep.subr.bf16.mxu0 %v5733
    %5966 = vmatpush2.bf16.msra.mxu0 %v5732
    %5967 = vmatprep.subr.bf16.mxu0 %v5731
    %5968 = vmatpush2.bf16.msra.mxu0 %v5730
    %5969 = vmatprep.subr.bf16.mxu0 %v5729
    %5970 = vmatpush2.bf16.msra.mxu0 %v5728
    %5971 = vmatprep.subr.bf16.mxu0 %v5727
    %5972 = vmatpush2.bf16.msra.mxu0 %v5726
    %5973 = vmatprep.subr.bf16.mxu0 %v5725
    %5974 = vmatpush2.bf16.msra.mxu0 %v5724
    %5975 = vmatprep.subr.bf16.mxu0 %v5723
    %5976 = vmatpush2.bf16.msra.mxu0 %v5722
    %5977 = vmatprep.mubr.bf16.mxu0 %v5327
    %5978 = vmatmul.mubr.bf16.gmra.mxu0 %v5326
    %v5979 = vpop.f32.mrf.mxu0
    %v5980 = vadd.f32 %v5931, %v5979
    %v5981 = vpop.f32.mrf.mxu0
    %v5982 = vadd.f32 %v5933, %v5981
    %v5983 = vpop.f32.mrf.mxu0
    %v5984 = vpop.f32.mrf.mxu0
    %5985 = vmatprep.mubr.bf16.mxu0 %v5334
    %5986 = vmatmul.mubr.bf16.gmra.mxu0 %v5333
    %v5987 = vpop.f32.mrf.mxu0
    %v5988 = vadd.f32 %v5939, %v5987
    %v5989 = vpop.f32.mrf.mxu0
    %v5990 = vadd.f32 %v5941, %v5989
    %v5991 = vpop.f32.mrf.mxu0
    %v5992 = vpop.f32.mrf.mxu0
    %5993 = vdwg.mxu0
    %5994 = vmatprep.subr.bf16.mxu0 %v5753
    %5995 = vmatpush1.bf16.msra.mxu0 %v5752
    %5996 = vmatprep.subr.bf16.mxu0 %v5751
    %5997 = vmatpush1.bf16.msra.mxu0 %v5750
    %5998 = vmatprep.subr.bf16.mxu0 %v5749
    %5999 = vmatpush1.bf16.msra.mxu0 %v5748
    %6000 = vmatprep.subr.bf16.mxu0 %v5747
    %6001 = vmatpush1.bf16.msra.mxu0 %v5746
    %6002 = vmatprep.subr.bf16.mxu0 %v5745
    %6003 = vmatpush1.bf16.msra.mxu0 %v5744
    %6004 = vmatprep.subr.bf16.mxu0 %v5743
    %6005 = vmatpush1.bf16.msra.mxu0 %v5742
    %6006 = vmatprep.subr.bf16.mxu0 %v5741
    %6007 = vmatpush1.bf16.msra.mxu0 %v5740
    %6008 = vmatprep.subr.bf16.mxu0 %v5739
    %6009 = vmatpush1.bf16.msra.mxu0 %v5738
    %6010 = vmatprep.subr.bf16.mxu0 %v5769
    %6011 = vmatpush2.bf16.msra.mxu0 %v5768
    %6012 = vmatprep.subr.bf16.mxu0 %v5767
    %6013 = vmatpush2.bf16.msra.mxu0 %v5766
    %6014 = vmatprep.subr.bf16.mxu0 %v5765
    %6015 = vmatpush2.bf16.msra.mxu0 %v5764
    %6016 = vmatprep.subr.bf16.mxu0 %v5763
    %6017 = vmatpush2.bf16.msra.mxu0 %v5762
    %6018 = vmatprep.subr.bf16.mxu0 %v5761
    %6019 = vmatpush2.bf16.msra.mxu0 %v5760
    %6020 = vmatprep.subr.bf16.mxu0 %v5759
    %6021 = vmatpush2.bf16.msra.mxu0 %v5758
    %6022 = vmatprep.subr.bf16.mxu0 %v5757
    %6023 = vmatpush2.bf16.msra.mxu0 %v5756
    %6024 = vmatprep.subr.bf16.mxu0 %v5755
    %6025 = vmatpush2.bf16.msra.mxu0 %v5754
    %6026 = vmatprep.mubr.bf16.mxu0 %v5329
    %6027 = vmatmul.mubr.bf16.gmra.mxu0 %v5328
    %v6028 = vpop.f32.mrf.mxu0
    %v6029 = vadd.f32 %v5980, %v6028
    %v6030 = vpop.f32.mrf.mxu0
    %v6031 = vadd.f32 %v5982, %v6030
    %v6032 = vpop.f32.mrf.mxu0
    %v6033 = vpop.f32.mrf.mxu0
    %6034 = vmatprep.mubr.bf16.mxu0 %v5336
    %6035 = vmatmul.mubr.bf16.gmra.mxu0 %v5335
    %v6036 = vpop.f32.mrf.mxu0
    %v6037 = vadd.f32 %v5988, %v6036
    %v6038 = vpop.f32.mrf.mxu0
    %v6039 = vadd.f32 %v5990, %v6038
    %v6040 = vpop.f32.mrf.mxu0
    %v6041 = vpop.f32.mrf.mxu0
    %6042 = vdwg.mxu0
    %6043 = vmatprep.subr.bf16.mxu0 0
    %6044 = vmatpush1.bf16.msra.mxu0 0
    %6045 = vmatprep.subr.bf16.mxu0 0
    %6046 = vmatpush1.bf16.msra.mxu0 0
    %6047 = vmatprep.subr.bf16.mxu0 %v5781
    %6048 = vmatpush1.bf16.msra.mxu0 %v5780
    %6049 = vmatprep.subr.bf16.mxu0 %v5779
    %6050 = vmatpush1.bf16.msra.mxu0 %v5778
    %6051 = vmatprep.subr.bf16.mxu0 %v5777
    %6052 = vmatpush1.bf16.msra.mxu0 %v5776
    %6053 = vmatprep.subr.bf16.mxu0 %v5775
    %6054 = vmatpush1.bf16.msra.mxu0 %v5774
    %6055 = vmatprep.subr.bf16.mxu0 %v5773
    %6056 = vmatpush1.bf16.msra.mxu0 %v5772
    %6057 = vmatprep.subr.bf16.mxu0 %v5771
    %6058 = vmatpush1.bf16.msra.mxu0 %v5770
    %6059 = vmatprep.subr.bf16.mxu0 0
    %6060 = vmatpush2.bf16.msra.mxu0 0
    %6061 = vmatprep.subr.bf16.mxu0 0
    %6062 = vmatpush2.bf16.msra.mxu0 0
    %6063 = vmatprep.subr.bf16.mxu0 0
    %6064 = vmatpush2.bf16.msra.mxu0 0
    %6065 = vmatprep.subr.bf16.mxu0 0
    %6066 = vmatpush2.bf16.msra.mxu0 0
    %6067 = vmatprep.subr.bf16.mxu0 0
    %6068 = vmatpush2.bf16.msra.mxu0 0
    %6069 = vmatprep.subr.bf16.mxu0 0
    %6070 = vmatpush2.bf16.msra.mxu0 0
    %6071 = vmatprep.subr.bf16.mxu0 0
    %6072 = vmatpush2.bf16.msra.mxu0 0
    %6073 = vmatprep.subr.bf16.mxu0 0
    %6074 = vmatpush2.bf16.msra.mxu0 0
    %6075 = vmatprep.mubr.bf16.mxu0 0
    %6076 = vmatmul.mubr.bf16.gmra.mxu0 %v5891
    %v6077 = vpop.f32.mrf.mxu0
    %v6078 = vadd.f32 %v6029, %v6077
    %v6079 = vpop.f32.mrf.mxu0
    %v6080 = vadd.f32 %v6031, %v6079
    %v6081 = vpop.f32.mrf.mxu0
    %v6082 = vpop.f32.mrf.mxu0
    %6083 = vmatprep.mubr.bf16.mxu0 0
    %6084 = vmatmul.mubr.bf16.gmra.mxu0 %v5894
    %v6085 = vpop.f32.mrf.mxu0
    %v6086 = vadd.f32 %v6037, %v6085
    %v6087 = vpop.f32.mrf.mxu0
    %v6088 = vadd.f32 %v6039, %v6087
    %v6089 = vpop.f32.mrf.mxu0
    %v6090 = vpop.f32.mrf.mxu0
    %6091 = vdwg.mxu0
    %v6092 = vld [vmem:[%s10] sm:$0x1]
    %v6094 = vlaneseq
    %v6095 = vshrl.u32 %v6094, 7
    %v6096 = vsub.s32 0, %v6095
    %v6097 = vrot.slane %v6092, %v6096
    %v6099 = vadd.f32 %v6078, %v6097
    %v6100 = vadd.f32 %v6086, %v6097
    %v6101 = vmax.f32 %v6099, 0.0
    %v6102 = vmax.f32 %v6100, 0.0
    %6103 = vst [vmem:[#allocation8 + $0x4] sm:$0x1] %v6101
    %6104 = vst [vmem:[#allocation8 + $0xd] sm:$0x1] %v6102
    %v6105 = vld [vmem:[#allocation8] sm:$0xff]
    %v6106 = vld [vmem:[#allocation8 + $0x8] sm:$0x3]
    %v6107 = vpack.c.bf16 %v6106, %v6105
    %v6109 = vunpack.c.l.b16 %v6107
    %v6110 = vunpack.c.h.b16 %v6107
    %v6111 = vpack.c.b16 %v6109, %v6109
    %v6112 = vpack.c.b16 %v6110, %v6110
    %6115 = vst [vmem:[#allocation14] sm:$0xf] %v6111
    %6116 = vst [vmem:[#allocation14 + $0x24] sm:$0x1] %v6112
    %v6117 = vld [vmem:[#allocation8 + $0x1] sm:$0xff]
    %v6118 = vld [vmem:[#allocation8 + $0x9] sm:$0x3]
    %v6119 = vpack.c.bf16 %v6118, %v6117
    %v6121 = vunpack.c.l.b16 %v6119
    %v6122 = vunpack.c.h.b16 %v6119
    %v6123 = vpack.c.b16 %v6121, %v6121
    %v6124 = vpack.c.b16 %v6122, %v6122
    %6127 = vst [vmem:[#allocation14 + $0x4] sm:$0xf] %v6123
    %6128 = vst [vmem:[#allocation14 + $0x28] sm:$0x1] %v6124
    %v6129 = vld [vmem:[#allocation8 + $0x2] sm:$0xff]
    %v6130 = vld [vmem:[#allocation8 + $0xa] sm:$0x3]
    %v6131 = vpack.c.bf16 %v6130, %v6129
    %v6133 = vunpack.c.l.b16 %v6131
    %v6134 = vunpack.c.h.b16 %v6131
    %v6135 = vpack.c.b16 %v6133, %v6133
    %v6136 = vpack.c.b16 %v6134, %v6134
    %6139 = vst [vmem:[#allocation14 + $0x8] sm:$0xf] %v6135
    %6140 = vst [vmem:[#allocation14 + $0x2c] sm:$0x1] %v6136
    %v6141 = vld [vmem:[#allocation8 + $0x3] sm:$0xff]
    %v6142 = vld [vmem:[#allocation8 + $0xb] sm:$0x3]
    %v6143 = vpack.c.bf16 %v6142, %v6141
    %v6145 = vunpack.c.l.b16 %v6143
    %v6146 = vunpack.c.h.b16 %v6143
    %v6147 = vpack.c.b16 %v6145, %v6145
    %v6148 = vpack.c.b16 %v6146, %v6146
    %6151 = vst [vmem:[#allocation14 + $0xc] sm:$0xf] %v6147
    %6152 = vst [vmem:[#allocation14 + $0x30] sm:$0x1] %v6148
    %v6153 = vld [vmem:[#allocation8 + $0x4] sm:$0xff]
    %v6154 = vld [vmem:[#allocation8 + $0xc] sm:$0x3]
    %v6155 = vpack.c.bf16 %v6154, %v6153
    %v6157 = vunpack.c.l.b16 %v6155
    %v6158 = vunpack.c.h.b16 %v6155
    %v6159 = vpack.c.b16 %v6157, %v6157
    %v6160 = vpack.c.b16 %v6158, %v6158
    %6163 = vst [vmem:[#allocation14 + $0x10] sm:$0xf] %v6159
    %6164 = vst [vmem:[#allocation14 + $0x34] sm:$0x1] %v6160
    %v6165 = vld [vmem:[#allocation8 + $0x5] sm:$0xff]
    %v6166 = vld [vmem:[#allocation8 + $0xd] sm:$0x3]
    %v6167 = vpack.c.bf16 %v6166, %v6165
    %v6169 = vunpack.c.l.b16 %v6167
    %v6170 = vunpack.c.h.b16 %v6167
    %v6171 = vpack.c.b16 %v6169, %v6169
    %v6172 = vpack.c.b16 %v6170, %v6170
    %6175 = vst [vmem:[#allocation14 + $0x14] sm:$0xf] %v6171
    %6176 = vst [vmem:[#allocation14 + $0x38] sm:$0x1] %v6172
    %v6177 = vld [vmem:[#allocation8 + $0x6] sm:$0xff]
    %v6178 = vld [vmem:[#allocation8 + $0xe] sm:$0x3]
    %v6179 = vpack.c.bf16 %v6178, %v6177
    %v6181 = vunpack.c.l.b16 %v6179
    %v6182 = vunpack.c.h.b16 %v6179
    %v6183 = vpack.c.b16 %v6181, %v6181
    %v6184 = vpack.c.b16 %v6182, %v6182
    %6187 = vst [vmem:[#allocation14 + $0x18] sm:$0xf] %v6183
    %6188 = vst [vmem:[#allocation14 + $0x3c] sm:$0x1] %v6184
    %v6189 = vld [vmem:[#allocation8 + $0x7] sm:$0xff]
    %v6190 = vld [vmem:[#allocation8 + $0xf] sm:$0x3]
    %v6191 = vpack.c.bf16 %v6190, %v6189
    %v6193 = vunpack.c.l.b16 %v6191
    %v6194 = vunpack.c.h.b16 %v6191
    %v6195 = vpack.c.b16 %v6193, %v6193
    %v6196 = vpack.c.b16 %v6194, %v6194
    %6199 = vst [vmem:[#allocation14 + $0x1c] sm:$0xf] %v6195
    %6200 = vst [vmem:[#allocation14 + $0x40] sm:$0x1] %v6196
    %v6201 = vld [vmem:[#allocation8 + $0x8] sm:$0xff]
    %v6202 = vld [vmem:[#allocation8 + $0x10] sm:$0x3]
    %v6203 = vpack.c.bf16 %v6202, %v6201
    %v6205 = vunpack.c.l.b16 %v6203
    %v6206 = vunpack.c.h.b16 %v6203
    %v6207 = vpack.c.b16 %v6205, %v6205
    %v6208 = vpack.c.b16 %v6206, %v6206
    %6211 = vst [vmem:[#allocation14 + $0x20] sm:$0xf] %v6207
    %6212 = vst [vmem:[#allocation14 + $0x44] sm:$0x1] %v6208
    %v6213 = vld [vmem:[#allocation14] sm:$0xff]
    %v6214 = vld [vmem:[#allocation14 + $0x8] sm:$0xff]
    %v6215 = vld [vmem:[#allocation14 + $0x10] sm:$0xff]
    %v6216 = vld [vmem:[#allocation14 + $0x18] sm:$0xff]
    %v6217 = vld [vmem:[#allocation14 + $0x20] sm:$0xf]
    %v6218 = vld [vmem:[#allocation14 + $0x24] sm:$0x11]
    %v6219 = vld [vmem:[#allocation14 + $0x2c] sm:$0x11]
    %v6220 = vld [vmem:[#allocation14 + $0x34] sm:$0x11]
    %v6221 = vld [vmem:[#allocation14 + $0x3c] sm:$0x11]
    %v6222 = vld [vmem:[#allocation14 + $0x44] sm:$0x1]
    %v6223 = vld [vmem:[%s11] sm:$0xf]
    %v6224 = vld [vmem:[%s11 + $0x4] sm:$0xf]
    %v6225 = vld [vmem:[%s11 + $0x8] sm:$0xf]
    %v6226 = vld [vmem:[%s11 + $0xc] sm:$0xf]
    %v6227 = vld [vmem:[%s11 + $0x10] sm:$0xf]
    %v6228 = vld [vmem:[%s11 + $0x14] sm:$0xf]
    %v6229 = vld [vmem:[%s11 + $0x18] sm:$0xf]
    %v6230 = vld [vmem:[%s11 + $0x1c] sm:$0xf]
    %v6231 = vld [vmem:[%s11 + $0x20] sm:$0xf]
    %v6232 = vld [vmem:[%s11 + $0x24] sm:$0xf]
    %v6233 = vld [vmem:[%s11 + $0x28] sm:$0xf]
    %v6234 = vld [vmem:[%s11 + $0x2c] sm:$0xf]
    %v6235 = vld [vmem:[%s11 + $0x30] sm:$0xf]
    %v6236 = vld [vmem:[%s11 + $0x34] sm:$0xf]
    %v6237 = vld [vmem:[%s11 + $0x38] sm:$0xf]
    %v6238 = vld [vmem:[%s11 + $0x3c] sm:$0xf]
    %v6239 = vld [vmem:[%s11 + $0x40] sm:$0xf]
    %v6240 = vld [vmem:[%s11 + $0x44] sm:$0xf]
    %v6241 = vld [vmem:[%s11 + $0x48] sm:$0xf]
    %v6242 = vld [vmem:[%s11 + $0x4c] sm:$0xf]
    %v6243 = vld [vmem:[%s11 + $0x50] sm:$0xf]
    %v6244 = vld [vmem:[%s11 + $0x54] sm:$0xf]
    %v6245 = vld [vmem:[%s11 + $0x58] sm:$0xf]
    %v6246 = vld [vmem:[%s11 + $0x5c] sm:$0xf]
    %v6247 = vld [vmem:[%s11 + $0x60] sm:$0xf]
    %v6248 = vld [vmem:[%s11 + $0x64] sm:$0xf]
    %v6249 = vld [vmem:[%s11 + $0x68] sm:$0xf]
    %v6250 = vld [vmem:[%s11 + $0x6c] sm:$0xf]
    %v6251 = vld [vmem:[%s11 + $0x70] sm:$0xf]
    %v6252 = vld [vmem:[%s11 + $0x74] sm:$0xf]
    %v6253 = vld [vmem:[%s11 + $0x78] sm:$0xf]
    %v6254 = vld [vmem:[%s11 + $0x7c] sm:$0xf]
    %v6255 = vld [vmem:[%s11 + $0x80] sm:$0xf]
    %v6256 = vld [vmem:[%s11 + $0x84] sm:$0xf]
    %v6257 = vld [vmem:[%s11 + $0x88] sm:$0xf]
    %v6258 = vld [vmem:[%s11 + $0x8c] sm:$0xf]
    %v6259 = vld [vmem:[%s11 + $0x90] sm:$0xf]
    %v6260 = vld [vmem:[%s11 + $0x94] sm:$0xf]
    %v6261 = vld [vmem:[%s11 + $0x98] sm:$0xf]
    %v6262 = vld [vmem:[%s11 + $0x9c] sm:$0xf]
    %v6263 = vld [vmem:[%s11 + $0xa0] sm:$0xf]
    %v6264 = vld [vmem:[%s11 + $0xa4] sm:$0xf]
    %v6265 = vld [vmem:[%s11 + $0xa8] sm:$0xf]
    %v6266 = vld [vmem:[%s11 + $0xac] sm:$0xf]
    %v6267 = vld [vmem:[%s11 + $0xb0] sm:$0xf]
    %v6268 = vld [vmem:[%s11 + $0xb4] sm:$0xf]
    %v6269 = vld [vmem:[%s11 + $0xb8] sm:$0xf]
    %v6270 = vld [vmem:[%s11 + $0xbc] sm:$0xf]
    %v6271 = vld [vmem:[%s11 + $0xc0] sm:$0xf]
    %v6272 = vld [vmem:[%s11 + $0xc4] sm:$0xf]
    %v6273 = vld [vmem:[%s11 + $0xc8] sm:$0xf]
    %v6274 = vld [vmem:[%s11 + $0xcc] sm:$0xf]
    %v6275 = vld [vmem:[%s11 + $0xd0] sm:$0xf]
    %v6276 = vld [vmem:[%s11 + $0xd4] sm:$0xf]
    %v6277 = vld [vmem:[%s11 + $0xd8] sm:$0xf]
    %v6278 = vld [vmem:[%s11 + $0xdc] sm:$0xf]
    %v6279 = vld [vmem:[%s11 + $0xe0] sm:$0xf]
    %v6280 = vld [vmem:[%s11 + $0xe4] sm:$0xf]
    %v6281 = vld [vmem:[%s11 + $0xe8] sm:$0xf]
    %v6282 = vld [vmem:[%s11 + $0xec] sm:$0xf]
    %v6283 = vld [vmem:[%s11 + $0xf0] sm:$0xf]
    %v6284 = vld [vmem:[%s11 + $0xf4] sm:$0xf]
    %v6285 = vld [vmem:[%s11 + $0xf8] sm:$0xf]
    %v6286 = vld [vmem:[%s11 + $0xfc] sm:$0xf]
    %v6287 = vld [vmem:[%s11 + $0x100] sm:$0xf]
    %v6288 = vld [vmem:[%s11 + $0x104] sm:$0xf]
    %v6289 = vld [vmem:[%s11 + $0x108] sm:$0xf]
    %v6290 = vld [vmem:[%s11 + $0x10c] sm:$0xf]
    %v6291 = vld [vmem:[%s11 + $0x110] sm:$0xf]
    %v6292 = vld [vmem:[%s11 + $0x114] sm:$0xf]
    %v6293 = vld [vmem:[%s11 + $0x118] sm:$0xf]
    %v6294 = vld [vmem:[%s11 + $0x11c] sm:$0xf]
    %v6295 = vld [vmem:[%s11 + $0x120] sm:$0xf]
    %v6296 = vld [vmem:[%s11 + $0x124] sm:$0xf]
    %v6297 = vld [vmem:[%s11 + $0x128] sm:$0xf]
    %v6298 = vld [vmem:[%s11 + $0x12c] sm:$0xf]
    %v6299 = vld [vmem:[%s11 + $0x130] sm:$0xf]
    %v6300 = vld [vmem:[%s11 + $0x134] sm:$0xf]
    %v6301 = vld [vmem:[%s11 + $0x138] sm:$0xf]
    %v6302 = vld [vmem:[%s11 + $0x13c] sm:$0xf]
    %v6303 = vld [vmem:[%s11 + $0x140] sm:$0xf]
    %v6304 = vld [vmem:[%s11 + $0x144] sm:$0xf]
    %v6305 = vld [vmem:[%s11 + $0x148] sm:$0xf]
    %v6306 = vld [vmem:[%s11 + $0x14c] sm:$0xf]
    %v6307 = vld [vmem:[%s11 + $0x150] sm:$0xf]
    %v6308 = vld [vmem:[%s11 + $0x154] sm:$0xf]
    %v6309 = vld [vmem:[%s11 + $0x158] sm:$0xf]
    %v6310 = vld [vmem:[%s11 + $0x15c] sm:$0xf]
    %v6311 = vld [vmem:[%s11 + $0x160] sm:$0xf]
    %v6312 = vld [vmem:[%s11 + $0x164] sm:$0xf]
    %v6313 = vld [vmem:[%s11 + $0x168] sm:$0xf]
    %v6314 = vld [vmem:[%s11 + $0x16c] sm:$0xf]
    %v6315 = vld [vmem:[%s11 + $0x170] sm:$0xf]
    %v6316 = vld [vmem:[%s11 + $0x174] sm:$0xf]
    %v6317 = vld [vmem:[%s11 + $0x178] sm:$0xf]
    %v6318 = vld [vmem:[%s11 + $0x17c] sm:$0xf]
    %v6319 = vld [vmem:[%s11 + $0x180] sm:$0xf]
    %v6320 = vld [vmem:[%s11 + $0x184] sm:$0xf]
    %v6321 = vld [vmem:[%s11 + $0x188] sm:$0xf]
    %v6322 = vld [vmem:[%s11 + $0x18c] sm:$0xf]
    %v6323 = vld [vmem:[%s11 + $0x190] sm:$0xf]
    %v6324 = vld [vmem:[%s11 + $0x194] sm:$0xf]
    %v6325 = vld [vmem:[%s11 + $0x198] sm:$0xf]
    %v6326 = vld [vmem:[%s11 + $0x19c] sm:$0xf]
    %v6327 = vld [vmem:[%s11 + $0x1a0] sm:$0xf]
    %v6328 = vld [vmem:[%s11 + $0x1a4] sm:$0xf]
    %v6329 = vld [vmem:[%s11 + $0x1a8] sm:$0xf]
    %v6330 = vld [vmem:[%s11 + $0x1ac] sm:$0xf]
    %v6331 = vld [vmem:[%s11 + $0x1b0] sm:$0xf]
    %v6332 = vld [vmem:[%s11 + $0x1b4] sm:$0xf]
    %v6333 = vld [vmem:[%s11 + $0x1b8] sm:$0xf]
    %v6334 = vld [vmem:[%s11 + $0x1bc] sm:$0xf]
    %v6335 = vld [vmem:[%s11 + $0x1c0] sm:$0xf]
    %v6336 = vld [vmem:[%s11 + $0x1c4] sm:$0xf]
    %v6337 = vld [vmem:[%s11 + $0x1c8] sm:$0xf]
    %v6338 = vld [vmem:[%s11 + $0x1cc] sm:$0xf]
    %v6339 = vld [vmem:[%s11 + $0x1d0] sm:$0xf]
    %v6340 = vld [vmem:[%s11 + $0x1d4] sm:$0xf]
    %v6341 = vld [vmem:[%s11 + $0x1d8] sm:$0xf]
    %v6342 = vld [vmem:[%s11 + $0x1dc] sm:$0xf]
    %v6343 = vld [vmem:[%s11 + $0x1e0] sm:$0xf]
    %v6344 = vld [vmem:[%s11 + $0x1e4] sm:$0xf]
    %v6345 = vld [vmem:[%s11 + $0x1e8] sm:$0xf]
    %v6346 = vld [vmem:[%s11 + $0x1ec] sm:$0xf]
    %v6347 = vld [vmem:[%s11 + $0x1f0] sm:$0xf]
    %v6348 = vld [vmem:[%s11 + $0x1f4] sm:$0xf]
    %v6349 = vld [vmem:[%s11 + $0x1f8] sm:$0xf]
    %v6350 = vld [vmem:[%s11 + $0x1fc] sm:$0xf]
    %v6351 = vld [vmem:[%s11 + $0x200] sm:$0xf]
    %v6352 = vld [vmem:[%s11 + $0x204] sm:$0xf]
    %v6353 = vld [vmem:[%s11 + $0x208] sm:$0xf]
    %v6354 = vld [vmem:[%s11 + $0x20c] sm:$0xf]
    %v6355 = vld [vmem:[%s11 + $0x210] sm:$0xf]
    %v6356 = vld [vmem:[%s11 + $0x214] sm:$0xf]
    %v6357 = vld [vmem:[%s11 + $0x218] sm:$0xf]
    %v6358 = vld [vmem:[%s11 + $0x21c] sm:$0xf]
    %v6359 = vld [vmem:[%s11 + $0x220] sm:$0xf]
    %v6360 = vld [vmem:[%s11 + $0x224] sm:$0xf]
    %v6361 = vld [vmem:[%s11 + $0x228] sm:$0xf]
    %v6362 = vld [vmem:[%s11 + $0x22c] sm:$0xf]
    %v6363 = vld [vmem:[%s11 + $0x230] sm:$0xf]
    %v6364 = vld [vmem:[%s11 + $0x234] sm:$0xf]
    %v6365 = vld [vmem:[%s11 + $0x238] sm:$0xf]
    %v6366 = vld [vmem:[%s11 + $0x23c] sm:$0xf]
    %v6377 = vunpack.c.l.b16 %v6213
    %v6378 = vunpack.c.h.b16 %v6213
    %v6379 = vunpack.c.l.b16 %v6214
    %v6380 = vunpack.c.h.b16 %v6214
    %v6381 = vunpack.c.l.b16 %v6215
    %v6382 = vunpack.c.h.b16 %v6215
    %v6383 = vunpack.c.l.b16 %v6216
    %v6384 = vunpack.c.h.b16 %v6216
    %v6385 = vunpack.c.l.b16 %v6217
    %v6386 = vunpack.c.l.b16 %v6218
    %v6387 = vunpack.c.h.b16 %v6218
    %v6388 = vunpack.c.l.b16 %v6219
    %v6389 = vunpack.c.h.b16 %v6219
    %v6390 = vunpack.c.l.b16 %v6220
    %v6391 = vunpack.c.h.b16 %v6220
    %v6392 = vunpack.c.l.b16 %v6221
    %v6393 = vunpack.c.h.b16 %v6221
    %v6394 = vunpack.c.l.b16 %v6222
    %v6395 = vpack.c.b16 %v6386, %v6377
    %v6396 = vpack.c.b16 %v6387, %v6378
    %v6397 = vpack.c.b16 %v6388, %v6379
    %v6398 = vpack.c.b16 %v6389, %v6380
    %v6399 = vpack.c.b16 %v6390, %v6381
    %v6400 = vpack.c.b16 %v6391, %v6382
    %v6401 = vpack.c.b16 %v6392, %v6383
    %v6402 = vpack.c.b16 %v6393, %v6384
    %v6403 = vpack.c.b16 %v6394, %v6385
    %v6557 = vunpack.c.l.b16 %v6223
    %v6558 = vunpack.c.l.b16 %v6224
    %v6559 = vunpack.c.l.b16 %v6225
    %v6560 = vunpack.c.l.b16 %v6226
    %v6561 = vunpack.c.l.b16 %v6227
    %v6562 = vunpack.c.l.b16 %v6228
    %v6563 = vunpack.c.l.b16 %v6229
    %v6564 = vunpack.c.l.b16 %v6230
    %v6565 = vunpack.c.l.b16 %v6231
    %v6566 = vunpack.c.l.b16 %v6232
    %v6567 = vunpack.c.l.b16 %v6233
    %v6568 = vunpack.c.l.b16 %v6234
    %v6569 = vunpack.c.l.b16 %v6235
    %v6570 = vunpack.c.l.b16 %v6236
    %v6571 = vunpack.c.l.b16 %v6237
    %v6572 = vunpack.c.l.b16 %v6238
    %v6573 = vunpack.c.l.b16 %v6239
    %v6574 = vunpack.c.l.b16 %v6240
    %v6575 = vunpack.c.l.b16 %v6241
    %v6576 = vunpack.c.l.b16 %v6242
    %v6577 = vunpack.c.l.b16 %v6243
    %v6578 = vunpack.c.l.b16 %v6244
    %v6579 = vunpack.c.l.b16 %v6245
    %v6580 = vunpack.c.l.b16 %v6246
    %v6581 = vunpack.c.l.b16 %v6247
    %v6582 = vunpack.c.l.b16 %v6248
    %v6583 = vunpack.c.l.b16 %v6249
    %v6584 = vunpack.c.l.b16 %v6250
    %v6585 = vunpack.c.l.b16 %v6251
    %v6586 = vunpack.c.l.b16 %v6252
    %v6587 = vunpack.c.l.b16 %v6253
    %v6588 = vunpack.c.l.b16 %v6254
    %v6589 = vunpack.c.l.b16 %v6255
    %v6590 = vunpack.c.l.b16 %v6256
    %v6591 = vunpack.c.l.b16 %v6257
    %v6592 = vunpack.c.l.b16 %v6258
    %v6593 = vunpack.c.l.b16 %v6259
    %v6594 = vunpack.c.l.b16 %v6260
    %v6595 = vunpack.c.l.b16 %v6261
    %v6596 = vunpack.c.l.b16 %v6262
    %v6597 = vunpack.c.l.b16 %v6263
    %v6598 = vunpack.c.l.b16 %v6264
    %v6599 = vunpack.c.l.b16 %v6265
    %v6600 = vunpack.c.l.b16 %v6266
    %v6601 = vunpack.c.l.b16 %v6267
    %v6602 = vunpack.c.l.b16 %v6268
    %v6603 = vunpack.c.l.b16 %v6269
    %v6604 = vunpack.c.l.b16 %v6270
    %v6605 = vunpack.c.l.b16 %v6271
    %v6606 = vunpack.c.l.b16 %v6272
    %v6607 = vunpack.c.l.b16 %v6273
    %v6608 = vunpack.c.l.b16 %v6274
    %v6609 = vunpack.c.l.b16 %v6275
    %v6610 = vunpack.c.l.b16 %v6276
    %v6611 = vunpack.c.l.b16 %v6277
    %v6612 = vunpack.c.l.b16 %v6278
    %v6613 = vunpack.c.l.b16 %v6279
    %v6614 = vunpack.c.l.b16 %v6280
    %v6615 = vunpack.c.l.b16 %v6281
    %v6616 = vunpack.c.l.b16 %v6282
    %v6617 = vunpack.c.l.b16 %v6283
    %v6618 = vunpack.c.l.b16 %v6284
    %v6619 = vunpack.c.l.b16 %v6285
    %v6620 = vunpack.c.l.b16 %v6286
    %v6621 = vunpack.c.l.b16 %v6287
    %v6622 = vunpack.c.l.b16 %v6288
    %v6623 = vunpack.c.l.b16 %v6289
    %v6624 = vunpack.c.l.b16 %v6290
    %v6625 = vunpack.c.l.b16 %v6291
    %v6626 = vunpack.c.l.b16 %v6292
    %v6627 = vunpack.c.l.b16 %v6293
    %v6628 = vunpack.c.l.b16 %v6294
    %v6629 = vunpack.c.l.b16 %v6295
    %v6630 = vunpack.c.l.b16 %v6296
    %v6631 = vunpack.c.l.b16 %v6297
    %v6632 = vunpack.c.l.b16 %v6298
    %v6633 = vunpack.c.l.b16 %v6299
    %v6634 = vunpack.c.l.b16 %v6300
    %v6635 = vunpack.c.l.b16 %v6301
    %v6636 = vunpack.c.l.b16 %v6302
    %v6637 = vunpack.c.l.b16 %v6303
    %v6638 = vunpack.c.l.b16 %v6304
    %v6639 = vunpack.c.l.b16 %v6305
    %v6640 = vunpack.c.l.b16 %v6306
    %v6641 = vunpack.c.l.b16 %v6307
    %v6642 = vunpack.c.l.b16 %v6308
    %v6643 = vunpack.c.l.b16 %v6309
    %v6644 = vunpack.c.l.b16 %v6310
    %v6645 = vunpack.c.l.b16 %v6311
    %v6646 = vunpack.c.l.b16 %v6312
    %v6647 = vunpack.c.l.b16 %v6313
    %v6648 = vunpack.c.l.b16 %v6314
    %v6649 = vunpack.c.l.b16 %v6315
    %v6650 = vunpack.c.l.b16 %v6316
    %v6651 = vunpack.c.l.b16 %v6317
    %v6652 = vunpack.c.l.b16 %v6318
    %v6653 = vunpack.c.l.b16 %v6319
    %v6654 = vunpack.c.l.b16 %v6320
    %v6655 = vunpack.c.l.b16 %v6321
    %v6656 = vunpack.c.l.b16 %v6322
    %v6657 = vunpack.c.l.b16 %v6323
    %v6658 = vunpack.c.l.b16 %v6324
    %v6659 = vunpack.c.l.b16 %v6325
    %v6660 = vunpack.c.l.b16 %v6326
    %v6661 = vunpack.c.l.b16 %v6327
    %v6662 = vunpack.c.l.b16 %v6328
    %v6663 = vunpack.c.l.b16 %v6329
    %v6664 = vunpack.c.l.b16 %v6330
    %v6665 = vunpack.c.l.b16 %v6331
    %v6666 = vunpack.c.l.b16 %v6332
    %v6667 = vunpack.c.l.b16 %v6333
    %v6668 = vunpack.c.l.b16 %v6334
    %v6669 = vunpack.c.l.b16 %v6335
    %v6670 = vunpack.c.l.b16 %v6336
    %v6671 = vunpack.c.l.b16 %v6337
    %v6672 = vunpack.c.l.b16 %v6338
    %v6673 = vunpack.c.l.b16 %v6339
    %v6674 = vunpack.c.l.b16 %v6340
    %v6675 = vunpack.c.l.b16 %v6341
    %v6676 = vunpack.c.l.b16 %v6342
    %v6677 = vunpack.c.l.b16 %v6343
    %v6678 = vunpack.c.l.b16 %v6344
    %v6679 = vunpack.c.l.b16 %v6345
    %v6680 = vunpack.c.l.b16 %v6346
    %v6681 = vunpack.c.l.b16 %v6347
    %v6682 = vunpack.c.l.b16 %v6348
    %v6683 = vunpack.c.l.b16 %v6349
    %v6684 = vunpack.c.l.b16 %v6350
    %v6685 = vunpack.c.l.b16 %v6351
    %v6686 = vunpack.c.l.b16 %v6352
    %v6687 = vunpack.c.l.b16 %v6353
    %v6688 = vunpack.c.l.b16 %v6354
    %v6689 = vunpack.c.l.b16 %v6355
    %v6690 = vunpack.c.l.b16 %v6356
    %v6691 = vunpack.c.l.b16 %v6357
    %v6692 = vunpack.c.l.b16 %v6358
    %v6693 = vunpack.c.l.b16 %v6359
    %v6694 = vunpack.c.l.b16 %v6360
    %v6695 = vunpack.c.l.b16 %v6361
    %v6696 = vunpack.c.l.b16 %v6362
    %v6697 = vunpack.c.l.b16 %v6363
    %v6698 = vunpack.c.l.b16 %v6364
    %v6699 = vunpack.c.l.b16 %v6365
    %v6700 = vunpack.c.l.b16 %v6366
    %v6701 = vpack.c.b16 %v6558, %v6557
    %v6702 = vpack.c.b16 %v6560, %v6559
    %v6703 = vpack.c.b16 %v6562, %v6561
    %v6704 = vpack.c.b16 %v6564, %v6563
    %v6705 = vpack.c.b16 %v6566, %v6565
    %v6706 = vpack.c.b16 %v6568, %v6567
    %v6707 = vpack.c.b16 %v6570, %v6569
    %v6708 = vpack.c.b16 %v6572, %v6571
    %v6709 = vpack.c.b16 %v6574, %v6573
    %v6710 = vpack.c.b16 %v6576, %v6575
    %v6711 = vpack.c.b16 %v6578, %v6577
    %v6712 = vpack.c.b16 %v6580, %v6579
    %v6713 = vpack.c.b16 %v6582, %v6581
    %v6714 = vpack.c.b16 %v6584, %v6583
    %v6715 = vpack.c.b16 %v6586, %v6585
    %v6716 = vpack.c.b16 %v6588, %v6587
    %v6717 = vpack.c.b16 %v6590, %v6589
    %v6718 = vpack.c.b16 %v6592, %v6591
    %v6719 = vpack.c.b16 %v6594, %v6593
    %v6720 = vpack.c.b16 %v6596, %v6595
    %v6721 = vpack.c.b16 %v6598, %v6597
    %v6722 = vpack.c.b16 %v6600, %v6599
    %v6723 = vpack.c.b16 %v6602, %v6601
    %v6724 = vpack.c.b16 %v6604, %v6603
    %v6725 = vpack.c.b16 %v6606, %v6605
    %v6726 = vpack.c.b16 %v6608, %v6607
    %v6727 = vpack.c.b16 %v6610, %v6609
    %v6728 = vpack.c.b16 %v6612, %v6611
    %v6729 = vpack.c.b16 %v6614, %v6613
    %v6730 = vpack.c.b16 %v6616, %v6615
    %v6731 = vpack.c.b16 %v6618, %v6617
    %v6732 = vpack.c.b16 %v6620, %v6619
    %v6733 = vpack.c.b16 %v6622, %v6621
    %v6734 = vpack.c.b16 %v6624, %v6623
    %v6735 = vpack.c.b16 %v6626, %v6625
    %v6736 = vpack.c.b16 %v6628, %v6627
    %v6737 = vpack.c.b16 %v6630, %v6629
    %v6738 = vpack.c.b16 %v6632, %v6631
    %v6739 = vpack.c.b16 %v6634, %v6633
    %v6740 = vpack.c.b16 %v6636, %v6635
    %v6741 = vpack.c.b16 %v6638, %v6637
    %v6742 = vpack.c.b16 %v6640, %v6639
    %v6743 = vpack.c.b16 %v6642, %v6641
    %v6744 = vpack.c.b16 %v6644, %v6643
    %v6745 = vpack.c.b16 %v6646, %v6645
    %v6746 = vpack.c.b16 %v6648, %v6647
    %v6747 = vpack.c.b16 %v6650, %v6649
    %v6748 = vpack.c.b16 %v6652, %v6651
    %v6749 = vpack.c.b16 %v6654, %v6653
    %v6750 = vpack.c.b16 %v6656, %v6655
    %v6751 = vpack.c.b16 %v6658, %v6657
    %v6752 = vpack.c.b16 %v6660, %v6659
    %v6753 = vpack.c.b16 %v6662, %v6661
    %v6754 = vpack.c.b16 %v6664, %v6663
    %v6755 = vpack.c.b16 %v6666, %v6665
    %v6756 = vpack.c.b16 %v6668, %v6667
    %v6757 = vpack.c.b16 %v6670, %v6669
    %v6758 = vpack.c.b16 %v6672, %v6671
    %v6759 = vpack.c.b16 %v6674, %v6673
    %v6760 = vpack.c.b16 %v6676, %v6675
    %v6761 = vpack.c.b16 %v6678, %v6677
    %v6762 = vpack.c.b16 %v6680, %v6679
    %v6763 = vpack.c.b16 %v6682, %v6681
    %v6764 = vpack.c.b16 %v6684, %v6683
    %v6765 = vpack.c.b16 %v6686, %v6685
    %v6766 = vpack.c.b16 %v6688, %v6687
    %v6767 = vpack.c.b16 %v6690, %v6689
    %v6768 = vpack.c.b16 %v6692, %v6691
    %v6769 = vpack.c.b16 %v6694, %v6693
    %v6770 = vpack.c.b16 %v6696, %v6695
    %v6771 = vpack.c.b16 %v6698, %v6697
    %v6772 = vpack.c.b16 %v6700, %v6699
    %6845 = vmatprep.subr.bf16.mxu0 0
    %6846 = vmatpush1.bf16.msra.mxu0 %v6708
    %6847 = vmatprep.subr.bf16.mxu0 0
    %6848 = vmatpush1.bf16.msra.mxu0 %v6707
    %6849 = vmatprep.subr.bf16.mxu0 0
    %6850 = vmatpush1.bf16.msra.mxu0 %v6706
    %6851 = vmatprep.subr.bf16.mxu0 0
    %6852 = vmatpush1.bf16.msra.mxu0 %v6705
    %6853 = vmatprep.subr.bf16.mxu0 0
    %6854 = vmatpush1.bf16.msra.mxu0 %v6704
    %6855 = vmatprep.subr.bf16.mxu0 0
    %6856 = vmatpush1.bf16.msra.mxu0 %v6703
    %6857 = vmatprep.subr.bf16.mxu0 0
    %6858 = vmatpush1.bf16.msra.mxu0 %v6702
    %6859 = vmatprep.subr.bf16.mxu0 0
    %6860 = vmatpush1.bf16.msra.mxu0 %v6701
    %6861 = vmatprep.subr.bf16.mxu0 0
    %6862 = vmatpush2.bf16.msra.mxu0 %v6716
    %6863 = vmatprep.subr.bf16.mxu0 0
    %6864 = vmatpush2.bf16.msra.mxu0 %v6715
    %6865 = vmatprep.subr.bf16.mxu0 0
    %6866 = vmatpush2.bf16.msra.mxu0 %v6714
    %6867 = vmatprep.subr.bf16.mxu0 0
    %6868 = vmatpush2.bf16.msra.mxu0 %v6713
    %6869 = vmatprep.subr.bf16.mxu0 0
    %6870 = vmatpush2.bf16.msra.mxu0 %v6712
    %6871 = vmatprep.subr.bf16.mxu0 0
    %6872 = vmatpush2.bf16.msra.mxu0 %v6711
    %6873 = vmatprep.subr.bf16.mxu0 0
    %6874 = vmatpush2.bf16.msra.mxu0 %v6710
    %6875 = vmatprep.subr.bf16.mxu0 0
    %6876 = vmatpush2.bf16.msra.mxu0 %v6709
    %6877 = vmatprep.mubr.bf16.mxu0 %v6396
    %6878 = vmatmul.mubr.bf16.gmra.mxu0 %v6395
    %v6879 = vpop.f32.mrf.mxu0
    %v6880 = vadd.f32 0.0, %v6879
    %v6881 = vpop.f32.mrf.mxu0
    %v6882 = vpop.f32.mrf.mxu0
    %v6883 = vadd.f32 0.0, %v6882
    %v6884 = vpop.f32.mrf.mxu0
    %6885 = vdwg.mxu0
    %6886 = vmatprep.subr.bf16.mxu0 0
    %6887 = vmatpush1.bf16.msra.mxu0 %v6724
    %6888 = vmatprep.subr.bf16.mxu0 0
    %6889 = vmatpush1.bf16.msra.mxu0 %v6723
    %6890 = vmatprep.subr.bf16.mxu0 0
    %6891 = vmatpush1.bf16.msra.mxu0 %v6722
    %6892 = vmatprep.subr.bf16.mxu0 0
    %6893 = vmatpush1.bf16.msra.mxu0 %v6721
    %6894 = vmatprep.subr.bf16.mxu0 0
    %6895 = vmatpush1.bf16.msra.mxu0 %v6720
    %6896 = vmatprep.subr.bf16.mxu0 0
    %6897 = vmatpush1.bf16.msra.mxu0 %v6719
    %6898 = vmatprep.subr.bf16.mxu0 0
    %6899 = vmatpush1.bf16.msra.mxu0 %v6718
    %6900 = vmatprep.subr.bf16.mxu0 0
    %6901 = vmatpush1.bf16.msra.mxu0 %v6717
    %6902 = vmatprep.subr.bf16.mxu0 0
    %6903 = vmatpush2.bf16.msra.mxu0 %v6732
    %6904 = vmatprep.subr.bf16.mxu0 0
    %6905 = vmatpush2.bf16.msra.mxu0 %v6731
    %6906 = vmatprep.subr.bf16.mxu0 0
    %6907 = vmatpush2.bf16.msra.mxu0 %v6730
    %6908 = vmatprep.subr.bf16.mxu0 0
    %6909 = vmatpush2.bf16.msra.mxu0 %v6729
    %6910 = vmatprep.subr.bf16.mxu0 0
    %6911 = vmatpush2.bf16.msra.mxu0 %v6728
    %6912 = vmatprep.subr.bf16.mxu0 0
    %6913 = vmatpush2.bf16.msra.mxu0 %v6727
    %6914 = vmatprep.subr.bf16.mxu0 0
    %6915 = vmatpush2.bf16.msra.mxu0 %v6726
    %6916 = vmatprep.subr.bf16.mxu0 0
    %6917 = vmatpush2.bf16.msra.mxu0 %v6725
    %6918 = vmatprep.mubr.bf16.mxu0 %v6398
    %6919 = vmatmul.mubr.bf16.gmra.mxu0 %v6397
    %v6920 = vpop.f32.mrf.mxu0
    %v6921 = vadd.f32 %v6880, %v6920
    %v6922 = vpop.f32.mrf.mxu0
    %v6923 = vpop.f32.mrf.mxu0
    %v6924 = vadd.f32 %v6883, %v6923
    %v6925 = vpop.f32.mrf.mxu0
    %6926 = vdwg.mxu0
    %6927 = vmatprep.subr.bf16.mxu0 0
    %6928 = vmatpush1.bf16.msra.mxu0 %v6740
    %6929 = vmatprep.subr.bf16.mxu0 0
    %6930 = vmatpush1.bf16.msra.mxu0 %v6739
    %6931 = vmatprep.subr.bf16.mxu0 0
    %6932 = vmatpush1.bf16.msra.mxu0 %v6738
    %6933 = vmatprep.subr.bf16.mxu0 0
    %6934 = vmatpush1.bf16.msra.mxu0 %v6737
    %6935 = vmatprep.subr.bf16.mxu0 0
    %6936 = vmatpush1.bf16.msra.mxu0 %v6736
    %6937 = vmatprep.subr.bf16.mxu0 0
    %6938 = vmatpush1.bf16.msra.mxu0 %v6735
    %6939 = vmatprep.subr.bf16.mxu0 0
    %6940 = vmatpush1.bf16.msra.mxu0 %v6734
    %6941 = vmatprep.subr.bf16.mxu0 0
    %6942 = vmatpush1.bf16.msra.mxu0 %v6733
    %6943 = vmatprep.subr.bf16.mxu0 0
    %6944 = vmatpush2.bf16.msra.mxu0 %v6748
    %6945 = vmatprep.subr.bf16.mxu0 0
    %6946 = vmatpush2.bf16.msra.mxu0 %v6747
    %6947 = vmatprep.subr.bf16.mxu0 0
    %6948 = vmatpush2.bf16.msra.mxu0 %v6746
    %6949 = vmatprep.subr.bf16.mxu0 0
    %6950 = vmatpush2.bf16.msra.mxu0 %v6745
    %6951 = vmatprep.subr.bf16.mxu0 0
    %6952 = vmatpush2.bf16.msra.mxu0 %v6744
    %6953 = vmatprep.subr.bf16.mxu0 0
    %6954 = vmatpush2.bf16.msra.mxu0 %v6743
    %6955 = vmatprep.subr.bf16.mxu0 0
    %6956 = vmatpush2.bf16.msra.mxu0 %v6742
    %6957 = vmatprep.subr.bf16.mxu0 0
    %6958 = vmatpush2.bf16.msra.mxu0 %v6741
    %6959 = vmatprep.mubr.bf16.mxu0 %v6400
    %6960 = vmatmul.mubr.bf16.gmra.mxu0 %v6399
    %v6961 = vpop.f32.mrf.mxu0
    %v6962 = vadd.f32 %v6921, %v6961
    %v6963 = vpop.f32.mrf.mxu0
    %v6964 = vpop.f32.mrf.mxu0
    %v6965 = vadd.f32 %v6924, %v6964
    %v6966 = vpop.f32.mrf.mxu0
    %6967 = vdwg.mxu0
    %6968 = vmatprep.subr.bf16.mxu0 0
    %6969 = vmatpush1.bf16.msra.mxu0 %v6756
    %6970 = vmatprep.subr.bf16.mxu0 0
    %6971 = vmatpush1.bf16.msra.mxu0 %v6755
    %6972 = vmatprep.subr.bf16.mxu0 0
    %6973 = vmatpush1.bf16.msra.mxu0 %v6754
    %6974 = vmatprep.subr.bf16.mxu0 0
    %6975 = vmatpush1.bf16.msra.mxu0 %v6753
    %6976 = vmatprep.subr.bf16.mxu0 0
    %6977 = vmatpush1.bf16.msra.mxu0 %v6752
    %6978 = vmatprep.subr.bf16.mxu0 0
    %6979 = vmatpush1.bf16.msra.mxu0 %v6751
    %6980 = vmatprep.subr.bf16.mxu0 0
    %6981 = vmatpush1.bf16.msra.mxu0 %v6750
    %6982 = vmatprep.subr.bf16.mxu0 0
    %6983 = vmatpush1.bf16.msra.mxu0 %v6749
    %6984 = vmatprep.subr.bf16.mxu0 0
    %6985 = vmatpush2.bf16.msra.mxu0 %v6764
    %6986 = vmatprep.subr.bf16.mxu0 0
    %6987 = vmatpush2.bf16.msra.mxu0 %v6763
    %6988 = vmatprep.subr.bf16.mxu0 0
    %6989 = vmatpush2.bf16.msra.mxu0 %v6762
    %6990 = vmatprep.subr.bf16.mxu0 0
    %6991 = vmatpush2.bf16.msra.mxu0 %v6761
    %6992 = vmatprep.subr.bf16.mxu0 0
    %6993 = vmatpush2.bf16.msra.mxu0 %v6760
    %6994 = vmatprep.subr.bf16.mxu0 0
    %6995 = vmatpush2.bf16.msra.mxu0 %v6759
    %6996 = vmatprep.subr.bf16.mxu0 0
    %6997 = vmatpush2.bf16.msra.mxu0 %v6758
    %6998 = vmatprep.subr.bf16.mxu0 0
    %6999 = vmatpush2.bf16.msra.mxu0 %v6757
    %7000 = vmatprep.mubr.bf16.mxu0 %v6402
    %7001 = vmatmul.mubr.bf16.gmra.mxu0 %v6401
    %v7002 = vpop.f32.mrf.mxu0
    %v7003 = vadd.f32 %v6962, %v7002
    %v7004 = vpop.f32.mrf.mxu0
    %v7005 = vpop.f32.mrf.mxu0
    %v7006 = vadd.f32 %v6965, %v7005
    %v7007 = vpop.f32.mrf.mxu0
    %7008 = vdwg.mxu0
    %7009 = vmatprep.subr.bf16.mxu0 0
    %7010 = vmatpush1.bf16.msra.mxu0 %v6772
    %7011 = vmatprep.subr.bf16.mxu0 0
    %7012 = vmatpush1.bf16.msra.mxu0 %v6771
    %7013 = vmatprep.subr.bf16.mxu0 0
    %7014 = vmatpush1.bf16.msra.mxu0 %v6770
    %7015 = vmatprep.subr.bf16.mxu0 0
    %7016 = vmatpush1.bf16.msra.mxu0 %v6769
    %7017 = vmatprep.subr.bf16.mxu0 0
    %7018 = vmatpush1.bf16.msra.mxu0 %v6768
    %7019 = vmatprep.subr.bf16.mxu0 0
    %7020 = vmatpush1.bf16.msra.mxu0 %v6767
    %7021 = vmatprep.subr.bf16.mxu0 0
    %7022 = vmatpush1.bf16.msra.mxu0 %v6766
    %7023 = vmatprep.subr.bf16.mxu0 0
    %7024 = vmatpush1.bf16.msra.mxu0 %v6765
    %7025 = vmatprep.subr.bf16.mxu0 0
    %7026 = vmatpush2.bf16.msra.mxu0 0
    %7027 = vmatprep.subr.bf16.mxu0 0
    %7028 = vmatpush2.bf16.msra.mxu0 0
    %7029 = vmatprep.subr.bf16.mxu0 0
    %7030 = vmatpush2.bf16.msra.mxu0 0
    %7031 = vmatprep.subr.bf16.mxu0 0
    %7032 = vmatpush2.bf16.msra.mxu0 0
    %7033 = vmatprep.subr.bf16.mxu0 0
    %7034 = vmatpush2.bf16.msra.mxu0 0
    %7035 = vmatprep.subr.bf16.mxu0 0
    %7036 = vmatpush2.bf16.msra.mxu0 0
    %7037 = vmatprep.subr.bf16.mxu0 0
    %7038 = vmatpush2.bf16.msra.mxu0 0
    %7039 = vmatprep.subr.bf16.mxu0 0
    %7040 = vmatpush2.bf16.msra.mxu0 0
    %7041 = vmatprep.mubr.bf16.mxu0 0
    %7042 = vmatmul.mubr.bf16.gmra.mxu0 %v6403
    %v7043 = vpop.f32.mrf.mxu0
    %v7044 = vadd.f32 %v7003, %v7043
    %v7045 = vpop.f32.mrf.mxu0
    %v7046 = vpop.f32.mrf.mxu0
    %v7047 = vadd.f32 %v7006, %v7046
    %v7048 = vpop.f32.mrf.mxu0
    %7049 = vdwg.mxu0
    %v7050 = vadd.f32 %v7044, %v6080
    %7051 = vst [vmem:[#allocation9 + $0x4] sm:$0x1] %v7050
    %v7053 = vrot.slane %v6088, 7
    %v7055 = vadd.f32 %v7047, %v7053
    %7056 = vst [vmem:[#allocation9 + $0xc] sm:$0x2] %v7055
    %v7057 = vld [vmem:[#allocation9] sm:$0xff]
    %v7058 = vld [vmem:[#allocation9 + $0x8] sm:$0x3]
    %v7059 = vpack.c.bf16 %v7058, %v7057
    %v7061 = vunpack.c.l.b16 %v7059
    %v7062 = vunpack.c.h.b16 %v7059
    %v7063 = vpack.c.b16 %v7061, %v7061
    %v7064 = vpack.c.b16 %v7062, %v7062
    %7067 = vst [vmem:[#allocation14] sm:$0xf] %v7063
    %7068 = vst [vmem:[#allocation14 + $0x24] sm:$0x1] %v7064
    %v7069 = vld [vmem:[#allocation9 + $0x1] sm:$0xff]
    %v7070 = vld [vmem:[#allocation9 + $0x9] sm:$0x3]
    %v7071 = vpack.c.bf16 %v7070, %v7069
    %v7073 = vunpack.c.l.b16 %v7071
    %v7074 = vunpack.c.h.b16 %v7071
    %v7075 = vpack.c.b16 %v7073, %v7073
    %v7076 = vpack.c.b16 %v7074, %v7074
    %7079 = vst [vmem:[#allocation14 + $0x4] sm:$0xf] %v7075
    %7080 = vst [vmem:[#allocation14 + $0x28] sm:$0x1] %v7076
    %v7081 = vld [vmem:[#allocation9 + $0x2] sm:$0xff]
    %v7082 = vld [vmem:[#allocation9 + $0xa] sm:$0x3]
    %v7083 = vpack.c.bf16 %v7082, %v7081
    %v7085 = vunpack.c.l.b16 %v7083
    %v7086 = vunpack.c.h.b16 %v7083
    %v7087 = vpack.c.b16 %v7085, %v7085
    %v7088 = vpack.c.b16 %v7086, %v7086
    %7091 = vst [vmem:[#allocation14 + $0x8] sm:$0xf] %v7087
    %7092 = vst [vmem:[#allocation14 + $0x2c] sm:$0x1] %v7088
    %v7093 = vld [vmem:[#allocation9 + $0x3] sm:$0xff]
    %v7094 = vld [vmem:[#allocation9 + $0xb] sm:$0x3]
    %v7095 = vpack.c.bf16 %v7094, %v7093
    %v7097 = vunpack.c.l.b16 %v7095
    %v7098 = vunpack.c.h.b16 %v7095
    %v7099 = vpack.c.b16 %v7097, %v7097
    %v7100 = vpack.c.b16 %v7098, %v7098
    %7103 = vst [vmem:[#allocation14 + $0xc] sm:$0xf] %v7099
    %7104 = vst [vmem:[#allocation14 + $0x30] sm:$0x1] %v7100
    %v7105 = vld [vmem:[#allocation9 + $0x4] sm:$0xff]
    %v7106 = vld [vmem:[#allocation9 + $0xc] sm:$0x3]
    %v7107 = vpack.c.bf16 %v7106, %v7105
    %v7109 = vunpack.c.l.b16 %v7107
    %v7110 = vunpack.c.h.b16 %v7107
    %v7111 = vpack.c.b16 %v7109, %v7109
    %v7112 = vpack.c.b16 %v7110, %v7110
    %7115 = vst [vmem:[#allocation14 + $0x10] sm:$0xf] %v7111
    %7116 = vst [vmem:[#allocation14 + $0x34] sm:$0x1] %v7112
    %v7117 = vld [vmem:[#allocation9 + $0x5] sm:$0xff]
    %v7118 = vld [vmem:[#allocation9 + $0xd] sm:$0x3]
    %v7119 = vpack.c.bf16 %v7118, %v7117
    %v7121 = vunpack.c.l.b16 %v7119
    %v7122 = vunpack.c.h.b16 %v7119
    %v7123 = vpack.c.b16 %v7121, %v7121
    %v7124 = vpack.c.b16 %v7122, %v7122
    %7127 = vst [vmem:[#allocation14 + $0x14] sm:$0xf] %v7123
    %7128 = vst [vmem:[#allocation14 + $0x38] sm:$0x1] %v7124
    %v7129 = vld [vmem:[#allocation9 + $0x6] sm:$0xff]
    %v7130 = vld [vmem:[#allocation9 + $0xe] sm:$0x3]
    %v7131 = vpack.c.bf16 %v7130, %v7129
    %v7133 = vunpack.c.l.b16 %v7131
    %v7134 = vunpack.c.h.b16 %v7131
    %v7135 = vpack.c.b16 %v7133, %v7133
    %v7136 = vpack.c.b16 %v7134, %v7134
    %7139 = vst [vmem:[#allocation14 + $0x18] sm:$0xf] %v7135
    %7140 = vst [vmem:[#allocation14 + $0x3c] sm:$0x1] %v7136
    %v7141 = vld [vmem:[#allocation9 + $0x7] sm:$0xff]
    %v7142 = vld [vmem:[#allocation9 + $0xf] sm:$0x3]
    %v7143 = vpack.c.bf16 %v7142, %v7141
    %v7145 = vunpack.c.l.b16 %v7143
    %v7146 = vunpack.c.h.b16 %v7143
    %v7147 = vpack.c.b16 %v7145, %v7145
    %v7148 = vpack.c.b16 %v7146, %v7146
    %7151 = vst [vmem:[#allocation14 + $0x1c] sm:$0xf] %v7147
    %7152 = vst [vmem:[#allocation14 + $0x40] sm:$0x1] %v7148
    %v7153 = vld [vmem:[#allocation9 + $0x8] sm:$0xff]
    %v7154 = vld [vmem:[#allocation9 + $0x10] sm:$0x3]
    %v7155 = vpack.c.bf16 %v7154, %v7153
    %v7157 = vunpack.c.l.b16 %v7155
    %v7158 = vunpack.c.h.b16 %v7155
    %v7159 = vpack.c.b16 %v7157, %v7157
    %v7160 = vpack.c.b16 %v7158, %v7158
    %7163 = vst [vmem:[#allocation14 + $0x20] sm:$0xf] %v7159
    %7164 = vst [vmem:[#allocation14 + $0x44] sm:$0x1] %v7160
    %v7165 = vld [vmem:[#allocation14] sm:$0xff]
    %v7166 = vld [vmem:[#allocation14 + $0x8] sm:$0xff]
    %v7167 = vld [vmem:[#allocation14 + $0x10] sm:$0xff]
    %v7168 = vld [vmem:[#allocation14 + $0x18] sm:$0xff]
    %v7169 = vld [vmem:[#allocation14 + $0x20] sm:$0xf]
    %v7170 = vld [vmem:[#allocation14 + $0x24] sm:$0x11]
    %v7171 = vld [vmem:[#allocation14 + $0x2c] sm:$0x11]
    %v7172 = vld [vmem:[#allocation14 + $0x34] sm:$0x11]
    %v7173 = vld [vmem:[#allocation14 + $0x3c] sm:$0x11]
    %v7174 = vld [vmem:[#allocation14 + $0x44] sm:$0x1]
    %v7175 = vld [vmem:[%s12] sm:$0xf]
    %v7176 = vld [vmem:[%s12 + $0x4] sm:$0xf]
    %v7177 = vld [vmem:[%s12 + $0x8] sm:$0xf]
    %v7178 = vld [vmem:[%s12 + $0xc] sm:$0xf]
    %v7179 = vld [vmem:[%s12 + $0x10] sm:$0xf]
    %v7180 = vld [vmem:[%s12 + $0x14] sm:$0xf]
    %v7181 = vld [vmem:[%s12 + $0x18] sm:$0xf]
    %v7182 = vld [vmem:[%s12 + $0x1c] sm:$0xf]
    %v7183 = vld [vmem:[%s12 + $0x20] sm:$0xf]
    %v7184 = vld [vmem:[%s12 + $0x24] sm:$0xf]
    %v7185 = vld [vmem:[%s12 + $0x28] sm:$0xf]
    %v7186 = vld [vmem:[%s12 + $0x2c] sm:$0xf]
    %v7187 = vld [vmem:[%s12 + $0x30] sm:$0xf]
    %v7188 = vld [vmem:[%s12 + $0x34] sm:$0xf]
    %v7189 = vld [vmem:[%s12 + $0x38] sm:$0xf]
    %v7190 = vld [vmem:[%s12 + $0x3c] sm:$0xf]
    %v7191 = vld [vmem:[%s12 + $0x40] sm:$0xf]
    %v7192 = vld [vmem:[%s12 + $0x44] sm:$0xf]
    %v7193 = vld [vmem:[%s12 + $0x48] sm:$0xf]
    %v7194 = vld [vmem:[%s12 + $0x4c] sm:$0xf]
    %v7195 = vld [vmem:[%s12 + $0x50] sm:$0xf]
    %v7196 = vld [vmem:[%s12 + $0x54] sm:$0xf]
    %v7197 = vld [vmem:[%s12 + $0x58] sm:$0xf]
    %v7198 = vld [vmem:[%s12 + $0x5c] sm:$0xf]
    %v7199 = vld [vmem:[%s12 + $0x60] sm:$0xf]
    %v7200 = vld [vmem:[%s12 + $0x64] sm:$0xf]
    %v7201 = vld [vmem:[%s12 + $0x68] sm:$0xf]
    %v7202 = vld [vmem:[%s12 + $0x6c] sm:$0xf]
    %v7203 = vld [vmem:[%s12 + $0x70] sm:$0xf]
    %v7204 = vld [vmem:[%s12 + $0x74] sm:$0xf]
    %v7205 = vld [vmem:[%s12 + $0x78] sm:$0xf]
    %v7206 = vld [vmem:[%s12 + $0x7c] sm:$0xf]
    %v7207 = vld [vmem:[%s12 + $0x80] sm:$0xf]
    %v7208 = vld [vmem:[%s12 + $0x84] sm:$0xf]
    %v7209 = vld [vmem:[%s12 + $0x88] sm:$0xf]
    %v7210 = vld [vmem:[%s12 + $0x8c] sm:$0xf]
    %v7211 = vld [vmem:[%s12 + $0x90] sm:$0xf]
    %v7212 = vld [vmem:[%s12 + $0x94] sm:$0xf]
    %v7213 = vld [vmem:[%s12 + $0x98] sm:$0xf]
    %v7214 = vld [vmem:[%s12 + $0x9c] sm:$0xf]
    %v7215 = vld [vmem:[%s12 + $0xa0] sm:$0xf]
    %v7216 = vld [vmem:[%s12 + $0xa4] sm:$0xf]
    %v7217 = vld [vmem:[%s12 + $0xa8] sm:$0xf]
    %v7218 = vld [vmem:[%s12 + $0xac] sm:$0xf]
    %v7219 = vld [vmem:[%s12 + $0xb0] sm:$0xf]
    %v7220 = vld [vmem:[%s12 + $0xb4] sm:$0xf]
    %v7221 = vld [vmem:[%s12 + $0xb8] sm:$0xf]
    %v7222 = vld [vmem:[%s12 + $0xbc] sm:$0xf]
    %v7223 = vld [vmem:[%s12 + $0xc0] sm:$0xf]
    %v7224 = vld [vmem:[%s12 + $0xc4] sm:$0xf]
    %v7225 = vld [vmem:[%s12 + $0xc8] sm:$0xf]
    %v7226 = vld [vmem:[%s12 + $0xcc] sm:$0xf]
    %v7227 = vld [vmem:[%s12 + $0xd0] sm:$0xf]
    %v7228 = vld [vmem:[%s12 + $0xd4] sm:$0xf]
    %v7229 = vld [vmem:[%s12 + $0xd8] sm:$0xf]
    %v7230 = vld [vmem:[%s12 + $0xdc] sm:$0xf]
    %v7231 = vld [vmem:[%s12 + $0xe0] sm:$0xf]
    %v7232 = vld [vmem:[%s12 + $0xe4] sm:$0xf]
    %v7233 = vld [vmem:[%s12 + $0xe8] sm:$0xf]
    %v7234 = vld [vmem:[%s12 + $0xec] sm:$0xf]
    %v7235 = vld [vmem:[%s12 + $0xf0] sm:$0xf]
    %v7236 = vld [vmem:[%s12 + $0xf4] sm:$0xf]
    %v7237 = vld [vmem:[%s12 + $0xf8] sm:$0xf]
    %v7238 = vld [vmem:[%s12 + $0xfc] sm:$0xf]
    %v7239 = vld [vmem:[%s12 + $0x100] sm:$0xf]
    %v7240 = vld [vmem:[%s12 + $0x104] sm:$0xf]
    %v7241 = vld [vmem:[%s12 + $0x108] sm:$0xf]
    %v7242 = vld [vmem:[%s12 + $0x10c] sm:$0xf]
    %v7243 = vld [vmem:[%s12 + $0x110] sm:$0xf]
    %v7244 = vld [vmem:[%s12 + $0x114] sm:$0xf]
    %v7245 = vld [vmem:[%s12 + $0x118] sm:$0xf]
    %v7246 = vld [vmem:[%s12 + $0x11c] sm:$0xf]
    %v7247 = vld [vmem:[%s12 + $0x120] sm:$0xf]
    %v7248 = vld [vmem:[%s12 + $0x124] sm:$0xf]
    %v7249 = vld [vmem:[%s12 + $0x128] sm:$0xf]
    %v7250 = vld [vmem:[%s12 + $0x12c] sm:$0xf]
    %v7251 = vld [vmem:[%s12 + $0x130] sm:$0xf]
    %v7252 = vld [vmem:[%s12 + $0x134] sm:$0xf]
    %v7253 = vld [vmem:[%s12 + $0x138] sm:$0xf]
    %v7254 = vld [vmem:[%s12 + $0x13c] sm:$0xf]
    %v7255 = vld [vmem:[%s12 + $0x140] sm:$0xf]
    %v7256 = vld [vmem:[%s12 + $0x144] sm:$0xf]
    %v7257 = vld [vmem:[%s12 + $0x148] sm:$0xf]
    %v7258 = vld [vmem:[%s12 + $0x14c] sm:$0xf]
    %v7259 = vld [vmem:[%s12 + $0x150] sm:$0xf]
    %v7260 = vld [vmem:[%s12 + $0x154] sm:$0xf]
    %v7261 = vld [vmem:[%s12 + $0x158] sm:$0xf]
    %v7262 = vld [vmem:[%s12 + $0x15c] sm:$0xf]
    %v7263 = vld [vmem:[%s12 + $0x160] sm:$0xf]
    %v7264 = vld [vmem:[%s12 + $0x164] sm:$0xf]
    %v7265 = vld [vmem:[%s12 + $0x168] sm:$0xf]
    %v7266 = vld [vmem:[%s12 + $0x16c] sm:$0xf]
    %v7267 = vld [vmem:[%s12 + $0x170] sm:$0xf]
    %v7268 = vld [vmem:[%s12 + $0x174] sm:$0xf]
    %v7269 = vld [vmem:[%s12 + $0x178] sm:$0xf]
    %v7270 = vld [vmem:[%s12 + $0x17c] sm:$0xf]
    %v7271 = vld [vmem:[%s12 + $0x180] sm:$0xf]
    %v7272 = vld [vmem:[%s12 + $0x184] sm:$0xf]
    %v7273 = vld [vmem:[%s12 + $0x188] sm:$0xf]
    %v7274 = vld [vmem:[%s12 + $0x18c] sm:$0xf]
    %v7275 = vld [vmem:[%s12 + $0x190] sm:$0xf]
    %v7276 = vld [vmem:[%s12 + $0x194] sm:$0xf]
    %v7277 = vld [vmem:[%s12 + $0x198] sm:$0xf]
    %v7278 = vld [vmem:[%s12 + $0x19c] sm:$0xf]
    %v7279 = vld [vmem:[%s12 + $0x1a0] sm:$0xf]
    %v7280 = vld [vmem:[%s12 + $0x1a4] sm:$0xf]
    %v7281 = vld [vmem:[%s12 + $0x1a8] sm:$0xf]
    %v7282 = vld [vmem:[%s12 + $0x1ac] sm:$0xf]
    %v7283 = vld [vmem:[%s12 + $0x1b0] sm:$0xf]
    %v7284 = vld [vmem:[%s12 + $0x1b4] sm:$0xf]
    %v7285 = vld [vmem:[%s12 + $0x1b8] sm:$0xf]
    %v7286 = vld [vmem:[%s12 + $0x1bc] sm:$0xf]
    %v7287 = vld [vmem:[%s12 + $0x1c0] sm:$0xf]
    %v7288 = vld [vmem:[%s12 + $0x1c4] sm:$0xf]
    %v7289 = vld [vmem:[%s12 + $0x1c8] sm:$0xf]
    %v7290 = vld [vmem:[%s12 + $0x1cc] sm:$0xf]
    %v7291 = vld [vmem:[%s12 + $0x1d0] sm:$0xf]
    %v7292 = vld [vmem:[%s12 + $0x1d4] sm:$0xf]
    %v7293 = vld [vmem:[%s12 + $0x1d8] sm:$0xf]
    %v7294 = vld [vmem:[%s12 + $0x1dc] sm:$0xf]
    %v7295 = vld [vmem:[%s12 + $0x1e0] sm:$0xf]
    %v7296 = vld [vmem:[%s12 + $0x1e4] sm:$0xf]
    %v7297 = vld [vmem:[%s12 + $0x1e8] sm:$0xf]
    %v7298 = vld [vmem:[%s12 + $0x1ec] sm:$0xf]
    %v7299 = vld [vmem:[%s12 + $0x1f0] sm:$0xf]
    %v7300 = vld [vmem:[%s12 + $0x1f4] sm:$0xf]
    %v7301 = vld [vmem:[%s12 + $0x1f8] sm:$0xf]
    %v7302 = vld [vmem:[%s12 + $0x1fc] sm:$0xf]
    %v7303 = vld [vmem:[%s12 + $0x200] sm:$0xf]
    %v7304 = vld [vmem:[%s12 + $0x204] sm:$0xf]
    %v7305 = vld [vmem:[%s12 + $0x208] sm:$0xf]
    %v7306 = vld [vmem:[%s12 + $0x20c] sm:$0xf]
    %v7307 = vld [vmem:[%s12 + $0x210] sm:$0xf]
    %v7308 = vld [vmem:[%s12 + $0x214] sm:$0xf]
    %v7309 = vld [vmem:[%s12 + $0x218] sm:$0xf]
    %v7310 = vld [vmem:[%s12 + $0x21c] sm:$0xf]
    %v7311 = vld [vmem:[%s12 + $0x220] sm:$0xf]
    %v7312 = vld [vmem:[%s12 + $0x224] sm:$0xf]
    %v7313 = vld [vmem:[%s12 + $0x228] sm:$0xf]
    %v7314 = vld [vmem:[%s12 + $0x22c] sm:$0xf]
    %v7315 = vld [vmem:[%s12 + $0x230] sm:$0xf]
    %v7316 = vld [vmem:[%s12 + $0x234] sm:$0xf]
    %v7317 = vld [vmem:[%s12 + $0x238] sm:$0xf]
    %v7318 = vld [vmem:[%s12 + $0x23c] sm:$0xf]
    %v7319 = vld [vmem:[%s13] sm:$0x1]
    %v7321 = vlaneseq
    %v7322 = vshrl.u32 %v7321, 7
    %v7323 = vsub.s32 0, %v7322
    %v7324 = vrot.slane %v7319, %v7323
    %v7336 = vunpack.c.l.b16 %v7165
    %v7337 = vunpack.c.h.b16 %v7165
    %v7338 = vunpack.c.l.b16 %v7166
    %v7339 = vunpack.c.h.b16 %v7166
    %v7340 = vunpack.c.l.b16 %v7167
    %v7341 = vunpack.c.h.b16 %v7167
    %v7342 = vunpack.c.l.b16 %v7168
    %v7343 = vunpack.c.h.b16 %v7168
    %v7344 = vunpack.c.l.b16 %v7169
    %v7345 = vunpack.c.l.b16 %v7170
    %v7346 = vunpack.c.h.b16 %v7170
    %v7347 = vunpack.c.l.b16 %v7171
    %v7348 = vunpack.c.h.b16 %v7171
    %v7349 = vunpack.c.l.b16 %v7172
    %v7350 = vunpack.c.h.b16 %v7172
    %v7351 = vunpack.c.l.b16 %v7173
    %v7352 = vunpack.c.h.b16 %v7173
    %v7353 = vunpack.c.l.b16 %v7174
    %v7354 = vpack.c.b16 %v7345, %v7336
    %v7355 = vpack.c.b16 %v7346, %v7337
    %v7356 = vpack.c.b16 %v7347, %v7338
    %v7357 = vpack.c.b16 %v7348, %v7339
    %v7358 = vpack.c.b16 %v7349, %v7340
    %v7359 = vpack.c.b16 %v7350, %v7341
    %v7360 = vpack.c.b16 %v7351, %v7342
    %v7361 = vpack.c.b16 %v7352, %v7343
    %v7362 = vpack.c.b16 %v7353, %v7344
    %v7516 = vunpack.c.l.b16 %v7175
    %v7517 = vunpack.c.l.b16 %v7176
    %v7518 = vunpack.c.l.b16 %v7177
    %v7519 = vunpack.c.l.b16 %v7178
    %v7520 = vunpack.c.l.b16 %v7179
    %v7521 = vunpack.c.l.b16 %v7180
    %v7522 = vunpack.c.l.b16 %v7181
    %v7523 = vunpack.c.l.b16 %v7182
    %v7524 = vunpack.c.l.b16 %v7183
    %v7525 = vunpack.c.l.b16 %v7184
    %v7526 = vunpack.c.l.b16 %v7185
    %v7527 = vunpack.c.l.b16 %v7186
    %v7528 = vunpack.c.l.b16 %v7187
    %v7529 = vunpack.c.l.b16 %v7188
    %v7530 = vunpack.c.l.b16 %v7189
    %v7531 = vunpack.c.l.b16 %v7190
    %v7532 = vunpack.c.l.b16 %v7191
    %v7533 = vunpack.c.l.b16 %v7192
    %v7534 = vunpack.c.l.b16 %v7193
    %v7535 = vunpack.c.l.b16 %v7194
    %v7536 = vunpack.c.l.b16 %v7195
    %v7537 = vunpack.c.l.b16 %v7196
    %v7538 = vunpack.c.l.b16 %v7197
    %v7539 = vunpack.c.l.b16 %v7198
    %v7540 = vunpack.c.l.b16 %v7199
    %v7541 = vunpack.c.l.b16 %v7200
    %v7542 = vunpack.c.l.b16 %v7201
    %v7543 = vunpack.c.l.b16 %v7202
    %v7544 = vunpack.c.l.b16 %v7203
    %v7545 = vunpack.c.l.b16 %v7204
    %v7546 = vunpack.c.l.b16 %v7205
    %v7547 = vunpack.c.l.b16 %v7206
    %v7548 = vunpack.c.l.b16 %v7207
    %v7549 = vunpack.c.l.b16 %v7208
    %v7550 = vunpack.c.l.b16 %v7209
    %v7551 = vunpack.c.l.b16 %v7210
    %v7552 = vunpack.c.l.b16 %v7211
    %v7553 = vunpack.c.l.b16 %v7212
    %v7554 = vunpack.c.l.b16 %v7213
    %v7555 = vunpack.c.l.b16 %v7214
    %v7556 = vunpack.c.l.b16 %v7215
    %v7557 = vunpack.c.l.b16 %v7216
    %v7558 = vunpack.c.l.b16 %v7217
    %v7559 = vunpack.c.l.b16 %v7218
    %v7560 = vunpack.c.l.b16 %v7219
    %v7561 = vunpack.c.l.b16 %v7220
    %v7562 = vunpack.c.l.b16 %v7221
    %v7563 = vunpack.c.l.b16 %v7222
    %v7564 = vunpack.c.l.b16 %v7223
    %v7565 = vunpack.c.l.b16 %v7224
    %v7566 = vunpack.c.l.b16 %v7225
    %v7567 = vunpack.c.l.b16 %v7226
    %v7568 = vunpack.c.l.b16 %v7227
    %v7569 = vunpack.c.l.b16 %v7228
    %v7570 = vunpack.c.l.b16 %v7229
    %v7571 = vunpack.c.l.b16 %v7230
    %v7572 = vunpack.c.l.b16 %v7231
    %v7573 = vunpack.c.l.b16 %v7232
    %v7574 = vunpack.c.l.b16 %v7233
    %v7575 = vunpack.c.l.b16 %v7234
    %v7576 = vunpack.c.l.b16 %v7235
    %v7577 = vunpack.c.l.b16 %v7236
    %v7578 = vunpack.c.l.b16 %v7237
    %v7579 = vunpack.c.l.b16 %v7238
    %v7580 = vunpack.c.l.b16 %v7239
    %v7581 = vunpack.c.l.b16 %v7240
    %v7582 = vunpack.c.l.b16 %v7241
    %v7583 = vunpack.c.l.b16 %v7242
    %v7584 = vunpack.c.l.b16 %v7243
    %v7585 = vunpack.c.l.b16 %v7244
    %v7586 = vunpack.c.l.b16 %v7245
    %v7587 = vunpack.c.l.b16 %v7246
    %v7588 = vunpack.c.l.b16 %v7247
    %v7589 = vunpack.c.l.b16 %v7248
    %v7590 = vunpack.c.l.b16 %v7249
    %v7591 = vunpack.c.l.b16 %v7250
    %v7592 = vunpack.c.l.b16 %v7251
    %v7593 = vunpack.c.l.b16 %v7252
    %v7594 = vunpack.c.l.b16 %v7253
    %v7595 = vunpack.c.l.b16 %v7254
    %v7596 = vunpack.c.l.b16 %v7255
    %v7597 = vunpack.c.l.b16 %v7256
    %v7598 = vunpack.c.l.b16 %v7257
    %v7599 = vunpack.c.l.b16 %v7258
    %v7600 = vunpack.c.l.b16 %v7259
    %v7601 = vunpack.c.l.b16 %v7260
    %v7602 = vunpack.c.l.b16 %v7261
    %v7603 = vunpack.c.l.b16 %v7262
    %v7604 = vunpack.c.l.b16 %v7263
    %v7605 = vunpack.c.l.b16 %v7264
    %v7606 = vunpack.c.l.b16 %v7265
    %v7607 = vunpack.c.l.b16 %v7266
    %v7608 = vunpack.c.l.b16 %v7267
    %v7609 = vunpack.c.l.b16 %v7268
    %v7610 = vunpack.c.l.b16 %v7269
    %v7611 = vunpack.c.l.b16 %v7270
    %v7612 = vunpack.c.l.b16 %v7271
    %v7613 = vunpack.c.l.b16 %v7272
    %v7614 = vunpack.c.l.b16 %v7273
    %v7615 = vunpack.c.l.b16 %v7274
    %v7616 = vunpack.c.l.b16 %v7275
    %v7617 = vunpack.c.l.b16 %v7276
    %v7618 = vunpack.c.l.b16 %v7277
    %v7619 = vunpack.c.l.b16 %v7278
    %v7620 = vunpack.c.l.b16 %v7279
    %v7621 = vunpack.c.l.b16 %v7280
    %v7622 = vunpack.c.l.b16 %v7281
    %v7623 = vunpack.c.l.b16 %v7282
    %v7624 = vunpack.c.l.b16 %v7283
    %v7625 = vunpack.c.l.b16 %v7284
    %v7626 = vunpack.c.l.b16 %v7285
    %v7627 = vunpack.c.l.b16 %v7286
    %v7628 = vunpack.c.l.b16 %v7287
    %v7629 = vunpack.c.l.b16 %v7288
    %v7630 = vunpack.c.l.b16 %v7289
    %v7631 = vunpack.c.l.b16 %v7290
    %v7632 = vunpack.c.l.b16 %v7291
    %v7633 = vunpack.c.l.b16 %v7292
    %v7634 = vunpack.c.l.b16 %v7293
    %v7635 = vunpack.c.l.b16 %v7294
    %v7636 = vunpack.c.l.b16 %v7295
    %v7637 = vunpack.c.l.b16 %v7296
    %v7638 = vunpack.c.l.b16 %v7297
    %v7639 = vunpack.c.l.b16 %v7298
    %v7640 = vunpack.c.l.b16 %v7299
    %v7641 = vunpack.c.l.b16 %v7300
    %v7642 = vunpack.c.l.b16 %v7301
    %v7643 = vunpack.c.l.b16 %v7302
    %v7644 = vunpack.c.l.b16 %v7303
    %v7645 = vunpack.c.l.b16 %v7304
    %v7646 = vunpack.c.l.b16 %v7305
    %v7647 = vunpack.c.l.b16 %v7306
    %v7648 = vunpack.c.l.b16 %v7307
    %v7649 = vunpack.c.l.b16 %v7308
    %v7650 = vunpack.c.l.b16 %v7309
    %v7651 = vunpack.c.l.b16 %v7310
    %v7652 = vunpack.c.l.b16 %v7311
    %v7653 = vunpack.c.l.b16 %v7312
    %v7654 = vunpack.c.l.b16 %v7313
    %v7655 = vunpack.c.l.b16 %v7314
    %v7656 = vunpack.c.l.b16 %v7315
    %v7657 = vunpack.c.l.b16 %v7316
    %v7658 = vunpack.c.l.b16 %v7317
    %v7659 = vunpack.c.l.b16 %v7318
    %v7660 = vpack.c.b16 %v7517, %v7516
    %v7661 = vpack.c.b16 %v7519, %v7518
    %v7662 = vpack.c.b16 %v7521, %v7520
    %v7663 = vpack.c.b16 %v7523, %v7522
    %v7664 = vpack.c.b16 %v7525, %v7524
    %v7665 = vpack.c.b16 %v7527, %v7526
    %v7666 = vpack.c.b16 %v7529, %v7528
    %v7667 = vpack.c.b16 %v7531, %v7530
    %v7668 = vpack.c.b16 %v7533, %v7532
    %v7669 = vpack.c.b16 %v7535, %v7534
    %v7670 = vpack.c.b16 %v7537, %v7536
    %v7671 = vpack.c.b16 %v7539, %v7538
    %v7672 = vpack.c.b16 %v7541, %v7540
    %v7673 = vpack.c.b16 %v7543, %v7542
    %v7674 = vpack.c.b16 %v7545, %v7544
    %v7675 = vpack.c.b16 %v7547, %v7546
    %v7676 = vpack.c.b16 %v7549, %v7548
    %v7677 = vpack.c.b16 %v7551, %v7550
    %v7678 = vpack.c.b16 %v7553, %v7552
    %v7679 = vpack.c.b16 %v7555, %v7554
    %v7680 = vpack.c.b16 %v7557, %v7556
    %v7681 = vpack.c.b16 %v7559, %v7558
    %v7682 = vpack.c.b16 %v7561, %v7560
    %v7683 = vpack.c.b16 %v7563, %v7562
    %v7684 = vpack.c.b16 %v7565, %v7564
    %v7685 = vpack.c.b16 %v7567, %v7566
    %v7686 = vpack.c.b16 %v7569, %v7568
    %v7687 = vpack.c.b16 %v7571, %v7570
    %v7688 = vpack.c.b16 %v7573, %v7572
    %v7689 = vpack.c.b16 %v7575, %v7574
    %v7690 = vpack.c.b16 %v7577, %v7576
    %v7691 = vpack.c.b16 %v7579, %v7578
    %v7692 = vpack.c.b16 %v7581, %v7580
    %v7693 = vpack.c.b16 %v7583, %v7582
    %v7694 = vpack.c.b16 %v7585, %v7584
    %v7695 = vpack.c.b16 %v7587, %v7586
    %v7696 = vpack.c.b16 %v7589, %v7588
    %v7697 = vpack.c.b16 %v7591, %v7590
    %v7698 = vpack.c.b16 %v7593, %v7592
    %v7699 = vpack.c.b16 %v7595, %v7594
    %v7700 = vpack.c.b16 %v7597, %v7596
    %v7701 = vpack.c.b16 %v7599, %v7598
    %v7702 = vpack.c.b16 %v7601, %v7600
    %v7703 = vpack.c.b16 %v7603, %v7602
    %v7704 = vpack.c.b16 %v7605, %v7604
    %v7705 = vpack.c.b16 %v7607, %v7606
    %v7706 = vpack.c.b16 %v7609, %v7608
    %v7707 = vpack.c.b16 %v7611, %v7610
    %v7708 = vpack.c.b16 %v7613, %v7612
    %v7709 = vpack.c.b16 %v7615, %v7614
    %v7710 = vpack.c.b16 %v7617, %v7616
    %v7711 = vpack.c.b16 %v7619, %v7618
    %v7712 = vpack.c.b16 %v7621, %v7620
    %v7713 = vpack.c.b16 %v7623, %v7622
    %v7714 = vpack.c.b16 %v7625, %v7624
    %v7715 = vpack.c.b16 %v7627, %v7626
    %v7716 = vpack.c.b16 %v7629, %v7628
    %v7717 = vpack.c.b16 %v7631, %v7630
    %v7718 = vpack.c.b16 %v7633, %v7632
    %v7719 = vpack.c.b16 %v7635, %v7634
    %v7720 = vpack.c.b16 %v7637, %v7636
    %v7721 = vpack.c.b16 %v7639, %v7638
    %v7722 = vpack.c.b16 %v7641, %v7640
    %v7723 = vpack.c.b16 %v7643, %v7642
    %v7724 = vpack.c.b16 %v7645, %v7644
    %v7725 = vpack.c.b16 %v7647, %v7646
    %v7726 = vpack.c.b16 %v7649, %v7648
    %v7727 = vpack.c.b16 %v7651, %v7650
    %v7728 = vpack.c.b16 %v7653, %v7652
    %v7729 = vpack.c.b16 %v7655, %v7654
    %v7730 = vpack.c.b16 %v7657, %v7656
    %v7731 = vpack.c.b16 %v7659, %v7658
    %7804 = vmatprep.subr.bf16.mxu0 0
    %7805 = vmatpush1.bf16.msra.mxu0 %v7667
    %7806 = vmatprep.subr.bf16.mxu0 0
    %7807 = vmatpush1.bf16.msra.mxu0 %v7666
    %7808 = vmatprep.subr.bf16.mxu0 0
    %7809 = vmatpush1.bf16.msra.mxu0 %v7665
    %7810 = vmatprep.subr.bf16.mxu0 0
    %7811 = vmatpush1.bf16.msra.mxu0 %v7664
    %7812 = vmatprep.subr.bf16.mxu0 0
    %7813 = vmatpush1.bf16.msra.mxu0 %v7663
    %7814 = vmatprep.subr.bf16.mxu0 0
    %7815 = vmatpush1.bf16.msra.mxu0 %v7662
    %7816 = vmatprep.subr.bf16.mxu0 0
    %7817 = vmatpush1.bf16.msra.mxu0 %v7661
    %7818 = vmatprep.subr.bf16.mxu0 0
    %7819 = vmatpush1.bf16.msra.mxu0 %v7660
    %7820 = vmatprep.subr.bf16.mxu0 0
    %7821 = vmatpush2.bf16.msra.mxu0 %v7675
    %7822 = vmatprep.subr.bf16.mxu0 0
    %7823 = vmatpush2.bf16.msra.mxu0 %v7674
    %7824 = vmatprep.subr.bf16.mxu0 0
    %7825 = vmatpush2.bf16.msra.mxu0 %v7673
    %7826 = vmatprep.subr.bf16.mxu0 0
    %7827 = vmatpush2.bf16.msra.mxu0 %v7672
    %7828 = vmatprep.subr.bf16.mxu0 0
    %7829 = vmatpush2.bf16.msra.mxu0 %v7671
    %7830 = vmatprep.subr.bf16.mxu0 0
    %7831 = vmatpush2.bf16.msra.mxu0 %v7670
    %7832 = vmatprep.subr.bf16.mxu0 0
    %7833 = vmatpush2.bf16.msra.mxu0 %v7669
    %7834 = vmatprep.subr.bf16.mxu0 0
    %7835 = vmatpush2.bf16.msra.mxu0 %v7668
    %7836 = vmatprep.mubr.bf16.mxu0 %v7355
    %7837 = vmatmul.mubr.bf16.gmra.mxu0 %v7354
    %v7838 = vpop.f32.mrf.mxu0
    %v7839 = vadd.f32 %v7324, %v7838
    %v7840 = vpop.f32.mrf.mxu0
    %v7841 = vpop.f32.mrf.mxu0
    %v7842 = vadd.f32 %v7324, %v7841
    %v7843 = vpop.f32.mrf.mxu0
    %7844 = vdwg.mxu0
    %7845 = vmatprep.subr.bf16.mxu0 0
    %7846 = vmatpush1.bf16.msra.mxu0 %v7683
    %7847 = vmatprep.subr.bf16.mxu0 0
    %7848 = vmatpush1.bf16.msra.mxu0 %v7682
    %7849 = vmatprep.subr.bf16.mxu0 0
    %7850 = vmatpush1.bf16.msra.mxu0 %v7681
    %7851 = vmatprep.subr.bf16.mxu0 0
    %7852 = vmatpush1.bf16.msra.mxu0 %v7680
    %7853 = vmatprep.subr.bf16.mxu0 0
    %7854 = vmatpush1.bf16.msra.mxu0 %v7679
    %7855 = vmatprep.subr.bf16.mxu0 0
    %7856 = vmatpush1.bf16.msra.mxu0 %v7678
    %7857 = vmatprep.subr.bf16.mxu0 0
    %7858 = vmatpush1.bf16.msra.mxu0 %v7677
    %7859 = vmatprep.subr.bf16.mxu0 0
    %7860 = vmatpush1.bf16.msra.mxu0 %v7676
    %7861 = vmatprep.subr.bf16.mxu0 0
    %7862 = vmatpush2.bf16.msra.mxu0 %v7691
    %7863 = vmatprep.subr.bf16.mxu0 0
    %7864 = vmatpush2.bf16.msra.mxu0 %v7690
    %7865 = vmatprep.subr.bf16.mxu0 0
    %7866 = vmatpush2.bf16.msra.mxu0 %v7689
    %7867 = vmatprep.subr.bf16.mxu0 0
    %7868 = vmatpush2.bf16.msra.mxu0 %v7688
    %7869 = vmatprep.subr.bf16.mxu0 0
    %7870 = vmatpush2.bf16.msra.mxu0 %v7687
    %7871 = vmatprep.subr.bf16.mxu0 0
    %7872 = vmatpush2.bf16.msra.mxu0 %v7686
    %7873 = vmatprep.subr.bf16.mxu0 0
    %7874 = vmatpush2.bf16.msra.mxu0 %v7685
    %7875 = vmatprep.subr.bf16.mxu0 0
    %7876 = vmatpush2.bf16.msra.mxu0 %v7684
    %7877 = vmatprep.mubr.bf16.mxu0 %v7357
    %7878 = vmatmul.mubr.bf16.gmra.mxu0 %v7356
    %v7879 = vpop.f32.mrf.mxu0
    %v7880 = vadd.f32 %v7839, %v7879
    %v7881 = vpop.f32.mrf.mxu0
    %v7882 = vpop.f32.mrf.mxu0
    %v7883 = vadd.f32 %v7842, %v7882
    %v7884 = vpop.f32.mrf.mxu0
    %7885 = vdwg.mxu0
    %7886 = vmatprep.subr.bf16.mxu0 0
    %7887 = vmatpush1.bf16.msra.mxu0 %v7699
    %7888 = vmatprep.subr.bf16.mxu0 0
    %7889 = vmatpush1.bf16.msra.mxu0 %v7698
    %7890 = vmatprep.subr.bf16.mxu0 0
    %7891 = vmatpush1.bf16.msra.mxu0 %v7697
    %7892 = vmatprep.subr.bf16.mxu0 0
    %7893 = vmatpush1.bf16.msra.mxu0 %v7696
    %7894 = vmatprep.subr.bf16.mxu0 0
    %7895 = vmatpush1.bf16.msra.mxu0 %v7695
    %7896 = vmatprep.subr.bf16.mxu0 0
    %7897 = vmatpush1.bf16.msra.mxu0 %v7694
    %7898 = vmatprep.subr.bf16.mxu0 0
    %7899 = vmatpush1.bf16.msra.mxu0 %v7693
    %7900 = vmatprep.subr.bf16.mxu0 0
    %7901 = vmatpush1.bf16.msra.mxu0 %v7692
    %7902 = vmatprep.subr.bf16.mxu0 0
    %7903 = vmatpush2.bf16.msra.mxu0 %v7707
    %7904 = vmatprep.subr.bf16.mxu0 0
    %7905 = vmatpush2.bf16.msra.mxu0 %v7706
    %7906 = vmatprep.subr.bf16.mxu0 0
    %7907 = vmatpush2.bf16.msra.mxu0 %v7705
    %7908 = vmatprep.subr.bf16.mxu0 0
    %7909 = vmatpush2.bf16.msra.mxu0 %v7704
    %7910 = vmatprep.subr.bf16.mxu0 0
    %7911 = vmatpush2.bf16.msra.mxu0 %v7703
    %7912 = vmatprep.subr.bf16.mxu0 0
    %7913 = vmatpush2.bf16.msra.mxu0 %v7702
    %7914 = vmatprep.subr.bf16.mxu0 0
    %7915 = vmatpush2.bf16.msra.mxu0 %v7701
    %7916 = vmatprep.subr.bf16.mxu0 0
    %7917 = vmatpush2.bf16.msra.mxu0 %v7700
    %7918 = vmatprep.mubr.bf16.mxu0 %v7359
    %7919 = vmatmul.mubr.bf16.gmra.mxu0 %v7358
    %v7920 = vpop.f32.mrf.mxu0
    %v7921 = vadd.f32 %v7880, %v7920
    %v7922 = vpop.f32.mrf.mxu0
    %v7923 = vpop.f32.mrf.mxu0
    %v7924 = vadd.f32 %v7883, %v7923
    %v7925 = vpop.f32.mrf.mxu0
    %7926 = vdwg.mxu0
    %7927 = vmatprep.subr.bf16.mxu0 0
    %7928 = vmatpush1.bf16.msra.mxu0 %v7715
    %7929 = vmatprep.subr.bf16.mxu0 0
    %7930 = vmatpush1.bf16.msra.mxu0 %v7714
    %7931 = vmatprep.subr.bf16.mxu0 0
    %7932 = vmatpush1.bf16.msra.mxu0 %v7713
    %7933 = vmatprep.subr.bf16.mxu0 0
    %7934 = vmatpush1.bf16.msra.mxu0 %v7712
    %7935 = vmatprep.subr.bf16.mxu0 0
    %7936 = vmatpush1.bf16.msra.mxu0 %v7711
    %7937 = vmatprep.subr.bf16.mxu0 0
    %7938 = vmatpush1.bf16.msra.mxu0 %v7710
    %7939 = vmatprep.subr.bf16.mxu0 0
    %7940 = vmatpush1.bf16.msra.mxu0 %v7709
    %7941 = vmatprep.subr.bf16.mxu0 0
    %7942 = vmatpush1.bf16.msra.mxu0 %v7708
    %7943 = vmatprep.subr.bf16.mxu0 0
    %7944 = vmatpush2.bf16.msra.mxu0 %v7723
    %7945 = vmatprep.subr.bf16.mxu0 0
    %7946 = vmatpush2.bf16.msra.mxu0 %v7722
    %7947 = vmatprep.subr.bf16.mxu0 0
    %7948 = vmatpush2.bf16.msra.mxu0 %v7721
    %7949 = vmatprep.subr.bf16.mxu0 0
    %7950 = vmatpush2.bf16.msra.mxu0 %v7720
    %7951 = vmatprep.subr.bf16.mxu0 0
    %7952 = vmatpush2.bf16.msra.mxu0 %v7719
    %7953 = vmatprep.subr.bf16.mxu0 0
    %7954 = vmatpush2.bf16.msra.mxu0 %v7718
    %7955 = vmatprep.subr.bf16.mxu0 0
    %7956 = vmatpush2.bf16.msra.mxu0 %v7717
    %7957 = vmatprep.subr.bf16.mxu0 0
    %7958 = vmatpush2.bf16.msra.mxu0 %v7716
    %7959 = vmatprep.mubr.bf16.mxu0 %v7361
    %7960 = vmatmul.mubr.bf16.gmra.mxu0 %v7360
    %v7961 = vpop.f32.mrf.mxu0
    %v7962 = vadd.f32 %v7921, %v7961
    %v7963 = vpop.f32.mrf.mxu0
    %v7964 = vpop.f32.mrf.mxu0
    %v7965 = vadd.f32 %v7924, %v7964
    %v7966 = vpop.f32.mrf.mxu0
    %7967 = vdwg.mxu0
    %7968 = vmatprep.subr.bf16.mxu0 0
    %7969 = vmatpush1.bf16.msra.mxu0 %v7731
    %7970 = vmatprep.subr.bf16.mxu0 0
    %7971 = vmatpush1.bf16.msra.mxu0 %v7730
    %7972 = vmatprep.subr.bf16.mxu0 0
    %7973 = vmatpush1.bf16.msra.mxu0 %v7729
    %7974 = vmatprep.subr.bf16.mxu0 0
    %7975 = vmatpush1.bf16.msra.mxu0 %v7728
    %7976 = vmatprep.subr.bf16.mxu0 0
    %7977 = vmatpush1.bf16.msra.mxu0 %v7727
    %7978 = vmatprep.subr.bf16.mxu0 0
    %7979 = vmatpush1.bf16.msra.mxu0 %v7726
    %7980 = vmatprep.subr.bf16.mxu0 0
    %7981 = vmatpush1.bf16.msra.mxu0 %v7725
    %7982 = vmatprep.subr.bf16.mxu0 0
    %7983 = vmatpush1.bf16.msra.mxu0 %v7724
    %7984 = vmatprep.subr.bf16.mxu0 0
    %7985 = vmatpush2.bf16.msra.mxu0 0
    %7986 = vmatprep.subr.bf16.mxu0 0
    %7987 = vmatpush2.bf16.msra.mxu0 0
    %7988 = vmatprep.subr.bf16.mxu0 0
    %7989 = vmatpush2.bf16.msra.mxu0 0
    %7990 = vmatprep.subr.bf16.mxu0 0
    %7991 = vmatpush2.bf16.msra.mxu0 0
    %7992 = vmatprep.subr.bf16.mxu0 0
    %7993 = vmatpush2.bf16.msra.mxu0 0
    %7994 = vmatprep.subr.bf16.mxu0 0
    %7995 = vmatpush2.bf16.msra.mxu0 0
    %7996 = vmatprep.subr.bf16.mxu0 0
    %7997 = vmatpush2.bf16.msra.mxu0 0
    %7998 = vmatprep.subr.bf16.mxu0 0
    %7999 = vmatpush2.bf16.msra.mxu0 0
    %8000 = vmatprep.mubr.bf16.mxu0 0
    %8001 = vmatmul.mubr.bf16.gmra.mxu0 %v7362
    %v8002 = vpop.f32.mrf.mxu0
    %v8003 = vadd.f32 %v7962, %v8002
    %v8004 = vpop.f32.mrf.mxu0
    %v8005 = vpop.f32.mrf.mxu0
    %v8006 = vadd.f32 %v7965, %v8005
    %v8007 = vpop.f32.mrf.mxu0
    %8008 = vdwg.mxu0
    %v8009 = vmax.f32 %v8003, 0.0
    %v8010 = vmax.f32 %v8006, 0.0
    %8011 = vst [vmem:[#allocation10 + $0x4] sm:$0x1] %v8009
    %8012 = vst [vmem:[#allocation10 + $0xc] sm:$0x2] %v8010
    %v8013 = vld [vmem:[#allocation10] sm:$0xff]
    %v8014 = vld [vmem:[#allocation10 + $0x8] sm:$0x3]
    %v8015 = vpack.c.bf16 %v8014, %v8013
    %v8017 = vunpack.c.l.b16 %v8015
    %v8018 = vunpack.c.h.b16 %v8015
    %v8019 = vpack.c.b16 %v8017, %v8017
    %v8020 = vpack.c.b16 %v8018, %v8018
    %8023 = vst [vmem:[#allocation14] sm:$0xf] %v8019
    %8024 = vst [vmem:[#allocation14 + $0x24] sm:$0x1] %v8020
    %v8025 = vld [vmem:[#allocation10 + $0x1] sm:$0xff]
    %v8026 = vld [vmem:[#allocation10 + $0x9] sm:$0x3]
    %v8027 = vpack.c.bf16 %v8026, %v8025
    %v8029 = vunpack.c.l.b16 %v8027
    %v8030 = vunpack.c.h.b16 %v8027
    %v8031 = vpack.c.b16 %v8029, %v8029
    %v8032 = vpack.c.b16 %v8030, %v8030
    %8035 = vst [vmem:[#allocation14 + $0x4] sm:$0xf] %v8031
    %8036 = vst [vmem:[#allocation14 + $0x28] sm:$0x1] %v8032
    %v8037 = vld [vmem:[#allocation10 + $0x2] sm:$0xff]
    %v8038 = vld [vmem:[#allocation10 + $0xa] sm:$0x3]
    %v8039 = vpack.c.bf16 %v8038, %v8037
    %v8041 = vunpack.c.l.b16 %v8039
    %v8042 = vunpack.c.h.b16 %v8039
    %v8043 = vpack.c.b16 %v8041, %v8041
    %v8044 = vpack.c.b16 %v8042, %v8042
    %8047 = vst [vmem:[#allocation14 + $0x8] sm:$0xf] %v8043
    %8048 = vst [vmem:[#allocation14 + $0x2c] sm:$0x1] %v8044
    %v8049 = vld [vmem:[#allocation10 + $0x3] sm:$0xff]
    %v8050 = vld [vmem:[#allocation10 + $0xb] sm:$0x3]
    %v8051 = vpack.c.bf16 %v8050, %v8049
    %v8053 = vunpack.c.l.b16 %v8051
    %v8054 = vunpack.c.h.b16 %v8051
    %v8055 = vpack.c.b16 %v8053, %v8053
    %v8056 = vpack.c.b16 %v8054, %v8054
    %8059 = vst [vmem:[#allocation14 + $0xc] sm:$0xf] %v8055
    %8060 = vst [vmem:[#allocation14 + $0x30] sm:$0x1] %v8056
    %v8061 = vld [vmem:[#allocation10 + $0x4] sm:$0xff]
    %v8062 = vld [vmem:[#allocation10 + $0xc] sm:$0x3]
    %v8063 = vpack.c.bf16 %v8062, %v8061
    %v8065 = vunpack.c.l.b16 %v8063
    %v8066 = vunpack.c.h.b16 %v8063
    %v8067 = vpack.c.b16 %v8065, %v8065
    %v8068 = vpack.c.b16 %v8066, %v8066
    %8071 = vst [vmem:[#allocation14 + $0x10] sm:$0xf] %v8067
    %8072 = vst [vmem:[#allocation14 + $0x34] sm:$0x1] %v8068
    %v8073 = vld [vmem:[#allocation10 + $0x5] sm:$0xff]
    %v8074 = vld [vmem:[#allocation10 + $0xd] sm:$0x3]
    %v8075 = vpack.c.bf16 %v8074, %v8073
    %v8077 = vunpack.c.l.b16 %v8075
    %v8078 = vunpack.c.h.b16 %v8075
    %v8079 = vpack.c.b16 %v8077, %v8077
    %v8080 = vpack.c.b16 %v8078, %v8078
    %8083 = vst [vmem:[#allocation14 + $0x14] sm:$0xf] %v8079
    %8084 = vst [vmem:[#allocation14 + $0x38] sm:$0x1] %v8080
    %v8085 = vld [vmem:[#allocation10 + $0x6] sm:$0xff]
    %v8086 = vld [vmem:[#allocation10 + $0xe] sm:$0x3]
    %v8087 = vpack.c.bf16 %v8086, %v8085
    %v8089 = vunpack.c.l.b16 %v8087
    %v8090 = vunpack.c.h.b16 %v8087
    %v8091 = vpack.c.b16 %v8089, %v8089
    %v8092 = vpack.c.b16 %v8090, %v8090
    %8095 = vst [vmem:[#allocation14 + $0x18] sm:$0xf] %v8091
    %8096 = vst [vmem:[#allocation14 + $0x3c] sm:$0x1] %v8092
    %v8097 = vld [vmem:[#allocation10 + $0x7] sm:$0xff]
    %v8098 = vld [vmem:[#allocation10 + $0xf] sm:$0x3]
    %v8099 = vpack.c.bf16 %v8098, %v8097
    %v8101 = vunpack.c.l.b16 %v8099
    %v8102 = vunpack.c.h.b16 %v8099
    %v8103 = vpack.c.b16 %v8101, %v8101
    %v8104 = vpack.c.b16 %v8102, %v8102
    %8107 = vst [vmem:[#allocation14 + $0x1c] sm:$0xf] %v8103
    %8108 = vst [vmem:[#allocation14 + $0x40] sm:$0x1] %v8104
    %v8109 = vld [vmem:[#allocation10 + $0x8] sm:$0xff]
    %v8110 = vld [vmem:[#allocation10 + $0x10] sm:$0x3]
    %v8111 = vpack.c.bf16 %v8110, %v8109
    %v8113 = vunpack.c.l.b16 %v8111
    %v8114 = vunpack.c.h.b16 %v8111
    %v8115 = vpack.c.b16 %v8113, %v8113
    %v8116 = vpack.c.b16 %v8114, %v8114
    %8119 = vst [vmem:[#allocation14 + $0x20] sm:$0xf] %v8115
    %8120 = vst [vmem:[#allocation14 + $0x44] sm:$0x1] %v8116
    %v8121 = vld [vmem:[#allocation14] sm:$0xff]
    %v8122 = vld [vmem:[#allocation14 + $0x8] sm:$0xff]
    %v8123 = vld [vmem:[#allocation14 + $0x10] sm:$0xff]
    %v8124 = vld [vmem:[#allocation14 + $0x18] sm:$0xff]
    %v8125 = vld [vmem:[#allocation14 + $0x20] sm:$0xf]
    %v8126 = vld [vmem:[#allocation14 + $0x24] sm:$0x11]
    %v8127 = vld [vmem:[#allocation14 + $0x2c] sm:$0x11]
    %v8128 = vld [vmem:[#allocation14 + $0x34] sm:$0x11]
    %v8129 = vld [vmem:[#allocation14 + $0x3c] sm:$0x11]
    %v8130 = vld [vmem:[#allocation14 + $0x44] sm:$0x1]
    %v8131 = vld [vmem:[%s14] sm:$0xf]
    %v8132 = vld [vmem:[%s14 + $0x4] sm:$0xf]
    %v8133 = vld [vmem:[%s14 + $0x8] sm:$0xf]
    %v8134 = vld [vmem:[%s14 + $0xc] sm:$0xf]
    %v8135 = vld [vmem:[%s14 + $0x10] sm:$0xf]
    %v8136 = vld [vmem:[%s14 + $0x14] sm:$0xf]
    %v8137 = vld [vmem:[%s14 + $0x18] sm:$0xf]
    %v8138 = vld [vmem:[%s14 + $0x1c] sm:$0xf]
    %v8139 = vld [vmem:[%s14 + $0x20] sm:$0xf]
    %v8140 = vld [vmem:[%s14 + $0x24] sm:$0xf]
    %v8141 = vld [vmem:[%s14 + $0x28] sm:$0xf]
    %v8142 = vld [vmem:[%s14 + $0x2c] sm:$0xf]
    %v8143 = vld [vmem:[%s14 + $0x30] sm:$0xf]
    %v8144 = vld [vmem:[%s14 + $0x34] sm:$0xf]
    %v8145 = vld [vmem:[%s14 + $0x38] sm:$0xf]
    %v8146 = vld [vmem:[%s14 + $0x3c] sm:$0xf]
    %v8147 = vld [vmem:[%s14 + $0x40] sm:$0xf]
    %v8148 = vld [vmem:[%s14 + $0x44] sm:$0xf]
    %v8149 = vld [vmem:[%s14 + $0x48] sm:$0xf]
    %v8150 = vld [vmem:[%s14 + $0x4c] sm:$0xf]
    %v8151 = vld [vmem:[%s14 + $0x50] sm:$0xf]
    %v8152 = vld [vmem:[%s14 + $0x54] sm:$0xf]
    %v8153 = vld [vmem:[%s14 + $0x58] sm:$0xf]
    %v8154 = vld [vmem:[%s14 + $0x5c] sm:$0xf]
    %v8155 = vld [vmem:[%s14 + $0x60] sm:$0xf]
    %v8156 = vld [vmem:[%s14 + $0x64] sm:$0xf]
    %v8157 = vld [vmem:[%s14 + $0x68] sm:$0xf]
    %v8158 = vld [vmem:[%s14 + $0x6c] sm:$0xf]
    %v8159 = vld [vmem:[%s14 + $0x70] sm:$0xf]
    %v8160 = vld [vmem:[%s14 + $0x74] sm:$0xf]
    %v8161 = vld [vmem:[%s14 + $0x78] sm:$0xf]
    %v8162 = vld [vmem:[%s14 + $0x7c] sm:$0xf]
    %v8163 = vld [vmem:[%s14 + $0x80] sm:$0xf]
    %v8164 = vld [vmem:[%s14 + $0x84] sm:$0xf]
    %v8165 = vld [vmem:[%s14 + $0x88] sm:$0xf]
    %v8166 = vld [vmem:[%s14 + $0x8c] sm:$0xf]
    %v8167 = vld [vmem:[%s14 + $0x90] sm:$0xf]
    %v8168 = vld [vmem:[%s14 + $0x94] sm:$0xf]
    %v8169 = vld [vmem:[%s14 + $0x98] sm:$0xf]
    %v8170 = vld [vmem:[%s14 + $0x9c] sm:$0xf]
    %v8171 = vld [vmem:[%s14 + $0xa0] sm:$0xf]
    %v8172 = vld [vmem:[%s14 + $0xa4] sm:$0xf]
    %v8173 = vld [vmem:[%s14 + $0xa8] sm:$0xf]
    %v8174 = vld [vmem:[%s14 + $0xac] sm:$0xf]
    %v8175 = vld [vmem:[%s14 + $0xb0] sm:$0xf]
    %v8176 = vld [vmem:[%s14 + $0xb4] sm:$0xf]
    %v8177 = vld [vmem:[%s14 + $0xb8] sm:$0xf]
    %v8178 = vld [vmem:[%s14 + $0xbc] sm:$0xf]
    %v8179 = vld [vmem:[%s14 + $0xc0] sm:$0xf]
    %v8180 = vld [vmem:[%s14 + $0xc4] sm:$0xf]
    %v8181 = vld [vmem:[%s14 + $0xc8] sm:$0xf]
    %v8182 = vld [vmem:[%s14 + $0xcc] sm:$0xf]
    %v8183 = vld [vmem:[%s14 + $0xd0] sm:$0xf]
    %v8184 = vld [vmem:[%s14 + $0xd4] sm:$0xf]
    %v8185 = vld [vmem:[%s14 + $0xd8] sm:$0xf]
    %v8186 = vld [vmem:[%s14 + $0xdc] sm:$0xf]
    %v8187 = vld [vmem:[%s14 + $0xe0] sm:$0xf]
    %v8188 = vld [vmem:[%s14 + $0xe4] sm:$0xf]
    %v8189 = vld [vmem:[%s14 + $0xe8] sm:$0xf]
    %v8190 = vld [vmem:[%s14 + $0xec] sm:$0xf]
    %v8191 = vld [vmem:[%s14 + $0xf0] sm:$0xf]
    %v8192 = vld [vmem:[%s14 + $0xf4] sm:$0xf]
    %v8193 = vld [vmem:[%s14 + $0xf8] sm:$0xf]
    %v8194 = vld [vmem:[%s14 + $0xfc] sm:$0xf]
    %v8195 = vld [vmem:[%s14 + $0x100] sm:$0xf]
    %v8196 = vld [vmem:[%s14 + $0x104] sm:$0xf]
    %v8197 = vld [vmem:[%s14 + $0x108] sm:$0xf]
    %v8198 = vld [vmem:[%s14 + $0x10c] sm:$0xf]
    %v8199 = vld [vmem:[%s14 + $0x110] sm:$0xf]
    %v8200 = vld [vmem:[%s14 + $0x114] sm:$0xf]
    %v8201 = vld [vmem:[%s14 + $0x118] sm:$0xf]
    %v8202 = vld [vmem:[%s14 + $0x11c] sm:$0xf]
    %v8203 = vld [vmem:[%s14 + $0x120] sm:$0xf]
    %v8204 = vld [vmem:[%s14 + $0x124] sm:$0xf]
    %v8205 = vld [vmem:[%s14 + $0x128] sm:$0xf]
    %v8206 = vld [vmem:[%s14 + $0x12c] sm:$0xf]
    %v8207 = vld [vmem:[%s14 + $0x130] sm:$0xf]
    %v8208 = vld [vmem:[%s14 + $0x134] sm:$0xf]
    %v8209 = vld [vmem:[%s14 + $0x138] sm:$0xf]
    %v8210 = vld [vmem:[%s14 + $0x13c] sm:$0xf]
    %v8211 = vld [vmem:[%s14 + $0x140] sm:$0xf]
    %v8212 = vld [vmem:[%s14 + $0x144] sm:$0xf]
    %v8213 = vld [vmem:[%s14 + $0x148] sm:$0xf]
    %v8214 = vld [vmem:[%s14 + $0x14c] sm:$0xf]
    %v8215 = vld [vmem:[%s14 + $0x150] sm:$0xf]
    %v8216 = vld [vmem:[%s14 + $0x154] sm:$0xf]
    %v8217 = vld [vmem:[%s14 + $0x158] sm:$0xf]
    %v8218 = vld [vmem:[%s14 + $0x15c] sm:$0xf]
    %v8219 = vld [vmem:[%s14 + $0x160] sm:$0xf]
    %v8220 = vld [vmem:[%s14 + $0x164] sm:$0xf]
    %v8221 = vld [vmem:[%s14 + $0x168] sm:$0xf]
    %v8222 = vld [vmem:[%s14 + $0x16c] sm:$0xf]
    %v8223 = vld [vmem:[%s14 + $0x170] sm:$0xf]
    %v8224 = vld [vmem:[%s14 + $0x174] sm:$0xf]
    %v8225 = vld [vmem:[%s14 + $0x178] sm:$0xf]
    %v8226 = vld [vmem:[%s14 + $0x17c] sm:$0xf]
    %v8227 = vld [vmem:[%s14 + $0x180] sm:$0xf]
    %v8228 = vld [vmem:[%s14 + $0x184] sm:$0xf]
    %v8229 = vld [vmem:[%s14 + $0x188] sm:$0xf]
    %v8230 = vld [vmem:[%s14 + $0x18c] sm:$0xf]
    %v8231 = vld [vmem:[%s14 + $0x190] sm:$0xf]
    %v8232 = vld [vmem:[%s14 + $0x194] sm:$0xf]
    %v8233 = vld [vmem:[%s14 + $0x198] sm:$0xf]
    %v8234 = vld [vmem:[%s14 + $0x19c] sm:$0xf]
    %v8235 = vld [vmem:[%s14 + $0x1a0] sm:$0xf]
    %v8236 = vld [vmem:[%s14 + $0x1a4] sm:$0xf]
    %v8237 = vld [vmem:[%s14 + $0x1a8] sm:$0xf]
    %v8238 = vld [vmem:[%s14 + $0x1ac] sm:$0xf]
    %v8239 = vld [vmem:[%s14 + $0x1b0] sm:$0xf]
    %v8240 = vld [vmem:[%s14 + $0x1b4] sm:$0xf]
    %v8241 = vld [vmem:[%s14 + $0x1b8] sm:$0xf]
    %v8242 = vld [vmem:[%s14 + $0x1bc] sm:$0xf]
    %v8243 = vld [vmem:[%s14 + $0x1c0] sm:$0xf]
    %v8244 = vld [vmem:[%s14 + $0x1c4] sm:$0xf]
    %v8245 = vld [vmem:[%s14 + $0x1c8] sm:$0xf]
    %v8246 = vld [vmem:[%s14 + $0x1cc] sm:$0xf]
    %v8247 = vld [vmem:[%s14 + $0x1d0] sm:$0xf]
    %v8248 = vld [vmem:[%s14 + $0x1d4] sm:$0xf]
    %v8249 = vld [vmem:[%s14 + $0x1d8] sm:$0xf]
    %v8250 = vld [vmem:[%s14 + $0x1dc] sm:$0xf]
    %v8251 = vld [vmem:[%s14 + $0x1e0] sm:$0xf]
    %v8252 = vld [vmem:[%s14 + $0x1e4] sm:$0xf]
    %v8253 = vld [vmem:[%s14 + $0x1e8] sm:$0xf]
    %v8254 = vld [vmem:[%s14 + $0x1ec] sm:$0xf]
    %v8255 = vld [vmem:[%s14 + $0x1f0] sm:$0xf]
    %v8256 = vld [vmem:[%s14 + $0x1f4] sm:$0xf]
    %v8257 = vld [vmem:[%s14 + $0x1f8] sm:$0xf]
    %v8258 = vld [vmem:[%s14 + $0x1fc] sm:$0xf]
    %v8259 = vld [vmem:[%s14 + $0x200] sm:$0xf]
    %v8260 = vld [vmem:[%s14 + $0x204] sm:$0xf]
    %v8261 = vld [vmem:[%s14 + $0x208] sm:$0xf]
    %v8262 = vld [vmem:[%s14 + $0x20c] sm:$0xf]
    %v8263 = vld [vmem:[%s14 + $0x210] sm:$0xf]
    %v8264 = vld [vmem:[%s14 + $0x214] sm:$0xf]
    %v8265 = vld [vmem:[%s14 + $0x218] sm:$0xf]
    %v8266 = vld [vmem:[%s14 + $0x21c] sm:$0xf]
    %v8267 = vld [vmem:[%s14 + $0x220] sm:$0xf]
    %v8268 = vld [vmem:[%s14 + $0x224] sm:$0xf]
    %v8269 = vld [vmem:[%s14 + $0x228] sm:$0xf]
    %v8270 = vld [vmem:[%s14 + $0x22c] sm:$0xf]
    %v8271 = vld [vmem:[%s14 + $0x230] sm:$0xf]
    %v8272 = vld [vmem:[%s14 + $0x234] sm:$0xf]
    %v8273 = vld [vmem:[%s14 + $0x238] sm:$0xf]
    %v8274 = vld [vmem:[%s14 + $0x23c] sm:$0xf]
    %v8285 = vunpack.c.l.b16 %v8121
    %v8286 = vunpack.c.h.b16 %v8121
    %v8287 = vunpack.c.l.b16 %v8122
    %v8288 = vunpack.c.h.b16 %v8122
    %v8289 = vunpack.c.l.b16 %v8123
    %v8290 = vunpack.c.h.b16 %v8123
    %v8291 = vunpack.c.l.b16 %v8124
    %v8292 = vunpack.c.h.b16 %v8124
    %v8293 = vunpack.c.l.b16 %v8125
    %v8294 = vunpack.c.l.b16 %v8126
    %v8295 = vunpack.c.h.b16 %v8126
    %v8296 = vunpack.c.l.b16 %v8127
    %v8297 = vunpack.c.h.b16 %v8127
    %v8298 = vunpack.c.l.b16 %v8128
    %v8299 = vunpack.c.h.b16 %v8128
    %v8300 = vunpack.c.l.b16 %v8129
    %v8301 = vunpack.c.h.b16 %v8129
    %v8302 = vunpack.c.l.b16 %v8130
    %v8303 = vpack.c.b16 %v8294, %v8285
    %v8304 = vpack.c.b16 %v8295, %v8286
    %v8305 = vpack.c.b16 %v8296, %v8287
    %v8306 = vpack.c.b16 %v8297, %v8288
    %v8307 = vpack.c.b16 %v8298, %v8289
    %v8308 = vpack.c.b16 %v8299, %v8290
    %v8309 = vpack.c.b16 %v8300, %v8291
    %v8310 = vpack.c.b16 %v8301, %v8292
    %v8311 = vpack.c.b16 %v8302, %v8293
    %v8465 = vunpack.c.l.b16 %v8131
    %v8466 = vunpack.c.l.b16 %v8132
    %v8467 = vunpack.c.l.b16 %v8133
    %v8468 = vunpack.c.l.b16 %v8134
    %v8469 = vunpack.c.l.b16 %v8135
    %v8470 = vunpack.c.l.b16 %v8136
    %v8471 = vunpack.c.l.b16 %v8137
    %v8472 = vunpack.c.l.b16 %v8138
    %v8473 = vunpack.c.l.b16 %v8139
    %v8474 = vunpack.c.l.b16 %v8140
    %v8475 = vunpack.c.l.b16 %v8141
    %v8476 = vunpack.c.l.b16 %v8142
    %v8477 = vunpack.c.l.b16 %v8143
    %v8478 = vunpack.c.l.b16 %v8144
    %v8479 = vunpack.c.l.b16 %v8145
    %v8480 = vunpack.c.l.b16 %v8146
    %v8481 = vunpack.c.l.b16 %v8147
    %v8482 = vunpack.c.l.b16 %v8148
    %v8483 = vunpack.c.l.b16 %v8149
    %v8484 = vunpack.c.l.b16 %v8150
    %v8485 = vunpack.c.l.b16 %v8151
    %v8486 = vunpack.c.l.b16 %v8152
    %v8487 = vunpack.c.l.b16 %v8153
    %v8488 = vunpack.c.l.b16 %v8154
    %v8489 = vunpack.c.l.b16 %v8155
    %v8490 = vunpack.c.l.b16 %v8156
    %v8491 = vunpack.c.l.b16 %v8157
    %v8492 = vunpack.c.l.b16 %v8158
    %v8493 = vunpack.c.l.b16 %v8159
    %v8494 = vunpack.c.l.b16 %v8160
    %v8495 = vunpack.c.l.b16 %v8161
    %v8496 = vunpack.c.l.b16 %v8162
    %v8497 = vunpack.c.l.b16 %v8163
    %v8498 = vunpack.c.l.b16 %v8164
    %v8499 = vunpack.c.l.b16 %v8165
    %v8500 = vunpack.c.l.b16 %v8166
    %v8501 = vunpack.c.l.b16 %v8167
    %v8502 = vunpack.c.l.b16 %v8168
    %v8503 = vunpack.c.l.b16 %v8169
    %v8504 = vunpack.c.l.b16 %v8170
    %v8505 = vunpack.c.l.b16 %v8171
    %v8506 = vunpack.c.l.b16 %v8172
    %v8507 = vunpack.c.l.b16 %v8173
    %v8508 = vunpack.c.l.b16 %v8174
    %v8509 = vunpack.c.l.b16 %v8175
    %v8510 = vunpack.c.l.b16 %v8176
    %v8511 = vunpack.c.l.b16 %v8177
    %v8512 = vunpack.c.l.b16 %v8178
    %v8513 = vunpack.c.l.b16 %v8179
    %v8514 = vunpack.c.l.b16 %v8180
    %v8515 = vunpack.c.l.b16 %v8181
    %v8516 = vunpack.c.l.b16 %v8182
    %v8517 = vunpack.c.l.b16 %v8183
    %v8518 = vunpack.c.l.b16 %v8184
    %v8519 = vunpack.c.l.b16 %v8185
    %v8520 = vunpack.c.l.b16 %v8186
    %v8521 = vunpack.c.l.b16 %v8187
    %v8522 = vunpack.c.l.b16 %v8188
    %v8523 = vunpack.c.l.b16 %v8189
    %v8524 = vunpack.c.l.b16 %v8190
    %v8525 = vunpack.c.l.b16 %v8191
    %v8526 = vunpack.c.l.b16 %v8192
    %v8527 = vunpack.c.l.b16 %v8193
    %v8528 = vunpack.c.l.b16 %v8194
    %v8529 = vunpack.c.l.b16 %v8195
    %v8530 = vunpack.c.l.b16 %v8196
    %v8531 = vunpack.c.l.b16 %v8197
    %v8532 = vunpack.c.l.b16 %v8198
    %v8533 = vunpack.c.l.b16 %v8199
    %v8534 = vunpack.c.l.b16 %v8200
    %v8535 = vunpack.c.l.b16 %v8201
    %v8536 = vunpack.c.l.b16 %v8202
    %v8537 = vunpack.c.l.b16 %v8203
    %v8538 = vunpack.c.l.b16 %v8204
    %v8539 = vunpack.c.l.b16 %v8205
    %v8540 = vunpack.c.l.b16 %v8206
    %v8541 = vunpack.c.l.b16 %v8207
    %v8542 = vunpack.c.l.b16 %v8208
    %v8543 = vunpack.c.l.b16 %v8209
    %v8544 = vunpack.c.l.b16 %v8210
    %v8545 = vunpack.c.l.b16 %v8211
    %v8546 = vunpack.c.l.b16 %v8212
    %v8547 = vunpack.c.l.b16 %v8213
    %v8548 = vunpack.c.l.b16 %v8214
    %v8549 = vunpack.c.l.b16 %v8215
    %v8550 = vunpack.c.l.b16 %v8216
    %v8551 = vunpack.c.l.b16 %v8217
    %v8552 = vunpack.c.l.b16 %v8218
    %v8553 = vunpack.c.l.b16 %v8219
    %v8554 = vunpack.c.l.b16 %v8220
    %v8555 = vunpack.c.l.b16 %v8221
    %v8556 = vunpack.c.l.b16 %v8222
    %v8557 = vunpack.c.l.b16 %v8223
    %v8558 = vunpack.c.l.b16 %v8224
    %v8559 = vunpack.c.l.b16 %v8225
    %v8560 = vunpack.c.l.b16 %v8226
    %v8561 = vunpack.c.l.b16 %v8227
    %v8562 = vunpack.c.l.b16 %v8228
    %v8563 = vunpack.c.l.b16 %v8229
    %v8564 = vunpack.c.l.b16 %v8230
    %v8565 = vunpack.c.l.b16 %v8231
    %v8566 = vunpack.c.l.b16 %v8232
    %v8567 = vunpack.c.l.b16 %v8233
    %v8568 = vunpack.c.l.b16 %v8234
    %v8569 = vunpack.c.l.b16 %v8235
    %v8570 = vunpack.c.l.b16 %v8236
    %v8571 = vunpack.c.l.b16 %v8237
    %v8572 = vunpack.c.l.b16 %v8238
    %v8573 = vunpack.c.l.b16 %v8239
    %v8574 = vunpack.c.l.b16 %v8240
    %v8575 = vunpack.c.l.b16 %v8241
    %v8576 = vunpack.c.l.b16 %v8242
    %v8577 = vunpack.c.l.b16 %v8243
    %v8578 = vunpack.c.l.b16 %v8244
    %v8579 = vunpack.c.l.b16 %v8245
    %v8580 = vunpack.c.l.b16 %v8246
    %v8581 = vunpack.c.l.b16 %v8247
    %v8582 = vunpack.c.l.b16 %v8248
    %v8583 = vunpack.c.l.b16 %v8249
    %v8584 = vunpack.c.l.b16 %v8250
    %v8585 = vunpack.c.l.b16 %v8251
    %v8586 = vunpack.c.l.b16 %v8252
    %v8587 = vunpack.c.l.b16 %v8253
    %v8588 = vunpack.c.l.b16 %v8254
    %v8589 = vunpack.c.l.b16 %v8255
    %v8590 = vunpack.c.l.b16 %v8256
    %v8591 = vunpack.c.l.b16 %v8257
    %v8592 = vunpack.c.l.b16 %v8258
    %v8593 = vunpack.c.l.b16 %v8259
    %v8594 = vunpack.c.l.b16 %v8260
    %v8595 = vunpack.c.l.b16 %v8261
    %v8596 = vunpack.c.l.b16 %v8262
    %v8597 = vunpack.c.l.b16 %v8263
    %v8598 = vunpack.c.l.b16 %v8264
    %v8599 = vunpack.c.l.b16 %v8265
    %v8600 = vunpack.c.l.b16 %v8266
    %v8601 = vunpack.c.l.b16 %v8267
    %v8602 = vunpack.c.l.b16 %v8268
    %v8603 = vunpack.c.l.b16 %v8269
    %v8604 = vunpack.c.l.b16 %v8270
    %v8605 = vunpack.c.l.b16 %v8271
    %v8606 = vunpack.c.l.b16 %v8272
    %v8607 = vunpack.c.l.b16 %v8273
    %v8608 = vunpack.c.l.b16 %v8274
    %v8609 = vpack.c.b16 %v8466, %v8465
    %v8610 = vpack.c.b16 %v8468, %v8467
    %v8611 = vpack.c.b16 %v8470, %v8469
    %v8612 = vpack.c.b16 %v8472, %v8471
    %v8613 = vpack.c.b16 %v8474, %v8473
    %v8614 = vpack.c.b16 %v8476, %v8475
    %v8615 = vpack.c.b16 %v8478, %v8477
    %v8616 = vpack.c.b16 %v8480, %v8479
    %v8617 = vpack.c.b16 %v8482, %v8481
    %v8618 = vpack.c.b16 %v8484, %v8483
    %v8619 = vpack.c.b16 %v8486, %v8485
    %v8620 = vpack.c.b16 %v8488, %v8487
    %v8621 = vpack.c.b16 %v8490, %v8489
    %v8622 = vpack.c.b16 %v8492, %v8491
    %v8623 = vpack.c.b16 %v8494, %v8493
    %v8624 = vpack.c.b16 %v8496, %v8495
    %v8625 = vpack.c.b16 %v8498, %v8497
    %v8626 = vpack.c.b16 %v8500, %v8499
    %v8627 = vpack.c.b16 %v8502, %v8501
    %v8628 = vpack.c.b16 %v8504, %v8503
    %v8629 = vpack.c.b16 %v8506, %v8505
    %v8630 = vpack.c.b16 %v8508, %v8507
    %v8631 = vpack.c.b16 %v8510, %v8509
    %v8632 = vpack.c.b16 %v8512, %v8511
    %v8633 = vpack.c.b16 %v8514, %v8513
    %v8634 = vpack.c.b16 %v8516, %v8515
    %v8635 = vpack.c.b16 %v8518, %v8517
    %v8636 = vpack.c.b16 %v8520, %v8519
    %v8637 = vpack.c.b16 %v8522, %v8521
    %v8638 = vpack.c.b16 %v8524, %v8523
    %v8639 = vpack.c.b16 %v8526, %v8525
    %v8640 = vpack.c.b16 %v8528, %v8527
    %v8641 = vpack.c.b16 %v8530, %v8529
    %v8642 = vpack.c.b16 %v8532, %v8531
    %v8643 = vpack.c.b16 %v8534, %v8533
    %v8644 = vpack.c.b16 %v8536, %v8535
    %v8645 = vpack.c.b16 %v8538, %v8537
    %v8646 = vpack.c.b16 %v8540, %v8539
    %v8647 = vpack.c.b16 %v8542, %v8541
    %v8648 = vpack.c.b16 %v8544, %v8543
    %v8649 = vpack.c.b16 %v8546, %v8545
    %v8650 = vpack.c.b16 %v8548, %v8547
    %v8651 = vpack.c.b16 %v8550, %v8549
    %v8652 = vpack.c.b16 %v8552, %v8551
    %v8653 = vpack.c.b16 %v8554, %v8553
    %v8654 = vpack.c.b16 %v8556, %v8555
    %v8655 = vpack.c.b16 %v8558, %v8557
    %v8656 = vpack.c.b16 %v8560, %v8559
    %v8657 = vpack.c.b16 %v8562, %v8561
    %v8658 = vpack.c.b16 %v8564, %v8563
    %v8659 = vpack.c.b16 %v8566, %v8565
    %v8660 = vpack.c.b16 %v8568, %v8567
    %v8661 = vpack.c.b16 %v8570, %v8569
    %v8662 = vpack.c.b16 %v8572, %v8571
    %v8663 = vpack.c.b16 %v8574, %v8573
    %v8664 = vpack.c.b16 %v8576, %v8575
    %v8665 = vpack.c.b16 %v8578, %v8577
    %v8666 = vpack.c.b16 %v8580, %v8579
    %v8667 = vpack.c.b16 %v8582, %v8581
    %v8668 = vpack.c.b16 %v8584, %v8583
    %v8669 = vpack.c.b16 %v8586, %v8585
    %v8670 = vpack.c.b16 %v8588, %v8587
    %v8671 = vpack.c.b16 %v8590, %v8589
    %v8672 = vpack.c.b16 %v8592, %v8591
    %v8673 = vpack.c.b16 %v8594, %v8593
    %v8674 = vpack.c.b16 %v8596, %v8595
    %v8675 = vpack.c.b16 %v8598, %v8597
    %v8676 = vpack.c.b16 %v8600, %v8599
    %v8677 = vpack.c.b16 %v8602, %v8601
    %v8678 = vpack.c.b16 %v8604, %v8603
    %v8679 = vpack.c.b16 %v8606, %v8605
    %v8680 = vpack.c.b16 %v8608, %v8607
    %8753 = vmatprep.subr.bf16.mxu0 0
    %8754 = vmatpush1.bf16.msra.mxu0 %v8616
    %8755 = vmatprep.subr.bf16.mxu0 0
    %8756 = vmatpush1.bf16.msra.mxu0 %v8615
    %8757 = vmatprep.subr.bf16.mxu0 0
    %8758 = vmatpush1.bf16.msra.mxu0 %v8614
    %8759 = vmatprep.subr.bf16.mxu0 0
    %8760 = vmatpush1.bf16.msra.mxu0 %v8613
    %8761 = vmatprep.subr.bf16.mxu0 0
    %8762 = vmatpush1.bf16.msra.mxu0 %v8612
    %8763 = vmatprep.subr.bf16.mxu0 0
    %8764 = vmatpush1.bf16.msra.mxu0 %v8611
    %8765 = vmatprep.subr.bf16.mxu0 0
    %8766 = vmatpush1.bf16.msra.mxu0 %v8610
    %8767 = vmatprep.subr.bf16.mxu0 0
    %8768 = vmatpush1.bf16.msra.mxu0 %v8609
    %8769 = vmatprep.subr.bf16.mxu0 0
    %8770 = vmatpush2.bf16.msra.mxu0 %v8624
    %8771 = vmatprep.subr.bf16.mxu0 0
    %8772 = vmatpush2.bf16.msra.mxu0 %v8623
    %8773 = vmatprep.subr.bf16.mxu0 0
    %8774 = vmatpush2.bf16.msra.mxu0 %v8622
    %8775 = vmatprep.subr.bf16.mxu0 0
    %8776 = vmatpush2.bf16.msra.mxu0 %v8621
    %8777 = vmatprep.subr.bf16.mxu0 0
    %8778 = vmatpush2.bf16.msra.mxu0 %v8620
    %8779 = vmatprep.subr.bf16.mxu0 0
    %8780 = vmatpush2.bf16.msra.mxu0 %v8619
    %8781 = vmatprep.subr.bf16.mxu0 0
    %8782 = vmatpush2.bf16.msra.mxu0 %v8618
    %8783 = vmatprep.subr.bf16.mxu0 0
    %8784 = vmatpush2.bf16.msra.mxu0 %v8617
    %8785 = vmatprep.mubr.bf16.mxu0 %v8304
    %8786 = vmatmul.mubr.bf16.gmra.mxu0 %v8303
    %v8787 = vpop.f32.mrf.mxu0
    %v8788 = vadd.f32 0.0, %v8787
    %v8789 = vpop.f32.mrf.mxu0
    %v8790 = vpop.f32.mrf.mxu0
    %v8791 = vadd.f32 0.0, %v8790
    %v8792 = vpop.f32.mrf.mxu0
    %8793 = vdwg.mxu0
    %8794 = vmatprep.subr.bf16.mxu0 0
    %8795 = vmatpush1.bf16.msra.mxu0 %v8632
    %8796 = vmatprep.subr.bf16.mxu0 0
    %8797 = vmatpush1.bf16.msra.mxu0 %v8631
    %8798 = vmatprep.subr.bf16.mxu0 0
    %8799 = vmatpush1.bf16.msra.mxu0 %v8630
    %8800 = vmatprep.subr.bf16.mxu0 0
    %8801 = vmatpush1.bf16.msra.mxu0 %v8629
    %8802 = vmatprep.subr.bf16.mxu0 0
    %8803 = vmatpush1.bf16.msra.mxu0 %v8628
    %8804 = vmatprep.subr.bf16.mxu0 0
    %8805 = vmatpush1.bf16.msra.mxu0 %v8627
    %8806 = vmatprep.subr.bf16.mxu0 0
    %8807 = vmatpush1.bf16.msra.mxu0 %v8626
    %8808 = vmatprep.subr.bf16.mxu0 0
    %8809 = vmatpush1.bf16.msra.mxu0 %v8625
    %8810 = vmatprep.subr.bf16.mxu0 0
    %8811 = vmatpush2.bf16.msra.mxu0 %v8640
    %8812 = vmatprep.subr.bf16.mxu0 0
    %8813 = vmatpush2.bf16.msra.mxu0 %v8639
    %8814 = vmatprep.subr.bf16.mxu0 0
    %8815 = vmatpush2.bf16.msra.mxu0 %v8638
    %8816 = vmatprep.subr.bf16.mxu0 0
    %8817 = vmatpush2.bf16.msra.mxu0 %v8637
    %8818 = vmatprep.subr.bf16.mxu0 0
    %8819 = vmatpush2.bf16.msra.mxu0 %v8636
    %8820 = vmatprep.subr.bf16.mxu0 0
    %8821 = vmatpush2.bf16.msra.mxu0 %v8635
    %8822 = vmatprep.subr.bf16.mxu0 0
    %8823 = vmatpush2.bf16.msra.mxu0 %v8634
    %8824 = vmatprep.subr.bf16.mxu0 0
    %8825 = vmatpush2.bf16.msra.mxu0 %v8633
    %8826 = vmatprep.mubr.bf16.mxu0 %v8306
    %8827 = vmatmul.mubr.bf16.gmra.mxu0 %v8305
    %v8828 = vpop.f32.mrf.mxu0
    %v8829 = vadd.f32 %v8788, %v8828
    %v8830 = vpop.f32.mrf.mxu0
    %v8831 = vpop.f32.mrf.mxu0
    %v8832 = vadd.f32 %v8791, %v8831
    %v8833 = vpop.f32.mrf.mxu0
    %8834 = vdwg.mxu0
    %8835 = vmatprep.subr.bf16.mxu0 0
    %8836 = vmatpush1.bf16.msra.mxu0 %v8648
    %8837 = vmatprep.subr.bf16.mxu0 0
    %8838 = vmatpush1.bf16.msra.mxu0 %v8647
    %8839 = vmatprep.subr.bf16.mxu0 0
    %8840 = vmatpush1.bf16.msra.mxu0 %v8646
    %8841 = vmatprep.subr.bf16.mxu0 0
    %8842 = vmatpush1.bf16.msra.mxu0 %v8645
    %8843 = vmatprep.subr.bf16.mxu0 0
    %8844 = vmatpush1.bf16.msra.mxu0 %v8644
    %8845 = vmatprep.subr.bf16.mxu0 0
    %8846 = vmatpush1.bf16.msra.mxu0 %v8643
    %8847 = vmatprep.subr.bf16.mxu0 0
    %8848 = vmatpush1.bf16.msra.mxu0 %v8642
    %8849 = vmatprep.subr.bf16.mxu0 0
    %8850 = vmatpush1.bf16.msra.mxu0 %v8641
    %8851 = vmatprep.subr.bf16.mxu0 0
    %8852 = vmatpush2.bf16.msra.mxu0 %v8656
    %8853 = vmatprep.subr.bf16.mxu0 0
    %8854 = vmatpush2.bf16.msra.mxu0 %v8655
    %8855 = vmatprep.subr.bf16.mxu0 0
    %8856 = vmatpush2.bf16.msra.mxu0 %v8654
    %8857 = vmatprep.subr.bf16.mxu0 0
    %8858 = vmatpush2.bf16.msra.mxu0 %v8653
    %8859 = vmatprep.subr.bf16.mxu0 0
    %8860 = vmatpush2.bf16.msra.mxu0 %v8652
    %8861 = vmatprep.subr.bf16.mxu0 0
    %8862 = vmatpush2.bf16.msra.mxu0 %v8651
    %8863 = vmatprep.subr.bf16.mxu0 0
    %8864 = vmatpush2.bf16.msra.mxu0 %v8650
    %8865 = vmatprep.subr.bf16.mxu0 0
    %8866 = vmatpush2.bf16.msra.mxu0 %v8649
    %8867 = vmatprep.mubr.bf16.mxu0 %v8308
    %8868 = vmatmul.mubr.bf16.gmra.mxu0 %v8307
    %v8869 = vpop.f32.mrf.mxu0
    %v8870 = vadd.f32 %v8829, %v8869
    %v8871 = vpop.f32.mrf.mxu0
    %v8872 = vpop.f32.mrf.mxu0
    %v8873 = vadd.f32 %v8832, %v8872
    %v8874 = vpop.f32.mrf.mxu0
    %8875 = vdwg.mxu0
    %8876 = vmatprep.subr.bf16.mxu0 0
    %8877 = vmatpush1.bf16.msra.mxu0 %v8664
    %8878 = vmatprep.subr.bf16.mxu0 0
    %8879 = vmatpush1.bf16.msra.mxu0 %v8663
    %8880 = vmatprep.subr.bf16.mxu0 0
    %8881 = vmatpush1.bf16.msra.mxu0 %v8662
    %8882 = vmatprep.subr.bf16.mxu0 0
    %8883 = vmatpush1.bf16.msra.mxu0 %v8661
    %8884 = vmatprep.subr.bf16.mxu0 0
    %8885 = vmatpush1.bf16.msra.mxu0 %v8660
    %8886 = vmatprep.subr.bf16.mxu0 0
    %8887 = vmatpush1.bf16.msra.mxu0 %v8659
    %8888 = vmatprep.subr.bf16.mxu0 0
    %8889 = vmatpush1.bf16.msra.mxu0 %v8658
    %8890 = vmatprep.subr.bf16.mxu0 0
    %8891 = vmatpush1.bf16.msra.mxu0 %v8657
    %8892 = vmatprep.subr.bf16.mxu0 0
    %8893 = vmatpush2.bf16.msra.mxu0 %v8672
    %8894 = vmatprep.subr.bf16.mxu0 0
    %8895 = vmatpush2.bf16.msra.mxu0 %v8671
    %8896 = vmatprep.subr.bf16.mxu0 0
    %8897 = vmatpush2.bf16.msra.mxu0 %v8670
    %8898 = vmatprep.subr.bf16.mxu0 0
    %8899 = vmatpush2.bf16.msra.mxu0 %v8669
    %8900 = vmatprep.subr.bf16.mxu0 0
    %8901 = vmatpush2.bf16.msra.mxu0 %v8668
    %8902 = vmatprep.subr.bf16.mxu0 0
    %8903 = vmatpush2.bf16.msra.mxu0 %v8667
    %8904 = vmatprep.subr.bf16.mxu0 0
    %8905 = vmatpush2.bf16.msra.mxu0 %v8666
    %8906 = vmatprep.subr.bf16.mxu0 0
    %8907 = vmatpush2.bf16.msra.mxu0 %v8665
    %8908 = vmatprep.mubr.bf16.mxu0 %v8310
    %8909 = vmatmul.mubr.bf16.gmra.mxu0 %v8309
    %v8910 = vpop.f32.mrf.mxu0
    %v8911 = vadd.f32 %v8870, %v8910
    %v8912 = vpop.f32.mrf.mxu0
    %v8913 = vpop.f32.mrf.mxu0
    %v8914 = vadd.f32 %v8873, %v8913
    %v8915 = vpop.f32.mrf.mxu0
    %8916 = vdwg.mxu0
    %8917 = vmatprep.subr.bf16.mxu0 0
    %8918 = vmatpush1.bf16.msra.mxu0 %v8680
    %8919 = vmatprep.subr.bf16.mxu0 0
    %8920 = vmatpush1.bf16.msra.mxu0 %v8679
    %8921 = vmatprep.subr.bf16.mxu0 0
    %8922 = vmatpush1.bf16.msra.mxu0 %v8678
    %8923 = vmatprep.subr.bf16.mxu0 0
    %8924 = vmatpush1.bf16.msra.mxu0 %v8677
    %8925 = vmatprep.subr.bf16.mxu0 0
    %8926 = vmatpush1.bf16.msra.mxu0 %v8676
    %8927 = vmatprep.subr.bf16.mxu0 0
    %8928 = vmatpush1.bf16.msra.mxu0 %v8675
    %8929 = vmatprep.subr.bf16.mxu0 0
    %8930 = vmatpush1.bf16.msra.mxu0 %v8674
    %8931 = vmatprep.subr.bf16.mxu0 0
    %8932 = vmatpush1.bf16.msra.mxu0 %v8673
    %8933 = vmatprep.subr.bf16.mxu0 0
    %8934 = vmatpush2.bf16.msra.mxu0 0
    %8935 = vmatprep.subr.bf16.mxu0 0
    %8936 = vmatpush2.bf16.msra.mxu0 0
    %8937 = vmatprep.subr.bf16.mxu0 0
    %8938 = vmatpush2.bf16.msra.mxu0 0
    %8939 = vmatprep.subr.bf16.mxu0 0
    %8940 = vmatpush2.bf16.msra.mxu0 0
    %8941 = vmatprep.subr.bf16.mxu0 0
    %8942 = vmatpush2.bf16.msra.mxu0 0
    %8943 = vmatprep.subr.bf16.mxu0 0
    %8944 = vmatpush2.bf16.msra.mxu0 0
    %8945 = vmatprep.subr.bf16.mxu0 0
    %8946 = vmatpush2.bf16.msra.mxu0 0
    %8947 = vmatprep.subr.bf16.mxu0 0
    %8948 = vmatpush2.bf16.msra.mxu0 0
    %8949 = vmatprep.mubr.bf16.mxu0 0
    %8950 = vmatmul.mubr.bf16.gmra.mxu0 %v8311
    %v8951 = vpop.f32.mrf.mxu0
    %v8952 = vadd.f32 %v8911, %v8951
    %v8953 = vpop.f32.mrf.mxu0
    %v8954 = vpop.f32.mrf.mxu0
    %v8955 = vadd.f32 %v8914, %v8954
    %v8956 = vpop.f32.mrf.mxu0
    %8957 = vdwg.mxu0
    %v8958 = vld [vmem:[#allocation9 + $0x4] sm:$0x1]
    %v8959 = vadd.f32 %v8952, %v8958
    %8960 = vst [vmem:[#allocation11] sm:$0x1] %v8959
    %v8961 = vld [vmem:[#allocation9 + $0xd] sm:$0x1]
    %v8963 = vrot.slane %v8961, 7
    %v8965 = vadd.f32 %v8955, %v8963
    %8966 = vst [vmem:[#allocation11] sm:$0x2] %v8965
    %v8967 = vld [vmem:[#allocation11] sm:$0x3]
    %v8968 = vpack.c.bf16 %v8967, %v8967
    %v8969 = vld [vmem:[%s15] sm:$0xf]
    %v8970 = vld [vmem:[%s15 + $0x4] sm:$0xf]
    %v8971 = vld [vmem:[%s15 + $0x8] sm:$0xf]
    %v8972 = vld [vmem:[%s15 + $0xc] sm:$0xf]
    %v8973 = vld [vmem:[%s15 + $0x10] sm:$0xf]
    %v8974 = vld [vmem:[%s15 + $0x14] sm:$0xf]
    %v8975 = vld [vmem:[%s15 + $0x18] sm:$0xf]
    %v8976 = vld [vmem:[%s15 + $0x1c] sm:$0xf]
    %v8977 = vld [vmem:[%s15 + $0x20] sm:$0xf]
    %v8978 = vld [vmem:[%s15 + $0x24] sm:$0xf]
    %v8979 = vld [vmem:[%s15 + $0x28] sm:$0xf]
    %v8980 = vld [vmem:[%s15 + $0x2c] sm:$0xf]
    %v8981 = vld [vmem:[%s15 + $0x30] sm:$0xf]
    %v8982 = vld [vmem:[%s15 + $0x34] sm:$0xf]
    %v8983 = vld [vmem:[%s15 + $0x38] sm:$0xf]
    %v8984 = vld [vmem:[%s15 + $0x3c] sm:$0xf]
    %v9001 = vunpack.c.l.b16 %v8969
    %v9002 = vunpack.c.l.b16 %v8970
    %v9003 = vunpack.c.l.b16 %v8971
    %v9004 = vunpack.c.l.b16 %v8972
    %v9005 = vunpack.c.l.b16 %v8973
    %v9006 = vunpack.c.l.b16 %v8974
    %v9007 = vunpack.c.l.b16 %v8975
    %v9008 = vunpack.c.l.b16 %v8976
    %v9009 = vunpack.c.l.b16 %v8977
    %v9010 = vunpack.c.l.b16 %v8978
    %v9011 = vunpack.c.l.b16 %v8979
    %v9012 = vunpack.c.l.b16 %v8980
    %v9013 = vunpack.c.l.b16 %v8981
    %v9014 = vunpack.c.l.b16 %v8982
    %v9015 = vunpack.c.l.b16 %v8983
    %v9016 = vunpack.c.l.b16 %v8984
    %v9017 = vpack.c.b16 %v9002, %v9001
    %v9018 = vpack.c.b16 %v9004, %v9003
    %v9019 = vpack.c.b16 %v9006, %v9005
    %v9020 = vpack.c.b16 %v9008, %v9007
    %v9021 = vpack.c.b16 %v9010, %v9009
    %v9022 = vpack.c.b16 %v9012, %v9011
    %v9023 = vpack.c.b16 %v9014, %v9013
    %v9024 = vpack.c.b16 %v9016, %v9015
    %9033 = vmatprep.subr.bf16.mxu0 0
    %9034 = vmatpush1.bf16.msra.mxu0 %v9024
    %9035 = vmatprep.subr.bf16.mxu0 0
    %9036 = vmatpush1.bf16.msra.mxu0 %v9023
    %9037 = vmatprep.subr.bf16.mxu0 0
    %9038 = vmatpush1.bf16.msra.mxu0 %v9022
    %9039 = vmatprep.subr.bf16.mxu0 0
    %9040 = vmatpush1.bf16.msra.mxu0 %v9021
    %9041 = vmatprep.subr.bf16.mxu0 0
    %9042 = vmatpush1.bf16.msra.mxu0 %v9020
    %9043 = vmatprep.subr.bf16.mxu0 0
    %9044 = vmatpush1.bf16.msra.mxu0 %v9019
    %9045 = vmatprep.subr.bf16.mxu0 0
    %9046 = vmatpush1.bf16.msra.mxu0 %v9018
    %9047 = vmatprep.subr.bf16.mxu0 0
    %9048 = vmatpush1.bf16.msra.mxu0 %v9017
    %9049 = vmatprep.subr.bf16.mxu0 0
    %9050 = vmatpush2.bf16.msra.mxu0 0
    %9051 = vmatprep.subr.bf16.mxu0 0
    %9052 = vmatpush2.bf16.msra.mxu0 0
    %9053 = vmatprep.subr.bf16.mxu0 0
    %9054 = vmatpush2.bf16.msra.mxu0 0
    %9055 = vmatprep.subr.bf16.mxu0 0
    %9056 = vmatpush2.bf16.msra.mxu0 0
    %9057 = vmatprep.subr.bf16.mxu0 0
    %9058 = vmatpush2.bf16.msra.mxu0 0
    %9059 = vmatprep.subr.bf16.mxu0 0
    %9060 = vmatpush2.bf16.msra.mxu0 0
    %9061 = vmatprep.subr.bf16.mxu0 0
    %9062 = vmatpush2.bf16.msra.mxu0 0
    %9063 = vmatprep.subr.bf16.mxu0 0
    %9064 = vmatpush2.bf16.msra.mxu0 0
    %9065 = vmatprep.mubr.bf16.mxu0 0
    %9066 = vmatmul.mubr.bf16.gmra.mxu0 %v8968
    %v9067 = vpop.f32.mrf.mxu0
    %v9068 = vadd.f32 0.0, %v9067
    %v9069 = vpop.f32.mrf.mxu0
    %v9070 = vpop.f32.mrf.mxu0
    %v9071 = vpop.f32.mrf.mxu0
    %9072 = vdwg.mxu0
    %v9073 = vadd.f32 %v9068, 0.0
    %v9074 = vld [vmem:[%s16] sm:$0x1]
    %v9075 = vadd.f32 %v9073, %v9074
    %9076 = vst [vmem:[#allocation15] sm:$0x1] %v9075
    %v9077 = vld [vmem:[%s16] sm:$0x1]
    %v9079 = vlaneseq
    %v9080 = vshrl.u32 %v9079, 7
    %v9081 = vsub.s32 0, %v9080
    %v9082 = vrot.slane %v9077, %v9081
    %v9084 = vadd.f32 %v9073, %v9082
    %9085 = vst [vmem:[#allocation15] sm:$0x2] %v9084
    // Predicated region
    $region70: #{feature_extractor.1} parent=1 // pred_check
      _
    $region71: #{feature_extractor.1} parent=1 // pred_check_branch
      %9087 = sbr.rel (0) target = $region73
    $region72: #{feature_extractor.1} parent=1 // pred_region
      %s9089 = ssub.s32 32, 32
      %9090 = vsyncadd [#allocation16], %s9089
      %s9092 = sshll.u32 [#allocation15], 4
      %s9093 = int_to_ptr.vmem [resolvable:$true] %s9092
      %9095 = dma.vmem_to_hbm [thread:$0]  %s9093, 32, %s17, [#allocation16]
    $region73: #{feature_extractor.1} parent=1 // pred_fallthru
      _
    // Predicated region
    $region74: #{feature_extractor.1} parent=1 // pred_check
      _
    $region75: #{feature_extractor.1} parent=1 // pred_check_branch
      %9097 = sbr.rel (0) target = $region77
    $region76: #{feature_extractor.1} parent=1 // pred_region
      %9098 = dma.done [#allocation16], 32
    $region77: #{feature_extractor.1} parent=1 // pred_fallthru
      _
    %9099 = vsyncpa [#allocation16], 1

</llo_original>
